<compile_context>
chip_gen: v5e
topology: v5e:2x2
jax: 0.10.0
libtpu: 0.0.40
codegen_flags: <defaults>
</compile_context>

<pallas_src>
import functools

import jax
import jax.numpy as jnp
from jax.experimental import pallas as pl
from jax.experimental.pallas import tpu as pltpu

LANE = 128
SUBLANE = 8


def _round_up(x, m):
    return ((x + m - 1) // m) * m


def _fused_mlp_kernel(*refs, n_layers, quantized):
    """refs = (x_ref, [w, (scale,), bias] * n_layers, o_ref)."""
    x_ref = refs[0]
    o_ref = refs[-1]
    wb = refs[1:-1]
    per = 3 if quantized else 2

    h = x_ref[...]                                       # (tm, K0) bf16
    for i in range(n_layers):
        w_ref = wb[per * i]
        b_ref = wb[per * i + (2 if quantized else 1)]
        if quantized:
            # int8 weights: integers up to 127 are exact in bf16, so the MXU
            # matmul is exact; the per-output-channel dequant scale is folded
            # into the f32 epilogue after the accumulate (per the review).
            w = w_ref[...].astype(jnp.float32).astype(jnp.bfloat16)
        else:
            w = w_ref[...]                               # bf16 weights
        y = jnp.dot(h.astype(jnp.bfloat16), w,
                    preferred_element_type=jnp.float32)  # MXU, f32 accumulate
        if quantized:
            y = y * wb[per * i + 1][...]                 # (1, N) per-channel scale
        y = y + b_ref[...]                               # (1, N) f32 bias, VPU
        if i < n_layers - 1:
            y = jnp.maximum(y, 0.0)                      # ReLU (not on last layer)
        # dropout(p=0.2) -> identity at inference time
        h = y
    o_ref[...] = h.astype(o_ref.dtype)                   # (tm, n_pad) lane-dense store


def init_params(key, n_feature, n_output, dtype=jnp.float32):
    """Deterministic init matching nn.Linear shapes (uniform +-1/sqrt(fan_in)).

    Weights stored (in_features, out_features) so each layer is x @ W + b.
    """
    dims = [n_feature, 256, 512, 1024, 1024, 512, 256, n_output]
    params = []
    for i in range(len(dims) - 1):
        fan_in, fan_out = dims[i], dims[i + 1]
        key, kw, kb = jax.random.split(key, 3)
        bound = 1.0 / jnp.sqrt(float(fan_in))
        w = jax.random.uniform(kw, (fan_in, fan_out), dtype, -bound, bound)
        b = jax.random.uniform(kb, (fan_out,), dtype, -bound, bound)
        params.append((w, b))
    return params


def _weights_are_int8():
    """int8 weight path only where the review recommends it (v5e / v6e).

    v7x (and anything unrecognized) keeps bf16: its MXU has no integer path.
    """
    try:
        kind = jax.devices()[0].device_kind.lower()
    except Exception:
        return False
    return any(tag in kind for tag in
               ("v5e", "v5 lite", "v5lite", "v6e", "v6 lite", "v6lite"))


def prepare_params(params, n_output, quantize):
    """Cast/quantize weights; biases to (1, N) f32; lane-pad the last layer.

    Returns (prepped, n_pad) with per-layer tuples:
      (w_bf16, b_f32)                when not quantized
      (w_int8, scale_f32, b_f32)     when quantized (per-output-channel scale)
    Padded columns of the last layer are exactly zero (w, scale->1, b), so
    out[:, n_output:] is zero before the wrapper slice.
    """
    n_pad = _round_up(max(n_output, LANE), LANE)
    last = len(params) - 1
    prepped = []
    for i, (w, b) in enumerate(params):
        k, n = w.shape
        n_out = n_pad if i == last else n
        w_f = jnp.zeros((k, n_out), jnp.float32).at[:, :n].set(w.astype(jnp.float32))
        b_f = jnp.zeros((1, n_out), jnp.float32).at[0, :n].set(b.astype(jnp.float32))
        if quantize:
            amax = jnp.max(jnp.abs(w_f), axis=0, keepdims=True)          # (1, n_out)
            scale = jnp.where(amax > 0.0, amax / 127.0, 1.0).astype(jnp.float32)
            w_q = jnp.clip(jnp.round(w_f / scale), -127.0, 127.0).astype(jnp.int8)
            prepped.append((w_q, scale, b_f))
        else:
            prepped.append((w_f.astype(jnp.bfloat16), b_f))
    return prepped, n_pad


def _vmem_limit_bytes(flat, tm, k0, n_pad):
    """Right-sized scoped-VMEM limit: resident weights + buffered tiles + headroom."""
    w_bytes = sum(int(a.size) * a.dtype.itemsize for a in flat)
    tile_bytes = 2 * (tm * k0 * 2) + 2 * (tm * n_pad * 4)   # double-buffered x / out
    act_bytes = 4 * tm * 1024 * 4                           # live f32 intermediates
    est = w_bytes + tile_bytes + act_bytes + (2 << 20)      # + dequant scratch
    return int(min(100 << 20, max(16 << 20, 2 * est)))


def linear_net_forward(x, prepped_params, n_output, n_pad, *, tm_max=256):
    quantized = len(prepped_params[0]) == 3
    n_layers = len(prepped_params)

    # x = x.view(x.size(0), -1); feed the kernel bf16 (halves x HBM bytes and
    # removes the in-kernel layer-0 cast).
    x = x.reshape(x.shape[0], -1)
    M, k0 = x.shape

    # M tiling: multiple of the 8-row sublane, capped so resident weights +
    # 2x buffered tiles + live activations fit v7x's smaller VMEM.
    m_pad = _round_up(M, SUBLANE)
    tm = min(tm_max, m_pad)
    m_pad = _round_up(m_pad, tm)
    x_p = jnp.zeros((m_pad, k0), jnp.bfloat16).at[:M, :].set(x.astype(jnp.bfloat16))

    flat = [a for layer in prepped_params for a in layer]

    # Weights/scales/biases: constant index_map -> loaded once, resident in VMEM
    # for every M tile. x/out: blocked along M.
    def const_spec(a):
        return pl.BlockSpec(a.shape, lambda i: (0,) * a.ndim)

    in_specs = [pl.BlockSpec((tm, k0), lambda i: (i, 0))] + [const_spec(a) for a in flat]

    out = pl.pallas_call(
        functools.partial(_fused_mlp_kernel, n_layers=n_layers, quantized=quantized),
        out_shape=jax.ShapeDtypeStruct((m_pad, n_pad), jnp.float32),
        grid=(m_pad // tm,),
        in_specs=in_specs,
        out_specs=pl.BlockSpec((tm, n_pad), lambda i: (i, 0)),
        compiler_params=pltpu.CompilerParams(
            dimension_semantics=("parallel",),           # v7x: 2 TCs split the M axis
            vmem_limit_bytes=_vmem_limit_bytes(flat, tm, k0, n_pad)),
    )(x_p, *flat)
    return out[:M, :n_output]


def reference_forward(x, prepped_params, n_output):
    """Plain-JAX reference using the SAME weight representation the kernel sees
    (bf16, or int8 + per-channel scale), so it validates the kernel itself.
    Note: this intentionally hides the (documented) quantization delta vs. the
    original f32 PyTorch LinearNet."""
    quantized = len(prepped_params[0]) == 3
    h = x.reshape(x.shape[0], -1).astype(jnp.bfloat16)
    n_layers = len(prepped_params)
    for i, layer in enumerate(prepped_params):
        if quantized:
            w, s, b = layer
            w = w.astype(jnp.float32).astype(jnp.bfloat16)
        else:
            w, b = layer
            s = None
        y = jnp.dot(h.astype(jnp.bfloat16), w, preferred_element_type=jnp.float32)
        if s is not None:
            y = y * s
        y = y + b
        if i < n_layers - 1:
            y = jnp.maximum(y, 0.0)
        h = y
    return h[:, :n_output]


if __name__ == "__main__":
    n_feature = 32
    n_output = 10
    batch = 8

    key = jax.random.PRNGKey(0)
    key, kx = jax.random.split(key)
    x = jax.random.normal(kx, (batch, n_feature), jnp.float32)

    params = init_params(jax.random.PRNGKey(0), n_feature, n_output)
    quantize = _weights_are_int8()            # int8 on v5e/v6e, bf16 elsewhere (v7x)
    prepped, n_pad = prepare_params(params, n_output, quantize)

    out = linear_net_forward(x, prepped, n_output, n_pad)
    jax.block_until_ready(out)

    ref = reference_forward(x, prepped, n_output)
    assert out.shape == (batch, n_output)
    assert jnp.allclose(out, ref, atol=2e-2, rtol=2e-2), (
        float(jnp.max(jnp.abs(out - ref))))

    print("KERNEL_OK")
</pallas_src>

<mosaic_0001>
module attributes {stable_mosaic.version = 11 : i64} {
  func.func @_fused_mlp_kernel(%arg0: i32, %arg1: memref<8x32xbf16, #tpu.memory_space<vmem>>, %arg2: memref<32x256xbf16, #tpu.memory_space<vmem>>, %arg3: memref<1x256xf32, #tpu.memory_space<vmem>>, %arg4: memref<256x512xbf16, #tpu.memory_space<vmem>>, %arg5: memref<1x512xf32, #tpu.memory_space<vmem>>, %arg6: memref<512x1024xbf16, #tpu.memory_space<vmem>>, %arg7: memref<1x1024xf32, #tpu.memory_space<vmem>>, %arg8: memref<1024x1024xbf16, #tpu.memory_space<vmem>>, %arg9: memref<1x1024xf32, #tpu.memory_space<vmem>>, %arg10: memref<1024x512xbf16, #tpu.memory_space<vmem>>, %arg11: memref<1x512xf32, #tpu.memory_space<vmem>>, %arg12: memref<512x256xbf16, #tpu.memory_space<vmem>>, %arg13: memref<1x256xf32, #tpu.memory_space<vmem>>, %arg14: memref<256x128xbf16, #tpu.memory_space<vmem>>, %arg15: memref<1x128xf32, #tpu.memory_space<vmem>>, %arg16: memref<8x128xf32, #tpu.memory_space<vmem>>) attributes {dimension_semantics = [#tpu.dimension_semantics<parallel>], iteration_bounds = array<i64: 1>, scalar_prefetch = 0 : i64, scratch_operands = 0 : i64, tpu.core_type = #tpu.core_type<tc>, window_params = [{transform_indices = @transform_0, window_bounds = array<i64: 8, 32>}, {pipeline_mode = #tpu.pipeline_mode<synchronous>, transform_indices = @transform_1, window_bounds = array<i64: 32, 256>}, {pipeline_mode = #tpu.pipeline_mode<synchronous>, transform_indices = @transform_2, window_bounds = array<i64: 1, 256>}, {pipeline_mode = #tpu.pipeline_mode<synchronous>, transform_indices = @transform_3, window_bounds = array<i64: 256, 512>}, {pipeline_mode = #tpu.pipeline_mode<synchronous>, transform_indices = @transform_4, window_bounds = array<i64: 1, 512>}, {pipeline_mode = #tpu.pipeline_mode<synchronous>, transform_indices = @transform_5, window_bounds = array<i64: 512, 1024>}, {pipeline_mode = #tpu.pipeline_mode<synchronous>, transform_indices = @transform_6, window_bounds = array<i64: 1, 1024>}, {pipeline_mode = #tpu.pipeline_mode<synchronous>, transform_indices = @transform_7, window_bounds = array<i64: 1024, 1024>}, {pipeline_mode = #tpu.pipeline_mode<synchronous>, transform_indices = @transform_8, window_bounds = array<i64: 1, 1024>}, {pipeline_mode = #tpu.pipeline_mode<synchronous>, transform_indices = @transform_9, window_bounds = array<i64: 1024, 512>}, {pipeline_mode = #tpu.pipeline_mode<synchronous>, transform_indices = @transform_10, window_bounds = array<i64: 1, 512>}, {pipeline_mode = #tpu.pipeline_mode<synchronous>, transform_indices = @transform_11, window_bounds = array<i64: 512, 256>}, {pipeline_mode = #tpu.pipeline_mode<synchronous>, transform_indices = @transform_12, window_bounds = array<i64: 1, 256>}, {pipeline_mode = #tpu.pipeline_mode<synchronous>, transform_indices = @transform_13, window_bounds = array<i64: 256, 128>}, {pipeline_mode = #tpu.pipeline_mode<synchronous>, transform_indices = @transform_14, window_bounds = array<i64: 1, 128>}, {transform_indices = @transform_15, window_bounds = array<i64: 8, 128>}]} {
    %c0 = arith.constant 0 : index
    %c0_0 = arith.constant 0 : index
    %0 = vector.load %arg1[%c0, %c0_0] : memref<8x32xbf16, #tpu.memory_space<vmem>>, vector<8x32xbf16>
    %c0_1 = arith.constant 0 : index
    %c0_2 = arith.constant 0 : index
    %1 = vector.load %arg2[%c0_1, %c0_2] : memref<32x256xbf16, #tpu.memory_space<vmem>>, vector<32x256xbf16>
    %cst = arith.constant dense<0.000000e+00> : vector<8x256xf32>
    %2 = tpu.matmul %0, %1, %cst {dimension_numbers = #tpu.dot_dimension_numbers<[1], [0], [0], [1], [0, 0, 1, 1], [], []>} : vector<8x32xbf16>, vector<32x256xbf16>, vector<8x256xf32> -> vector<8x256xf32>
    %c0_3 = arith.constant 0 : index
    %c0_4 = arith.constant 0 : index
    %3 = vector.load %arg3[%c0_3, %c0_4] : memref<1x256xf32, #tpu.memory_space<vmem>>, vector<1x256xf32>
    %4 = vector.broadcast %3 : vector<1x256xf32> to vector<8x256xf32>
    %5 = arith.addf %2, %4 : vector<8x256xf32>
    %cst_5 = arith.constant 0.000000e+00 : f32
    %6 = vector.broadcast %cst_5 : f32 to vector<8x256xf32>
    %7 = arith.maximumf %5, %6 : vector<8x256xf32>
    %c0_6 = arith.constant 0 : index
    %c0_7 = arith.constant 0 : index
    %8 = vector.load %arg4[%c0_6, %c0_7] : memref<256x512xbf16, #tpu.memory_space<vmem>>, vector<256x512xbf16>
    %9 = arith.truncf %7 : vector<8x256xf32> to vector<8x256xbf16>
    %cst_8 = arith.constant dense<0.000000e+00> : vector<8x512xf32>
    %10 = tpu.matmul %9, %8, %cst_8 {dimension_numbers = #tpu.dot_dimension_numbers<[1], [0], [0], [1], [0, 0, 1, 1], [], []>} : vector<8x256xbf16>, vector<256x512xbf16>, vector<8x512xf32> -> vector<8x512xf32>
    %c0_9 = arith.constant 0 : index
    %c0_10 = arith.constant 0 : index
    %11 = vector.load %arg5[%c0_9, %c0_10] : memref<1x512xf32, #tpu.memory_space<vmem>>, vector<1x512xf32>
    %12 = vector.broadcast %11 : vector<1x512xf32> to vector<8x512xf32>
    %13 = arith.addf %10, %12 : vector<8x512xf32>
    %cst_11 = arith.constant 0.000000e+00 : f32
    %14 = vector.broadcast %cst_11 : f32 to vector<8x512xf32>
    %15 = arith.maximumf %13, %14 : vector<8x512xf32>
    %c0_12 = arith.constant 0 : index
    %c0_13 = arith.constant 0 : index
    %16 = vector.load %arg6[%c0_12, %c0_13] : memref<512x1024xbf16, #tpu.memory_space<vmem>>, vector<512x1024xbf16>
    %17 = arith.truncf %15 : vector<8x512xf32> to vector<8x512xbf16>
    %cst_14 = arith.constant dense<0.000000e+00> : vector<8x1024xf32>
    %18 = tpu.matmul %17, %16, %cst_14 {dimension_numbers = #tpu.dot_dimension_numbers<[1], [0], [0], [1], [0, 0, 1, 1], [], []>} : vector<8x512xbf16>, vector<512x1024xbf16>, vector<8x1024xf32> -> vector<8x1024xf32>
    %c0_15 = arith.constant 0 : index
    %c0_16 = arith.constant 0 : index
    %19 = vector.load %arg7[%c0_15, %c0_16] : memref<1x1024xf32, #tpu.memory_space<vmem>>, vector<1x1024xf32>
    %20 = vector.broadcast %19 : vector<1x1024xf32> to vector<8x1024xf32>
    %21 = arith.addf %18, %20 : vector<8x1024xf32>
    %cst_17 = arith.constant 0.000000e+00 : f32
    %22 = vector.broadcast %cst_17 : f32 to vector<8x1024xf32>
    %23 = arith.maximumf %21, %22 : vector<8x1024xf32>
    %c0_18 = arith.constant 0 : index
    %c0_19 = arith.constant 0 : index
    %24 = vector.load %arg8[%c0_18, %c0_19] : memref<1024x1024xbf16, #tpu.memory_space<vmem>>, vector<1024x1024xbf16>
    %25 = arith.truncf %23 : vector<8x1024xf32> to vector<8x1024xbf16>
    %cst_20 = arith.constant dense<0.000000e+00> : vector<8x1024xf32>
    %26 = tpu.matmul %25, %24, %cst_20 {dimension_numbers = #tpu.dot_dimension_numbers<[1], [0], [0], [1], [0, 0, 1, 1], [], []>} : vector<8x1024xbf16>, vector<1024x1024xbf16>, vector<8x1024xf32> -> vector<8x1024xf32>
    %c0_21 = arith.constant 0 : index
    %c0_22 = arith.constant 0 : index
    %27 = vector.load %arg9[%c0_21, %c0_22] : memref<1x1024xf32, #tpu.memory_space<vmem>>, vector<1x1024xf32>
    %28 = vector.broadcast %27 : vector<1x1024xf32> to vector<8x1024xf32>
    %29 = arith.addf %26, %28 : vector<8x1024xf32>
    %cst_23 = arith.constant 0.000000e+00 : f32
    %30 = vector.broadcast %cst_23 : f32 to vector<8x1024xf32>
    %31 = arith.maximumf %29, %30 : vector<8x1024xf32>
    %c0_24 = arith.constant 0 : index
    %c0_25 = arith.constant 0 : index
    %32 = vector.load %arg10[%c0_24, %c0_25] : memref<1024x512xbf16, #tpu.memory_space<vmem>>, vector<1024x512xbf16>
    %33 = arith.truncf %31 : vector<8x1024xf32> to vector<8x1024xbf16>
    %cst_26 = arith.constant dense<0.000000e+00> : vector<8x512xf32>
    %34 = tpu.matmul %33, %32, %cst_26 {dimension_numbers = #tpu.dot_dimension_numbers<[1], [0], [0], [1], [0, 0, 1, 1], [], []>} : vector<8x1024xbf16>, vector<1024x512xbf16>, vector<8x512xf32> -> vector<8x512xf32>
    %c0_27 = arith.constant 0 : index
    %c0_28 = arith.constant 0 : index
    %35 = vector.load %arg11[%c0_27, %c0_28] : memref<1x512xf32, #tpu.memory_space<vmem>>, vector<1x512xf32>
    %36 = vector.broadcast %35 : vector<1x512xf32> to vector<8x512xf32>
    %37 = arith.addf %34, %36 : vector<8x512xf32>
    %cst_29 = arith.constant 0.000000e+00 : f32
    %38 = vector.broadcast %cst_29 : f32 to vector<8x512xf32>
    %39 = arith.maximumf %37, %38 : vector<8x512xf32>
    %c0_30 = arith.constant 0 : index
    %c0_31 = arith.constant 0 : index
    %40 = vector.load %arg12[%c0_30, %c0_31] : memref<512x256xbf16, #tpu.memory_space<vmem>>, vector<512x256xbf16>
    %41 = arith.truncf %39 : vector<8x512xf32> to vector<8x512xbf16>
    %cst_32 = arith.constant dense<0.000000e+00> : vector<8x256xf32>
    %42 = tpu.matmul %41, %40, %cst_32 {dimension_numbers = #tpu.dot_dimension_numbers<[1], [0], [0], [1], [0, 0, 1, 1], [], []>} : vector<8x512xbf16>, vector<512x256xbf16>, vector<8x256xf32> -> vector<8x256xf32>
    %c0_33 = arith.constant 0 : index
    %c0_34 = arith.constant 0 : index
    %43 = vector.load %arg13[%c0_33, %c0_34] : memref<1x256xf32, #tpu.memory_space<vmem>>, vector<1x256xf32>
    %44 = vector.broadcast %43 : vector<1x256xf32> to vector<8x256xf32>
    %45 = arith.addf %42, %44 : vector<8x256xf32>
    %cst_35 = arith.constant 0.000000e+00 : f32
    %46 = vector.broadcast %cst_35 : f32 to vector<8x256xf32>
    %47 = arith.maximumf %45, %46 : vector<8x256xf32>
    %c0_36 = arith.constant 0 : index
    %c0_37 = arith.constant 0 : index
    %48 = vector.load %arg14[%c0_36, %c0_37] : memref<256x128xbf16, #tpu.memory_space<vmem>>, vector<256x128xbf16>
    %49 = arith.truncf %47 : vector<8x256xf32> to vector<8x256xbf16>
    %cst_38 = arith.constant dense<0.000000e+00> : vector<8x128xf32>
    %50 = tpu.matmul %49, %48, %cst_38 {dimension_numbers = #tpu.dot_dimension_numbers<[1], [0], [0], [1], [0, 0, 1, 1], [], []>} : vector<8x256xbf16>, vector<256x128xbf16>, vector<8x128xf32> -> vector<8x128xf32>
    %c0_39 = arith.constant 0 : index
    %c0_40 = arith.constant 0 : index
    %51 = vector.load %arg15[%c0_39, %c0_40] : memref<1x128xf32, #tpu.memory_space<vmem>>, vector<1x128xf32>
    %52 = vector.broadcast %51 : vector<1x128xf32> to vector<8x128xf32>
    %53 = arith.addf %50, %52 : vector<8x128xf32>
    %c0_41 = arith.constant 0 : index
    %c0_42 = arith.constant 0 : index
    %54 = vector.load %arg16[%c0_41, %c0_42] : memref<8x128xf32, #tpu.memory_space<vmem>>, vector<8x128xf32>
    tpu.vector_store %arg16[%c0_41, %c0_42], %53 {strides = array<i32>} : memref<8x128xf32, #tpu.memory_space<vmem>>, vector<8x128xf32>,
    return
  }
  func.func @transform_0(%arg0: i32) -> (i32, i32) {
    %c0_i32 = arith.constant 0 : i32
    %c0_i32_0 = arith.constant 0 : i32
    return %arg0, %c0_i32 : i32, i32
  }
  func.func @transform_1(%arg0: i32) -> (i32, i32) {
    %c0_i32 = arith.constant 0 : i32
    %c0_i32_0 = arith.constant 0 : i32
    %c0_i32_1 = arith.constant 0 : i32
    return %c0_i32, %c0_i32_0 : i32, i32
  }
  func.func @transform_2(%arg0: i32) -> (i32, i32) {
    %c0_i32 = arith.constant 0 : i32
    %c0_i32_0 = arith.constant 0 : i32
    %c0_i32_1 = arith.constant 0 : i32
    return %c0_i32, %c0_i32_0 : i32, i32
  }
  func.func @transform_3(%arg0: i32) -> (i32, i32) {
    %c0_i32 = arith.constant 0 : i32
    %c0_i32_0 = arith.constant 0 : i32
    %c0_i32_1 = arith.constant 0 : i32
    return %c0_i32, %c0_i32_0 : i32, i32
  }
  func.func @transform_4(%arg0: i32) -> (i32, i32) {
    %c0_i32 = arith.constant 0 : i32
    %c0_i32_0 = arith.constant 0 : i32
    %c0_i32_1 = arith.constant 0 : i32
    return %c0_i32, %c0_i32_0 : i32, i32
  }
  func.func @transform_5(%arg0: i32) -> (i32, i32) {
    %c0_i32 = arith.constant 0 : i32
    %c0_i32_0 = arith.constant 0 : i32
    %c0_i32_1 = arith.constant 0 : i32
    return %c0_i32, %c0_i32_0 : i32, i32
  }
  func.func @transform_6(%arg0: i32) -> (i32, i32) {
    %c0_i32 = arith.constant 0 : i32
    %c0_i32_0 = arith.constant 0 : i32
    %c0_i32_1 = arith.constant 0 : i32
    return %c0_i32, %c0_i32_0 : i32, i32
  }
  func.func @transform_7(%arg0: i32) -> (i32, i32) {
    %c0_i32 = arith.constant 0 : i32
    %c0_i32_0 = arith.constant 0 : i32
    %c0_i32_1 = arith.constant 0 : i32
    return %c0_i32, %c0_i32_0 : i32, i32
  }
  func.func @transform_8(%arg0: i32) -> (i32, i32) {
    %c0_i32 = arith.constant 0 : i32
    %c0_i32_0 = arith.constant 0 : i32
    %c0_i32_1 = arith.constant 0 : i32
    return %c0_i32, %c0_i32_0 : i32, i32
  }
  func.func @transform_9(%arg0: i32) -> (i32, i32) {
    %c0_i32 = arith.constant 0 : i32
    %c0_i32_0 = arith.constant 0 : i32
    %c0_i32_1 = arith.constant 0 : i32
    return %c0_i32, %c0_i32_0 : i32, i32
  }
  func.func @transform_10(%arg0: i32) -> (i32, i32) {
    %c0_i32 = arith.constant 0 : i32
    %c0_i32_0 = arith.constant 0 : i32
    %c0_i32_1 = arith.constant 0 : i32
    return %c0_i32, %c0_i32_0 : i32, i32
  }
  func.func @transform_11(%arg0: i32) -> (i32, i32) {
    %c0_i32 = arith.constant 0 : i32
    %c0_i32_0 = arith.constant 0 : i32
    %c0_i32_1 = arith.constant 0 : i32
    return %c0_i32, %c0_i32_0 : i32, i32
  }
  func.func @transform_12(%arg0: i32) -> (i32, i32) {
    %c0_i32 = arith.constant 0 : i32
    %c0_i32_0 = arith.constant 0 : i32
    %c0_i32_1 = arith.constant 0 : i32
    return %c0_i32, %c0_i32_0 : i32, i32
  }
  func.func @transform_13(%arg0: i32) -> (i32, i32) {
    %c0_i32 = arith.constant 0 : i32
    %c0_i32_0 = arith.constant 0 : i32
    %c0_i32_1 = arith.constant 0 : i32
    return %c0_i32, %c0_i32_0 : i32, i32
  }
  func.func @transform_14(%arg0: i32) -> (i32, i32) {
    %c0_i32 = arith.constant 0 : i32
    %c0_i32_0 = arith.constant 0 : i32
    %c0_i32_1 = arith.constant 0 : i32
    return %c0_i32, %c0_i32_0 : i32, i32
  }
  func.func @transform_15(%arg0: i32) -> (i32, i32) {
    %c0_i32 = arith.constant 0 : i32
    %c0_i32_0 = arith.constant 0 : i32
    return %arg0, %c0_i32 : i32, i32
  }
}

</mosaic_0001>

<llo_original>
// kernel: tpu_custom_call.1
$region0: #{tpu_custom_call.1}
  #allocation0 [shape = 'u32[]', space=smem, size = 0x4, offset = 0x4, fixed_abs, tag = 'smem constant byte address 0x4 - core index']
  #allocation1 [shape = 'u32[72,128]{1,0:T(1,128)}', space=vmem, size = 0x9000, scoped, tag = 'internal scratch']
  %s0 = inlined_call_operand.hbm [shape: bf16[8,32], index: 0, kind: input, shape index: {}]
  %s1 = inlined_call_operand.hbm [shape: bf16[32,256], index: 1, kind: input, shape index: {}]
  %s2 = inlined_call_operand.hbm [shape: f32[1,256], index: 2, kind: input, shape index: {}]
  %s3 = inlined_call_operand.hbm [shape: bf16[256,512], index: 3, kind: input, shape index: {}]
  %s4 = inlined_call_operand.hbm [shape: f32[1,512], index: 4, kind: input, shape index: {}]
  %s5 = inlined_call_operand.hbm [shape: bf16[512,1024], index: 5, kind: input, shape index: {}]
  %s6 = inlined_call_operand.hbm [shape: f32[1,1024], index: 6, kind: input, shape index: {}]
  %s7 = inlined_call_operand.hbm [shape: bf16[1024,1024], index: 7, kind: input, shape index: {}]
  %s8 = inlined_call_operand.hbm [shape: f32[1,1024], index: 8, kind: input, shape index: {}]
  %s9 = inlined_call_operand.hbm [shape: bf16[1024,512], index: 9, kind: input, shape index: {}]
  %s10 = inlined_call_operand.hbm [shape: f32[1,512], index: 10, kind: input, shape index: {}]
  %s11 = inlined_call_operand.hbm [shape: bf16[512,256], index: 11, kind: input, shape index: {}]
  %s12 = inlined_call_operand.hbm [shape: f32[1,256], index: 12, kind: input, shape index: {}]
  %s13 = inlined_call_operand.hbm [shape: bf16[256,128], index: 13, kind: input, shape index: {}]
  %s14 = inlined_call_operand.hbm [shape: f32[1,128], index: 14, kind: input, shape index: {}]
  %s15 = inlined_call_operand.hbm [shape: f32[8,128], index: 15, kind: output, shape index: {}]
  %s16 = sld [smem:[#allocation0]]
  $region130: #{tpu_custom_call.1} parent=0
    _
  %s18 = ssub.s32 1, %s16
  %s19 = scalar_select 0, %s18, %s16
  $region1: #{tpu_custom_call.1} parent=0
    #allocation2 [shape = 'u8[2048]{0}', space=vmem, size = 0x800, scoped, tag = 'input window, operand 0, single buffered']
    #allocation3 [shape = 's32[1]{0}', space=sflag, size = 0x4, scoped, tag = 'scoped memory for tpu_custom_call.1']
    #allocation4 [shape = 's32[1]{0}', space=sflag, size = 0x4, scoped, tag = 'scoped memory for tpu_custom_call.1']
    #allocation5 [shape = 'u8[16384]{0}', space=vmem, size = 0x4000, scoped, tag = 'input window, operand 1, single buffered']
    #allocation6 [shape = 's32[1]{0}', space=sflag, size = 0x4, scoped, tag = 'scoped memory for tpu_custom_call.1']
    #allocation7 [shape = 'u8[1024]{0}', space=vmem, size = 0x400, scoped, tag = 'input window, operand 2, single buffered']
    #allocation8 [shape = 'u8[262144]{0}', space=vmem, size = 0x40000, scoped, tag = 'input window, operand 3, single buffered']
    #allocation9 [shape = 's32[1]{0}', space=sflag, size = 0x4, scoped, tag = 'scoped memory for tpu_custom_call.1']
    #allocation10 [shape = 'u8[2048]{0}', space=vmem, size = 0x800, scoped, tag = 'input window, operand 4, single buffered']
    #allocation11 [shape = 'u8[1048576]{0}', space=vmem, size = 0x100000, scoped, tag = 'input window, operand 5, single buffered']
    #allocation12 [shape = 's32[1]{0}', space=sflag, size = 0x4, scoped, tag = 'scoped memory for tpu_custom_call.1']
    #allocation13 [shape = 'u8[4096]{0}', space=vmem, size = 0x1000, scoped, tag = 'input window, operand 6, single buffered']
    #allocation14 [shape = 'u8[2097152]{0}', space=vmem, size = 0x200000, scoped, tag = 'input window, operand 7, single buffered']
    #allocation15 [shape = 's32[1]{0}', space=sflag, size = 0x4, scoped, tag = 'scoped memory for tpu_custom_call.1']
    #allocation16 [shape = 'u8[4096]{0}', space=vmem, size = 0x1000, scoped, tag = 'input window, operand 8, single buffered']
    #allocation17 [shape = 'u8[1048576]{0}', space=vmem, size = 0x100000, scoped, tag = 'input window, operand 9, single buffered']
    #allocation18 [shape = 's32[1]{0}', space=sflag, size = 0x4, scoped, tag = 'scoped memory for tpu_custom_call.1']
    #allocation19 [shape = 'u8[2048]{0}', space=vmem, size = 0x800, scoped, tag = 'input window, operand 10, single buffered']
    #allocation20 [shape = 'u8[262144]{0}', space=vmem, size = 0x40000, scoped, tag = 'input window, operand 11, single buffered']
    #allocation21 [shape = 's32[1]{0}', space=sflag, size = 0x4, scoped, tag = 'scoped memory for tpu_custom_call.1']
    #allocation22 [shape = 'u8[1024]{0}', space=vmem, size = 0x400, scoped, tag = 'input window, operand 12, single buffered']
    #allocation23 [shape = 'u8[65536]{0}', space=vmem, size = 0x10000, scoped, tag = 'input window, operand 13, single buffered']
    #allocation24 [shape = 's32[1]{0}', space=sflag, size = 0x4, scoped, tag = 'scoped memory for tpu_custom_call.1']
    #allocation25 [shape = 'u8[512]{0}', space=vmem, size = 0x400, scoped, tag = 'input window, operand 14, single buffered']
    #allocation26 [shape = 'u8[4096]{0}', space=vmem, size = 0x1000, scoped, tag = 'output window, operand 0, single buffered']
    %20 = vsyncpa [#allocation3], 0
    %21 = vsyncpa [#allocation6], 0
    %22 = vsyncpa [#allocation9], 0
    %23 = vsyncpa [#allocation12], 0
    %24 = vsyncpa [#allocation15], 0
    %25 = vsyncpa [#allocation18], 0
    %26 = vsyncpa [#allocation21], 0
    %27 = vsyncpa [#allocation24], 0
    %28 = vsyncpa [#allocation4], 0
    // Predicated region
    $region2: #{tpu_custom_call.1} parent=1 // pred_check
      _
    $region3: #{tpu_custom_call.1} parent=1 // pred_check_branch
      %30 = sbr.rel (0) target = $region5
    $region4: #{tpu_custom_call.1} parent=1 // pred_region
      %32 = vsyncadd [#allocation3], 0
      %s34 = sshll.u32 %s0, 4
      %s35 = int_to_ptr.hbm [resolvable:$true] %s34
      %s36 = sshll.u32 [#allocation2], 4
      %s37 = int_to_ptr.vmem [resolvable:$true] %s36
      %39 = dma.hbm_to_vmem [thread:$0]  %s35, 64, %s37, [#allocation3]
    $region5: #{tpu_custom_call.1} parent=1 // pred_fallthru
      _
    // Predicated region
    $region6: #{tpu_custom_call.1} parent=1 // pred_check
      _
    $region7: #{tpu_custom_call.1} parent=1 // pred_check_branch
      %41 = sbr.rel (0) target = $region9
    $region8: #{tpu_custom_call.1} parent=1 // pred_region
      %43 = vsyncadd [#allocation6], 0
      %s44 = sshll.u32 %s1, 4
      %s45 = int_to_ptr.hbm [resolvable:$true] %s44
      %s46 = sshll.u32 [#allocation5], 4
      %s47 = int_to_ptr.vmem [resolvable:$true] %s46
      %52 = dma.hbm_to_vmem [thread:$0]  %s45, 512, %s47, [#allocation6], 128, 128, 8
    $region9: #{tpu_custom_call.1} parent=1 // pred_fallthru
      _
    // Predicated region
    $region10: #{tpu_custom_call.1} parent=1 // pred_check
      _
    $region11: #{tpu_custom_call.1} parent=1 // pred_check_branch
      %54 = sbr.rel (0) target = $region13
    $region12: #{tpu_custom_call.1} parent=1 // pred_region
      %56 = vsyncadd [#allocation6], 0
      %s58 = sshll.u32 %s2, 4
      %s59 = int_to_ptr.hbm [resolvable:$true] %s58
      %s60 = sshll.u32 [#allocation7], 4
      %s61 = int_to_ptr.vmem [resolvable:$true] %s60
      %63 = dma.hbm_to_vmem [thread:$0]  %s59, 32, %s61, [#allocation6]
    $region13: #{tpu_custom_call.1} parent=1 // pred_fallthru
      _
    // Predicated region
    $region14: #{tpu_custom_call.1} parent=1 // pred_check
      _
    $region15: #{tpu_custom_call.1} parent=1 // pred_check_branch
      %65 = sbr.rel (0) target = $region17
    $region16: #{tpu_custom_call.1} parent=1 // pred_region
      %67 = vsyncadd [#allocation9], 0
      %s68 = sshll.u32 %s3, 4
      %s69 = int_to_ptr.hbm [resolvable:$true] %s68
      %s70 = sshll.u32 [#allocation8], 4
      %s71 = int_to_ptr.vmem [resolvable:$true] %s70
      %76 = dma.hbm_to_vmem [thread:$0]  %s69, 8192, %s71, [#allocation9], 256, 256, 16
    $region17: #{tpu_custom_call.1} parent=1 // pred_fallthru
      _
    // Predicated region
    $region18: #{tpu_custom_call.1} parent=1 // pred_check
      _
    $region19: #{tpu_custom_call.1} parent=1 // pred_check_branch
      %78 = sbr.rel (0) target = $region21
    $region20: #{tpu_custom_call.1} parent=1 // pred_region
      %80 = vsyncadd [#allocation9], 0
      %s82 = sshll.u32 %s4, 4
      %s83 = int_to_ptr.hbm [resolvable:$true] %s82
      %s84 = sshll.u32 [#allocation10], 4
      %s85 = int_to_ptr.vmem [resolvable:$true] %s84
      %87 = dma.hbm_to_vmem [thread:$0]  %s83, 64, %s85, [#allocation9]
    $region21: #{tpu_custom_call.1} parent=1 // pred_fallthru
      _
    // Predicated region
    $region22: #{tpu_custom_call.1} parent=1 // pred_check
      _
    $region23: #{tpu_custom_call.1} parent=1 // pred_check_branch
      %89 = sbr.rel (0) target = $region25
    $region24: #{tpu_custom_call.1} parent=1 // pred_region
      %91 = vsyncadd [#allocation12], 0
      %s92 = sshll.u32 %s5, 4
      %s93 = int_to_ptr.hbm [resolvable:$true] %s92
      %s94 = sshll.u32 [#allocation11], 4
      %s95 = int_to_ptr.vmem [resolvable:$true] %s94
      %100 = dma.hbm_to_vmem [thread:$0]  %s93, 32768, %s95, [#allocation12], 512, 512, 32
    $region25: #{tpu_custom_call.1} parent=1 // pred_fallthru
      _
    // Predicated region
    $region26: #{tpu_custom_call.1} parent=1 // pred_check
      _
    $region27: #{tpu_custom_call.1} parent=1 // pred_check_branch
      %102 = sbr.rel (0) target = $region29
    $region28: #{tpu_custom_call.1} parent=1 // pred_region
      %104 = vsyncadd [#allocation12], 0
      %s106 = sshll.u32 %s6, 4
      %s107 = int_to_ptr.hbm [resolvable:$true] %s106
      %s108 = sshll.u32 [#allocation13], 4
      %s109 = int_to_ptr.vmem [resolvable:$true] %s108
      %111 = dma.hbm_to_vmem [thread:$0]  %s107, 128, %s109, [#allocation12]
    $region29: #{tpu_custom_call.1} parent=1 // pred_fallthru
      _
    // Predicated region
    $region30: #{tpu_custom_call.1} parent=1 // pred_check
      _
    $region31: #{tpu_custom_call.1} parent=1 // pred_check_branch
      %113 = sbr.rel (0) target = $region33
    $region32: #{tpu_custom_call.1} parent=1 // pred_region
      %115 = vsyncadd [#allocation15], 0
      %s116 = sshll.u32 %s7, 4
      %s117 = int_to_ptr.hbm [resolvable:$true] %s116
      %s118 = sshll.u32 [#allocation14], 4
      %s119 = int_to_ptr.vmem [resolvable:$true] %s118
      %124 = dma.hbm_to_vmem [thread:$0]  %s117, 65536, %s119, [#allocation15], 512, 512, 32
    $region33: #{tpu_custom_call.1} parent=1 // pred_fallthru
      _
    // Predicated region
    $region34: #{tpu_custom_call.1} parent=1 // pred_check
      _
    $region35: #{tpu_custom_call.1} parent=1 // pred_check_branch
      %126 = sbr.rel (0) target = $region37
    $region36: #{tpu_custom_call.1} parent=1 // pred_region
      %128 = vsyncadd [#allocation15], 0
      %s130 = sshll.u32 %s8, 4
      %s131 = int_to_ptr.hbm [resolvable:$true] %s130
      %s132 = sshll.u32 [#allocation16], 4
      %s133 = int_to_ptr.vmem [resolvable:$true] %s132
      %135 = dma.hbm_to_vmem [thread:$0]  %s131, 128, %s133, [#allocation15]
    $region37: #{tpu_custom_call.1} parent=1 // pred_fallthru
      _
    // Predicated region
    $region38: #{tpu_custom_call.1} parent=1 // pred_check
      _
    $region39: #{tpu_custom_call.1} parent=1 // pred_check_branch
      %137 = sbr.rel (0) target = $region41
    $region40: #{tpu_custom_call.1} parent=1 // pred_region
      %139 = vsyncadd [#allocation18], 0
      %s140 = sshll.u32 %s9, 4
      %s141 = int_to_ptr.hbm [resolvable:$true] %s140
      %s142 = sshll.u32 [#allocation17], 4
      %s143 = int_to_ptr.vmem [resolvable:$true] %s142
      %148 = dma.hbm_to_vmem [thread:$0]  %s141, 32768, %s143, [#allocation18], 256, 256, 16
    $region41: #{tpu_custom_call.1} parent=1 // pred_fallthru
      _
    // Predicated region
    $region42: #{tpu_custom_call.1} parent=1 // pred_check
      _
    $region43: #{tpu_custom_call.1} parent=1 // pred_check_branch
      %150 = sbr.rel (0) target = $region45
    $region44: #{tpu_custom_call.1} parent=1 // pred_region
      %152 = vsyncadd [#allocation18], 0
      %s154 = sshll.u32 %s10, 4
      %s155 = int_to_ptr.hbm [resolvable:$true] %s154
      %s156 = sshll.u32 [#allocation19], 4
      %s157 = int_to_ptr.vmem [resolvable:$true] %s156
      %159 = dma.hbm_to_vmem [thread:$0]  %s155, 64, %s157, [#allocation18]
    $region45: #{tpu_custom_call.1} parent=1 // pred_fallthru
      _
    // Predicated region
    $region46: #{tpu_custom_call.1} parent=1 // pred_check
      _
    $region47: #{tpu_custom_call.1} parent=1 // pred_check_branch
      %161 = sbr.rel (0) target = $region49
    $region48: #{tpu_custom_call.1} parent=1 // pred_region
      %163 = vsyncadd [#allocation21], 0
      %s164 = sshll.u32 %s11, 4
      %s165 = int_to_ptr.hbm [resolvable:$true] %s164
      %s166 = sshll.u32 [#allocation20], 4
      %s167 = int_to_ptr.vmem [resolvable:$true] %s166
      %172 = dma.hbm_to_vmem [thread:$0]  %s165, 8192, %s167, [#allocation21], 128, 128, 8
    $region49: #{tpu_custom_call.1} parent=1 // pred_fallthru
      _
    // Predicated region
    $region50: #{tpu_custom_call.1} parent=1 // pred_check
      _
    $region51: #{tpu_custom_call.1} parent=1 // pred_check_branch
      %174 = sbr.rel (0) target = $region53
    $region52: #{tpu_custom_call.1} parent=1 // pred_region
      %176 = vsyncadd [#allocation21], 0
      %s178 = sshll.u32 %s12, 4
      %s179 = int_to_ptr.hbm [resolvable:$true] %s178
      %s180 = sshll.u32 [#allocation22], 4
      %s181 = int_to_ptr.vmem [resolvable:$true] %s180
      %183 = dma.hbm_to_vmem [thread:$0]  %s179, 32, %s181, [#allocation21]
    $region53: #{tpu_custom_call.1} parent=1 // pred_fallthru
      _
    // Predicated region
    $region54: #{tpu_custom_call.1} parent=1 // pred_check
      _
    $region55: #{tpu_custom_call.1} parent=1 // pred_check_branch
      %185 = sbr.rel (0) target = $region57
    $region56: #{tpu_custom_call.1} parent=1 // pred_region
      %187 = vsyncadd [#allocation24], 0
      %s188 = sshll.u32 %s13, 4
      %s189 = int_to_ptr.hbm [resolvable:$true] %s188
      %s190 = sshll.u32 [#allocation23], 4
      %s191 = int_to_ptr.vmem [resolvable:$true] %s190
      %196 = dma.hbm_to_vmem [thread:$0]  %s189, 2048, %s191, [#allocation24], 64, 64, 4
    $region57: #{tpu_custom_call.1} parent=1 // pred_fallthru
      _
    // Predicated region
    $region58: #{tpu_custom_call.1} parent=1 // pred_check
      _
    $region59: #{tpu_custom_call.1} parent=1 // pred_check_branch
      %198 = sbr.rel (0) target = $region61
    $region60: #{tpu_custom_call.1} parent=1 // pred_region
      %200 = vsyncadd [#allocation24], 0
      %s202 = sshll.u32 %s14, 4
      %s203 = int_to_ptr.hbm [resolvable:$true] %s202
      %s204 = sshll.u32 [#allocation25], 4
      %s205 = int_to_ptr.vmem [resolvable:$true] %s204
      %207 = dma.hbm_to_vmem [thread:$0]  %s203, 16, %s205, [#allocation24]
    $region61: #{tpu_custom_call.1} parent=1 // pred_fallthru
      _
    // Predicated region
    $region62: #{tpu_custom_call.1} parent=1 // pred_check
      _
    $region63: #{tpu_custom_call.1} parent=1 // pred_check_branch
      %209 = sbr.rel (0) target = $region65
    $region64: #{tpu_custom_call.1} parent=1 // pred_region
      %211 = dma.done [#allocation3], 64
    $region65: #{tpu_custom_call.1} parent=1 // pred_fallthru
      _
    // Predicated region
    $region66: #{tpu_custom_call.1} parent=1 // pred_check
      _
    $region67: #{tpu_custom_call.1} parent=1 // pred_check_branch
      %213 = sbr.rel (0) target = $region69
    $region68: #{tpu_custom_call.1} parent=1 // pred_region
      %215 = dma.done [#allocation6], 512
    $region69: #{tpu_custom_call.1} parent=1 // pred_fallthru
      _
    // Predicated region
    $region70: #{tpu_custom_call.1} parent=1 // pred_check
      _
    $region71: #{tpu_custom_call.1} parent=1 // pred_check_branch
      %217 = sbr.rel (0) target = $region73
    $region72: #{tpu_custom_call.1} parent=1 // pred_region
      %219 = dma.done [#allocation6], 32
    $region73: #{tpu_custom_call.1} parent=1 // pred_fallthru
      _
    // Predicated region
    $region74: #{tpu_custom_call.1} parent=1 // pred_check
      _
    $region75: #{tpu_custom_call.1} parent=1 // pred_check_branch
      %221 = sbr.rel (0) target = $region77
    $region76: #{tpu_custom_call.1} parent=1 // pred_region
      %223 = dma.done [#allocation9], 8192
    $region77: #{tpu_custom_call.1} parent=1 // pred_fallthru
      _
    // Predicated region
    $region78: #{tpu_custom_call.1} parent=1 // pred_check
      _
    $region79: #{tpu_custom_call.1} parent=1 // pred_check_branch
      %225 = sbr.rel (0) target = $region81
    $region80: #{tpu_custom_call.1} parent=1 // pred_region
      %227 = dma.done [#allocation9], 64
    $region81: #{tpu_custom_call.1} parent=1 // pred_fallthru
      _
    // Predicated region
    $region82: #{tpu_custom_call.1} parent=1 // pred_check
      _
    $region83: #{tpu_custom_call.1} parent=1 // pred_check_branch
      %229 = sbr.rel (0) target = $region85
    $region84: #{tpu_custom_call.1} parent=1 // pred_region
      %231 = dma.done [#allocation12], 32768
    $region85: #{tpu_custom_call.1} parent=1 // pred_fallthru
      _
    // Predicated region
    $region86: #{tpu_custom_call.1} parent=1 // pred_check
      _
    $region87: #{tpu_custom_call.1} parent=1 // pred_check_branch
      %233 = sbr.rel (0) target = $region89
    $region88: #{tpu_custom_call.1} parent=1 // pred_region
      %235 = dma.done [#allocation12], 128
    $region89: #{tpu_custom_call.1} parent=1 // pred_fallthru
      _
    // Predicated region
    $region90: #{tpu_custom_call.1} parent=1 // pred_check
      _
    $region91: #{tpu_custom_call.1} parent=1 // pred_check_branch
      %237 = sbr.rel (0) target = $region93
    $region92: #{tpu_custom_call.1} parent=1 // pred_region
      %239 = dma.done [#allocation15], 65536
    $region93: #{tpu_custom_call.1} parent=1 // pred_fallthru
      _
    // Predicated region
    $region94: #{tpu_custom_call.1} parent=1 // pred_check
      _
    $region95: #{tpu_custom_call.1} parent=1 // pred_check_branch
      %241 = sbr.rel (0) target = $region97
    $region96: #{tpu_custom_call.1} parent=1 // pred_region
      %243 = dma.done [#allocation15], 128
    $region97: #{tpu_custom_call.1} parent=1 // pred_fallthru
      _
    // Predicated region
    $region98: #{tpu_custom_call.1} parent=1 // pred_check
      _
    $region99: #{tpu_custom_call.1} parent=1 // pred_check_branch
      %245 = sbr.rel (0) target = $region101
    $region100: #{tpu_custom_call.1} parent=1 // pred_region
      %247 = dma.done [#allocation18], 32768
    $region101: #{tpu_custom_call.1} parent=1 // pred_fallthru
      _
    // Predicated region
    $region102: #{tpu_custom_call.1} parent=1 // pred_check
      _
    $region103: #{tpu_custom_call.1} parent=1 // pred_check_branch
      %249 = sbr.rel (0) target = $region105
    $region104: #{tpu_custom_call.1} parent=1 // pred_region
      %251 = dma.done [#allocation18], 64
    $region105: #{tpu_custom_call.1} parent=1 // pred_fallthru
      _
    // Predicated region
    $region106: #{tpu_custom_call.1} parent=1 // pred_check
      _
    $region107: #{tpu_custom_call.1} parent=1 // pred_check_branch
      %253 = sbr.rel (0) target = $region109
    $region108: #{tpu_custom_call.1} parent=1 // pred_region
      %255 = dma.done [#allocation21], 8192
    $region109: #{tpu_custom_call.1} parent=1 // pred_fallthru
      _
    // Predicated region
    $region110: #{tpu_custom_call.1} parent=1 // pred_check
      _
    $region111: #{tpu_custom_call.1} parent=1 // pred_check_branch
      %257 = sbr.rel (0) target = $region113
    $region112: #{tpu_custom_call.1} parent=1 // pred_region
      %259 = dma.done [#allocation21], 32
    $region113: #{tpu_custom_call.1} parent=1 // pred_fallthru
      _
    // Predicated region
    $region114: #{tpu_custom_call.1} parent=1 // pred_check
      _
    $region115: #{tpu_custom_call.1} parent=1 // pred_check_branch
      %261 = sbr.rel (0) target = $region117
    $region116: #{tpu_custom_call.1} parent=1 // pred_region
      %263 = dma.done [#allocation24], 2048
    $region117: #{tpu_custom_call.1} parent=1 // pred_fallthru
      _
    // Predicated region
    $region118: #{tpu_custom_call.1} parent=1 // pred_check
      _
    $region119: #{tpu_custom_call.1} parent=1 // pred_check_branch
      %265 = sbr.rel (0) target = $region121
    $region120: #{tpu_custom_call.1} parent=1 // pred_region
      %267 = dma.done [#allocation24], 16
    $region121: #{tpu_custom_call.1} parent=1 // pred_fallthru
      _
    %v269 = vld [vmem:[#allocation2] sm:$0xf]
    %v270 = vld [vmem:[#allocation5] sm:$0xff]
    %v271 = vld [vmem:[#allocation5 + $0x8] sm:$0xff]
    %v272 = vld [vmem:[#allocation5 + $0x10] sm:$0xff]
    %v273 = vld [vmem:[#allocation5 + $0x18] sm:$0xff]
    %v274 = vld [vmem:[#allocation7] sm:$0x3]
    %v276 = vperm.slane %v274, 0
    %v277 = vperm.slane %v274, 1
    %v284 = vunpack.c.l.b16 %v270
    %v285 = vunpack.c.h.b16 %v270
    %v286 = vunpack.c.l.b16 %v271
    %v287 = vunpack.c.h.b16 %v271
    %v288 = vunpack.c.l.b16 %v272
    %v289 = vunpack.c.h.b16 %v272
    %v290 = vunpack.c.l.b16 %v273
    %v291 = vunpack.c.h.b16 %v273
    %v292 = vpack.c.b16 %v286, %v284
    %v293 = vpack.c.b16 %v287, %v285
    %v294 = vpack.c.b16 %v290, %v288
    %v295 = vpack.c.b16 %v291, %v289
    %vm300 = vcmask 261120
    %v302 = vsel %vm300, %v269, 0
    %304 = vmatpush.bf16.msra.mxu0 0
    %305 = vmatpush.bf16.msra.mxu0 0
    %306 = vmatpush.bf16.msra.mxu0 0
    %307 = vmatpush.bf16.msra.mxu0 0
    %308 = vmatpush.bf16.msra.mxu0 0
    %309 = vmatpush.bf16.msra.mxu0 0
    %310 = vmatpush.bf16.msra.mxu0 %v294
    %311 = vmatpush.bf16.msra.mxu0 %v292
    %312 = vmatmul.bf16.gmra.mxu0 %v302
    %v313 = vpop.f32.mrf.mxu0
    %v314 = vadd.f32 %v276, %v313
    %v315 = vpop.f32.mrf.mxu0
    %316 = vdwg.mxu0
    %317 = vmatpush.bf16.msra.mxu0 0
    %318 = vmatpush.bf16.msra.mxu0 0
    %319 = vmatpush.bf16.msra.mxu0 0
    %320 = vmatpush.bf16.msra.mxu0 0
    %321 = vmatpush.bf16.msra.mxu0 0
    %322 = vmatpush.bf16.msra.mxu0 0
    %323 = vmatpush.bf16.msra.mxu0 %v295
    %324 = vmatpush.bf16.msra.mxu0 %v293
    %325 = vmatmul.bf16.gmra.mxu0 %v302
    %v326 = vpop.f32.mrf.mxu0
    %v327 = vadd.f32 %v277, %v326
    %v328 = vpop.f32.mrf.mxu0
    %329 = vdwg.mxu0
    %v330 = vmax.f32 %v314, 0.0
    %v331 = vmax.f32 %v327, 0.0
    %v332 = vld [vmem:[#allocation8] sm:$0xff]
    %v333 = vld [vmem:[#allocation8 + $0x8] sm:$0xff]
    %v334 = vld [vmem:[#allocation8 + $0x10] sm:$0xff]
    %v335 = vld [vmem:[#allocation8 + $0x18] sm:$0xff]
    %v336 = vld [vmem:[#allocation8 + $0x20] sm:$0xff]
    %v337 = vld [vmem:[#allocation8 + $0x28] sm:$0xff]
    %v338 = vld [vmem:[#allocation8 + $0x30] sm:$0xff]
    %v339 = vld [vmem:[#allocation8 + $0x38] sm:$0xff]
    %v340 = vld [vmem:[#allocation8 + $0x40] sm:$0xff]
    %v341 = vld [vmem:[#allocation8 + $0x48] sm:$0xff]
    %v342 = vld [vmem:[#allocation8 + $0x50] sm:$0xff]
    %v343 = vld [vmem:[#allocation8 + $0x58] sm:$0xff]
    %v344 = vld [vmem:[#allocation8 + $0x60] sm:$0xff]
    %v345 = vld [vmem:[#allocation8 + $0x68] sm:$0xff]
    %v346 = vld [vmem:[#allocation8 + $0x70] sm:$0xff]
    %v347 = vld [vmem:[#allocation8 + $0x78] sm:$0xff]
    %v348 = vld [vmem:[#allocation8 + $0x80] sm:$0xff]
    %v349 = vld [vmem:[#allocation8 + $0x88] sm:$0xff]
    %v350 = vld [vmem:[#allocation8 + $0x90] sm:$0xff]
    %v351 = vld [vmem:[#allocation8 + $0x98] sm:$0xff]
    %v352 = vld [vmem:[#allocation8 + $0xa0] sm:$0xff]
    %v353 = vld [vmem:[#allocation8 + $0xa8] sm:$0xff]
    %v354 = vld [vmem:[#allocation8 + $0xb0] sm:$0xff]
    %v355 = vld [vmem:[#allocation8 + $0xb8] sm:$0xff]
    %v356 = vld [vmem:[#allocation8 + $0xc0] sm:$0xff]
    %v357 = vld [vmem:[#allocation8 + $0xc8] sm:$0xff]
    %v358 = vld [vmem:[#allocation8 + $0xd0] sm:$0xff]
    %v359 = vld [vmem:[#allocation8 + $0xd8] sm:$0xff]
    %v360 = vld [vmem:[#allocation8 + $0xe0] sm:$0xff]
    %v361 = vld [vmem:[#allocation8 + $0xe8] sm:$0xff]
    %v362 = vld [vmem:[#allocation8 + $0xf0] sm:$0xff]
    %v363 = vld [vmem:[#allocation8 + $0xf8] sm:$0xff]
    %v364 = vld [vmem:[#allocation8 + $0x100] sm:$0xff]
    %v365 = vld [vmem:[#allocation8 + $0x108] sm:$0xff]
    %v366 = vld [vmem:[#allocation8 + $0x110] sm:$0xff]
    %v367 = vld [vmem:[#allocation8 + $0x118] sm:$0xff]
    %v368 = vld [vmem:[#allocation8 + $0x120] sm:$0xff]
    %v369 = vld [vmem:[#allocation8 + $0x128] sm:$0xff]
    %v370 = vld [vmem:[#allocation8 + $0x130] sm:$0xff]
    %v371 = vld [vmem:[#allocation8 + $0x138] sm:$0xff]
    %v372 = vld [vmem:[#allocation8 + $0x140] sm:$0xff]
    %v373 = vld [vmem:[#allocation8 + $0x148] sm:$0xff]
    %v374 = vld [vmem:[#allocation8 + $0x150] sm:$0xff]
    %v375 = vld [vmem:[#allocation8 + $0x158] sm:$0xff]
    %v376 = vld [vmem:[#allocation8 + $0x160] sm:$0xff]
    %v377 = vld [vmem:[#allocation8 + $0x168] sm:$0xff]
    %v378 = vld [vmem:[#allocation8 + $0x170] sm:$0xff]
    %v379 = vld [vmem:[#allocation8 + $0x178] sm:$0xff]
    %v380 = vld [vmem:[#allocation8 + $0x180] sm:$0xff]
    %v381 = vld [vmem:[#allocation8 + $0x188] sm:$0xff]
    %v382 = vld [vmem:[#allocation8 + $0x190] sm:$0xff]
    %v383 = vld [vmem:[#allocation8 + $0x198] sm:$0xff]
    %v384 = vld [vmem:[#allocation8 + $0x1a0] sm:$0xff]
    %v385 = vld [vmem:[#allocation8 + $0x1a8] sm:$0xff]
    %v386 = vld [vmem:[#allocation8 + $0x1b0] sm:$0xff]
    %v387 = vld [vmem:[#allocation8 + $0x1b8] sm:$0xff]
    %v388 = vld [vmem:[#allocation8 + $0x1c0] sm:$0xff]
    %v389 = vld [vmem:[#allocation8 + $0x1c8] sm:$0xff]
    %v390 = vld [vmem:[#allocation8 + $0x1d0] sm:$0xff]
    %v391 = vld [vmem:[#allocation8 + $0x1d8] sm:$0xff]
    %v392 = vld [vmem:[#allocation8 + $0x1e0] sm:$0xff]
    %v393 = vld [vmem:[#allocation8 + $0x1e8] sm:$0xff]
    %v394 = vld [vmem:[#allocation8 + $0x1f0] sm:$0xff]
    %v395 = vld [vmem:[#allocation8 + $0x1f8] sm:$0xff]
    %v396 = vpack.c.bf16 %v330, %v330
    %v397 = vpack.c.bf16 %v331, %v331
    %v398 = vld [vmem:[#allocation10] sm:$0xf]
    %v400 = vperm.slane %v398, 0
    %v401 = vperm.slane %v398, 1
    %v402 = vperm.slane %v398, 2
    %v403 = vperm.slane %v398, 3
    %v472 = vunpack.c.l.b16 %v332
    %v473 = vunpack.c.h.b16 %v332
    %v474 = vunpack.c.l.b16 %v333
    %v475 = vunpack.c.h.b16 %v333
    %v476 = vunpack.c.l.b16 %v334
    %v477 = vunpack.c.h.b16 %v334
    %v478 = vunpack.c.l.b16 %v335
    %v479 = vunpack.c.h.b16 %v335
    %v480 = vunpack.c.l.b16 %v336
    %v481 = vunpack.c.h.b16 %v336
    %v482 = vunpack.c.l.b16 %v337
    %v483 = vunpack.c.h.b16 %v337
    %v484 = vunpack.c.l.b16 %v338
    %v485 = vunpack.c.h.b16 %v338
    %v486 = vunpack.c.l.b16 %v339
    %v487 = vunpack.c.h.b16 %v339
    %v488 = vunpack.c.l.b16 %v340
    %v489 = vunpack.c.h.b16 %v340
    %v490 = vunpack.c.l.b16 %v341
    %v491 = vunpack.c.h.b16 %v341
    %v492 = vunpack.c.l.b16 %v342
    %v493 = vunpack.c.h.b16 %v342
    %v494 = vunpack.c.l.b16 %v343
    %v495 = vunpack.c.h.b16 %v343
    %v496 = vunpack.c.l.b16 %v344
    %v497 = vunpack.c.h.b16 %v344
    %v498 = vunpack.c.l.b16 %v345
    %v499 = vunpack.c.h.b16 %v345
    %v500 = vunpack.c.l.b16 %v346
    %v501 = vunpack.c.h.b16 %v346
    %v502 = vunpack.c.l.b16 %v347
    %v503 = vunpack.c.h.b16 %v347
    %v504 = vunpack.c.l.b16 %v348
    %v505 = vunpack.c.h.b16 %v348
    %v506 = vunpack.c.l.b16 %v349
    %v507 = vunpack.c.h.b16 %v349
    %v508 = vunpack.c.l.b16 %v350
    %v509 = vunpack.c.h.b16 %v350
    %v510 = vunpack.c.l.b16 %v351
    %v511 = vunpack.c.h.b16 %v351
    %v512 = vunpack.c.l.b16 %v352
    %v513 = vunpack.c.h.b16 %v352
    %v514 = vunpack.c.l.b16 %v353
    %v515 = vunpack.c.h.b16 %v353
    %v516 = vunpack.c.l.b16 %v354
    %v517 = vunpack.c.h.b16 %v354
    %v518 = vunpack.c.l.b16 %v355
    %v519 = vunpack.c.h.b16 %v355
    %v520 = vunpack.c.l.b16 %v356
    %v521 = vunpack.c.h.b16 %v356
    %v522 = vunpack.c.l.b16 %v357
    %v523 = vunpack.c.h.b16 %v357
    %v524 = vunpack.c.l.b16 %v358
    %v525 = vunpack.c.h.b16 %v358
    %v526 = vunpack.c.l.b16 %v359
    %v527 = vunpack.c.h.b16 %v359
    %v528 = vunpack.c.l.b16 %v360
    %v529 = vunpack.c.h.b16 %v360
    %v530 = vunpack.c.l.b16 %v361
    %v531 = vunpack.c.h.b16 %v361
    %v532 = vunpack.c.l.b16 %v362
    %v533 = vunpack.c.h.b16 %v362
    %v534 = vunpack.c.l.b16 %v363
    %v535 = vunpack.c.h.b16 %v363
    %v536 = vunpack.c.l.b16 %v364
    %v537 = vunpack.c.h.b16 %v364
    %v538 = vunpack.c.l.b16 %v365
    %v539 = vunpack.c.h.b16 %v365
    %v540 = vunpack.c.l.b16 %v366
    %v541 = vunpack.c.h.b16 %v366
    %v542 = vunpack.c.l.b16 %v367
    %v543 = vunpack.c.h.b16 %v367
    %v544 = vunpack.c.l.b16 %v368
    %v545 = vunpack.c.h.b16 %v368
    %v546 = vunpack.c.l.b16 %v369
    %v547 = vunpack.c.h.b16 %v369
    %v548 = vunpack.c.l.b16 %v370
    %v549 = vunpack.c.h.b16 %v370
    %v550 = vunpack.c.l.b16 %v371
    %v551 = vunpack.c.h.b16 %v371
    %v552 = vunpack.c.l.b16 %v372
    %v553 = vunpack.c.h.b16 %v372
    %v554 = vunpack.c.l.b16 %v373
    %v555 = vunpack.c.h.b16 %v373
    %v556 = vunpack.c.l.b16 %v374
    %v557 = vunpack.c.h.b16 %v374
    %v558 = vunpack.c.l.b16 %v375
    %v559 = vunpack.c.h.b16 %v375
    %v560 = vunpack.c.l.b16 %v376
    %v561 = vunpack.c.h.b16 %v376
    %v562 = vunpack.c.l.b16 %v377
    %v563 = vunpack.c.h.b16 %v377
    %v564 = vunpack.c.l.b16 %v378
    %v565 = vunpack.c.h.b16 %v378
    %v566 = vunpack.c.l.b16 %v379
    %v567 = vunpack.c.h.b16 %v379
    %v568 = vunpack.c.l.b16 %v380
    %v569 = vunpack.c.h.b16 %v380
    %v570 = vunpack.c.l.b16 %v381
    %v571 = vunpack.c.h.b16 %v381
    %v572 = vunpack.c.l.b16 %v382
    %v573 = vunpack.c.h.b16 %v382
    %v574 = vunpack.c.l.b16 %v383
    %v575 = vunpack.c.h.b16 %v383
    %v576 = vunpack.c.l.b16 %v384
    %v577 = vunpack.c.h.b16 %v384
    %v578 = vunpack.c.l.b16 %v385
    %v579 = vunpack.c.h.b16 %v385
    %v580 = vunpack.c.l.b16 %v386
    %v581 = vunpack.c.h.b16 %v386
    %v582 = vunpack.c.l.b16 %v387
    %v583 = vunpack.c.h.b16 %v387
    %v584 = vunpack.c.l.b16 %v388
    %v585 = vunpack.c.h.b16 %v388
    %v586 = vunpack.c.l.b16 %v389
    %v587 = vunpack.c.h.b16 %v389
    %v588 = vunpack.c.l.b16 %v390
    %v589 = vunpack.c.h.b16 %v390
    %v590 = vunpack.c.l.b16 %v391
    %v591 = vunpack.c.h.b16 %v391
    %v592 = vunpack.c.l.b16 %v392
    %v593 = vunpack.c.h.b16 %v392
    %v594 = vunpack.c.l.b16 %v393
    %v595 = vunpack.c.h.b16 %v393
    %v596 = vunpack.c.l.b16 %v394
    %v597 = vunpack.c.h.b16 %v394
    %v598 = vunpack.c.l.b16 %v395
    %v599 = vunpack.c.h.b16 %v395
    %v600 = vpack.c.b16 %v476, %v472
    %v601 = vpack.c.b16 %v477, %v473
    %v602 = vpack.c.b16 %v478, %v474
    %v603 = vpack.c.b16 %v479, %v475
    %v604 = vpack.c.b16 %v484, %v480
    %v605 = vpack.c.b16 %v485, %v481
    %v606 = vpack.c.b16 %v486, %v482
    %v607 = vpack.c.b16 %v487, %v483
    %v608 = vpack.c.b16 %v492, %v488
    %v609 = vpack.c.b16 %v493, %v489
    %v610 = vpack.c.b16 %v494, %v490
    %v611 = vpack.c.b16 %v495, %v491
    %v612 = vpack.c.b16 %v500, %v496
    %v613 = vpack.c.b16 %v501, %v497
    %v614 = vpack.c.b16 %v502, %v498
    %v615 = vpack.c.b16 %v503, %v499
    %v616 = vpack.c.b16 %v508, %v504
    %v617 = vpack.c.b16 %v509, %v505
    %v618 = vpack.c.b16 %v510, %v506
    %v619 = vpack.c.b16 %v511, %v507
    %v620 = vpack.c.b16 %v516, %v512
    %v621 = vpack.c.b16 %v517, %v513
    %v622 = vpack.c.b16 %v518, %v514
    %v623 = vpack.c.b16 %v519, %v515
    %v624 = vpack.c.b16 %v524, %v520
    %v625 = vpack.c.b16 %v525, %v521
    %v626 = vpack.c.b16 %v526, %v522
    %v627 = vpack.c.b16 %v527, %v523
    %v628 = vpack.c.b16 %v532, %v528
    %v629 = vpack.c.b16 %v533, %v529
    %v630 = vpack.c.b16 %v534, %v530
    %v631 = vpack.c.b16 %v535, %v531
    %v632 = vpack.c.b16 %v540, %v536
    %v633 = vpack.c.b16 %v541, %v537
    %v634 = vpack.c.b16 %v542, %v538
    %v635 = vpack.c.b16 %v543, %v539
    %v636 = vpack.c.b16 %v548, %v544
    %v637 = vpack.c.b16 %v549, %v545
    %v638 = vpack.c.b16 %v550, %v546
    %v639 = vpack.c.b16 %v551, %v547
    %v640 = vpack.c.b16 %v556, %v552
    %v641 = vpack.c.b16 %v557, %v553
    %v642 = vpack.c.b16 %v558, %v554
    %v643 = vpack.c.b16 %v559, %v555
    %v644 = vpack.c.b16 %v564, %v560
    %v645 = vpack.c.b16 %v565, %v561
    %v646 = vpack.c.b16 %v566, %v562
    %v647 = vpack.c.b16 %v567, %v563
    %v648 = vpack.c.b16 %v572, %v568
    %v649 = vpack.c.b16 %v573, %v569
    %v650 = vpack.c.b16 %v574, %v570
    %v651 = vpack.c.b16 %v575, %v571
    %v652 = vpack.c.b16 %v580, %v576
    %v653 = vpack.c.b16 %v581, %v577
    %v654 = vpack.c.b16 %v582, %v578
    %v655 = vpack.c.b16 %v583, %v579
    %v656 = vpack.c.b16 %v588, %v584
    %v657 = vpack.c.b16 %v589, %v585
    %v658 = vpack.c.b16 %v590, %v586
    %v659 = vpack.c.b16 %v591, %v587
    %v660 = vpack.c.b16 %v596, %v592
    %v661 = vpack.c.b16 %v597, %v593
    %v662 = vpack.c.b16 %v598, %v594
    %v663 = vpack.c.b16 %v599, %v595
    %728 = vmatpush.bf16.msra.mxu0 %v628
    %729 = vmatpush.bf16.msra.mxu0 %v624
    %730 = vmatpush.bf16.msra.mxu0 %v620
    %731 = vmatpush.bf16.msra.mxu0 %v616
    %732 = vmatpush.bf16.msra.mxu0 %v612
    %733 = vmatpush.bf16.msra.mxu0 %v608
    %734 = vmatpush.bf16.msra.mxu0 %v604
    %735 = vmatpush.bf16.msra.mxu0 %v600
    %736 = vmatmul.bf16.gmra.mxu0 %v396
    %v737 = vpop.f32.mrf.mxu0
    %v738 = vadd.f32 %v400, %v737
    %v739 = vpop.f32.mrf.mxu0
    %740 = vdwg.mxu0
    %741 = vmatpush.bf16.msra.mxu0 %v660
    %742 = vmatpush.bf16.msra.mxu0 %v656
    %743 = vmatpush.bf16.msra.mxu0 %v652
    %744 = vmatpush.bf16.msra.mxu0 %v648
    %745 = vmatpush.bf16.msra.mxu0 %v644
    %746 = vmatpush.bf16.msra.mxu0 %v640
    %747 = vmatpush.bf16.msra.mxu0 %v636
    %748 = vmatpush.bf16.msra.mxu0 %v632
    %749 = vmatmul.bf16.gmra.mxu0 %v397
    %v750 = vpop.f32.mrf.mxu0
    %v751 = vadd.f32 %v738, %v750
    %v752 = vpop.f32.mrf.mxu0
    %753 = vdwg.mxu0
    %754 = vmatpush.bf16.msra.mxu0 %v629
    %755 = vmatpush.bf16.msra.mxu0 %v625
    %756 = vmatpush.bf16.msra.mxu0 %v621
    %757 = vmatpush.bf16.msra.mxu0 %v617
    %758 = vmatpush.bf16.msra.mxu0 %v613
    %759 = vmatpush.bf16.msra.mxu0 %v609
    %760 = vmatpush.bf16.msra.mxu0 %v605
    %761 = vmatpush.bf16.msra.mxu0 %v601
    %762 = vmatmul.bf16.gmra.mxu0 %v396
    %v763 = vpop.f32.mrf.mxu0
    %v764 = vadd.f32 %v401, %v763
    %v765 = vpop.f32.mrf.mxu0
    %766 = vdwg.mxu0
    %767 = vmatpush.bf16.msra.mxu0 %v661
    %768 = vmatpush.bf16.msra.mxu0 %v657
    %769 = vmatpush.bf16.msra.mxu0 %v653
    %770 = vmatpush.bf16.msra.mxu0 %v649
    %771 = vmatpush.bf16.msra.mxu0 %v645
    %772 = vmatpush.bf16.msra.mxu0 %v641
    %773 = vmatpush.bf16.msra.mxu0 %v637
    %774 = vmatpush.bf16.msra.mxu0 %v633
    %775 = vmatmul.bf16.gmra.mxu0 %v397
    %v776 = vpop.f32.mrf.mxu0
    %v777 = vadd.f32 %v764, %v776
    %v778 = vpop.f32.mrf.mxu0
    %779 = vdwg.mxu0
    %780 = vmatpush.bf16.msra.mxu0 %v630
    %781 = vmatpush.bf16.msra.mxu0 %v626
    %782 = vmatpush.bf16.msra.mxu0 %v622
    %783 = vmatpush.bf16.msra.mxu0 %v618
    %784 = vmatpush.bf16.msra.mxu0 %v614
    %785 = vmatpush.bf16.msra.mxu0 %v610
    %786 = vmatpush.bf16.msra.mxu0 %v606
    %787 = vmatpush.bf16.msra.mxu0 %v602
    %788 = vmatmul.bf16.gmra.mxu0 %v396
    %v789 = vpop.f32.mrf.mxu0
    %v790 = vadd.f32 %v402, %v789
    %v791 = vpop.f32.mrf.mxu0
    %792 = vdwg.mxu0
    %793 = vmatpush.bf16.msra.mxu0 %v662
    %794 = vmatpush.bf16.msra.mxu0 %v658
    %795 = vmatpush.bf16.msra.mxu0 %v654
    %796 = vmatpush.bf16.msra.mxu0 %v650
    %797 = vmatpush.bf16.msra.mxu0 %v646
    %798 = vmatpush.bf16.msra.mxu0 %v642
    %799 = vmatpush.bf16.msra.mxu0 %v638
    %800 = vmatpush.bf16.msra.mxu0 %v634
    %801 = vmatmul.bf16.gmra.mxu0 %v397
    %v802 = vpop.f32.mrf.mxu0
    %v803 = vadd.f32 %v790, %v802
    %v804 = vpop.f32.mrf.mxu0
    %805 = vdwg.mxu0
    %806 = vmatpush.bf16.msra.mxu0 %v631
    %807 = vmatpush.bf16.msra.mxu0 %v627
    %808 = vmatpush.bf16.msra.mxu0 %v623
    %809 = vmatpush.bf16.msra.mxu0 %v619
    %810 = vmatpush.bf16.msra.mxu0 %v615
    %811 = vmatpush.bf16.msra.mxu0 %v611
    %812 = vmatpush.bf16.msra.mxu0 %v607
    %813 = vmatpush.bf16.msra.mxu0 %v603
    %814 = vmatmul.bf16.gmra.mxu0 %v396
    %v815 = vpop.f32.mrf.mxu0
    %v816 = vadd.f32 %v403, %v815
    %v817 = vpop.f32.mrf.mxu0
    %818 = vdwg.mxu0
    %819 = vmatpush.bf16.msra.mxu0 %v663
    %820 = vmatpush.bf16.msra.mxu0 %v659
    %821 = vmatpush.bf16.msra.mxu0 %v655
    %822 = vmatpush.bf16.msra.mxu0 %v651
    %823 = vmatpush.bf16.msra.mxu0 %v647
    %824 = vmatpush.bf16.msra.mxu0 %v643
    %825 = vmatpush.bf16.msra.mxu0 %v639
    %826 = vmatpush.bf16.msra.mxu0 %v635
    %827 = vmatmul.bf16.gmra.mxu0 %v397
    %v828 = vpop.f32.mrf.mxu0
    %v829 = vadd.f32 %v816, %v828
    %v830 = vpop.f32.mrf.mxu0
    %831 = vdwg.mxu0
    %v832 = vmax.f32 %v751, 0.0
    %v833 = vmax.f32 %v777, 0.0
    %v834 = vmax.f32 %v803, 0.0
    %v835 = vmax.f32 %v829, 0.0
    %v836 = vld [vmem:[#allocation11] sm:$0xff]
    %v837 = vld [vmem:[#allocation11 + $0x8] sm:$0xff]
    %v838 = vld [vmem:[#allocation11 + $0x10] sm:$0xff]
    %v839 = vld [vmem:[#allocation11 + $0x18] sm:$0xff]
    %v840 = vld [vmem:[#allocation11 + $0x20] sm:$0xff]
    %v841 = vld [vmem:[#allocation11 + $0x28] sm:$0xff]
    %v842 = vld [vmem:[#allocation11 + $0x30] sm:$0xff]
    %v843 = vld [vmem:[#allocation11 + $0x38] sm:$0xff]
    %v844 = vld [vmem:[#allocation11 + $0x40] sm:$0xff]
    %v845 = vld [vmem:[#allocation11 + $0x48] sm:$0xff]
    %v846 = vld [vmem:[#allocation11 + $0x50] sm:$0xff]
    %v847 = vld [vmem:[#allocation11 + $0x58] sm:$0xff]
    %v848 = vld [vmem:[#allocation11 + $0x60] sm:$0xff]
    %v849 = vld [vmem:[#allocation11 + $0x68] sm:$0xff]
    %v850 = vld [vmem:[#allocation11 + $0x70] sm:$0xff]
    %v851 = vld [vmem:[#allocation11 + $0x78] sm:$0xff]
    %v852 = vld [vmem:[#allocation11 + $0x80] sm:$0xff]
    %v853 = vld [vmem:[#allocation11 + $0x88] sm:$0xff]
    %v854 = vld [vmem:[#allocation11 + $0x90] sm:$0xff]
    %v855 = vld [vmem:[#allocation11 + $0x98] sm:$0xff]
    %v856 = vld [vmem:[#allocation11 + $0xa0] sm:$0xff]
    %v857 = vld [vmem:[#allocation11 + $0xa8] sm:$0xff]
    %v858 = vld [vmem:[#allocation11 + $0xb0] sm:$0xff]
    %v859 = vld [vmem:[#allocation11 + $0xb8] sm:$0xff]
    %v860 = vld [vmem:[#allocation11 + $0xc0] sm:$0xff]
    %v861 = vld [vmem:[#allocation11 + $0xc8] sm:$0xff]
    %v862 = vld [vmem:[#allocation11 + $0xd0] sm:$0xff]
    %v863 = vld [vmem:[#allocation11 + $0xd8] sm:$0xff]
    %v864 = vld [vmem:[#allocation11 + $0xe0] sm:$0xff]
    %v865 = vld [vmem:[#allocation11 + $0xe8] sm:$0xff]
    %v866 = vld [vmem:[#allocation11 + $0xf0] sm:$0xff]
    %v867 = vld [vmem:[#allocation11 + $0xf8] sm:$0xff]
    %v868 = vld [vmem:[#allocation11 + $0x100] sm:$0xff]
    %v869 = vld [vmem:[#allocation11 + $0x108] sm:$0xff]
    %v870 = vld [vmem:[#allocation11 + $0x110] sm:$0xff]
    %v871 = vld [vmem:[#allocation11 + $0x118] sm:$0xff]
    %v872 = vld [vmem:[#allocation11 + $0x120] sm:$0xff]
    %v873 = vld [vmem:[#allocation11 + $0x128] sm:$0xff]
    %v874 = vld [vmem:[#allocation11 + $0x130] sm:$0xff]
    %v875 = vld [vmem:[#allocation11 + $0x138] sm:$0xff]
    %v876 = vld [vmem:[#allocation11 + $0x140] sm:$0xff]
    %v877 = vld [vmem:[#allocation11 + $0x148] sm:$0xff]
    %v878 = vld [vmem:[#allocation11 + $0x150] sm:$0xff]
    %v879 = vld [vmem:[#allocation11 + $0x158] sm:$0xff]
    %v880 = vld [vmem:[#allocation11 + $0x160] sm:$0xff]
    %v881 = vld [vmem:[#allocation11 + $0x168] sm:$0xff]
    %v882 = vld [vmem:[#allocation11 + $0x170] sm:$0xff]
    %v883 = vld [vmem:[#allocation11 + $0x178] sm:$0xff]
    %v884 = vld [vmem:[#allocation11 + $0x180] sm:$0xff]
    %v885 = vld [vmem:[#allocation11 + $0x188] sm:$0xff]
    %v886 = vld [vmem:[#allocation11 + $0x190] sm:$0xff]
    %v887 = vld [vmem:[#allocation11 + $0x198] sm:$0xff]
    %v888 = vld [vmem:[#allocation11 + $0x1a0] sm:$0xff]
    %v889 = vld [vmem:[#allocation11 + $0x1a8] sm:$0xff]
    %v890 = vld [vmem:[#allocation11 + $0x1b0] sm:$0xff]
    %v891 = vld [vmem:[#allocation11 + $0x1b8] sm:$0xff]
    %v892 = vld [vmem:[#allocation11 + $0x1c0] sm:$0xff]
    %v893 = vld [vmem:[#allocation11 + $0x1c8] sm:$0xff]
    %v894 = vld [vmem:[#allocation11 + $0x1d0] sm:$0xff]
    %v895 = vld [vmem:[#allocation11 + $0x1d8] sm:$0xff]
    %v896 = vld [vmem:[#allocation11 + $0x1e0] sm:$0xff]
    %v897 = vld [vmem:[#allocation11 + $0x1e8] sm:$0xff]
    %v898 = vld [vmem:[#allocation11 + $0x1f0] sm:$0xff]
    %v899 = vld [vmem:[#allocation11 + $0x1f8] sm:$0xff]
    %v900 = vld [vmem:[#allocation11 + $0x200] sm:$0xff]
    %v901 = vld [vmem:[#allocation11 + $0x208] sm:$0xff]
    %v902 = vld [vmem:[#allocation11 + $0x210] sm:$0xff]
    %v903 = vld [vmem:[#allocation11 + $0x218] sm:$0xff]
    %v904 = vld [vmem:[#allocation11 + $0x220] sm:$0xff]
    %v905 = vld [vmem:[#allocation11 + $0x228] sm:$0xff]
    %v906 = vld [vmem:[#allocation11 + $0x230] sm:$0xff]
    %v907 = vld [vmem:[#allocation11 + $0x238] sm:$0xff]
    %v908 = vld [vmem:[#allocation11 + $0x240] sm:$0xff]
    %v909 = vld [vmem:[#allocation11 + $0x248] sm:$0xff]
    %v910 = vld [vmem:[#allocation11 + $0x250] sm:$0xff]
    %v911 = vld [vmem:[#allocation11 + $0x258] sm:$0xff]
    %v912 = vld [vmem:[#allocation11 + $0x260] sm:$0xff]
    %v913 = vld [vmem:[#allocation11 + $0x268] sm:$0xff]
    %v914 = vld [vmem:[#allocation11 + $0x270] sm:$0xff]
    %v915 = vld [vmem:[#allocation11 + $0x278] sm:$0xff]
    %v916 = vld [vmem:[#allocation11 + $0x280] sm:$0xff]
    %v917 = vld [vmem:[#allocation11 + $0x288] sm:$0xff]
    %v918 = vld [vmem:[#allocation11 + $0x290] sm:$0xff]
    %v919 = vld [vmem:[#allocation11 + $0x298] sm:$0xff]
    %v920 = vld [vmem:[#allocation11 + $0x2a0] sm:$0xff]
    %v921 = vld [vmem:[#allocation11 + $0x2a8] sm:$0xff]
    %v922 = vld [vmem:[#allocation11 + $0x2b0] sm:$0xff]
    %v923 = vld [vmem:[#allocation11 + $0x2b8] sm:$0xff]
    %v924 = vld [vmem:[#allocation11 + $0x2c0] sm:$0xff]
    %v925 = vld [vmem:[#allocation11 + $0x2c8] sm:$0xff]
    %v926 = vld [vmem:[#allocation11 + $0x2d0] sm:$0xff]
    %v927 = vld [vmem:[#allocation11 + $0x2d8] sm:$0xff]
    %v928 = vld [vmem:[#allocation11 + $0x2e0] sm:$0xff]
    %v929 = vld [vmem:[#allocation11 + $0x2e8] sm:$0xff]
    %v930 = vld [vmem:[#allocation11 + $0x2f0] sm:$0xff]
    %v931 = vld [vmem:[#allocation11 + $0x2f8] sm:$0xff]
    %v932 = vld [vmem:[#allocation11 + $0x300] sm:$0xff]
    %v933 = vld [vmem:[#allocation11 + $0x308] sm:$0xff]
    %v934 = vld [vmem:[#allocation11 + $0x310] sm:$0xff]
    %v935 = vld [vmem:[#allocation11 + $0x318] sm:$0xff]
    %v936 = vld [vmem:[#allocation11 + $0x320] sm:$0xff]
    %v937 = vld [vmem:[#allocation11 + $0x328] sm:$0xff]
    %v938 = vld [vmem:[#allocation11 + $0x330] sm:$0xff]
    %v939 = vld [vmem:[#allocation11 + $0x338] sm:$0xff]
    %v940 = vld [vmem:[#allocation11 + $0x340] sm:$0xff]
    %v941 = vld [vmem:[#allocation11 + $0x348] sm:$0xff]
    %v942 = vld [vmem:[#allocation11 + $0x350] sm:$0xff]
    %v943 = vld [vmem:[#allocation11 + $0x358] sm:$0xff]
    %v944 = vld [vmem:[#allocation11 + $0x360] sm:$0xff]
    %v945 = vld [vmem:[#allocation11 + $0x368] sm:$0xff]
    %v946 = vld [vmem:[#allocation11 + $0x370] sm:$0xff]
    %v947 = vld [vmem:[#allocation11 + $0x378] sm:$0xff]
    %v948 = vld [vmem:[#allocation11 + $0x380] sm:$0xff]
    %v949 = vld [vmem:[#allocation11 + $0x388] sm:$0xff]
    %v950 = vld [vmem:[#allocation11 + $0x390] sm:$0xff]
    %v951 = vld [vmem:[#allocation11 + $0x398] sm:$0xff]
    %v952 = vld [vmem:[#allocation11 + $0x3a0] sm:$0xff]
    %v953 = vld [vmem:[#allocation11 + $0x3a8] sm:$0xff]
    %v954 = vld [vmem:[#allocation11 + $0x3b0] sm:$0xff]
    %v955 = vld [vmem:[#allocation11 + $0x3b8] sm:$0xff]
    %v956 = vld [vmem:[#allocation11 + $0x3c0] sm:$0xff]
    %v957 = vld [vmem:[#allocation11 + $0x3c8] sm:$0xff]
    %v958 = vld [vmem:[#allocation11 + $0x3d0] sm:$0xff]
    %v959 = vld [vmem:[#allocation11 + $0x3d8] sm:$0xff]
    %v960 = vld [vmem:[#allocation11 + $0x3e0] sm:$0xff]
    %v961 = vld [vmem:[#allocation11 + $0x3e8] sm:$0xff]
    %v962 = vld [vmem:[#allocation11 + $0x3f0] sm:$0xff]
    %v963 = vld [vmem:[#allocation11 + $0x3f8] sm:$0xff]
    %v964 = vld [vmem:[#allocation11 + $0x400] sm:$0xff]
    %v965 = vld [vmem:[#allocation11 + $0x408] sm:$0xff]
    %v966 = vld [vmem:[#allocation11 + $0x410] sm:$0xff]
    %v967 = vld [vmem:[#allocation11 + $0x418] sm:$0xff]
    %v968 = vld [vmem:[#allocation11 + $0x420] sm:$0xff]
    %v969 = vld [vmem:[#allocation11 + $0x428] sm:$0xff]
    %v970 = vld [vmem:[#allocation11 + $0x430] sm:$0xff]
    %v971 = vld [vmem:[#allocation11 + $0x438] sm:$0xff]
    %v972 = vld [vmem:[#allocation11 + $0x440] sm:$0xff]
    %v973 = vld [vmem:[#allocation11 + $0x448] sm:$0xff]
    %v974 = vld [vmem:[#allocation11 + $0x450] sm:$0xff]
    %v975 = vld [vmem:[#allocation11 + $0x458] sm:$0xff]
    %v976 = vld [vmem:[#allocation11 + $0x460] sm:$0xff]
    %v977 = vld [vmem:[#allocation11 + $0x468] sm:$0xff]
    %v978 = vld [vmem:[#allocation11 + $0x470] sm:$0xff]
    %v979 = vld [vmem:[#allocation11 + $0x478] sm:$0xff]
    %v980 = vld [vmem:[#allocation11 + $0x480] sm:$0xff]
    %v981 = vld [vmem:[#allocation11 + $0x488] sm:$0xff]
    %v982 = vld [vmem:[#allocation11 + $0x490] sm:$0xff]
    %v983 = vld [vmem:[#allocation11 + $0x498] sm:$0xff]
    %v984 = vld [vmem:[#allocation11 + $0x4a0] sm:$0xff]
    %v985 = vld [vmem:[#allocation11 + $0x4a8] sm:$0xff]
    %v986 = vld [vmem:[#allocation11 + $0x4b0] sm:$0xff]
    %v987 = vld [vmem:[#allocation11 + $0x4b8] sm:$0xff]
    %v988 = vld [vmem:[#allocation11 + $0x4c0] sm:$0xff]
    %v989 = vld [vmem:[#allocation11 + $0x4c8] sm:$0xff]
    %v990 = vld [vmem:[#allocation11 + $0x4d0] sm:$0xff]
    %v991 = vld [vmem:[#allocation11 + $0x4d8] sm:$0xff]
    %v992 = vld [vmem:[#allocation11 + $0x4e0] sm:$0xff]
    %v993 = vld [vmem:[#allocation11 + $0x4e8] sm:$0xff]
    %v994 = vld [vmem:[#allocation11 + $0x4f0] sm:$0xff]
    %v995 = vld [vmem:[#allocation11 + $0x4f8] sm:$0xff]
    %v996 = vld [vmem:[#allocation11 + $0x500] sm:$0xff]
    %v997 = vld [vmem:[#allocation11 + $0x508] sm:$0xff]
    %v998 = vld [vmem:[#allocation11 + $0x510] sm:$0xff]
    %v999 = vld [vmem:[#allocation11 + $0x518] sm:$0xff]
    %v1000 = vld [vmem:[#allocation11 + $0x520] sm:$0xff]
    %v1001 = vld [vmem:[#allocation11 + $0x528] sm:$0xff]
    %v1002 = vld [vmem:[#allocation11 + $0x530] sm:$0xff]
    %v1003 = vld [vmem:[#allocation11 + $0x538] sm:$0xff]
    %v1004 = vld [vmem:[#allocation11 + $0x540] sm:$0xff]
    %v1005 = vld [vmem:[#allocation11 + $0x548] sm:$0xff]
    %v1006 = vld [vmem:[#allocation11 + $0x550] sm:$0xff]
    %v1007 = vld [vmem:[#allocation11 + $0x558] sm:$0xff]
    %v1008 = vld [vmem:[#allocation11 + $0x560] sm:$0xff]
    %v1009 = vld [vmem:[#allocation11 + $0x568] sm:$0xff]
    %v1010 = vld [vmem:[#allocation11 + $0x570] sm:$0xff]
    %v1011 = vld [vmem:[#allocation11 + $0x578] sm:$0xff]
    %v1012 = vld [vmem:[#allocation11 + $0x580] sm:$0xff]
    %v1013 = vld [vmem:[#allocation11 + $0x588] sm:$0xff]
    %v1014 = vld [vmem:[#allocation11 + $0x590] sm:$0xff]
    %v1015 = vld [vmem:[#allocation11 + $0x598] sm:$0xff]
    %v1016 = vld [vmem:[#allocation11 + $0x5a0] sm:$0xff]
    %v1017 = vld [vmem:[#allocation11 + $0x5a8] sm:$0xff]
    %v1018 = vld [vmem:[#allocation11 + $0x5b0] sm:$0xff]
    %v1019 = vld [vmem:[#allocation11 + $0x5b8] sm:$0xff]
    %v1020 = vld [vmem:[#allocation11 + $0x5c0] sm:$0xff]
    %v1021 = vld [vmem:[#allocation11 + $0x5c8] sm:$0xff]
    %v1022 = vld [vmem:[#allocation11 + $0x5d0] sm:$0xff]
    %v1023 = vld [vmem:[#allocation11 + $0x5d8] sm:$0xff]
    %v1024 = vld [vmem:[#allocation11 + $0x5e0] sm:$0xff]
    %v1025 = vld [vmem:[#allocation11 + $0x5e8] sm:$0xff]
    %v1026 = vld [vmem:[#allocation11 + $0x5f0] sm:$0xff]
    %v1027 = vld [vmem:[#allocation11 + $0x5f8] sm:$0xff]
    %v1028 = vld [vmem:[#allocation11 + $0x600] sm:$0xff]
    %v1029 = vld [vmem:[#allocation11 + $0x608] sm:$0xff]
    %v1030 = vld [vmem:[#allocation11 + $0x610] sm:$0xff]
    %v1031 = vld [vmem:[#allocation11 + $0x618] sm:$0xff]
    %v1032 = vld [vmem:[#allocation11 + $0x620] sm:$0xff]
    %v1033 = vld [vmem:[#allocation11 + $0x628] sm:$0xff]
    %v1034 = vld [vmem:[#allocation11 + $0x630] sm:$0xff]
    %v1035 = vld [vmem:[#allocation11 + $0x638] sm:$0xff]
    %v1036 = vld [vmem:[#allocation11 + $0x640] sm:$0xff]
    %v1037 = vld [vmem:[#allocation11 + $0x648] sm:$0xff]
    %v1038 = vld [vmem:[#allocation11 + $0x650] sm:$0xff]
    %v1039 = vld [vmem:[#allocation11 + $0x658] sm:$0xff]
    %v1040 = vld [vmem:[#allocation11 + $0x660] sm:$0xff]
    %v1041 = vld [vmem:[#allocation11 + $0x668] sm:$0xff]
    %v1042 = vld [vmem:[#allocation11 + $0x670] sm:$0xff]
    %v1043 = vld [vmem:[#allocation11 + $0x678] sm:$0xff]
    %v1044 = vld [vmem:[#allocation11 + $0x680] sm:$0xff]
    %v1045 = vld [vmem:[#allocation11 + $0x688] sm:$0xff]
    %v1046 = vld [vmem:[#allocation11 + $0x690] sm:$0xff]
    %v1047 = vld [vmem:[#allocation11 + $0x698] sm:$0xff]
    %v1048 = vld [vmem:[#allocation11 + $0x6a0] sm:$0xff]
    %v1049 = vld [vmem:[#allocation11 + $0x6a8] sm:$0xff]
    %v1050 = vld [vmem:[#allocation11 + $0x6b0] sm:$0xff]
    %v1051 = vld [vmem:[#allocation11 + $0x6b8] sm:$0xff]
    %v1052 = vld [vmem:[#allocation11 + $0x6c0] sm:$0xff]
    %v1053 = vld [vmem:[#allocation11 + $0x6c8] sm:$0xff]
    %v1054 = vld [vmem:[#allocation11 + $0x6d0] sm:$0xff]
    %v1055 = vld [vmem:[#allocation11 + $0x6d8] sm:$0xff]
    %v1056 = vld [vmem:[#allocation11 + $0x6e0] sm:$0xff]
    %v1057 = vld [vmem:[#allocation11 + $0x6e8] sm:$0xff]
    %v1058 = vld [vmem:[#allocation11 + $0x6f0] sm:$0xff]
    %v1059 = vld [vmem:[#allocation11 + $0x6f8] sm:$0xff]
    %v1060 = vld [vmem:[#allocation11 + $0x700] sm:$0xff]
    %v1061 = vld [vmem:[#allocation11 + $0x708] sm:$0xff]
    %v1062 = vld [vmem:[#allocation11 + $0x710] sm:$0xff]
    %v1063 = vld [vmem:[#allocation11 + $0x718] sm:$0xff]
    %v1064 = vld [vmem:[#allocation11 + $0x720] sm:$0xff]
    %v1065 = vld [vmem:[#allocation11 + $0x728] sm:$0xff]
    %v1066 = vld [vmem:[#allocation11 + $0x730] sm:$0xff]
    %v1067 = vld [vmem:[#allocation11 + $0x738] sm:$0xff]
    %v1068 = vld [vmem:[#allocation11 + $0x740] sm:$0xff]
    %v1069 = vld [vmem:[#allocation11 + $0x748] sm:$0xff]
    %v1070 = vld [vmem:[#allocation11 + $0x750] sm:$0xff]
    %v1071 = vld [vmem:[#allocation11 + $0x758] sm:$0xff]
    %v1072 = vld [vmem:[#allocation11 + $0x760] sm:$0xff]
    %v1073 = vld [vmem:[#allocation11 + $0x768] sm:$0xff]
    %v1074 = vld [vmem:[#allocation11 + $0x770] sm:$0xff]
    %v1075 = vld [vmem:[#allocation11 + $0x778] sm:$0xff]
    %v1076 = vld [vmem:[#allocation11 + $0x780] sm:$0xff]
    %v1077 = vld [vmem:[#allocation11 + $0x788] sm:$0xff]
    %v1078 = vld [vmem:[#allocation11 + $0x790] sm:$0xff]
    %v1079 = vld [vmem:[#allocation11 + $0x798] sm:$0xff]
    %v1080 = vld [vmem:[#allocation11 + $0x7a0] sm:$0xff]
    %v1081 = vld [vmem:[#allocation11 + $0x7a8] sm:$0xff]
    %v1082 = vld [vmem:[#allocation11 + $0x7b0] sm:$0xff]
    %v1083 = vld [vmem:[#allocation11 + $0x7b8] sm:$0xff]
    %v1084 = vld [vmem:[#allocation11 + $0x7c0] sm:$0xff]
    %v1085 = vld [vmem:[#allocation11 + $0x7c8] sm:$0xff]
    %v1086 = vld [vmem:[#allocation11 + $0x7d0] sm:$0xff]
    %v1087 = vld [vmem:[#allocation11 + $0x7d8] sm:$0xff]
    %v1088 = vld [vmem:[#allocation11 + $0x7e0] sm:$0xff]
    %v1089 = vld [vmem:[#allocation11 + $0x7e8] sm:$0xff]
    %v1090 = vld [vmem:[#allocation11 + $0x7f0] sm:$0xff]
    %v1091 = vld [vmem:[#allocation11 + $0x7f8] sm:$0xff]
    %v1092 = vpack.c.bf16 %v832, %v832
    %v1093 = vpack.c.bf16 %v833, %v833
    %v1094 = vpack.c.bf16 %v834, %v834
    %v1095 = vpack.c.bf16 %v835, %v835
    %v1096 = vld [vmem:[#allocation13] sm:$0xff]
    %v1098 = vperm.slane %v1096, 0
    %v1099 = vperm.slane %v1096, 1
    %v1100 = vperm.slane %v1096, 2
    %v1101 = vperm.slane %v1096, 3
    %v1102 = vperm.slane %v1096, 4
    %v1103 = vperm.slane %v1096, 5
    %v1104 = vperm.slane %v1096, 6
    %v1105 = vperm.slane %v1096, 7
    %v1370 = vunpack.c.l.b16 %v836
    %v1371 = vunpack.c.h.b16 %v836
    %v1372 = vunpack.c.l.b16 %v837
    %v1373 = vunpack.c.h.b16 %v837
    %v1374 = vunpack.c.l.b16 %v838
    %v1375 = vunpack.c.h.b16 %v838
    %v1376 = vunpack.c.l.b16 %v839
    %v1377 = vunpack.c.h.b16 %v839
    %v1378 = vunpack.c.l.b16 %v840
    %v1379 = vunpack.c.h.b16 %v840
    %v1380 = vunpack.c.l.b16 %v841
    %v1381 = vunpack.c.h.b16 %v841
    %v1382 = vunpack.c.l.b16 %v842
    %v1383 = vunpack.c.h.b16 %v842
    %v1384 = vunpack.c.l.b16 %v843
    %v1385 = vunpack.c.h.b16 %v843
    %v1386 = vunpack.c.l.b16 %v844
    %v1387 = vunpack.c.h.b16 %v844
    %v1388 = vunpack.c.l.b16 %v845
    %v1389 = vunpack.c.h.b16 %v845
    %v1390 = vunpack.c.l.b16 %v846
    %v1391 = vunpack.c.h.b16 %v846
    %v1392 = vunpack.c.l.b16 %v847
    %v1393 = vunpack.c.h.b16 %v847
    %v1394 = vunpack.c.l.b16 %v848
    %v1395 = vunpack.c.h.b16 %v848
    %v1396 = vunpack.c.l.b16 %v849
    %v1397 = vunpack.c.h.b16 %v849
    %v1398 = vunpack.c.l.b16 %v850
    %v1399 = vunpack.c.h.b16 %v850
    %v1400 = vunpack.c.l.b16 %v851
    %v1401 = vunpack.c.h.b16 %v851
    %v1402 = vunpack.c.l.b16 %v852
    %v1403 = vunpack.c.h.b16 %v852
    %v1404 = vunpack.c.l.b16 %v853
    %v1405 = vunpack.c.h.b16 %v853
    %v1406 = vunpack.c.l.b16 %v854
    %v1407 = vunpack.c.h.b16 %v854
    %v1408 = vunpack.c.l.b16 %v855
    %v1409 = vunpack.c.h.b16 %v855
    %v1410 = vunpack.c.l.b16 %v856
    %v1411 = vunpack.c.h.b16 %v856
    %v1412 = vunpack.c.l.b16 %v857
    %v1413 = vunpack.c.h.b16 %v857
    %v1414 = vunpack.c.l.b16 %v858
    %v1415 = vunpack.c.h.b16 %v858
    %v1416 = vunpack.c.l.b16 %v859
    %v1417 = vunpack.c.h.b16 %v859
    %v1418 = vunpack.c.l.b16 %v860
    %v1419 = vunpack.c.h.b16 %v860
    %v1420 = vunpack.c.l.b16 %v861
    %v1421 = vunpack.c.h.b16 %v861
    %v1422 = vunpack.c.l.b16 %v862
    %v1423 = vunpack.c.h.b16 %v862
    %v1424 = vunpack.c.l.b16 %v863
    %v1425 = vunpack.c.h.b16 %v863
    %v1426 = vunpack.c.l.b16 %v864
    %v1427 = vunpack.c.h.b16 %v864
    %v1428 = vunpack.c.l.b16 %v865
    %v1429 = vunpack.c.h.b16 %v865
    %v1430 = vunpack.c.l.b16 %v866
    %v1431 = vunpack.c.h.b16 %v866
    %v1432 = vunpack.c.l.b16 %v867
    %v1433 = vunpack.c.h.b16 %v867
    %v1434 = vunpack.c.l.b16 %v868
    %v1435 = vunpack.c.h.b16 %v868
    %v1436 = vunpack.c.l.b16 %v869
    %v1437 = vunpack.c.h.b16 %v869
    %v1438 = vunpack.c.l.b16 %v870
    %v1439 = vunpack.c.h.b16 %v870
    %v1440 = vunpack.c.l.b16 %v871
    %v1441 = vunpack.c.h.b16 %v871
    %v1442 = vunpack.c.l.b16 %v872
    %v1443 = vunpack.c.h.b16 %v872
    %v1444 = vunpack.c.l.b16 %v873
    %v1445 = vunpack.c.h.b16 %v873
    %v1446 = vunpack.c.l.b16 %v874
    %v1447 = vunpack.c.h.b16 %v874
    %v1448 = vunpack.c.l.b16 %v875
    %v1449 = vunpack.c.h.b16 %v875
    %v1450 = vunpack.c.l.b16 %v876
    %v1451 = vunpack.c.h.b16 %v876
    %v1452 = vunpack.c.l.b16 %v877
    %v1453 = vunpack.c.h.b16 %v877
    %v1454 = vunpack.c.l.b16 %v878
    %v1455 = vunpack.c.h.b16 %v878
    %v1456 = vunpack.c.l.b16 %v879
    %v1457 = vunpack.c.h.b16 %v879
    %v1458 = vunpack.c.l.b16 %v880
    %v1459 = vunpack.c.h.b16 %v880
    %v1460 = vunpack.c.l.b16 %v881
    %v1461 = vunpack.c.h.b16 %v881
    %v1462 = vunpack.c.l.b16 %v882
    %v1463 = vunpack.c.h.b16 %v882
    %v1464 = vunpack.c.l.b16 %v883
    %v1465 = vunpack.c.h.b16 %v883
    %v1466 = vunpack.c.l.b16 %v884
    %v1467 = vunpack.c.h.b16 %v884
    %v1468 = vunpack.c.l.b16 %v885
    %v1469 = vunpack.c.h.b16 %v885
    %v1470 = vunpack.c.l.b16 %v886
    %v1471 = vunpack.c.h.b16 %v886
    %v1472 = vunpack.c.l.b16 %v887
    %v1473 = vunpack.c.h.b16 %v887
    %v1474 = vunpack.c.l.b16 %v888
    %v1475 = vunpack.c.h.b16 %v888
    %v1476 = vunpack.c.l.b16 %v889
    %v1477 = vunpack.c.h.b16 %v889
    %v1478 = vunpack.c.l.b16 %v890
    %v1479 = vunpack.c.h.b16 %v890
    %v1480 = vunpack.c.l.b16 %v891
    %v1481 = vunpack.c.h.b16 %v891
    %v1482 = vunpack.c.l.b16 %v892
    %v1483 = vunpack.c.h.b16 %v892
    %v1484 = vunpack.c.l.b16 %v893
    %v1485 = vunpack.c.h.b16 %v893
    %v1486 = vunpack.c.l.b16 %v894
    %v1487 = vunpack.c.h.b16 %v894
    %v1488 = vunpack.c.l.b16 %v895
    %v1489 = vunpack.c.h.b16 %v895
    %v1490 = vunpack.c.l.b16 %v896
    %v1491 = vunpack.c.h.b16 %v896
    %v1492 = vunpack.c.l.b16 %v897
    %v1493 = vunpack.c.h.b16 %v897
    %v1494 = vunpack.c.l.b16 %v898
    %v1495 = vunpack.c.h.b16 %v898
    %v1496 = vunpack.c.l.b16 %v899
    %v1497 = vunpack.c.h.b16 %v899
    %v1498 = vunpack.c.l.b16 %v900
    %v1499 = vunpack.c.h.b16 %v900
    %v1500 = vunpack.c.l.b16 %v901
    %v1501 = vunpack.c.h.b16 %v901
    %v1502 = vunpack.c.l.b16 %v902
    %v1503 = vunpack.c.h.b16 %v902
    %v1504 = vunpack.c.l.b16 %v903
    %v1505 = vunpack.c.h.b16 %v903
    %v1506 = vunpack.c.l.b16 %v904
    %v1507 = vunpack.c.h.b16 %v904
    %v1508 = vunpack.c.l.b16 %v905
    %v1509 = vunpack.c.h.b16 %v905
    %v1510 = vunpack.c.l.b16 %v906
    %v1511 = vunpack.c.h.b16 %v906
    %v1512 = vunpack.c.l.b16 %v907
    %v1513 = vunpack.c.h.b16 %v907
    %v1514 = vunpack.c.l.b16 %v908
    %v1515 = vunpack.c.h.b16 %v908
    %v1516 = vunpack.c.l.b16 %v909
    %v1517 = vunpack.c.h.b16 %v909
    %v1518 = vunpack.c.l.b16 %v910
    %v1519 = vunpack.c.h.b16 %v910
    %v1520 = vunpack.c.l.b16 %v911
    %v1521 = vunpack.c.h.b16 %v911
    %v1522 = vunpack.c.l.b16 %v912
    %v1523 = vunpack.c.h.b16 %v912
    %v1524 = vunpack.c.l.b16 %v913
    %v1525 = vunpack.c.h.b16 %v913
    %v1526 = vunpack.c.l.b16 %v914
    %v1527 = vunpack.c.h.b16 %v914
    %v1528 = vunpack.c.l.b16 %v915
    %v1529 = vunpack.c.h.b16 %v915
    %v1530 = vunpack.c.l.b16 %v916
    %v1531 = vunpack.c.h.b16 %v916
    %v1532 = vunpack.c.l.b16 %v917
    %v1533 = vunpack.c.h.b16 %v917
    %v1534 = vunpack.c.l.b16 %v918
    %v1535 = vunpack.c.h.b16 %v918
    %v1536 = vunpack.c.l.b16 %v919
    %v1537 = vunpack.c.h.b16 %v919
    %v1538 = vunpack.c.l.b16 %v920
    %v1539 = vunpack.c.h.b16 %v920
    %v1540 = vunpack.c.l.b16 %v921
    %v1541 = vunpack.c.h.b16 %v921
    %v1542 = vunpack.c.l.b16 %v922
    %v1543 = vunpack.c.h.b16 %v922
    %v1544 = vunpack.c.l.b16 %v923
    %v1545 = vunpack.c.h.b16 %v923
    %v1546 = vunpack.c.l.b16 %v924
    %v1547 = vunpack.c.h.b16 %v924
    %v1548 = vunpack.c.l.b16 %v925
    %v1549 = vunpack.c.h.b16 %v925
    %v1550 = vunpack.c.l.b16 %v926
    %v1551 = vunpack.c.h.b16 %v926
    %v1552 = vunpack.c.l.b16 %v927
    %v1553 = vunpack.c.h.b16 %v927
    %v1554 = vunpack.c.l.b16 %v928
    %v1555 = vunpack.c.h.b16 %v928
    %v1556 = vunpack.c.l.b16 %v929
    %v1557 = vunpack.c.h.b16 %v929
    %v1558 = vunpack.c.l.b16 %v930
    %v1559 = vunpack.c.h.b16 %v930
    %v1560 = vunpack.c.l.b16 %v931
    %v1561 = vunpack.c.h.b16 %v931
    %v1562 = vunpack.c.l.b16 %v932
    %v1563 = vunpack.c.h.b16 %v932
    %v1564 = vunpack.c.l.b16 %v933
    %v1565 = vunpack.c.h.b16 %v933
    %v1566 = vunpack.c.l.b16 %v934
    %v1567 = vunpack.c.h.b16 %v934
    %v1568 = vunpack.c.l.b16 %v935
    %v1569 = vunpack.c.h.b16 %v935
    %v1570 = vunpack.c.l.b16 %v936
    %v1571 = vunpack.c.h.b16 %v936
    %v1572 = vunpack.c.l.b16 %v937
    %v1573 = vunpack.c.h.b16 %v937
    %v1574 = vunpack.c.l.b16 %v938
    %v1575 = vunpack.c.h.b16 %v938
    %v1576 = vunpack.c.l.b16 %v939
    %v1577 = vunpack.c.h.b16 %v939
    %v1578 = vunpack.c.l.b16 %v940
    %v1579 = vunpack.c.h.b16 %v940
    %v1580 = vunpack.c.l.b16 %v941
    %v1581 = vunpack.c.h.b16 %v941
    %v1582 = vunpack.c.l.b16 %v942
    %v1583 = vunpack.c.h.b16 %v942
    %v1584 = vunpack.c.l.b16 %v943
    %v1585 = vunpack.c.h.b16 %v943
    %v1586 = vunpack.c.l.b16 %v944
    %v1587 = vunpack.c.h.b16 %v944
    %v1588 = vunpack.c.l.b16 %v945
    %v1589 = vunpack.c.h.b16 %v945
    %v1590 = vunpack.c.l.b16 %v946
    %v1591 = vunpack.c.h.b16 %v946
    %v1592 = vunpack.c.l.b16 %v947
    %v1593 = vunpack.c.h.b16 %v947
    %v1594 = vunpack.c.l.b16 %v948
    %v1595 = vunpack.c.h.b16 %v948
    %v1596 = vunpack.c.l.b16 %v949
    %v1597 = vunpack.c.h.b16 %v949
    %v1598 = vunpack.c.l.b16 %v950
    %v1599 = vunpack.c.h.b16 %v950
    %v1600 = vunpack.c.l.b16 %v951
    %v1601 = vunpack.c.h.b16 %v951
    %v1602 = vunpack.c.l.b16 %v952
    %v1603 = vunpack.c.h.b16 %v952
    %v1604 = vunpack.c.l.b16 %v953
    %v1605 = vunpack.c.h.b16 %v953
    %v1606 = vunpack.c.l.b16 %v954
    %v1607 = vunpack.c.h.b16 %v954
    %v1608 = vunpack.c.l.b16 %v955
    %v1609 = vunpack.c.h.b16 %v955
    %v1610 = vunpack.c.l.b16 %v956
    %v1611 = vunpack.c.h.b16 %v956
    %v1612 = vunpack.c.l.b16 %v957
    %v1613 = vunpack.c.h.b16 %v957
    %v1614 = vunpack.c.l.b16 %v958
    %v1615 = vunpack.c.h.b16 %v958
    %v1616 = vunpack.c.l.b16 %v959
    %v1617 = vunpack.c.h.b16 %v959
    %v1618 = vunpack.c.l.b16 %v960
    %v1619 = vunpack.c.h.b16 %v960
    %v1620 = vunpack.c.l.b16 %v961
    %v1621 = vunpack.c.h.b16 %v961
    %v1622 = vunpack.c.l.b16 %v962
    %v1623 = vunpack.c.h.b16 %v962
    %v1624 = vunpack.c.l.b16 %v963
    %v1625 = vunpack.c.h.b16 %v963
    %v1626 = vunpack.c.l.b16 %v964
    %v1627 = vunpack.c.h.b16 %v964
    %v1628 = vunpack.c.l.b16 %v965
    %v1629 = vunpack.c.h.b16 %v965
    %v1630 = vunpack.c.l.b16 %v966
    %v1631 = vunpack.c.h.b16 %v966
    %v1632 = vunpack.c.l.b16 %v967
    %v1633 = vunpack.c.h.b16 %v967
    %v1634 = vunpack.c.l.b16 %v968
    %v1635 = vunpack.c.h.b16 %v968
    %v1636 = vunpack.c.l.b16 %v969
    %v1637 = vunpack.c.h.b16 %v969
    %v1638 = vunpack.c.l.b16 %v970
    %v1639 = vunpack.c.h.b16 %v970
    %v1640 = vunpack.c.l.b16 %v971
    %v1641 = vunpack.c.h.b16 %v971
    %v1642 = vunpack.c.l.b16 %v972
    %v1643 = vunpack.c.h.b16 %v972
    %v1644 = vunpack.c.l.b16 %v973
    %v1645 = vunpack.c.h.b16 %v973
    %v1646 = vunpack.c.l.b16 %v974
    %v1647 = vunpack.c.h.b16 %v974
    %v1648 = vunpack.c.l.b16 %v975
    %v1649 = vunpack.c.h.b16 %v975
    %v1650 = vunpack.c.l.b16 %v976
    %v1651 = vunpack.c.h.b16 %v976
    %v1652 = vunpack.c.l.b16 %v977
    %v1653 = vunpack.c.h.b16 %v977
    %v1654 = vunpack.c.l.b16 %v978
    %v1655 = vunpack.c.h.b16 %v978
    %v1656 = vunpack.c.l.b16 %v979
    %v1657 = vunpack.c.h.b16 %v979
    %v1658 = vunpack.c.l.b16 %v980
    %v1659 = vunpack.c.h.b16 %v980
    %v1660 = vunpack.c.l.b16 %v981
    %v1661 = vunpack.c.h.b16 %v981
    %v1662 = vunpack.c.l.b16 %v982
    %v1663 = vunpack.c.h.b16 %v982
    %v1664 = vunpack.c.l.b16 %v983
    %v1665 = vunpack.c.h.b16 %v983
    %v1666 = vunpack.c.l.b16 %v984
    %v1667 = vunpack.c.h.b16 %v984
    %v1668 = vunpack.c.l.b16 %v985
    %v1669 = vunpack.c.h.b16 %v985
    %v1670 = vunpack.c.l.b16 %v986
    %v1671 = vunpack.c.h.b16 %v986
    %v1672 = vunpack.c.l.b16 %v987
    %v1673 = vunpack.c.h.b16 %v987
    %v1674 = vunpack.c.l.b16 %v988
    %v1675 = vunpack.c.h.b16 %v988
    %v1676 = vunpack.c.l.b16 %v989
    %v1677 = vunpack.c.h.b16 %v989
    %v1678 = vunpack.c.l.b16 %v990
    %v1679 = vunpack.c.h.b16 %v990
    %v1680 = vunpack.c.l.b16 %v991
    %v1681 = vunpack.c.h.b16 %v991
    %v1682 = vunpack.c.l.b16 %v992
    %v1683 = vunpack.c.h.b16 %v992
    %v1684 = vunpack.c.l.b16 %v993
    %v1685 = vunpack.c.h.b16 %v993
    %v1686 = vunpack.c.l.b16 %v994
    %v1687 = vunpack.c.h.b16 %v994
    %v1688 = vunpack.c.l.b16 %v995
    %v1689 = vunpack.c.h.b16 %v995
    %v1690 = vunpack.c.l.b16 %v996
    %v1691 = vunpack.c.h.b16 %v996
    %v1692 = vunpack.c.l.b16 %v997
    %v1693 = vunpack.c.h.b16 %v997
    %v1694 = vunpack.c.l.b16 %v998
    %v1695 = vunpack.c.h.b16 %v998
    %v1696 = vunpack.c.l.b16 %v999
    %v1697 = vunpack.c.h.b16 %v999
    %v1698 = vunpack.c.l.b16 %v1000
    %v1699 = vunpack.c.h.b16 %v1000
    %v1700 = vunpack.c.l.b16 %v1001
    %v1701 = vunpack.c.h.b16 %v1001
    %v1702 = vunpack.c.l.b16 %v1002
    %v1703 = vunpack.c.h.b16 %v1002
    %v1704 = vunpack.c.l.b16 %v1003
    %v1705 = vunpack.c.h.b16 %v1003
    %v1706 = vunpack.c.l.b16 %v1004
    %v1707 = vunpack.c.h.b16 %v1004
    %v1708 = vunpack.c.l.b16 %v1005
    %v1709 = vunpack.c.h.b16 %v1005
    %v1710 = vunpack.c.l.b16 %v1006
    %v1711 = vunpack.c.h.b16 %v1006
    %v1712 = vunpack.c.l.b16 %v1007
    %v1713 = vunpack.c.h.b16 %v1007
    %v1714 = vunpack.c.l.b16 %v1008
    %v1715 = vunpack.c.h.b16 %v1008
    %v1716 = vunpack.c.l.b16 %v1009
    %v1717 = vunpack.c.h.b16 %v1009
    %v1718 = vunpack.c.l.b16 %v1010
    %v1719 = vunpack.c.h.b16 %v1010
    %v1720 = vunpack.c.l.b16 %v1011
    %v1721 = vunpack.c.h.b16 %v1011
    %v1722 = vunpack.c.l.b16 %v1012
    %v1723 = vunpack.c.h.b16 %v1012
    %v1724 = vunpack.c.l.b16 %v1013
    %v1725 = vunpack.c.h.b16 %v1013
    %v1726 = vunpack.c.l.b16 %v1014
    %v1727 = vunpack.c.h.b16 %v1014
    %v1728 = vunpack.c.l.b16 %v1015
    %v1729 = vunpack.c.h.b16 %v1015
    %v1730 = vunpack.c.l.b16 %v1016
    %v1731 = vunpack.c.h.b16 %v1016
    %v1732 = vunpack.c.l.b16 %v1017
    %v1733 = vunpack.c.h.b16 %v1017
    %v1734 = vunpack.c.l.b16 %v1018
    %v1735 = vunpack.c.h.b16 %v1018
    %v1736 = vunpack.c.l.b16 %v1019
    %v1737 = vunpack.c.h.b16 %v1019
    %v1738 = vunpack.c.l.b16 %v1020
    %v1739 = vunpack.c.h.b16 %v1020
    %v1740 = vunpack.c.l.b16 %v1021
    %v1741 = vunpack.c.h.b16 %v1021
    %v1742 = vunpack.c.l.b16 %v1022
    %v1743 = vunpack.c.h.b16 %v1022
    %v1744 = vunpack.c.l.b16 %v1023
    %v1745 = vunpack.c.h.b16 %v1023
    %v1746 = vunpack.c.l.b16 %v1024
    %v1747 = vunpack.c.h.b16 %v1024
    %v1748 = vunpack.c.l.b16 %v1025
    %v1749 = vunpack.c.h.b16 %v1025
    %v1750 = vunpack.c.l.b16 %v1026
    %v1751 = vunpack.c.h.b16 %v1026
    %v1752 = vunpack.c.l.b16 %v1027
    %v1753 = vunpack.c.h.b16 %v1027
    %v1754 = vunpack.c.l.b16 %v1028
    %v1755 = vunpack.c.h.b16 %v1028
    %v1756 = vunpack.c.l.b16 %v1029
    %v1757 = vunpack.c.h.b16 %v1029
    %v1758 = vunpack.c.l.b16 %v1030
    %v1759 = vunpack.c.h.b16 %v1030
    %v1760 = vunpack.c.l.b16 %v1031
    %v1761 = vunpack.c.h.b16 %v1031
    %v1762 = vunpack.c.l.b16 %v1032
    %v1763 = vunpack.c.h.b16 %v1032
    %v1764 = vunpack.c.l.b16 %v1033
    %v1765 = vunpack.c.h.b16 %v1033
    %v1766 = vunpack.c.l.b16 %v1034
    %v1767 = vunpack.c.h.b16 %v1034
    %v1768 = vunpack.c.l.b16 %v1035
    %v1769 = vunpack.c.h.b16 %v1035
    %v1770 = vunpack.c.l.b16 %v1036
    %v1771 = vunpack.c.h.b16 %v1036
    %v1772 = vunpack.c.l.b16 %v1037
    %v1773 = vunpack.c.h.b16 %v1037
    %v1774 = vunpack.c.l.b16 %v1038
    %v1775 = vunpack.c.h.b16 %v1038
    %v1776 = vunpack.c.l.b16 %v1039
    %v1777 = vunpack.c.h.b16 %v1039
    %v1778 = vunpack.c.l.b16 %v1040
    %v1779 = vunpack.c.h.b16 %v1040
    %v1780 = vunpack.c.l.b16 %v1041
    %v1781 = vunpack.c.h.b16 %v1041
    %v1782 = vunpack.c.l.b16 %v1042
    %v1783 = vunpack.c.h.b16 %v1042
    %v1784 = vunpack.c.l.b16 %v1043
    %v1785 = vunpack.c.h.b16 %v1043
    %v1786 = vunpack.c.l.b16 %v1044
    %v1787 = vunpack.c.h.b16 %v1044
    %v1788 = vunpack.c.l.b16 %v1045
    %v1789 = vunpack.c.h.b16 %v1045
    %v1790 = vunpack.c.l.b16 %v1046
    %v1791 = vunpack.c.h.b16 %v1046
    %v1792 = vunpack.c.l.b16 %v1047
    %v1793 = vunpack.c.h.b16 %v1047
    %v1794 = vunpack.c.l.b16 %v1048
    %v1795 = vunpack.c.h.b16 %v1048
    %v1796 = vunpack.c.l.b16 %v1049
    %v1797 = vunpack.c.h.b16 %v1049
    %v1798 = vunpack.c.l.b16 %v1050
    %v1799 = vunpack.c.h.b16 %v1050
    %v1800 = vunpack.c.l.b16 %v1051
    %v1801 = vunpack.c.h.b16 %v1051
    %v1802 = vunpack.c.l.b16 %v1052
    %v1803 = vunpack.c.h.b16 %v1052
    %v1804 = vunpack.c.l.b16 %v1053
    %v1805 = vunpack.c.h.b16 %v1053
    %v1806 = vunpack.c.l.b16 %v1054
    %v1807 = vunpack.c.h.b16 %v1054
    %v1808 = vunpack.c.l.b16 %v1055
    %v1809 = vunpack.c.h.b16 %v1055
    %v1810 = vunpack.c.l.b16 %v1056
    %v1811 = vunpack.c.h.b16 %v1056
    %v1812 = vunpack.c.l.b16 %v1057
    %v1813 = vunpack.c.h.b16 %v1057
    %v1814 = vunpack.c.l.b16 %v1058
    %v1815 = vunpack.c.h.b16 %v1058
    %v1816 = vunpack.c.l.b16 %v1059
    %v1817 = vunpack.c.h.b16 %v1059
    %v1818 = vunpack.c.l.b16 %v1060
    %v1819 = vunpack.c.h.b16 %v1060
    %v1820 = vunpack.c.l.b16 %v1061
    %v1821 = vunpack.c.h.b16 %v1061
    %v1822 = vunpack.c.l.b16 %v1062
    %v1823 = vunpack.c.h.b16 %v1062
    %v1824 = vunpack.c.l.b16 %v1063
    %v1825 = vunpack.c.h.b16 %v1063
    %v1826 = vunpack.c.l.b16 %v1064
    %v1827 = vunpack.c.h.b16 %v1064
    %v1828 = vunpack.c.l.b16 %v1065
    %v1829 = vunpack.c.h.b16 %v1065
    %v1830 = vunpack.c.l.b16 %v1066
    %v1831 = vunpack.c.h.b16 %v1066
    %v1832 = vunpack.c.l.b16 %v1067
    %v1833 = vunpack.c.h.b16 %v1067
    %v1834 = vunpack.c.l.b16 %v1068
    %v1835 = vunpack.c.h.b16 %v1068
    %v1836 = vunpack.c.l.b16 %v1069
    %v1837 = vunpack.c.h.b16 %v1069
    %v1838 = vunpack.c.l.b16 %v1070
    %v1839 = vunpack.c.h.b16 %v1070
    %v1840 = vunpack.c.l.b16 %v1071
    %v1841 = vunpack.c.h.b16 %v1071
    %v1842 = vunpack.c.l.b16 %v1072
    %v1843 = vunpack.c.h.b16 %v1072
    %v1844 = vunpack.c.l.b16 %v1073
    %v1845 = vunpack.c.h.b16 %v1073
    %v1846 = vunpack.c.l.b16 %v1074
    %v1847 = vunpack.c.h.b16 %v1074
    %v1848 = vunpack.c.l.b16 %v1075
    %v1849 = vunpack.c.h.b16 %v1075
    %v1850 = vunpack.c.l.b16 %v1076
    %v1851 = vunpack.c.h.b16 %v1076
    %v1852 = vunpack.c.l.b16 %v1077
    %v1853 = vunpack.c.h.b16 %v1077
    %v1854 = vunpack.c.l.b16 %v1078
    %v1855 = vunpack.c.h.b16 %v1078
    %v1856 = vunpack.c.l.b16 %v1079
    %v1857 = vunpack.c.h.b16 %v1079
    %v1858 = vunpack.c.l.b16 %v1080
    %v1859 = vunpack.c.h.b16 %v1080
    %v1860 = vunpack.c.l.b16 %v1081
    %v1861 = vunpack.c.h.b16 %v1081
    %v1862 = vunpack.c.l.b16 %v1082
    %v1863 = vunpack.c.h.b16 %v1082
    %v1864 = vunpack.c.l.b16 %v1083
    %v1865 = vunpack.c.h.b16 %v1083
    %v1866 = vunpack.c.l.b16 %v1084
    %v1867 = vunpack.c.h.b16 %v1084
    %v1868 = vunpack.c.l.b16 %v1085
    %v1869 = vunpack.c.h.b16 %v1085
    %v1870 = vunpack.c.l.b16 %v1086
    %v1871 = vunpack.c.h.b16 %v1086
    %v1872 = vunpack.c.l.b16 %v1087
    %v1873 = vunpack.c.h.b16 %v1087
    %v1874 = vunpack.c.l.b16 %v1088
    %v1875 = vunpack.c.h.b16 %v1088
    %v1876 = vunpack.c.l.b16 %v1089
    %v1877 = vunpack.c.h.b16 %v1089
    %v1878 = vunpack.c.l.b16 %v1090
    %v1879 = vunpack.c.h.b16 %v1090
    %v1880 = vunpack.c.l.b16 %v1091
    %v1881 = vunpack.c.h.b16 %v1091
    %v1882 = vpack.c.b16 %v1378, %v1370
    %v1883 = vpack.c.b16 %v1379, %v1371
    %v1884 = vpack.c.b16 %v1380, %v1372
    %v1885 = vpack.c.b16 %v1381, %v1373
    %v1886 = vpack.c.b16 %v1382, %v1374
    %v1887 = vpack.c.b16 %v1383, %v1375
    %v1888 = vpack.c.b16 %v1384, %v1376
    %v1889 = vpack.c.b16 %v1385, %v1377
    %v1890 = vpack.c.b16 %v1394, %v1386
    %v1891 = vpack.c.b16 %v1395, %v1387
    %v1892 = vpack.c.b16 %v1396, %v1388
    %v1893 = vpack.c.b16 %v1397, %v1389
    %v1894 = vpack.c.b16 %v1398, %v1390
    %v1895 = vpack.c.b16 %v1399, %v1391
    %v1896 = vpack.c.b16 %v1400, %v1392
    %v1897 = vpack.c.b16 %v1401, %v1393
    %v1898 = vpack.c.b16 %v1410, %v1402
    %v1899 = vpack.c.b16 %v1411, %v1403
    %v1900 = vpack.c.b16 %v1412, %v1404
    %v1901 = vpack.c.b16 %v1413, %v1405
    %v1902 = vpack.c.b16 %v1414, %v1406
    %v1903 = vpack.c.b16 %v1415, %v1407
    %v1904 = vpack.c.b16 %v1416, %v1408
    %v1905 = vpack.c.b16 %v1417, %v1409
    %v1906 = vpack.c.b16 %v1426, %v1418
    %v1907 = vpack.c.b16 %v1427, %v1419
    %v1908 = vpack.c.b16 %v1428, %v1420
    %v1909 = vpack.c.b16 %v1429, %v1421
    %v1910 = vpack.c.b16 %v1430, %v1422
    %v1911 = vpack.c.b16 %v1431, %v1423
    %v1912 = vpack.c.b16 %v1432, %v1424
    %v1913 = vpack.c.b16 %v1433, %v1425
    %v1914 = vpack.c.b16 %v1442, %v1434
    %v1915 = vpack.c.b16 %v1443, %v1435
    %v1916 = vpack.c.b16 %v1444, %v1436
    %v1917 = vpack.c.b16 %v1445, %v1437
    %v1918 = vpack.c.b16 %v1446, %v1438
    %v1919 = vpack.c.b16 %v1447, %v1439
    %v1920 = vpack.c.b16 %v1448, %v1440
    %v1921 = vpack.c.b16 %v1449, %v1441
    %v1922 = vpack.c.b16 %v1458, %v1450
    %v1923 = vpack.c.b16 %v1459, %v1451
    %v1924 = vpack.c.b16 %v1460, %v1452
    %v1925 = vpack.c.b16 %v1461, %v1453
    %v1926 = vpack.c.b16 %v1462, %v1454
    %v1927 = vpack.c.b16 %v1463, %v1455
    %v1928 = vpack.c.b16 %v1464, %v1456
    %v1929 = vpack.c.b16 %v1465, %v1457
    %v1930 = vpack.c.b16 %v1474, %v1466
    %v1931 = vpack.c.b16 %v1475, %v1467
    %v1932 = vpack.c.b16 %v1476, %v1468
    %v1933 = vpack.c.b16 %v1477, %v1469
    %v1934 = vpack.c.b16 %v1478, %v1470
    %v1935 = vpack.c.b16 %v1479, %v1471
    %v1936 = vpack.c.b16 %v1480, %v1472
    %v1937 = vpack.c.b16 %v1481, %v1473
    %v1938 = vpack.c.b16 %v1490, %v1482
    %v1939 = vpack.c.b16 %v1491, %v1483
    %v1940 = vpack.c.b16 %v1492, %v1484
    %v1941 = vpack.c.b16 %v1493, %v1485
    %v1942 = vpack.c.b16 %v1494, %v1486
    %v1943 = vpack.c.b16 %v1495, %v1487
    %v1944 = vpack.c.b16 %v1496, %v1488
    %v1945 = vpack.c.b16 %v1497, %v1489
    %v1946 = vpack.c.b16 %v1506, %v1498
    %v1947 = vpack.c.b16 %v1507, %v1499
    %v1948 = vpack.c.b16 %v1508, %v1500
    %v1949 = vpack.c.b16 %v1509, %v1501
    %v1950 = vpack.c.b16 %v1510, %v1502
    %v1951 = vpack.c.b16 %v1511, %v1503
    %v1952 = vpack.c.b16 %v1512, %v1504
    %v1953 = vpack.c.b16 %v1513, %v1505
    %v1954 = vpack.c.b16 %v1522, %v1514
    %v1955 = vpack.c.b16 %v1523, %v1515
    %v1956 = vpack.c.b16 %v1524, %v1516
    %v1957 = vpack.c.b16 %v1525, %v1517
    %v1958 = vpack.c.b16 %v1526, %v1518
    %v1959 = vpack.c.b16 %v1527, %v1519
    %v1960 = vpack.c.b16 %v1528, %v1520
    %v1961 = vpack.c.b16 %v1529, %v1521
    %v1962 = vpack.c.b16 %v1538, %v1530
    %v1963 = vpack.c.b16 %v1539, %v1531
    %v1964 = vpack.c.b16 %v1540, %v1532
    %v1965 = vpack.c.b16 %v1541, %v1533
    %v1966 = vpack.c.b16 %v1542, %v1534
    %v1967 = vpack.c.b16 %v1543, %v1535
    %v1968 = vpack.c.b16 %v1544, %v1536
    %v1969 = vpack.c.b16 %v1545, %v1537
    %v1970 = vpack.c.b16 %v1554, %v1546
    %v1971 = vpack.c.b16 %v1555, %v1547
    %v1972 = vpack.c.b16 %v1556, %v1548
    %v1973 = vpack.c.b16 %v1557, %v1549
    %v1974 = vpack.c.b16 %v1558, %v1550
    %v1975 = vpack.c.b16 %v1559, %v1551
    %v1976 = vpack.c.b16 %v1560, %v1552
    %v1977 = vpack.c.b16 %v1561, %v1553
    %v1978 = vpack.c.b16 %v1570, %v1562
    %v1979 = vpack.c.b16 %v1571, %v1563
    %v1980 = vpack.c.b16 %v1572, %v1564
    %v1981 = vpack.c.b16 %v1573, %v1565
    %v1982 = vpack.c.b16 %v1574, %v1566
    %v1983 = vpack.c.b16 %v1575, %v1567
    %v1984 = vpack.c.b16 %v1576, %v1568
    %v1985 = vpack.c.b16 %v1577, %v1569
    %v1986 = vpack.c.b16 %v1586, %v1578
    %v1987 = vpack.c.b16 %v1587, %v1579
    %v1988 = vpack.c.b16 %v1588, %v1580
    %v1989 = vpack.c.b16 %v1589, %v1581
    %v1990 = vpack.c.b16 %v1590, %v1582
    %v1991 = vpack.c.b16 %v1591, %v1583
    %v1992 = vpack.c.b16 %v1592, %v1584
    %v1993 = vpack.c.b16 %v1593, %v1585
    %v1994 = vpack.c.b16 %v1602, %v1594
    %v1995 = vpack.c.b16 %v1603, %v1595
    %v1996 = vpack.c.b16 %v1604, %v1596
    %v1997 = vpack.c.b16 %v1605, %v1597
    %v1998 = vpack.c.b16 %v1606, %v1598
    %v1999 = vpack.c.b16 %v1607, %v1599
    %v2000 = vpack.c.b16 %v1608, %v1600
    %v2001 = vpack.c.b16 %v1609, %v1601
    %v2002 = vpack.c.b16 %v1618, %v1610
    %v2003 = vpack.c.b16 %v1619, %v1611
    %v2004 = vpack.c.b16 %v1620, %v1612
    %v2005 = vpack.c.b16 %v1621, %v1613
    %v2006 = vpack.c.b16 %v1622, %v1614
    %v2007 = vpack.c.b16 %v1623, %v1615
    %v2008 = vpack.c.b16 %v1624, %v1616
    %v2009 = vpack.c.b16 %v1625, %v1617
    %v2010 = vpack.c.b16 %v1634, %v1626
    %v2011 = vpack.c.b16 %v1635, %v1627
    %v2012 = vpack.c.b16 %v1636, %v1628
    %v2013 = vpack.c.b16 %v1637, %v1629
    %v2014 = vpack.c.b16 %v1638, %v1630
    %v2015 = vpack.c.b16 %v1639, %v1631
    %v2016 = vpack.c.b16 %v1640, %v1632
    %v2017 = vpack.c.b16 %v1641, %v1633
    %v2018 = vpack.c.b16 %v1650, %v1642
    %v2019 = vpack.c.b16 %v1651, %v1643
    %v2020 = vpack.c.b16 %v1652, %v1644
    %v2021 = vpack.c.b16 %v1653, %v1645
    %v2022 = vpack.c.b16 %v1654, %v1646
    %v2023 = vpack.c.b16 %v1655, %v1647
    %v2024 = vpack.c.b16 %v1656, %v1648
    %v2025 = vpack.c.b16 %v1657, %v1649
    %v2026 = vpack.c.b16 %v1666, %v1658
    %v2027 = vpack.c.b16 %v1667, %v1659
    %v2028 = vpack.c.b16 %v1668, %v1660
    %v2029 = vpack.c.b16 %v1669, %v1661
    %v2030 = vpack.c.b16 %v1670, %v1662
    %v2031 = vpack.c.b16 %v1671, %v1663
    %v2032 = vpack.c.b16 %v1672, %v1664
    %v2033 = vpack.c.b16 %v1673, %v1665
    %v2034 = vpack.c.b16 %v1682, %v1674
    %v2035 = vpack.c.b16 %v1683, %v1675
    %v2036 = vpack.c.b16 %v1684, %v1676
    %v2037 = vpack.c.b16 %v1685, %v1677
    %v2038 = vpack.c.b16 %v1686, %v1678
    %v2039 = vpack.c.b16 %v1687, %v1679
    %v2040 = vpack.c.b16 %v1688, %v1680
    %v2041 = vpack.c.b16 %v1689, %v1681
    %v2042 = vpack.c.b16 %v1698, %v1690
    %v2043 = vpack.c.b16 %v1699, %v1691
    %v2044 = vpack.c.b16 %v1700, %v1692
    %v2045 = vpack.c.b16 %v1701, %v1693
    %v2046 = vpack.c.b16 %v1702, %v1694
    %v2047 = vpack.c.b16 %v1703, %v1695
    %v2048 = vpack.c.b16 %v1704, %v1696
    %v2049 = vpack.c.b16 %v1705, %v1697
    %v2050 = vpack.c.b16 %v1714, %v1706
    %v2051 = vpack.c.b16 %v1715, %v1707
    %v2052 = vpack.c.b16 %v1716, %v1708
    %v2053 = vpack.c.b16 %v1717, %v1709
    %v2054 = vpack.c.b16 %v1718, %v1710
    %v2055 = vpack.c.b16 %v1719, %v1711
    %v2056 = vpack.c.b16 %v1720, %v1712
    %v2057 = vpack.c.b16 %v1721, %v1713
    %v2058 = vpack.c.b16 %v1730, %v1722
    %v2059 = vpack.c.b16 %v1731, %v1723
    %v2060 = vpack.c.b16 %v1732, %v1724
    %v2061 = vpack.c.b16 %v1733, %v1725
    %v2062 = vpack.c.b16 %v1734, %v1726
    %v2063 = vpack.c.b16 %v1735, %v1727
    %v2064 = vpack.c.b16 %v1736, %v1728
    %v2065 = vpack.c.b16 %v1737, %v1729
    %v2066 = vpack.c.b16 %v1746, %v1738
    %v2067 = vpack.c.b16 %v1747, %v1739
    %v2068 = vpack.c.b16 %v1748, %v1740
    %v2069 = vpack.c.b16 %v1749, %v1741
    %v2070 = vpack.c.b16 %v1750, %v1742
    %v2071 = vpack.c.b16 %v1751, %v1743
    %v2072 = vpack.c.b16 %v1752, %v1744
    %v2073 = vpack.c.b16 %v1753, %v1745
    %v2074 = vpack.c.b16 %v1762, %v1754
    %v2075 = vpack.c.b16 %v1763, %v1755
    %v2076 = vpack.c.b16 %v1764, %v1756
    %v2077 = vpack.c.b16 %v1765, %v1757
    %v2078 = vpack.c.b16 %v1766, %v1758
    %v2079 = vpack.c.b16 %v1767, %v1759
    %v2080 = vpack.c.b16 %v1768, %v1760
    %v2081 = vpack.c.b16 %v1769, %v1761
    %v2082 = vpack.c.b16 %v1778, %v1770
    %v2083 = vpack.c.b16 %v1779, %v1771
    %v2084 = vpack.c.b16 %v1780, %v1772
    %v2085 = vpack.c.b16 %v1781, %v1773
    %v2086 = vpack.c.b16 %v1782, %v1774
    %v2087 = vpack.c.b16 %v1783, %v1775
    %v2088 = vpack.c.b16 %v1784, %v1776
    %v2089 = vpack.c.b16 %v1785, %v1777
    %v2090 = vpack.c.b16 %v1794, %v1786
    %v2091 = vpack.c.b16 %v1795, %v1787
    %v2092 = vpack.c.b16 %v1796, %v1788
    %v2093 = vpack.c.b16 %v1797, %v1789
    %v2094 = vpack.c.b16 %v1798, %v1790
    %v2095 = vpack.c.b16 %v1799, %v1791
    %v2096 = vpack.c.b16 %v1800, %v1792
    %v2097 = vpack.c.b16 %v1801, %v1793
    %v2098 = vpack.c.b16 %v1810, %v1802
    %v2099 = vpack.c.b16 %v1811, %v1803
    %v2100 = vpack.c.b16 %v1812, %v1804
    %v2101 = vpack.c.b16 %v1813, %v1805
    %v2102 = vpack.c.b16 %v1814, %v1806
    %v2103 = vpack.c.b16 %v1815, %v1807
    %v2104 = vpack.c.b16 %v1816, %v1808
    %v2105 = vpack.c.b16 %v1817, %v1809
    %v2106 = vpack.c.b16 %v1826, %v1818
    %v2107 = vpack.c.b16 %v1827, %v1819
    %v2108 = vpack.c.b16 %v1828, %v1820
    %v2109 = vpack.c.b16 %v1829, %v1821
    %v2110 = vpack.c.b16 %v1830, %v1822
    %v2111 = vpack.c.b16 %v1831, %v1823
    %v2112 = vpack.c.b16 %v1832, %v1824
    %v2113 = vpack.c.b16 %v1833, %v1825
    %v2114 = vpack.c.b16 %v1842, %v1834
    %v2115 = vpack.c.b16 %v1843, %v1835
    %v2116 = vpack.c.b16 %v1844, %v1836
    %v2117 = vpack.c.b16 %v1845, %v1837
    %v2118 = vpack.c.b16 %v1846, %v1838
    %v2119 = vpack.c.b16 %v1847, %v1839
    %v2120 = vpack.c.b16 %v1848, %v1840
    %v2121 = vpack.c.b16 %v1849, %v1841
    %v2122 = vpack.c.b16 %v1858, %v1850
    %v2123 = vpack.c.b16 %v1859, %v1851
    %v2124 = vpack.c.b16 %v1860, %v1852
    %v2125 = vpack.c.b16 %v1861, %v1853
    %v2126 = vpack.c.b16 %v1862, %v1854
    %v2127 = vpack.c.b16 %v1863, %v1855
    %v2128 = vpack.c.b16 %v1864, %v1856
    %v2129 = vpack.c.b16 %v1865, %v1857
    %v2130 = vpack.c.b16 %v1874, %v1866
    %v2131 = vpack.c.b16 %v1875, %v1867
    %v2132 = vpack.c.b16 %v1876, %v1868
    %v2133 = vpack.c.b16 %v1877, %v1869
    %v2134 = vpack.c.b16 %v1878, %v1870
    %v2135 = vpack.c.b16 %v1879, %v1871
    %v2136 = vpack.c.b16 %v1880, %v1872
    %v2137 = vpack.c.b16 %v1881, %v1873
    %2394 = vmatpush.bf16.msra.mxu0 %v1938
    %2395 = vmatpush.bf16.msra.mxu0 %v1930
    %2396 = vmatpush.bf16.msra.mxu0 %v1922
    %2397 = vmatpush.bf16.msra.mxu0 %v1914
    %2398 = vmatpush.bf16.msra.mxu0 %v1906
    %2399 = vmatpush.bf16.msra.mxu0 %v1898
    %2400 = vmatpush.bf16.msra.mxu0 %v1890
    %2401 = vmatpush.bf16.msra.mxu0 %v1882
    %2402 = vmatmul.bf16.gmra.mxu0 %v1092
    %v2403 = vpop.f32.mrf.mxu0
    %v2404 = vadd.f32 %v1098, %v2403
    %v2405 = vpop.f32.mrf.mxu0
    %2406 = vdwg.mxu0
    %2407 = vmatpush.bf16.msra.mxu0 %v2002
    %2408 = vmatpush.bf16.msra.mxu0 %v1994
    %2409 = vmatpush.bf16.msra.mxu0 %v1986
    %2410 = vmatpush.bf16.msra.mxu0 %v1978
    %2411 = vmatpush.bf16.msra.mxu0 %v1970
    %2412 = vmatpush.bf16.msra.mxu0 %v1962
    %2413 = vmatpush.bf16.msra.mxu0 %v1954
    %2414 = vmatpush.bf16.msra.mxu0 %v1946
    %2415 = vmatmul.bf16.gmra.mxu0 %v1093
    %v2416 = vpop.f32.mrf.mxu0
    %v2417 = vadd.f32 %v2404, %v2416
    %v2418 = vpop.f32.mrf.mxu0
    %2419 = vdwg.mxu0
    %2420 = vmatpush.bf16.msra.mxu0 %v2066
    %2421 = vmatpush.bf16.msra.mxu0 %v2058
    %2422 = vmatpush.bf16.msra.mxu0 %v2050
    %2423 = vmatpush.bf16.msra.mxu0 %v2042
    %2424 = vmatpush.bf16.msra.mxu0 %v2034
    %2425 = vmatpush.bf16.msra.mxu0 %v2026
    %2426 = vmatpush.bf16.msra.mxu0 %v2018
    %2427 = vmatpush.bf16.msra.mxu0 %v2010
    %2428 = vmatmul.bf16.gmra.mxu0 %v1094
    %v2429 = vpop.f32.mrf.mxu0
    %v2430 = vadd.f32 %v2417, %v2429
    %v2431 = vpop.f32.mrf.mxu0
    %2432 = vdwg.mxu0
    %2433 = vmatpush.bf16.msra.mxu0 %v2130
    %2434 = vmatpush.bf16.msra.mxu0 %v2122
    %2435 = vmatpush.bf16.msra.mxu0 %v2114
    %2436 = vmatpush.bf16.msra.mxu0 %v2106
    %2437 = vmatpush.bf16.msra.mxu0 %v2098
    %2438 = vmatpush.bf16.msra.mxu0 %v2090
    %2439 = vmatpush.bf16.msra.mxu0 %v2082
    %2440 = vmatpush.bf16.msra.mxu0 %v2074
    %2441 = vmatmul.bf16.gmra.mxu0 %v1095
    %v2442 = vpop.f32.mrf.mxu0
    %v2443 = vadd.f32 %v2430, %v2442
    %v2444 = vpop.f32.mrf.mxu0
    %2445 = vdwg.mxu0
    %2446 = vmatpush.bf16.msra.mxu0 %v1939
    %2447 = vmatpush.bf16.msra.mxu0 %v1931
    %2448 = vmatpush.bf16.msra.mxu0 %v1923
    %2449 = vmatpush.bf16.msra.mxu0 %v1915
    %2450 = vmatpush.bf16.msra.mxu0 %v1907
    %2451 = vmatpush.bf16.msra.mxu0 %v1899
    %2452 = vmatpush.bf16.msra.mxu0 %v1891
    %2453 = vmatpush.bf16.msra.mxu0 %v1883
    %2454 = vmatmul.bf16.gmra.mxu0 %v1092
    %v2455 = vpop.f32.mrf.mxu0
    %v2456 = vadd.f32 %v1099, %v2455
    %v2457 = vpop.f32.mrf.mxu0
    %2458 = vdwg.mxu0
    %2459 = vmatpush.bf16.msra.mxu0 %v2003
    %2460 = vmatpush.bf16.msra.mxu0 %v1995
    %2461 = vmatpush.bf16.msra.mxu0 %v1987
    %2462 = vmatpush.bf16.msra.mxu0 %v1979
    %2463 = vmatpush.bf16.msra.mxu0 %v1971
    %2464 = vmatpush.bf16.msra.mxu0 %v1963
    %2465 = vmatpush.bf16.msra.mxu0 %v1955
    %2466 = vmatpush.bf16.msra.mxu0 %v1947
    %2467 = vmatmul.bf16.gmra.mxu0 %v1093
    %v2468 = vpop.f32.mrf.mxu0
    %v2469 = vadd.f32 %v2456, %v2468
    %v2470 = vpop.f32.mrf.mxu0
    %2471 = vdwg.mxu0
    %2472 = vmatpush.bf16.msra.mxu0 %v2067
    %2473 = vmatpush.bf16.msra.mxu0 %v2059
    %2474 = vmatpush.bf16.msra.mxu0 %v2051
    %2475 = vmatpush.bf16.msra.mxu0 %v2043
    %2476 = vmatpush.bf16.msra.mxu0 %v2035
    %2477 = vmatpush.bf16.msra.mxu0 %v2027
    %2478 = vmatpush.bf16.msra.mxu0 %v2019
    %2479 = vmatpush.bf16.msra.mxu0 %v2011
    %2480 = vmatmul.bf16.gmra.mxu0 %v1094
    %v2481 = vpop.f32.mrf.mxu0
    %v2482 = vadd.f32 %v2469, %v2481
    %v2483 = vpop.f32.mrf.mxu0
    %2484 = vdwg.mxu0
    %2485 = vmatpush.bf16.msra.mxu0 %v2131
    %2486 = vmatpush.bf16.msra.mxu0 %v2123
    %2487 = vmatpush.bf16.msra.mxu0 %v2115
    %2488 = vmatpush.bf16.msra.mxu0 %v2107
    %2489 = vmatpush.bf16.msra.mxu0 %v2099
    %2490 = vmatpush.bf16.msra.mxu0 %v2091
    %2491 = vmatpush.bf16.msra.mxu0 %v2083
    %2492 = vmatpush.bf16.msra.mxu0 %v2075
    %2493 = vmatmul.bf16.gmra.mxu0 %v1095
    %v2494 = vpop.f32.mrf.mxu0
    %v2495 = vadd.f32 %v2482, %v2494
    %v2496 = vpop.f32.mrf.mxu0
    %2497 = vdwg.mxu0
    %2498 = vmatpush.bf16.msra.mxu0 %v1940
    %2499 = vmatpush.bf16.msra.mxu0 %v1932
    %2500 = vmatpush.bf16.msra.mxu0 %v1924
    %2501 = vmatpush.bf16.msra.mxu0 %v1916
    %2502 = vmatpush.bf16.msra.mxu0 %v1908
    %2503 = vmatpush.bf16.msra.mxu0 %v1900
    %2504 = vmatpush.bf16.msra.mxu0 %v1892
    %2505 = vmatpush.bf16.msra.mxu0 %v1884
    %2506 = vmatmul.bf16.gmra.mxu0 %v1092
    %v2507 = vpop.f32.mrf.mxu0
    %v2508 = vadd.f32 %v1100, %v2507
    %v2509 = vpop.f32.mrf.mxu0
    %2510 = vdwg.mxu0
    %2511 = vmatpush.bf16.msra.mxu0 %v2004
    %2512 = vmatpush.bf16.msra.mxu0 %v1996
    %2513 = vmatpush.bf16.msra.mxu0 %v1988
    %2514 = vmatpush.bf16.msra.mxu0 %v1980
    %2515 = vmatpush.bf16.msra.mxu0 %v1972
    %2516 = vmatpush.bf16.msra.mxu0 %v1964
    %2517 = vmatpush.bf16.msra.mxu0 %v1956
    %2518 = vmatpush.bf16.msra.mxu0 %v1948
    %2519 = vmatmul.bf16.gmra.mxu0 %v1093
    %v2520 = vpop.f32.mrf.mxu0
    %v2521 = vadd.f32 %v2508, %v2520
    %v2522 = vpop.f32.mrf.mxu0
    %2523 = vdwg.mxu0
    %2524 = vmatpush.bf16.msra.mxu0 %v2068
    %2525 = vmatpush.bf16.msra.mxu0 %v2060
    %2526 = vmatpush.bf16.msra.mxu0 %v2052
    %2527 = vmatpush.bf16.msra.mxu0 %v2044
    %2528 = vmatpush.bf16.msra.mxu0 %v2036
    %2529 = vmatpush.bf16.msra.mxu0 %v2028
    %2530 = vmatpush.bf16.msra.mxu0 %v2020
    %2531 = vmatpush.bf16.msra.mxu0 %v2012
    %2532 = vmatmul.bf16.gmra.mxu0 %v1094
    %v2533 = vpop.f32.mrf.mxu0
    %v2534 = vadd.f32 %v2521, %v2533
    %v2535 = vpop.f32.mrf.mxu0
    %2536 = vdwg.mxu0
    %2537 = vmatpush.bf16.msra.mxu0 %v2132
    %2538 = vmatpush.bf16.msra.mxu0 %v2124
    %2539 = vmatpush.bf16.msra.mxu0 %v2116
    %2540 = vmatpush.bf16.msra.mxu0 %v2108
    %2541 = vmatpush.bf16.msra.mxu0 %v2100
    %2542 = vmatpush.bf16.msra.mxu0 %v2092
    %2543 = vmatpush.bf16.msra.mxu0 %v2084
    %2544 = vmatpush.bf16.msra.mxu0 %v2076
    %2545 = vmatmul.bf16.gmra.mxu0 %v1095
    %v2546 = vpop.f32.mrf.mxu0
    %v2547 = vadd.f32 %v2534, %v2546
    %v2548 = vpop.f32.mrf.mxu0
    %2549 = vdwg.mxu0
    %2550 = vmatpush.bf16.msra.mxu0 %v1941
    %2551 = vmatpush.bf16.msra.mxu0 %v1933
    %2552 = vmatpush.bf16.msra.mxu0 %v1925
    %2553 = vmatpush.bf16.msra.mxu0 %v1917
    %2554 = vmatpush.bf16.msra.mxu0 %v1909
    %2555 = vmatpush.bf16.msra.mxu0 %v1901
    %2556 = vmatpush.bf16.msra.mxu0 %v1893
    %2557 = vmatpush.bf16.msra.mxu0 %v1885
    %2558 = vmatmul.bf16.gmra.mxu0 %v1092
    %v2559 = vpop.f32.mrf.mxu0
    %v2560 = vadd.f32 %v1101, %v2559
    %v2561 = vpop.f32.mrf.mxu0
    %2562 = vdwg.mxu0
    %2563 = vmatpush.bf16.msra.mxu0 %v2005
    %2564 = vmatpush.bf16.msra.mxu0 %v1997
    %2565 = vmatpush.bf16.msra.mxu0 %v1989
    %2566 = vmatpush.bf16.msra.mxu0 %v1981
    %2567 = vmatpush.bf16.msra.mxu0 %v1973
    %2568 = vmatpush.bf16.msra.mxu0 %v1965
    %2569 = vmatpush.bf16.msra.mxu0 %v1957
    %2570 = vmatpush.bf16.msra.mxu0 %v1949
    %2571 = vmatmul.bf16.gmra.mxu0 %v1093
    %v2572 = vpop.f32.mrf.mxu0
    %v2573 = vadd.f32 %v2560, %v2572
    %v2574 = vpop.f32.mrf.mxu0
    %2575 = vdwg.mxu0
    %2576 = vmatpush.bf16.msra.mxu0 %v2069
    %2577 = vmatpush.bf16.msra.mxu0 %v2061
    %2578 = vmatpush.bf16.msra.mxu0 %v2053
    %2579 = vmatpush.bf16.msra.mxu0 %v2045
    %2580 = vmatpush.bf16.msra.mxu0 %v2037
    %2581 = vmatpush.bf16.msra.mxu0 %v2029
    %2582 = vmatpush.bf16.msra.mxu0 %v2021
    %2583 = vmatpush.bf16.msra.mxu0 %v2013
    %2584 = vmatmul.bf16.gmra.mxu0 %v1094
    %v2585 = vpop.f32.mrf.mxu0
    %v2586 = vadd.f32 %v2573, %v2585
    %v2587 = vpop.f32.mrf.mxu0
    %2588 = vdwg.mxu0
    %2589 = vmatpush.bf16.msra.mxu0 %v2133
    %2590 = vmatpush.bf16.msra.mxu0 %v2125
    %2591 = vmatpush.bf16.msra.mxu0 %v2117
    %2592 = vmatpush.bf16.msra.mxu0 %v2109
    %2593 = vmatpush.bf16.msra.mxu0 %v2101
    %2594 = vmatpush.bf16.msra.mxu0 %v2093
    %2595 = vmatpush.bf16.msra.mxu0 %v2085
    %2596 = vmatpush.bf16.msra.mxu0 %v2077
    %2597 = vmatmul.bf16.gmra.mxu0 %v1095
    %v2598 = vpop.f32.mrf.mxu0
    %v2599 = vadd.f32 %v2586, %v2598
    %v2600 = vpop.f32.mrf.mxu0
    %2601 = vdwg.mxu0
    %2602 = vmatpush.bf16.msra.mxu0 %v1942
    %2603 = vmatpush.bf16.msra.mxu0 %v1934
    %2604 = vmatpush.bf16.msra.mxu0 %v1926
    %2605 = vmatpush.bf16.msra.mxu0 %v1918
    %2606 = vmatpush.bf16.msra.mxu0 %v1910
    %2607 = vmatpush.bf16.msra.mxu0 %v1902
    %2608 = vmatpush.bf16.msra.mxu0 %v1894
    %2609 = vmatpush.bf16.msra.mxu0 %v1886
    %2610 = vmatmul.bf16.gmra.mxu0 %v1092
    %v2611 = vpop.f32.mrf.mxu0
    %v2612 = vadd.f32 %v1102, %v2611
    %v2613 = vpop.f32.mrf.mxu0
    %2614 = vdwg.mxu0
    %2615 = vmatpush.bf16.msra.mxu0 %v2006
    %2616 = vmatpush.bf16.msra.mxu0 %v1998
    %2617 = vmatpush.bf16.msra.mxu0 %v1990
    %2618 = vmatpush.bf16.msra.mxu0 %v1982
    %2619 = vmatpush.bf16.msra.mxu0 %v1974
    %2620 = vmatpush.bf16.msra.mxu0 %v1966
    %2621 = vmatpush.bf16.msra.mxu0 %v1958
    %2622 = vmatpush.bf16.msra.mxu0 %v1950
    %2623 = vmatmul.bf16.gmra.mxu0 %v1093
    %v2624 = vpop.f32.mrf.mxu0
    %v2625 = vadd.f32 %v2612, %v2624
    %v2626 = vpop.f32.mrf.mxu0
    %2627 = vdwg.mxu0
    %2628 = vmatpush.bf16.msra.mxu0 %v2070
    %2629 = vmatpush.bf16.msra.mxu0 %v2062
    %2630 = vmatpush.bf16.msra.mxu0 %v2054
    %2631 = vmatpush.bf16.msra.mxu0 %v2046
    %2632 = vmatpush.bf16.msra.mxu0 %v2038
    %2633 = vmatpush.bf16.msra.mxu0 %v2030
    %2634 = vmatpush.bf16.msra.mxu0 %v2022
    %2635 = vmatpush.bf16.msra.mxu0 %v2014
    %2636 = vmatmul.bf16.gmra.mxu0 %v1094
    %v2637 = vpop.f32.mrf.mxu0
    %v2638 = vadd.f32 %v2625, %v2637
    %v2639 = vpop.f32.mrf.mxu0
    %2640 = vdwg.mxu0
    %2641 = vmatpush.bf16.msra.mxu0 %v2134
    %2642 = vmatpush.bf16.msra.mxu0 %v2126
    %2643 = vmatpush.bf16.msra.mxu0 %v2118
    %2644 = vmatpush.bf16.msra.mxu0 %v2110
    %2645 = vmatpush.bf16.msra.mxu0 %v2102
    %2646 = vmatpush.bf16.msra.mxu0 %v2094
    %2647 = vmatpush.bf16.msra.mxu0 %v2086
    %2648 = vmatpush.bf16.msra.mxu0 %v2078
    %2649 = vmatmul.bf16.gmra.mxu0 %v1095
    %v2650 = vpop.f32.mrf.mxu0
    %v2651 = vadd.f32 %v2638, %v2650
    %v2652 = vpop.f32.mrf.mxu0
    %2653 = vdwg.mxu0
    %2654 = vmatpush.bf16.msra.mxu0 %v1943
    %2655 = vmatpush.bf16.msra.mxu0 %v1935
    %2656 = vmatpush.bf16.msra.mxu0 %v1927
    %2657 = vmatpush.bf16.msra.mxu0 %v1919
    %2658 = vmatpush.bf16.msra.mxu0 %v1911
    %2659 = vmatpush.bf16.msra.mxu0 %v1903
    %2660 = vmatpush.bf16.msra.mxu0 %v1895
    %2661 = vmatpush.bf16.msra.mxu0 %v1887
    %2662 = vmatmul.bf16.gmra.mxu0 %v1092
    %v2663 = vpop.f32.mrf.mxu0
    %v2664 = vadd.f32 %v1103, %v2663
    %v2665 = vpop.f32.mrf.mxu0
    %2666 = vdwg.mxu0
    %2667 = vmatpush.bf16.msra.mxu0 %v2007
    %2668 = vmatpush.bf16.msra.mxu0 %v1999
    %2669 = vmatpush.bf16.msra.mxu0 %v1991
    %2670 = vmatpush.bf16.msra.mxu0 %v1983
    %2671 = vmatpush.bf16.msra.mxu0 %v1975
    %2672 = vmatpush.bf16.msra.mxu0 %v1967
    %2673 = vmatpush.bf16.msra.mxu0 %v1959
    %2674 = vmatpush.bf16.msra.mxu0 %v1951
    %2675 = vmatmul.bf16.gmra.mxu0 %v1093
    %v2676 = vpop.f32.mrf.mxu0
    %v2677 = vadd.f32 %v2664, %v2676
    %v2678 = vpop.f32.mrf.mxu0
    %2679 = vdwg.mxu0
    %2680 = vmatpush.bf16.msra.mxu0 %v2071
    %2681 = vmatpush.bf16.msra.mxu0 %v2063
    %2682 = vmatpush.bf16.msra.mxu0 %v2055
    %2683 = vmatpush.bf16.msra.mxu0 %v2047
    %2684 = vmatpush.bf16.msra.mxu0 %v2039
    %2685 = vmatpush.bf16.msra.mxu0 %v2031
    %2686 = vmatpush.bf16.msra.mxu0 %v2023
    %2687 = vmatpush.bf16.msra.mxu0 %v2015
    %2688 = vmatmul.bf16.gmra.mxu0 %v1094
    %v2689 = vpop.f32.mrf.mxu0
    %v2690 = vadd.f32 %v2677, %v2689
    %v2691 = vpop.f32.mrf.mxu0
    %2692 = vdwg.mxu0
    %2693 = vmatpush.bf16.msra.mxu0 %v2135
    %2694 = vmatpush.bf16.msra.mxu0 %v2127
    %2695 = vmatpush.bf16.msra.mxu0 %v2119
    %2696 = vmatpush.bf16.msra.mxu0 %v2111
    %2697 = vmatpush.bf16.msra.mxu0 %v2103
    %2698 = vmatpush.bf16.msra.mxu0 %v2095
    %2699 = vmatpush.bf16.msra.mxu0 %v2087
    %2700 = vmatpush.bf16.msra.mxu0 %v2079
    %2701 = vmatmul.bf16.gmra.mxu0 %v1095
    %v2702 = vpop.f32.mrf.mxu0
    %v2703 = vadd.f32 %v2690, %v2702
    %v2704 = vpop.f32.mrf.mxu0
    %2705 = vdwg.mxu0
    %2706 = vmatpush.bf16.msra.mxu0 %v1944
    %2707 = vmatpush.bf16.msra.mxu0 %v1936
    %2708 = vmatpush.bf16.msra.mxu0 %v1928
    %2709 = vmatpush.bf16.msra.mxu0 %v1920
    %2710 = vmatpush.bf16.msra.mxu0 %v1912
    %2711 = vmatpush.bf16.msra.mxu0 %v1904
    %2712 = vmatpush.bf16.msra.mxu0 %v1896
    %2713 = vmatpush.bf16.msra.mxu0 %v1888
    %2714 = vmatmul.bf16.gmra.mxu0 %v1092
    %v2715 = vpop.f32.mrf.mxu0
    %v2716 = vadd.f32 %v1104, %v2715
    %v2717 = vpop.f32.mrf.mxu0
    %2718 = vdwg.mxu0
    %2719 = vmatpush.bf16.msra.mxu0 %v2008
    %2720 = vmatpush.bf16.msra.mxu0 %v2000
    %2721 = vmatpush.bf16.msra.mxu0 %v1992
    %2722 = vmatpush.bf16.msra.mxu0 %v1984
    %2723 = vmatpush.bf16.msra.mxu0 %v1976
    %2724 = vmatpush.bf16.msra.mxu0 %v1968
    %2725 = vmatpush.bf16.msra.mxu0 %v1960
    %2726 = vmatpush.bf16.msra.mxu0 %v1952
    %2727 = vmatmul.bf16.gmra.mxu0 %v1093
    %v2728 = vpop.f32.mrf.mxu0
    %v2729 = vadd.f32 %v2716, %v2728
    %v2730 = vpop.f32.mrf.mxu0
    %2731 = vdwg.mxu0
    %2732 = vmatpush.bf16.msra.mxu0 %v2072
    %2733 = vmatpush.bf16.msra.mxu0 %v2064
    %2734 = vmatpush.bf16.msra.mxu0 %v2056
    %2735 = vmatpush.bf16.msra.mxu0 %v2048
    %2736 = vmatpush.bf16.msra.mxu0 %v2040
    %2737 = vmatpush.bf16.msra.mxu0 %v2032
    %2738 = vmatpush.bf16.msra.mxu0 %v2024
    %2739 = vmatpush.bf16.msra.mxu0 %v2016
    %2740 = vmatmul.bf16.gmra.mxu0 %v1094
    %v2741 = vpop.f32.mrf.mxu0
    %v2742 = vadd.f32 %v2729, %v2741
    %v2743 = vpop.f32.mrf.mxu0
    %2744 = vdwg.mxu0
    %2745 = vmatpush.bf16.msra.mxu0 %v2136
    %2746 = vmatpush.bf16.msra.mxu0 %v2128
    %2747 = vmatpush.bf16.msra.mxu0 %v2120
    %2748 = vmatpush.bf16.msra.mxu0 %v2112
    %2749 = vmatpush.bf16.msra.mxu0 %v2104
    %2750 = vmatpush.bf16.msra.mxu0 %v2096
    %2751 = vmatpush.bf16.msra.mxu0 %v2088
    %2752 = vmatpush.bf16.msra.mxu0 %v2080
    %2753 = vmatmul.bf16.gmra.mxu0 %v1095
    %v2754 = vpop.f32.mrf.mxu0
    %v2755 = vadd.f32 %v2742, %v2754
    %v2756 = vpop.f32.mrf.mxu0
    %2757 = vdwg.mxu0
    %2758 = vmatpush.bf16.msra.mxu0 %v1945
    %2759 = vmatpush.bf16.msra.mxu0 %v1937
    %2760 = vmatpush.bf16.msra.mxu0 %v1929
    %2761 = vmatpush.bf16.msra.mxu0 %v1921
    %2762 = vmatpush.bf16.msra.mxu0 %v1913
    %2763 = vmatpush.bf16.msra.mxu0 %v1905
    %2764 = vmatpush.bf16.msra.mxu0 %v1897
    %2765 = vmatpush.bf16.msra.mxu0 %v1889
    %2766 = vmatmul.bf16.gmra.mxu0 %v1092
    %v2767 = vpop.f32.mrf.mxu0
    %v2768 = vadd.f32 %v1105, %v2767
    %v2769 = vpop.f32.mrf.mxu0
    %2770 = vdwg.mxu0
    %2771 = vmatpush.bf16.msra.mxu0 %v2009
    %2772 = vmatpush.bf16.msra.mxu0 %v2001
    %2773 = vmatpush.bf16.msra.mxu0 %v1993
    %2774 = vmatpush.bf16.msra.mxu0 %v1985
    %2775 = vmatpush.bf16.msra.mxu0 %v1977
    %2776 = vmatpush.bf16.msra.mxu0 %v1969
    %2777 = vmatpush.bf16.msra.mxu0 %v1961
    %2778 = vmatpush.bf16.msra.mxu0 %v1953
    %2779 = vmatmul.bf16.gmra.mxu0 %v1093
    %v2780 = vpop.f32.mrf.mxu0
    %v2781 = vadd.f32 %v2768, %v2780
    %v2782 = vpop.f32.mrf.mxu0
    %2783 = vdwg.mxu0
    %2784 = vmatpush.bf16.msra.mxu0 %v2073
    %2785 = vmatpush.bf16.msra.mxu0 %v2065
    %2786 = vmatpush.bf16.msra.mxu0 %v2057
    %2787 = vmatpush.bf16.msra.mxu0 %v2049
    %2788 = vmatpush.bf16.msra.mxu0 %v2041
    %2789 = vmatpush.bf16.msra.mxu0 %v2033
    %2790 = vmatpush.bf16.msra.mxu0 %v2025
    %2791 = vmatpush.bf16.msra.mxu0 %v2017
    %2792 = vmatmul.bf16.gmra.mxu0 %v1094
    %v2793 = vpop.f32.mrf.mxu0
    %v2794 = vadd.f32 %v2781, %v2793
    %v2795 = vpop.f32.mrf.mxu0
    %2796 = vdwg.mxu0
    %2797 = vmatpush.bf16.msra.mxu0 %v2137
    %2798 = vmatpush.bf16.msra.mxu0 %v2129
    %2799 = vmatpush.bf16.msra.mxu0 %v2121
    %2800 = vmatpush.bf16.msra.mxu0 %v2113
    %2801 = vmatpush.bf16.msra.mxu0 %v2105
    %2802 = vmatpush.bf16.msra.mxu0 %v2097
    %2803 = vmatpush.bf16.msra.mxu0 %v2089
    %2804 = vmatpush.bf16.msra.mxu0 %v2081
    %2805 = vmatmul.bf16.gmra.mxu0 %v1095
    %v2806 = vpop.f32.mrf.mxu0
    %v2807 = vadd.f32 %v2794, %v2806
    %v2808 = vpop.f32.mrf.mxu0
    %2809 = vdwg.mxu0
    %v2810 = vmax.f32 %v2443, 0.0
    %v2811 = vmax.f32 %v2495, 0.0
    %v2812 = vmax.f32 %v2547, 0.0
    %v2813 = vmax.f32 %v2599, 0.0
    %v2814 = vmax.f32 %v2651, 0.0
    %v2815 = vmax.f32 %v2703, 0.0
    %v2816 = vmax.f32 %v2755, 0.0
    %v2817 = vmax.f32 %v2807, 0.0
    %v2818 = vld [vmem:[#allocation14] sm:$0xff]
    %v2819 = vld [vmem:[#allocation14 + $0x8] sm:$0xff]
    %v2820 = vld [vmem:[#allocation14 + $0x10] sm:$0xff]
    %v2821 = vld [vmem:[#allocation14 + $0x18] sm:$0xff]
    %v2822 = vld [vmem:[#allocation14 + $0x20] sm:$0xff]
    %v2823 = vld [vmem:[#allocation14 + $0x28] sm:$0xff]
    %v2824 = vld [vmem:[#allocation14 + $0x30] sm:$0xff]
    %v2825 = vld [vmem:[#allocation14 + $0x38] sm:$0xff]
    %v2826 = vld [vmem:[#allocation14 + $0x40] sm:$0xff]
    %v2827 = vld [vmem:[#allocation14 + $0x48] sm:$0xff]
    %v2828 = vld [vmem:[#allocation14 + $0x50] sm:$0xff]
    %v2829 = vld [vmem:[#allocation14 + $0x58] sm:$0xff]
    %v2830 = vld [vmem:[#allocation14 + $0x60] sm:$0xff]
    %v2831 = vld [vmem:[#allocation14 + $0x68] sm:$0xff]
    %v2832 = vld [vmem:[#allocation14 + $0x70] sm:$0xff]
    %v2833 = vld [vmem:[#allocation14 + $0x78] sm:$0xff]
    %v2834 = vld [vmem:[#allocation14 + $0x80] sm:$0xff]
    %v2835 = vld [vmem:[#allocation14 + $0x88] sm:$0xff]
    %v2836 = vld [vmem:[#allocation14 + $0x90] sm:$0xff]
    %v2837 = vld [vmem:[#allocation14 + $0x98] sm:$0xff]
    %v2838 = vld [vmem:[#allocation14 + $0xa0] sm:$0xff]
    %v2839 = vld [vmem:[#allocation14 + $0xa8] sm:$0xff]
    %v2840 = vld [vmem:[#allocation14 + $0xb0] sm:$0xff]
    %v2841 = vld [vmem:[#allocation14 + $0xb8] sm:$0xff]
    %v2842 = vld [vmem:[#allocation14 + $0xc0] sm:$0xff]
    %v2843 = vld [vmem:[#allocation14 + $0xc8] sm:$0xff]
    %v2844 = vld [vmem:[#allocation14 + $0xd0] sm:$0xff]
    %v2845 = vld [vmem:[#allocation14 + $0xd8] sm:$0xff]
    %v2846 = vld [vmem:[#allocation14 + $0xe0] sm:$0xff]
    %v2847 = vld [vmem:[#allocation14 + $0xe8] sm:$0xff]
    %v2848 = vld [vmem:[#allocation14 + $0xf0] sm:$0xff]
    %v2849 = vld [vmem:[#allocation14 + $0xf8] sm:$0xff]
    %v2850 = vld [vmem:[#allocation14 + $0x100] sm:$0xff]
    %v2851 = vld [vmem:[#allocation14 + $0x108] sm:$0xff]
    %v2852 = vld [vmem:[#allocation14 + $0x110] sm:$0xff]
    %v2853 = vld [vmem:[#allocation14 + $0x118] sm:$0xff]
    %v2854 = vld [vmem:[#allocation14 + $0x120] sm:$0xff]
    %v2855 = vld [vmem:[#allocation14 + $0x128] sm:$0xff]
    %v2856 = vld [vmem:[#allocation14 + $0x130] sm:$0xff]
    %v2857 = vld [vmem:[#allocation14 + $0x138] sm:$0xff]
    %v2858 = vld [vmem:[#allocation14 + $0x140] sm:$0xff]
    %v2859 = vld [vmem:[#allocation14 + $0x148] sm:$0xff]
    %v2860 = vld [vmem:[#allocation14 + $0x150] sm:$0xff]
    %v2861 = vld [vmem:[#allocation14 + $0x158] sm:$0xff]
    %v2862 = vld [vmem:[#allocation14 + $0x160] sm:$0xff]
    %v2863 = vld [vmem:[#allocation14 + $0x168] sm:$0xff]
    %v2864 = vld [vmem:[#allocation14 + $0x170] sm:$0xff]
    %v2865 = vld [vmem:[#allocation14 + $0x178] sm:$0xff]
    %v2866 = vld [vmem:[#allocation14 + $0x180] sm:$0xff]
    %v2867 = vld [vmem:[#allocation14 + $0x188] sm:$0xff]
    %v2868 = vld [vmem:[#allocation14 + $0x190] sm:$0xff]
    %v2869 = vld [vmem:[#allocation14 + $0x198] sm:$0xff]
    %v2870 = vld [vmem:[#allocation14 + $0x1a0] sm:$0xff]
    %v2871 = vld [vmem:[#allocation14 + $0x1a8] sm:$0xff]
    %v2872 = vld [vmem:[#allocation14 + $0x1b0] sm:$0xff]
    %v2873 = vld [vmem:[#allocation14 + $0x1b8] sm:$0xff]
    %v2874 = vld [vmem:[#allocation14 + $0x1c0] sm:$0xff]
    %v2875 = vld [vmem:[#allocation14 + $0x1c8] sm:$0xff]
    %v2876 = vld [vmem:[#allocation14 + $0x1d0] sm:$0xff]
    %v2877 = vld [vmem:[#allocation14 + $0x1d8] sm:$0xff]
    %v2878 = vld [vmem:[#allocation14 + $0x1e0] sm:$0xff]
    %v2879 = vld [vmem:[#allocation14 + $0x1e8] sm:$0xff]
    %v2880 = vld [vmem:[#allocation14 + $0x1f0] sm:$0xff]
    %v2881 = vld [vmem:[#allocation14 + $0x1f8] sm:$0xff]
    %v2882 = vld [vmem:[#allocation14 + $0x200] sm:$0xff]
    %v2883 = vld [vmem:[#allocation14 + $0x208] sm:$0xff]
    %v2884 = vld [vmem:[#allocation14 + $0x210] sm:$0xff]
    %v2885 = vld [vmem:[#allocation14 + $0x218] sm:$0xff]
    %v2886 = vld [vmem:[#allocation14 + $0x220] sm:$0xff]
    %v2887 = vld [vmem:[#allocation14 + $0x228] sm:$0xff]
    %v2888 = vld [vmem:[#allocation14 + $0x230] sm:$0xff]
    %v2889 = vld [vmem:[#allocation14 + $0x238] sm:$0xff]
    %v2890 = vld [vmem:[#allocation14 + $0x240] sm:$0xff]
    %v2891 = vld [vmem:[#allocation14 + $0x248] sm:$0xff]
    %v2892 = vld [vmem:[#allocation14 + $0x250] sm:$0xff]
    %v2893 = vld [vmem:[#allocation14 + $0x258] sm:$0xff]
    %v2894 = vld [vmem:[#allocation14 + $0x260] sm:$0xff]
    %v2895 = vld [vmem:[#allocation14 + $0x268] sm:$0xff]
    %v2896 = vld [vmem:[#allocation14 + $0x270] sm:$0xff]
    %v2897 = vld [vmem:[#allocation14 + $0x278] sm:$0xff]
    %v2898 = vld [vmem:[#allocation14 + $0x280] sm:$0xff]
    %v2899 = vld [vmem:[#allocation14 + $0x288] sm:$0xff]
    %v2900 = vld [vmem:[#allocation14 + $0x290] sm:$0xff]
    %v2901 = vld [vmem:[#allocation14 + $0x298] sm:$0xff]
    %v2902 = vld [vmem:[#allocation14 + $0x2a0] sm:$0xff]
    %v2903 = vld [vmem:[#allocation14 + $0x2a8] sm:$0xff]
    %v2904 = vld [vmem:[#allocation14 + $0x2b0] sm:$0xff]
    %v2905 = vld [vmem:[#allocation14 + $0x2b8] sm:$0xff]
    %v2906 = vld [vmem:[#allocation14 + $0x2c0] sm:$0xff]
    %v2907 = vld [vmem:[#allocation14 + $0x2c8] sm:$0xff]
    %v2908 = vld [vmem:[#allocation14 + $0x2d0] sm:$0xff]
    %v2909 = vld [vmem:[#allocation14 + $0x2d8] sm:$0xff]
    %v2910 = vld [vmem:[#allocation14 + $0x2e0] sm:$0xff]
    %v2911 = vld [vmem:[#allocation14 + $0x2e8] sm:$0xff]
    %v2912 = vld [vmem:[#allocation14 + $0x2f0] sm:$0xff]
    %v2913 = vld [vmem:[#allocation14 + $0x2f8] sm:$0xff]
    %v2914 = vld [vmem:[#allocation14 + $0x300] sm:$0xff]
    %v2915 = vld [vmem:[#allocation14 + $0x308] sm:$0xff]
    %v2916 = vld [vmem:[#allocation14 + $0x310] sm:$0xff]
    %v2917 = vld [vmem:[#allocation14 + $0x318] sm:$0xff]
    %v2918 = vld [vmem:[#allocation14 + $0x320] sm:$0xff]
    %v2919 = vld [vmem:[#allocation14 + $0x328] sm:$0xff]
    %v2920 = vld [vmem:[#allocation14 + $0x330] sm:$0xff]
    %v2921 = vld [vmem:[#allocation14 + $0x338] sm:$0xff]
    %v2922 = vld [vmem:[#allocation14 + $0x340] sm:$0xff]
    %v2923 = vld [vmem:[#allocation14 + $0x348] sm:$0xff]
    %v2924 = vld [vmem:[#allocation14 + $0x350] sm:$0xff]
    %v2925 = vld [vmem:[#allocation14 + $0x358] sm:$0xff]
    %v2926 = vld [vmem:[#allocation14 + $0x360] sm:$0xff]
    %v2927 = vld [vmem:[#allocation14 + $0x368] sm:$0xff]
    %v2928 = vld [vmem:[#allocation14 + $0x370] sm:$0xff]
    %v2929 = vld [vmem:[#allocation14 + $0x378] sm:$0xff]
    %v2930 = vld [vmem:[#allocation14 + $0x380] sm:$0xff]
    %v2931 = vld [vmem:[#allocation14 + $0x388] sm:$0xff]
    %v2932 = vld [vmem:[#allocation14 + $0x390] sm:$0xff]
    %v2933 = vld [vmem:[#allocation14 + $0x398] sm:$0xff]
    %v2934 = vld [vmem:[#allocation14 + $0x3a0] sm:$0xff]
    %v2935 = vld [vmem:[#allocation14 + $0x3a8] sm:$0xff]
    %v2936 = vld [vmem:[#allocation14 + $0x3b0] sm:$0xff]
    %v2937 = vld [vmem:[#allocation14 + $0x3b8] sm:$0xff]
    %v2938 = vld [vmem:[#allocation14 + $0x3c0] sm:$0xff]
    %v2939 = vld [vmem:[#allocation14 + $0x3c8] sm:$0xff]
    %v2940 = vld [vmem:[#allocation14 + $0x3d0] sm:$0xff]
    %v2941 = vld [vmem:[#allocation14 + $0x3d8] sm:$0xff]
    %v2942 = vld [vmem:[#allocation14 + $0x3e0] sm:$0xff]
    %v2943 = vld [vmem:[#allocation14 + $0x3e8] sm:$0xff]
    %v2944 = vld [vmem:[#allocation14 + $0x3f0] sm:$0xff]
    %v2945 = vld [vmem:[#allocation14 + $0x3f8] sm:$0xff]
    %v2946 = vld [vmem:[#allocation14 + $0x400] sm:$0xff]
    %v2947 = vld [vmem:[#allocation14 + $0x408] sm:$0xff]
    %v2948 = vld [vmem:[#allocation14 + $0x410] sm:$0xff]
    %v2949 = vld [vmem:[#allocation14 + $0x418] sm:$0xff]
    %v2950 = vld [vmem:[#allocation14 + $0x420] sm:$0xff]
    %v2951 = vld [vmem:[#allocation14 + $0x428] sm:$0xff]
    %v2952 = vld [vmem:[#allocation14 + $0x430] sm:$0xff]
    %v2953 = vld [vmem:[#allocation14 + $0x438] sm:$0xff]
    %v2954 = vld [vmem:[#allocation14 + $0x440] sm:$0xff]
    %v2955 = vld [vmem:[#allocation14 + $0x448] sm:$0xff]
    %v2956 = vld [vmem:[#allocation14 + $0x450] sm:$0xff]
    %v2957 = vld [vmem:[#allocation14 + $0x458] sm:$0xff]
    %v2958 = vld [vmem:[#allocation14 + $0x460] sm:$0xff]
    %v2959 = vld [vmem:[#allocation14 + $0x468] sm:$0xff]
    %v2960 = vld [vmem:[#allocation14 + $0x470] sm:$0xff]
    %v2961 = vld [vmem:[#allocation14 + $0x478] sm:$0xff]
    %v2962 = vld [vmem:[#allocation14 + $0x480] sm:$0xff]
    %v2963 = vld [vmem:[#allocation14 + $0x488] sm:$0xff]
    %v2964 = vld [vmem:[#allocation14 + $0x490] sm:$0xff]
    %v2965 = vld [vmem:[#allocation14 + $0x498] sm:$0xff]
    %v2966 = vld [vmem:[#allocation14 + $0x4a0] sm:$0xff]
    %v2967 = vld [vmem:[#allocation14 + $0x4a8] sm:$0xff]
    %v2968 = vld [vmem:[#allocation14 + $0x4b0] sm:$0xff]
    %v2969 = vld [vmem:[#allocation14 + $0x4b8] sm:$0xff]
    %v2970 = vld [vmem:[#allocation14 + $0x4c0] sm:$0xff]
    %v2971 = vld [vmem:[#allocation14 + $0x4c8] sm:$0xff]
    %v2972 = vld [vmem:[#allocation14 + $0x4d0] sm:$0xff]
    %v2973 = vld [vmem:[#allocation14 + $0x4d8] sm:$0xff]
    %v2974 = vld [vmem:[#allocation14 + $0x4e0] sm:$0xff]
    %v2975 = vld [vmem:[#allocation14 + $0x4e8] sm:$0xff]
    %v2976 = vld [vmem:[#allocation14 + $0x4f0] sm:$0xff]
    %v2977 = vld [vmem:[#allocation14 + $0x4f8] sm:$0xff]
    %v2978 = vld [vmem:[#allocation14 + $0x500] sm:$0xff]
    %v2979 = vld [vmem:[#allocation14 + $0x508] sm:$0xff]
    %v2980 = vld [vmem:[#allocation14 + $0x510] sm:$0xff]
    %v2981 = vld [vmem:[#allocation14 + $0x518] sm:$0xff]
    %v2982 = vld [vmem:[#allocation14 + $0x520] sm:$0xff]
    %v2983 = vld [vmem:[#allocation14 + $0x528] sm:$0xff]
    %v2984 = vld [vmem:[#allocation14 + $0x530] sm:$0xff]
    %v2985 = vld [vmem:[#allocation14 + $0x538] sm:$0xff]
    %v2986 = vld [vmem:[#allocation14 + $0x540] sm:$0xff]
    %v2987 = vld [vmem:[#allocation14 + $0x548] sm:$0xff]
    %v2988 = vld [vmem:[#allocation14 + $0x550] sm:$0xff]
    %v2989 = vld [vmem:[#allocation14 + $0x558] sm:$0xff]
    %v2990 = vld [vmem:[#allocation14 + $0x560] sm:$0xff]
    %v2991 = vld [vmem:[#allocation14 + $0x568] sm:$0xff]
    %v2992 = vld [vmem:[#allocation14 + $0x570] sm:$0xff]
    %v2993 = vld [vmem:[#allocation14 + $0x578] sm:$0xff]
    %v2994 = vld [vmem:[#allocation14 + $0x580] sm:$0xff]
    %v2995 = vld [vmem:[#allocation14 + $0x588] sm:$0xff]
    %v2996 = vld [vmem:[#allocation14 + $0x590] sm:$0xff]
    %v2997 = vld [vmem:[#allocation14 + $0x598] sm:$0xff]
    %v2998 = vld [vmem:[#allocation14 + $0x5a0] sm:$0xff]
    %v2999 = vld [vmem:[#allocation14 + $0x5a8] sm:$0xff]
    %v3000 = vld [vmem:[#allocation14 + $0x5b0] sm:$0xff]
    %v3001 = vld [vmem:[#allocation14 + $0x5b8] sm:$0xff]
    %v3002 = vld [vmem:[#allocation14 + $0x5c0] sm:$0xff]
    %v3003 = vld [vmem:[#allocation14 + $0x5c8] sm:$0xff]
    %v3004 = vld [vmem:[#allocation14 + $0x5d0] sm:$0xff]
    %v3005 = vld [vmem:[#allocation14 + $0x5d8] sm:$0xff]
    %v3006 = vld [vmem:[#allocation14 + $0x5e0] sm:$0xff]
    %v3007 = vld [vmem:[#allocation14 + $0x5e8] sm:$0xff]
    %v3008 = vld [vmem:[#allocation14 + $0x5f0] sm:$0xff]
    %v3009 = vld [vmem:[#allocation14 + $0x5f8] sm:$0xff]
    %v3010 = vld [vmem:[#allocation14 + $0x600] sm:$0xff]
    %v3011 = vld [vmem:[#allocation14 + $0x608] sm:$0xff]
    %v3012 = vld [vmem:[#allocation14 + $0x610] sm:$0xff]
    %v3013 = vld [vmem:[#allocation14 + $0x618] sm:$0xff]
    %v3014 = vld [vmem:[#allocation14 + $0x620] sm:$0xff]
    %v3015 = vld [vmem:[#allocation14 + $0x628] sm:$0xff]
    %v3016 = vld [vmem:[#allocation14 + $0x630] sm:$0xff]
    %v3017 = vld [vmem:[#allocation14 + $0x638] sm:$0xff]
    %v3018 = vld [vmem:[#allocation14 + $0x640] sm:$0xff]
    %v3019 = vld [vmem:[#allocation14 + $0x648] sm:$0xff]
    %v3020 = vld [vmem:[#allocation14 + $0x650] sm:$0xff]
    %v3021 = vld [vmem:[#allocation14 + $0x658] sm:$0xff]
    %v3022 = vld [vmem:[#allocation14 + $0x660] sm:$0xff]
    %v3023 = vld [vmem:[#allocation14 + $0x668] sm:$0xff]
    %v3024 = vld [vmem:[#allocation14 + $0x670] sm:$0xff]
    %v3025 = vld [vmem:[#allocation14 + $0x678] sm:$0xff]
    %v3026 = vld [vmem:[#allocation14 + $0x680] sm:$0xff]
    %v3027 = vld [vmem:[#allocation14 + $0x688] sm:$0xff]
    %v3028 = vld [vmem:[#allocation14 + $0x690] sm:$0xff]
    %v3029 = vld [vmem:[#allocation14 + $0x698] sm:$0xff]
    %v3030 = vld [vmem:[#allocation14 + $0x6a0] sm:$0xff]
    %v3031 = vld [vmem:[#allocation14 + $0x6a8] sm:$0xff]
    %v3032 = vld [vmem:[#allocation14 + $0x6b0] sm:$0xff]
    %v3033 = vld [vmem:[#allocation14 + $0x6b8] sm:$0xff]
    %v3034 = vld [vmem:[#allocation14 + $0x6c0] sm:$0xff]
    %v3035 = vld [vmem:[#allocation14 + $0x6c8] sm:$0xff]
    %v3036 = vld [vmem:[#allocation14 + $0x6d0] sm:$0xff]
    %v3037 = vld [vmem:[#allocation14 + $0x6d8] sm:$0xff]
    %v3038 = vld [vmem:[#allocation14 + $0x6e0] sm:$0xff]
    %v3039 = vld [vmem:[#allocation14 + $0x6e8] sm:$0xff]
    %v3040 = vld [vmem:[#allocation14 + $0x6f0] sm:$0xff]
    %v3041 = vld [vmem:[#allocation14 + $0x6f8] sm:$0xff]
    %v3042 = vld [vmem:[#allocation14 + $0x700] sm:$0xff]
    %v3043 = vld [vmem:[#allocation14 + $0x708] sm:$0xff]
    %v3044 = vld [vmem:[#allocation14 + $0x710] sm:$0xff]
    %v3045 = vld [vmem:[#allocation14 + $0x718] sm:$0xff]
    %v3046 = vld [vmem:[#allocation14 + $0x720] sm:$0xff]
    %v3047 = vld [vmem:[#allocation14 + $0x728] sm:$0xff]
    %v3048 = vld [vmem:[#allocation14 + $0x730] sm:$0xff]
    %v3049 = vld [vmem:[#allocation14 + $0x738] sm:$0xff]
    %v3050 = vld [vmem:[#allocation14 + $0x740] sm:$0xff]
    %v3051 = vld [vmem:[#allocation14 + $0x748] sm:$0xff]
    %v3052 = vld [vmem:[#allocation14 + $0x750] sm:$0xff]
    %v3053 = vld [vmem:[#allocation14 + $0x758] sm:$0xff]
    %v3054 = vld [vmem:[#allocation14 + $0x760] sm:$0xff]
    %v3055 = vld [vmem:[#allocation14 + $0x768] sm:$0xff]
    %v3056 = vld [vmem:[#allocation14 + $0x770] sm:$0xff]
    %v3057 = vld [vmem:[#allocation14 + $0x778] sm:$0xff]
    %v3058 = vld [vmem:[#allocation14 + $0x780] sm:$0xff]
    %v3059 = vld [vmem:[#allocation14 + $0x788] sm:$0xff]
    %v3060 = vld [vmem:[#allocation14 + $0x790] sm:$0xff]
    %v3061 = vld [vmem:[#allocation14 + $0x798] sm:$0xff]
    %v3062 = vld [vmem:[#allocation14 + $0x7a0] sm:$0xff]
    %v3063 = vld [vmem:[#allocation14 + $0x7a8] sm:$0xff]
    %v3064 = vld [vmem:[#allocation14 + $0x7b0] sm:$0xff]
    %v3065 = vld [vmem:[#allocation14 + $0x7b8] sm:$0xff]
    %v3066 = vld [vmem:[#allocation14 + $0x7c0] sm:$0xff]
    %v3067 = vld [vmem:[#allocation14 + $0x7c8] sm:$0xff]
    %v3068 = vld [vmem:[#allocation14 + $0x7d0] sm:$0xff]
    %v3069 = vld [vmem:[#allocation14 + $0x7d8] sm:$0xff]
    %v3070 = vld [vmem:[#allocation14 + $0x7e0] sm:$0xff]
    %v3071 = vld [vmem:[#allocation14 + $0x7e8] sm:$0xff]
    %v3072 = vld [vmem:[#allocation14 + $0x7f0] sm:$0xff]
    %v3073 = vld [vmem:[#allocation14 + $0x7f8] sm:$0xff]
    %v3074 = vld [vmem:[#allocation14 + $0x800] sm:$0xff]
    %v3075 = vld [vmem:[#allocation14 + $0x808] sm:$0xff]
    %v3076 = vld [vmem:[#allocation14 + $0x810] sm:$0xff]
    %v3077 = vld [vmem:[#allocation14 + $0x818] sm:$0xff]
    %v3078 = vld [vmem:[#allocation14 + $0x820] sm:$0xff]
    %v3079 = vld [vmem:[#allocation14 + $0x828] sm:$0xff]
    %v3080 = vld [vmem:[#allocation14 + $0x830] sm:$0xff]
    %v3081 = vld [vmem:[#allocation14 + $0x838] sm:$0xff]
    %v3082 = vld [vmem:[#allocation14 + $0x840] sm:$0xff]
    %v3083 = vld [vmem:[#allocation14 + $0x848] sm:$0xff]
    %v3084 = vld [vmem:[#allocation14 + $0x850] sm:$0xff]
    %v3085 = vld [vmem:[#allocation14 + $0x858] sm:$0xff]
    %v3086 = vld [vmem:[#allocation14 + $0x860] sm:$0xff]
    %v3087 = vld [vmem:[#allocation14 + $0x868] sm:$0xff]
    %v3088 = vld [vmem:[#allocation14 + $0x870] sm:$0xff]
    %v3089 = vld [vmem:[#allocation14 + $0x878] sm:$0xff]
    %v3090 = vld [vmem:[#allocation14 + $0x880] sm:$0xff]
    %v3091 = vld [vmem:[#allocation14 + $0x888] sm:$0xff]
    %v3092 = vld [vmem:[#allocation14 + $0x890] sm:$0xff]
    %v3093 = vld [vmem:[#allocation14 + $0x898] sm:$0xff]
    %v3094 = vld [vmem:[#allocation14 + $0x8a0] sm:$0xff]
    %v3095 = vld [vmem:[#allocation14 + $0x8a8] sm:$0xff]
    %v3096 = vld [vmem:[#allocation14 + $0x8b0] sm:$0xff]
    %v3097 = vld [vmem:[#allocation14 + $0x8b8] sm:$0xff]
    %v3098 = vld [vmem:[#allocation14 + $0x8c0] sm:$0xff]
    %v3099 = vld [vmem:[#allocation14 + $0x8c8] sm:$0xff]
    %v3100 = vld [vmem:[#allocation14 + $0x8d0] sm:$0xff]
    %v3101 = vld [vmem:[#allocation14 + $0x8d8] sm:$0xff]
    %v3102 = vld [vmem:[#allocation14 + $0x8e0] sm:$0xff]
    %v3103 = vld [vmem:[#allocation14 + $0x8e8] sm:$0xff]
    %v3104 = vld [vmem:[#allocation14 + $0x8f0] sm:$0xff]
    %v3105 = vld [vmem:[#allocation14 + $0x8f8] sm:$0xff]
    %v3106 = vld [vmem:[#allocation14 + $0x900] sm:$0xff]
    %v3107 = vld [vmem:[#allocation14 + $0x908] sm:$0xff]
    %v3108 = vld [vmem:[#allocation14 + $0x910] sm:$0xff]
    %v3109 = vld [vmem:[#allocation14 + $0x918] sm:$0xff]
    %v3110 = vld [vmem:[#allocation14 + $0x920] sm:$0xff]
    %v3111 = vld [vmem:[#allocation14 + $0x928] sm:$0xff]
    %v3112 = vld [vmem:[#allocation14 + $0x930] sm:$0xff]
    %v3113 = vld [vmem:[#allocation14 + $0x938] sm:$0xff]
    %v3114 = vld [vmem:[#allocation14 + $0x940] sm:$0xff]
    %v3115 = vld [vmem:[#allocation14 + $0x948] sm:$0xff]
    %v3116 = vld [vmem:[#allocation14 + $0x950] sm:$0xff]
    %v3117 = vld [vmem:[#allocation14 + $0x958] sm:$0xff]
    %v3118 = vld [vmem:[#allocation14 + $0x960] sm:$0xff]
    %v3119 = vld [vmem:[#allocation14 + $0x968] sm:$0xff]
    %v3120 = vld [vmem:[#allocation14 + $0x970] sm:$0xff]
    %v3121 = vld [vmem:[#allocation14 + $0x978] sm:$0xff]
    %v3122 = vld [vmem:[#allocation14 + $0x980] sm:$0xff]
    %v3123 = vld [vmem:[#allocation14 + $0x988] sm:$0xff]
    %v3124 = vld [vmem:[#allocation14 + $0x990] sm:$0xff]
    %v3125 = vld [vmem:[#allocation14 + $0x998] sm:$0xff]
    %v3126 = vld [vmem:[#allocation14 + $0x9a0] sm:$0xff]
    %v3127 = vld [vmem:[#allocation14 + $0x9a8] sm:$0xff]
    %v3128 = vld [vmem:[#allocation14 + $0x9b0] sm:$0xff]
    %v3129 = vld [vmem:[#allocation14 + $0x9b8] sm:$0xff]
    %v3130 = vld [vmem:[#allocation14 + $0x9c0] sm:$0xff]
    %v3131 = vld [vmem:[#allocation14 + $0x9c8] sm:$0xff]
    %v3132 = vld [vmem:[#allocation14 + $0x9d0] sm:$0xff]
    %v3133 = vld [vmem:[#allocation14 + $0x9d8] sm:$0xff]
    %v3134 = vld [vmem:[#allocation14 + $0x9e0] sm:$0xff]
    %v3135 = vld [vmem:[#allocation14 + $0x9e8] sm:$0xff]
    %v3136 = vld [vmem:[#allocation14 + $0x9f0] sm:$0xff]
    %v3137 = vld [vmem:[#allocation14 + $0x9f8] sm:$0xff]
    %v3138 = vld [vmem:[#allocation14 + $0xa00] sm:$0xff]
    %v3139 = vld [vmem:[#allocation14 + $0xa08] sm:$0xff]
    %v3140 = vld [vmem:[#allocation14 + $0xa10] sm:$0xff]
    %v3141 = vld [vmem:[#allocation14 + $0xa18] sm:$0xff]
    %v3142 = vld [vmem:[#allocation14 + $0xa20] sm:$0xff]
    %v3143 = vld [vmem:[#allocation14 + $0xa28] sm:$0xff]
    %v3144 = vld [vmem:[#allocation14 + $0xa30] sm:$0xff]
    %v3145 = vld [vmem:[#allocation14 + $0xa38] sm:$0xff]
    %v3146 = vld [vmem:[#allocation14 + $0xa40] sm:$0xff]
    %v3147 = vld [vmem:[#allocation14 + $0xa48] sm:$0xff]
    %v3148 = vld [vmem:[#allocation14 + $0xa50] sm:$0xff]
    %v3149 = vld [vmem:[#allocation14 + $0xa58] sm:$0xff]
    %v3150 = vld [vmem:[#allocation14 + $0xa60] sm:$0xff]
    %v3151 = vld [vmem:[#allocation14 + $0xa68] sm:$0xff]
    %v3152 = vld [vmem:[#allocation14 + $0xa70] sm:$0xff]
    %v3153 = vld [vmem:[#allocation14 + $0xa78] sm:$0xff]
    %v3154 = vld [vmem:[#allocation14 + $0xa80] sm:$0xff]
    %v3155 = vld [vmem:[#allocation14 + $0xa88] sm:$0xff]
    %v3156 = vld [vmem:[#allocation14 + $0xa90] sm:$0xff]
    %v3157 = vld [vmem:[#allocation14 + $0xa98] sm:$0xff]
    %v3158 = vld [vmem:[#allocation14 + $0xaa0] sm:$0xff]
    %v3159 = vld [vmem:[#allocation14 + $0xaa8] sm:$0xff]
    %v3160 = vld [vmem:[#allocation14 + $0xab0] sm:$0xff]
    %v3161 = vld [vmem:[#allocation14 + $0xab8] sm:$0xff]
    %v3162 = vld [vmem:[#allocation14 + $0xac0] sm:$0xff]
    %v3163 = vld [vmem:[#allocation14 + $0xac8] sm:$0xff]
    %v3164 = vld [vmem:[#allocation14 + $0xad0] sm:$0xff]
    %v3165 = vld [vmem:[#allocation14 + $0xad8] sm:$0xff]
    %v3166 = vld [vmem:[#allocation14 + $0xae0] sm:$0xff]
    %v3167 = vld [vmem:[#allocation14 + $0xae8] sm:$0xff]
    %v3168 = vld [vmem:[#allocation14 + $0xaf0] sm:$0xff]
    %v3169 = vld [vmem:[#allocation14 + $0xaf8] sm:$0xff]
    %v3170 = vld [vmem:[#allocation14 + $0xb00] sm:$0xff]
    %v3171 = vld [vmem:[#allocation14 + $0xb08] sm:$0xff]
    %v3172 = vld [vmem:[#allocation14 + $0xb10] sm:$0xff]
    %v3173 = vld [vmem:[#allocation14 + $0xb18] sm:$0xff]
    %v3174 = vld [vmem:[#allocation14 + $0xb20] sm:$0xff]
    %v3175 = vld [vmem:[#allocation14 + $0xb28] sm:$0xff]
    %v3176 = vld [vmem:[#allocation14 + $0xb30] sm:$0xff]
    %v3177 = vld [vmem:[#allocation14 + $0xb38] sm:$0xff]
    %v3178 = vld [vmem:[#allocation14 + $0xb40] sm:$0xff]
    %v3179 = vld [vmem:[#allocation14 + $0xb48] sm:$0xff]
    %v3180 = vld [vmem:[#allocation14 + $0xb50] sm:$0xff]
    %v3181 = vld [vmem:[#allocation14 + $0xb58] sm:$0xff]
    %v3182 = vld [vmem:[#allocation14 + $0xb60] sm:$0xff]
    %v3183 = vld [vmem:[#allocation14 + $0xb68] sm:$0xff]
    %v3184 = vld [vmem:[#allocation14 + $0xb70] sm:$0xff]
    %v3185 = vld [vmem:[#allocation14 + $0xb78] sm:$0xff]
    %v3186 = vld [vmem:[#allocation14 + $0xb80] sm:$0xff]
    %v3187 = vld [vmem:[#allocation14 + $0xb88] sm:$0xff]
    %v3188 = vld [vmem:[#allocation14 + $0xb90] sm:$0xff]
    %v3189 = vld [vmem:[#allocation14 + $0xb98] sm:$0xff]
    %v3190 = vld [vmem:[#allocation14 + $0xba0] sm:$0xff]
    %v3191 = vld [vmem:[#allocation14 + $0xba8] sm:$0xff]
    %v3192 = vld [vmem:[#allocation14 + $0xbb0] sm:$0xff]
    %v3193 = vld [vmem:[#allocation14 + $0xbb8] sm:$0xff]
    %v3194 = vld [vmem:[#allocation14 + $0xbc0] sm:$0xff]
    %v3195 = vld [vmem:[#allocation14 + $0xbc8] sm:$0xff]
    %v3196 = vld [vmem:[#allocation14 + $0xbd0] sm:$0xff]
    %v3197 = vld [vmem:[#allocation14 + $0xbd8] sm:$0xff]
    %v3198 = vld [vmem:[#allocation14 + $0xbe0] sm:$0xff]
    %v3199 = vld [vmem:[#allocation14 + $0xbe8] sm:$0xff]
    %v3200 = vld [vmem:[#allocation14 + $0xbf0] sm:$0xff]
    %v3201 = vld [vmem:[#allocation14 + $0xbf8] sm:$0xff]
    %v3202 = vld [vmem:[#allocation14 + $0xc00] sm:$0xff]
    %v3203 = vld [vmem:[#allocation14 + $0xc08] sm:$0xff]
    %v3204 = vld [vmem:[#allocation14 + $0xc10] sm:$0xff]
    %v3205 = vld [vmem:[#allocation14 + $0xc18] sm:$0xff]
    %v3206 = vld [vmem:[#allocation14 + $0xc20] sm:$0xff]
    %v3207 = vld [vmem:[#allocation14 + $0xc28] sm:$0xff]
    %v3208 = vld [vmem:[#allocation14 + $0xc30] sm:$0xff]
    %v3209 = vld [vmem:[#allocation14 + $0xc38] sm:$0xff]
    %v3210 = vld [vmem:[#allocation14 + $0xc40] sm:$0xff]
    %v3211 = vld [vmem:[#allocation14 + $0xc48] sm:$0xff]
    %v3212 = vld [vmem:[#allocation14 + $0xc50] sm:$0xff]
    %v3213 = vld [vmem:[#allocation14 + $0xc58] sm:$0xff]
    %v3214 = vld [vmem:[#allocation14 + $0xc60] sm:$0xff]
    %v3215 = vld [vmem:[#allocation14 + $0xc68] sm:$0xff]
    %v3216 = vld [vmem:[#allocation14 + $0xc70] sm:$0xff]
    %v3217 = vld [vmem:[#allocation14 + $0xc78] sm:$0xff]
    %v3218 = vld [vmem:[#allocation14 + $0xc80] sm:$0xff]
    %v3219 = vld [vmem:[#allocation14 + $0xc88] sm:$0xff]
    %v3220 = vld [vmem:[#allocation14 + $0xc90] sm:$0xff]
    %v3221 = vld [vmem:[#allocation14 + $0xc98] sm:$0xff]
    %v3222 = vld [vmem:[#allocation14 + $0xca0] sm:$0xff]
    %v3223 = vld [vmem:[#allocation14 + $0xca8] sm:$0xff]
    %v3224 = vld [vmem:[#allocation14 + $0xcb0] sm:$0xff]
    %v3225 = vld [vmem:[#allocation14 + $0xcb8] sm:$0xff]
    %v3226 = vld [vmem:[#allocation14 + $0xcc0] sm:$0xff]
    %v3227 = vld [vmem:[#allocation14 + $0xcc8] sm:$0xff]
    %v3228 = vld [vmem:[#allocation14 + $0xcd0] sm:$0xff]
    %v3229 = vld [vmem:[#allocation14 + $0xcd8] sm:$0xff]
    %v3230 = vld [vmem:[#allocation14 + $0xce0] sm:$0xff]
    %v3231 = vld [vmem:[#allocation14 + $0xce8] sm:$0xff]
    %v3232 = vld [vmem:[#allocation14 + $0xcf0] sm:$0xff]
    %v3233 = vld [vmem:[#allocation14 + $0xcf8] sm:$0xff]
    %v3234 = vld [vmem:[#allocation14 + $0xd00] sm:$0xff]
    %v3235 = vld [vmem:[#allocation14 + $0xd08] sm:$0xff]
    %v3236 = vld [vmem:[#allocation14 + $0xd10] sm:$0xff]
    %v3237 = vld [vmem:[#allocation14 + $0xd18] sm:$0xff]
    %v3238 = vld [vmem:[#allocation14 + $0xd20] sm:$0xff]
    %v3239 = vld [vmem:[#allocation14 + $0xd28] sm:$0xff]
    %v3240 = vld [vmem:[#allocation14 + $0xd30] sm:$0xff]
    %v3241 = vld [vmem:[#allocation14 + $0xd38] sm:$0xff]
    %v3242 = vld [vmem:[#allocation14 + $0xd40] sm:$0xff]
    %v3243 = vld [vmem:[#allocation14 + $0xd48] sm:$0xff]
    %v3244 = vld [vmem:[#allocation14 + $0xd50] sm:$0xff]
    %v3245 = vld [vmem:[#allocation14 + $0xd58] sm:$0xff]
    %v3246 = vld [vmem:[#allocation14 + $0xd60] sm:$0xff]
    %v3247 = vld [vmem:[#allocation14 + $0xd68] sm:$0xff]
    %v3248 = vld [vmem:[#allocation14 + $0xd70] sm:$0xff]
    %v3249 = vld [vmem:[#allocation14 + $0xd78] sm:$0xff]
    %v3250 = vld [vmem:[#allocation14 + $0xd80] sm:$0xff]
    %v3251 = vld [vmem:[#allocation14 + $0xd88] sm:$0xff]
    %v3252 = vld [vmem:[#allocation14 + $0xd90] sm:$0xff]
    %v3253 = vld [vmem:[#allocation14 + $0xd98] sm:$0xff]
    %v3254 = vld [vmem:[#allocation14 + $0xda0] sm:$0xff]
    %v3255 = vld [vmem:[#allocation14 + $0xda8] sm:$0xff]
    %v3256 = vld [vmem:[#allocation14 + $0xdb0] sm:$0xff]
    %v3257 = vld [vmem:[#allocation14 + $0xdb8] sm:$0xff]
    %v3258 = vld [vmem:[#allocation14 + $0xdc0] sm:$0xff]
    %v3259 = vld [vmem:[#allocation14 + $0xdc8] sm:$0xff]
    %v3260 = vld [vmem:[#allocation14 + $0xdd0] sm:$0xff]
    %v3261 = vld [vmem:[#allocation14 + $0xdd8] sm:$0xff]
    %v3262 = vld [vmem:[#allocation14 + $0xde0] sm:$0xff]
    %v3263 = vld [vmem:[#allocation14 + $0xde8] sm:$0xff]
    %v3264 = vld [vmem:[#allocation14 + $0xdf0] sm:$0xff]
    %v3265 = vld [vmem:[#allocation14 + $0xdf8] sm:$0xff]
    %v3266 = vld [vmem:[#allocation14 + $0xe00] sm:$0xff]
    %v3267 = vld [vmem:[#allocation14 + $0xe08] sm:$0xff]
    %v3268 = vld [vmem:[#allocation14 + $0xe10] sm:$0xff]
    %v3269 = vld [vmem:[#allocation14 + $0xe18] sm:$0xff]
    %v3270 = vld [vmem:[#allocation14 + $0xe20] sm:$0xff]
    %v3271 = vld [vmem:[#allocation14 + $0xe28] sm:$0xff]
    %v3272 = vld [vmem:[#allocation14 + $0xe30] sm:$0xff]
    %v3273 = vld [vmem:[#allocation14 + $0xe38] sm:$0xff]
    %v3274 = vld [vmem:[#allocation14 + $0xe40] sm:$0xff]
    %v3275 = vld [vmem:[#allocation14 + $0xe48] sm:$0xff]
    %v3276 = vld [vmem:[#allocation14 + $0xe50] sm:$0xff]
    %v3277 = vld [vmem:[#allocation14 + $0xe58] sm:$0xff]
    %v3278 = vld [vmem:[#allocation14 + $0xe60] sm:$0xff]
    %v3279 = vld [vmem:[#allocation14 + $0xe68] sm:$0xff]
    %v3280 = vld [vmem:[#allocation14 + $0xe70] sm:$0xff]
    %v3281 = vld [vmem:[#allocation14 + $0xe78] sm:$0xff]
    %v3282 = vld [vmem:[#allocation14 + $0xe80] sm:$0xff]
    %v3283 = vld [vmem:[#allocation14 + $0xe88] sm:$0xff]
    %v3284 = vld [vmem:[#allocation14 + $0xe90] sm:$0xff]
    %v3285 = vld [vmem:[#allocation14 + $0xe98] sm:$0xff]
    %v3286 = vld [vmem:[#allocation14 + $0xea0] sm:$0xff]
    %v3287 = vld [vmem:[#allocation14 + $0xea8] sm:$0xff]
    %v3288 = vld [vmem:[#allocation14 + $0xeb0] sm:$0xff]
    %v3289 = vld [vmem:[#allocation14 + $0xeb8] sm:$0xff]
    %v3290 = vld [vmem:[#allocation14 + $0xec0] sm:$0xff]
    %v3291 = vld [vmem:[#allocation14 + $0xec8] sm:$0xff]
    %v3292 = vld [vmem:[#allocation14 + $0xed0] sm:$0xff]
    %v3293 = vld [vmem:[#allocation14 + $0xed8] sm:$0xff]
    %v3294 = vld [vmem:[#allocation14 + $0xee0] sm:$0xff]
    %v3295 = vld [vmem:[#allocation14 + $0xee8] sm:$0xff]
    %v3296 = vld [vmem:[#allocation14 + $0xef0] sm:$0xff]
    %v3297 = vld [vmem:[#allocation14 + $0xef8] sm:$0xff]
    %v3298 = vld [vmem:[#allocation14 + $0xf00] sm:$0xff]
    %v3299 = vld [vmem:[#allocation14 + $0xf08] sm:$0xff]
    %v3300 = vld [vmem:[#allocation14 + $0xf10] sm:$0xff]
    %v3301 = vld [vmem:[#allocation14 + $0xf18] sm:$0xff]
    %v3302 = vld [vmem:[#allocation14 + $0xf20] sm:$0xff]
    %v3303 = vld [vmem:[#allocation14 + $0xf28] sm:$0xff]
    %v3304 = vld [vmem:[#allocation14 + $0xf30] sm:$0xff]
    %v3305 = vld [vmem:[#allocation14 + $0xf38] sm:$0xff]
    %v3306 = vld [vmem:[#allocation14 + $0xf40] sm:$0xff]
    %v3307 = vld [vmem:[#allocation14 + $0xf48] sm:$0xff]
    %v3308 = vld [vmem:[#allocation14 + $0xf50] sm:$0xff]
    %v3309 = vld [vmem:[#allocation14 + $0xf58] sm:$0xff]
    %v3310 = vld [vmem:[#allocation14 + $0xf60] sm:$0xff]
    %v3311 = vld [vmem:[#allocation14 + $0xf68] sm:$0xff]
    %v3312 = vld [vmem:[#allocation14 + $0xf70] sm:$0xff]
    %v3313 = vld [vmem:[#allocation14 + $0xf78] sm:$0xff]
    %v3314 = vld [vmem:[#allocation14 + $0xf80] sm:$0xff]
    %v3315 = vld [vmem:[#allocation14 + $0xf88] sm:$0xff]
    %v3316 = vld [vmem:[#allocation14 + $0xf90] sm:$0xff]
    %v3317 = vld [vmem:[#allocation14 + $0xf98] sm:$0xff]
    %v3318 = vld [vmem:[#allocation14 + $0xfa0] sm:$0xff]
    %v3319 = vld [vmem:[#allocation14 + $0xfa8] sm:$0xff]
    %v3320 = vld [vmem:[#allocation14 + $0xfb0] sm:$0xff]
    %v3321 = vld [vmem:[#allocation14 + $0xfb8] sm:$0xff]
    %v3322 = vld [vmem:[#allocation14 + $0xfc0] sm:$0xff]
    %v3323 = vld [vmem:[#allocation14 + $0xfc8] sm:$0xff]
    %v3324 = vld [vmem:[#allocation14 + $0xfd0] sm:$0xff]
    %v3325 = vld [vmem:[#allocation14 + $0xfd8] sm:$0xff]
    %v3326 = vld [vmem:[#allocation14 + $0xfe0] sm:$0xff]
    %v3327 = vld [vmem:[#allocation14 + $0xfe8] sm:$0xff]
    %v3328 = vld [vmem:[#allocation14 + $0xff0] sm:$0xff]
    %v3329 = vld [vmem:[#allocation14 + $0xff8] sm:$0xff]
    %v3330 = vpack.c.bf16 %v2810, %v2810
    %v3331 = vpack.c.bf16 %v2811, %v2811
    %v3332 = vpack.c.bf16 %v2812, %v2812
    %v3333 = vpack.c.bf16 %v2813, %v2813
    %v3334 = vpack.c.bf16 %v2814, %v2814
    %v3335 = vpack.c.bf16 %v2815, %v2815
    %v3336 = vpack.c.bf16 %v2816, %v2816
    %v3337 = vpack.c.bf16 %v2817, %v2817
    %v3338 = vld [vmem:[#allocation16] sm:$0xff]
    %v3340 = vperm.slane %v3338, 0
    %v3341 = vperm.slane %v3338, 1
    %v3342 = vperm.slane %v3338, 2
    %v3343 = vperm.slane %v3338, 3
    %v3344 = vperm.slane %v3338, 4
    %v3345 = vperm.slane %v3338, 5
    %v3346 = vperm.slane %v3338, 6
    %v3347 = vperm.slane %v3338, 7
    %v3868 = vunpack.c.l.b16 %v2818
    %v3869 = vunpack.c.h.b16 %v2818
    %v3870 = vunpack.c.l.b16 %v2819
    %v3871 = vunpack.c.h.b16 %v2819
    %v3872 = vunpack.c.l.b16 %v2820
    %v3873 = vunpack.c.h.b16 %v2820
    %v3874 = vunpack.c.l.b16 %v2821
    %v3875 = vunpack.c.h.b16 %v2821
    %v3876 = vunpack.c.l.b16 %v2822
    %v3877 = vunpack.c.h.b16 %v2822
    %v3878 = vunpack.c.l.b16 %v2823
    %v3879 = vunpack.c.h.b16 %v2823
    %v3880 = vunpack.c.l.b16 %v2824
    %v3881 = vunpack.c.h.b16 %v2824
    %v3882 = vunpack.c.l.b16 %v2825
    %v3883 = vunpack.c.h.b16 %v2825
    %v3884 = vunpack.c.l.b16 %v2826
    %v3885 = vunpack.c.h.b16 %v2826
    %v3886 = vunpack.c.l.b16 %v2827
    %v3887 = vunpack.c.h.b16 %v2827
    %v3888 = vunpack.c.l.b16 %v2828
    %v3889 = vunpack.c.h.b16 %v2828
    %v3890 = vunpack.c.l.b16 %v2829
    %v3891 = vunpack.c.h.b16 %v2829
    %v3892 = vunpack.c.l.b16 %v2830
    %v3893 = vunpack.c.h.b16 %v2830
    %v3894 = vunpack.c.l.b16 %v2831
    %v3895 = vunpack.c.h.b16 %v2831
    %v3896 = vunpack.c.l.b16 %v2832
    %v3897 = vunpack.c.h.b16 %v2832
    %v3898 = vunpack.c.l.b16 %v2833
    %v3899 = vunpack.c.h.b16 %v2833
    %v3900 = vunpack.c.l.b16 %v2834
    %v3901 = vunpack.c.h.b16 %v2834
    %v3902 = vunpack.c.l.b16 %v2835
    %v3903 = vunpack.c.h.b16 %v2835
    %v3904 = vunpack.c.l.b16 %v2836
    %v3905 = vunpack.c.h.b16 %v2836
    %v3906 = vunpack.c.l.b16 %v2837
    %v3907 = vunpack.c.h.b16 %v2837
    %v3908 = vunpack.c.l.b16 %v2838
    %v3909 = vunpack.c.h.b16 %v2838
    %v3910 = vunpack.c.l.b16 %v2839
    %v3911 = vunpack.c.h.b16 %v2839
    %v3912 = vunpack.c.l.b16 %v2840
    %v3913 = vunpack.c.h.b16 %v2840
    %v3914 = vunpack.c.l.b16 %v2841
    %v3915 = vunpack.c.h.b16 %v2841
    %v3916 = vunpack.c.l.b16 %v2842
    %v3917 = vunpack.c.h.b16 %v2842
    %v3918 = vunpack.c.l.b16 %v2843
    %v3919 = vunpack.c.h.b16 %v2843
    %v3920 = vunpack.c.l.b16 %v2844
    %v3921 = vunpack.c.h.b16 %v2844
    %v3922 = vunpack.c.l.b16 %v2845
    %v3923 = vunpack.c.h.b16 %v2845
    %v3924 = vunpack.c.l.b16 %v2846
    %v3925 = vunpack.c.h.b16 %v2846
    %v3926 = vunpack.c.l.b16 %v2847
    %v3927 = vunpack.c.h.b16 %v2847
    %v3928 = vunpack.c.l.b16 %v2848
    %v3929 = vunpack.c.h.b16 %v2848
    %v3930 = vunpack.c.l.b16 %v2849
    %v3931 = vunpack.c.h.b16 %v2849
    %v3932 = vunpack.c.l.b16 %v2850
    %v3933 = vunpack.c.h.b16 %v2850
    %v3934 = vunpack.c.l.b16 %v2851
    %v3935 = vunpack.c.h.b16 %v2851
    %v3936 = vunpack.c.l.b16 %v2852
    %v3937 = vunpack.c.h.b16 %v2852
    %v3938 = vunpack.c.l.b16 %v2853
    %v3939 = vunpack.c.h.b16 %v2853
    %v3940 = vunpack.c.l.b16 %v2854
    %v3941 = vunpack.c.h.b16 %v2854
    %v3942 = vunpack.c.l.b16 %v2855
    %v3943 = vunpack.c.h.b16 %v2855
    %v3944 = vunpack.c.l.b16 %v2856
    %v3945 = vunpack.c.h.b16 %v2856
    %v3946 = vunpack.c.l.b16 %v2857
    %v3947 = vunpack.c.h.b16 %v2857
    %v3948 = vunpack.c.l.b16 %v2858
    %v3949 = vunpack.c.h.b16 %v2858
    %v3950 = vunpack.c.l.b16 %v2859
    %v3951 = vunpack.c.h.b16 %v2859
    %v3952 = vunpack.c.l.b16 %v2860
    %v3953 = vunpack.c.h.b16 %v2860
    %v3954 = vunpack.c.l.b16 %v2861
    %v3955 = vunpack.c.h.b16 %v2861
    %v3956 = vunpack.c.l.b16 %v2862
    %v3957 = vunpack.c.h.b16 %v2862
    %v3958 = vunpack.c.l.b16 %v2863
    %v3959 = vunpack.c.h.b16 %v2863
    %v3960 = vunpack.c.l.b16 %v2864
    %v3961 = vunpack.c.h.b16 %v2864
    %v3962 = vunpack.c.l.b16 %v2865
    %v3963 = vunpack.c.h.b16 %v2865
    %v3964 = vunpack.c.l.b16 %v2866
    %v3965 = vunpack.c.h.b16 %v2866
    %v3966 = vunpack.c.l.b16 %v2867
    %v3967 = vunpack.c.h.b16 %v2867
    %v3968 = vunpack.c.l.b16 %v2868
    %v3969 = vunpack.c.h.b16 %v2868
    %v3970 = vunpack.c.l.b16 %v2869
    %v3971 = vunpack.c.h.b16 %v2869
    %v3972 = vunpack.c.l.b16 %v2870
    %v3973 = vunpack.c.h.b16 %v2870
    %v3974 = vunpack.c.l.b16 %v2871
    %v3975 = vunpack.c.h.b16 %v2871
    %v3976 = vunpack.c.l.b16 %v2872
    %v3977 = vunpack.c.h.b16 %v2872
    %v3978 = vunpack.c.l.b16 %v2873
    %v3979 = vunpack.c.h.b16 %v2873
    %v3980 = vunpack.c.l.b16 %v2874
    %v3981 = vunpack.c.h.b16 %v2874
    %v3982 = vunpack.c.l.b16 %v2875
    %v3983 = vunpack.c.h.b16 %v2875
    %v3984 = vunpack.c.l.b16 %v2876
    %v3985 = vunpack.c.h.b16 %v2876
    %v3986 = vunpack.c.l.b16 %v2877
    %v3987 = vunpack.c.h.b16 %v2877
    %v3988 = vunpack.c.l.b16 %v2878
    %v3989 = vunpack.c.h.b16 %v2878
    %v3990 = vunpack.c.l.b16 %v2879
    %v3991 = vunpack.c.h.b16 %v2879
    %v3992 = vunpack.c.l.b16 %v2880
    %v3993 = vunpack.c.h.b16 %v2880
    %v3994 = vunpack.c.l.b16 %v2881
    %v3995 = vunpack.c.h.b16 %v2881
    %v3996 = vunpack.c.l.b16 %v2882
    %v3997 = vunpack.c.h.b16 %v2882
    %v3998 = vunpack.c.l.b16 %v2883
    %v3999 = vunpack.c.h.b16 %v2883
    %v4000 = vunpack.c.l.b16 %v2884
    %v4001 = vunpack.c.h.b16 %v2884
    %v4002 = vunpack.c.l.b16 %v2885
    %v4003 = vunpack.c.h.b16 %v2885
    %v4004 = vunpack.c.l.b16 %v2886
    %v4005 = vunpack.c.h.b16 %v2886
    %v4006 = vunpack.c.l.b16 %v2887
    %v4007 = vunpack.c.h.b16 %v2887
    %v4008 = vunpack.c.l.b16 %v2888
    %v4009 = vunpack.c.h.b16 %v2888
    %v4010 = vunpack.c.l.b16 %v2889
    %v4011 = vunpack.c.h.b16 %v2889
    %v4012 = vunpack.c.l.b16 %v2890
    %v4013 = vunpack.c.h.b16 %v2890
    %v4014 = vunpack.c.l.b16 %v2891
    %v4015 = vunpack.c.h.b16 %v2891
    %v4016 = vunpack.c.l.b16 %v2892
    %v4017 = vunpack.c.h.b16 %v2892
    %v4018 = vunpack.c.l.b16 %v2893
    %v4019 = vunpack.c.h.b16 %v2893
    %v4020 = vunpack.c.l.b16 %v2894
    %v4021 = vunpack.c.h.b16 %v2894
    %v4022 = vunpack.c.l.b16 %v2895
    %v4023 = vunpack.c.h.b16 %v2895
    %v4024 = vunpack.c.l.b16 %v2896
    %v4025 = vunpack.c.h.b16 %v2896
    %v4026 = vunpack.c.l.b16 %v2897
    %v4027 = vunpack.c.h.b16 %v2897
    %v4028 = vunpack.c.l.b16 %v2898
    %v4029 = vunpack.c.h.b16 %v2898
    %v4030 = vunpack.c.l.b16 %v2899
    %v4031 = vunpack.c.h.b16 %v2899
    %v4032 = vunpack.c.l.b16 %v2900
    %v4033 = vunpack.c.h.b16 %v2900
    %v4034 = vunpack.c.l.b16 %v2901
    %v4035 = vunpack.c.h.b16 %v2901
    %v4036 = vunpack.c.l.b16 %v2902
    %v4037 = vunpack.c.h.b16 %v2902
    %v4038 = vunpack.c.l.b16 %v2903
    %v4039 = vunpack.c.h.b16 %v2903
    %v4040 = vunpack.c.l.b16 %v2904
    %v4041 = vunpack.c.h.b16 %v2904
    %v4042 = vunpack.c.l.b16 %v2905
    %v4043 = vunpack.c.h.b16 %v2905
    %v4044 = vunpack.c.l.b16 %v2906
    %v4045 = vunpack.c.h.b16 %v2906
    %v4046 = vunpack.c.l.b16 %v2907
    %v4047 = vunpack.c.h.b16 %v2907
    %v4048 = vunpack.c.l.b16 %v2908
    %v4049 = vunpack.c.h.b16 %v2908
    %v4050 = vunpack.c.l.b16 %v2909
    %v4051 = vunpack.c.h.b16 %v2909
    %v4052 = vunpack.c.l.b16 %v2910
    %v4053 = vunpack.c.h.b16 %v2910
    %v4054 = vunpack.c.l.b16 %v2911
    %v4055 = vunpack.c.h.b16 %v2911
    %v4056 = vunpack.c.l.b16 %v2912
    %v4057 = vunpack.c.h.b16 %v2912
    %v4058 = vunpack.c.l.b16 %v2913
    %v4059 = vunpack.c.h.b16 %v2913
    %v4060 = vunpack.c.l.b16 %v2914
    %v4061 = vunpack.c.h.b16 %v2914
    %v4062 = vunpack.c.l.b16 %v2915
    %v4063 = vunpack.c.h.b16 %v2915
    %v4064 = vunpack.c.l.b16 %v2916
    %v4065 = vunpack.c.h.b16 %v2916
    %v4066 = vunpack.c.l.b16 %v2917
    %v4067 = vunpack.c.h.b16 %v2917
    %v4068 = vunpack.c.l.b16 %v2918
    %v4069 = vunpack.c.h.b16 %v2918
    %v4070 = vunpack.c.l.b16 %v2919
    %v4071 = vunpack.c.h.b16 %v2919
    %v4072 = vunpack.c.l.b16 %v2920
    %v4073 = vunpack.c.h.b16 %v2920
    %v4074 = vunpack.c.l.b16 %v2921
    %v4075 = vunpack.c.h.b16 %v2921
    %v4076 = vunpack.c.l.b16 %v2922
    %v4077 = vunpack.c.h.b16 %v2922
    %v4078 = vunpack.c.l.b16 %v2923
    %v4079 = vunpack.c.h.b16 %v2923
    %v4080 = vunpack.c.l.b16 %v2924
    %v4081 = vunpack.c.h.b16 %v2924
    %v4082 = vunpack.c.l.b16 %v2925
    %v4083 = vunpack.c.h.b16 %v2925
    %v4084 = vunpack.c.l.b16 %v2926
    %v4085 = vunpack.c.h.b16 %v2926
    %v4086 = vunpack.c.l.b16 %v2927
    %v4087 = vunpack.c.h.b16 %v2927
    %v4088 = vunpack.c.l.b16 %v2928
    %v4089 = vunpack.c.h.b16 %v2928
    %v4090 = vunpack.c.l.b16 %v2929
    %v4091 = vunpack.c.h.b16 %v2929
    %v4092 = vunpack.c.l.b16 %v2930
    %v4093 = vunpack.c.h.b16 %v2930
    %v4094 = vunpack.c.l.b16 %v2931
    %v4095 = vunpack.c.h.b16 %v2931
    %v4096 = vunpack.c.l.b16 %v2932
    %v4097 = vunpack.c.h.b16 %v2932
    %v4098 = vunpack.c.l.b16 %v2933
    %v4099 = vunpack.c.h.b16 %v2933
    %v4100 = vunpack.c.l.b16 %v2934
    %v4101 = vunpack.c.h.b16 %v2934
    %v4102 = vunpack.c.l.b16 %v2935
    %v4103 = vunpack.c.h.b16 %v2935
    %v4104 = vunpack.c.l.b16 %v2936
    %v4105 = vunpack.c.h.b16 %v2936
    %v4106 = vunpack.c.l.b16 %v2937
    %v4107 = vunpack.c.h.b16 %v2937
    %v4108 = vunpack.c.l.b16 %v2938
    %v4109 = vunpack.c.h.b16 %v2938
    %v4110 = vunpack.c.l.b16 %v2939
    %v4111 = vunpack.c.h.b16 %v2939
    %v4112 = vunpack.c.l.b16 %v2940
    %v4113 = vunpack.c.h.b16 %v2940
    %v4114 = vunpack.c.l.b16 %v2941
    %v4115 = vunpack.c.h.b16 %v2941
    %v4116 = vunpack.c.l.b16 %v2942
    %v4117 = vunpack.c.h.b16 %v2942
    %v4118 = vunpack.c.l.b16 %v2943
    %v4119 = vunpack.c.h.b16 %v2943
    %v4120 = vunpack.c.l.b16 %v2944
    %v4121 = vunpack.c.h.b16 %v2944
    %v4122 = vunpack.c.l.b16 %v2945
    %v4123 = vunpack.c.h.b16 %v2945
    %v4124 = vunpack.c.l.b16 %v2946
    %v4125 = vunpack.c.h.b16 %v2946
    %v4126 = vunpack.c.l.b16 %v2947
    %v4127 = vunpack.c.h.b16 %v2947
    %v4128 = vunpack.c.l.b16 %v2948
    %v4129 = vunpack.c.h.b16 %v2948
    %v4130 = vunpack.c.l.b16 %v2949
    %v4131 = vunpack.c.h.b16 %v2949
    %v4132 = vunpack.c.l.b16 %v2950
    %v4133 = vunpack.c.h.b16 %v2950
    %v4134 = vunpack.c.l.b16 %v2951
    %v4135 = vunpack.c.h.b16 %v2951
    %v4136 = vunpack.c.l.b16 %v2952
    %v4137 = vunpack.c.h.b16 %v2952
    %v4138 = vunpack.c.l.b16 %v2953
    %v4139 = vunpack.c.h.b16 %v2953
    %v4140 = vunpack.c.l.b16 %v2954
    %v4141 = vunpack.c.h.b16 %v2954
    %v4142 = vunpack.c.l.b16 %v2955
    %v4143 = vunpack.c.h.b16 %v2955
    %v4144 = vunpack.c.l.b16 %v2956
    %v4145 = vunpack.c.h.b16 %v2956
    %v4146 = vunpack.c.l.b16 %v2957
    %v4147 = vunpack.c.h.b16 %v2957
    %v4148 = vunpack.c.l.b16 %v2958
    %v4149 = vunpack.c.h.b16 %v2958
    %v4150 = vunpack.c.l.b16 %v2959
    %v4151 = vunpack.c.h.b16 %v2959
    %v4152 = vunpack.c.l.b16 %v2960
    %v4153 = vunpack.c.h.b16 %v2960
    %v4154 = vunpack.c.l.b16 %v2961
    %v4155 = vunpack.c.h.b16 %v2961
    %v4156 = vunpack.c.l.b16 %v2962
    %v4157 = vunpack.c.h.b16 %v2962
    %v4158 = vunpack.c.l.b16 %v2963
    %v4159 = vunpack.c.h.b16 %v2963
    %v4160 = vunpack.c.l.b16 %v2964
    %v4161 = vunpack.c.h.b16 %v2964
    %v4162 = vunpack.c.l.b16 %v2965
    %v4163 = vunpack.c.h.b16 %v2965
    %v4164 = vunpack.c.l.b16 %v2966
    %v4165 = vunpack.c.h.b16 %v2966
    %v4166 = vunpack.c.l.b16 %v2967
    %v4167 = vunpack.c.h.b16 %v2967
    %v4168 = vunpack.c.l.b16 %v2968
    %v4169 = vunpack.c.h.b16 %v2968
    %v4170 = vunpack.c.l.b16 %v2969
    %v4171 = vunpack.c.h.b16 %v2969
    %v4172 = vunpack.c.l.b16 %v2970
    %v4173 = vunpack.c.h.b16 %v2970
    %v4174 = vunpack.c.l.b16 %v2971
    %v4175 = vunpack.c.h.b16 %v2971
    %v4176 = vunpack.c.l.b16 %v2972
    %v4177 = vunpack.c.h.b16 %v2972
    %v4178 = vunpack.c.l.b16 %v2973
    %v4179 = vunpack.c.h.b16 %v2973
    %v4180 = vunpack.c.l.b16 %v2974
    %v4181 = vunpack.c.h.b16 %v2974
    %v4182 = vunpack.c.l.b16 %v2975
    %v4183 = vunpack.c.h.b16 %v2975
    %v4184 = vunpack.c.l.b16 %v2976
    %v4185 = vunpack.c.h.b16 %v2976
    %v4186 = vunpack.c.l.b16 %v2977
    %v4187 = vunpack.c.h.b16 %v2977
    %v4188 = vunpack.c.l.b16 %v2978
    %v4189 = vunpack.c.h.b16 %v2978
    %v4190 = vunpack.c.l.b16 %v2979
    %v4191 = vunpack.c.h.b16 %v2979
    %v4192 = vunpack.c.l.b16 %v2980
    %v4193 = vunpack.c.h.b16 %v2980
    %v4194 = vunpack.c.l.b16 %v2981
    %v4195 = vunpack.c.h.b16 %v2981
    %v4196 = vunpack.c.l.b16 %v2982
    %v4197 = vunpack.c.h.b16 %v2982
    %v4198 = vunpack.c.l.b16 %v2983
    %v4199 = vunpack.c.h.b16 %v2983
    %v4200 = vunpack.c.l.b16 %v2984
    %v4201 = vunpack.c.h.b16 %v2984
    %v4202 = vunpack.c.l.b16 %v2985
    %v4203 = vunpack.c.h.b16 %v2985
    %v4204 = vunpack.c.l.b16 %v2986
    %v4205 = vunpack.c.h.b16 %v2986
    %v4206 = vunpack.c.l.b16 %v2987
    %v4207 = vunpack.c.h.b16 %v2987
    %v4208 = vunpack.c.l.b16 %v2988
    %v4209 = vunpack.c.h.b16 %v2988
    %v4210 = vunpack.c.l.b16 %v2989
    %v4211 = vunpack.c.h.b16 %v2989
    %v4212 = vunpack.c.l.b16 %v2990
    %v4213 = vunpack.c.h.b16 %v2990
    %v4214 = vunpack.c.l.b16 %v2991
    %v4215 = vunpack.c.h.b16 %v2991
    %v4216 = vunpack.c.l.b16 %v2992
    %v4217 = vunpack.c.h.b16 %v2992
    %v4218 = vunpack.c.l.b16 %v2993
    %v4219 = vunpack.c.h.b16 %v2993
    %v4220 = vunpack.c.l.b16 %v2994
    %v4221 = vunpack.c.h.b16 %v2994
    %v4222 = vunpack.c.l.b16 %v2995
    %v4223 = vunpack.c.h.b16 %v2995
    %v4224 = vunpack.c.l.b16 %v2996
    %v4225 = vunpack.c.h.b16 %v2996
    %v4226 = vunpack.c.l.b16 %v2997
    %v4227 = vunpack.c.h.b16 %v2997
    %v4228 = vunpack.c.l.b16 %v2998
    %v4229 = vunpack.c.h.b16 %v2998
    %v4230 = vunpack.c.l.b16 %v2999
    %v4231 = vunpack.c.h.b16 %v2999
    %v4232 = vunpack.c.l.b16 %v3000
    %v4233 = vunpack.c.h.b16 %v3000
    %v4234 = vunpack.c.l.b16 %v3001
    %v4235 = vunpack.c.h.b16 %v3001
    %v4236 = vunpack.c.l.b16 %v3002
    %v4237 = vunpack.c.h.b16 %v3002
    %v4238 = vunpack.c.l.b16 %v3003
    %v4239 = vunpack.c.h.b16 %v3003
    %v4240 = vunpack.c.l.b16 %v3004
    %v4241 = vunpack.c.h.b16 %v3004
    %v4242 = vunpack.c.l.b16 %v3005
    %v4243 = vunpack.c.h.b16 %v3005
    %v4244 = vunpack.c.l.b16 %v3006
    %v4245 = vunpack.c.h.b16 %v3006
    %v4246 = vunpack.c.l.b16 %v3007
    %v4247 = vunpack.c.h.b16 %v3007
    %v4248 = vunpack.c.l.b16 %v3008
    %v4249 = vunpack.c.h.b16 %v3008
    %v4250 = vunpack.c.l.b16 %v3009
    %v4251 = vunpack.c.h.b16 %v3009
    %v4252 = vunpack.c.l.b16 %v3010
    %v4253 = vunpack.c.h.b16 %v3010
    %v4254 = vunpack.c.l.b16 %v3011
    %v4255 = vunpack.c.h.b16 %v3011
    %v4256 = vunpack.c.l.b16 %v3012
    %v4257 = vunpack.c.h.b16 %v3012
    %v4258 = vunpack.c.l.b16 %v3013
    %v4259 = vunpack.c.h.b16 %v3013
    %v4260 = vunpack.c.l.b16 %v3014
    %v4261 = vunpack.c.h.b16 %v3014
    %v4262 = vunpack.c.l.b16 %v3015
    %v4263 = vunpack.c.h.b16 %v3015
    %v4264 = vunpack.c.l.b16 %v3016
    %v4265 = vunpack.c.h.b16 %v3016
    %v4266 = vunpack.c.l.b16 %v3017
    %v4267 = vunpack.c.h.b16 %v3017
    %v4268 = vunpack.c.l.b16 %v3018
    %v4269 = vunpack.c.h.b16 %v3018
    %v4270 = vunpack.c.l.b16 %v3019
    %v4271 = vunpack.c.h.b16 %v3019
    %v4272 = vunpack.c.l.b16 %v3020
    %v4273 = vunpack.c.h.b16 %v3020
    %v4274 = vunpack.c.l.b16 %v3021
    %v4275 = vunpack.c.h.b16 %v3021
    %v4276 = vunpack.c.l.b16 %v3022
    %v4277 = vunpack.c.h.b16 %v3022
    %v4278 = vunpack.c.l.b16 %v3023
    %v4279 = vunpack.c.h.b16 %v3023
    %v4280 = vunpack.c.l.b16 %v3024
    %v4281 = vunpack.c.h.b16 %v3024
    %v4282 = vunpack.c.l.b16 %v3025
    %v4283 = vunpack.c.h.b16 %v3025
    %v4284 = vunpack.c.l.b16 %v3026
    %v4285 = vunpack.c.h.b16 %v3026
    %v4286 = vunpack.c.l.b16 %v3027
    %v4287 = vunpack.c.h.b16 %v3027
    %v4288 = vunpack.c.l.b16 %v3028
    %v4289 = vunpack.c.h.b16 %v3028
    %v4290 = vunpack.c.l.b16 %v3029
    %v4291 = vunpack.c.h.b16 %v3029
    %v4292 = vunpack.c.l.b16 %v3030
    %v4293 = vunpack.c.h.b16 %v3030
    %v4294 = vunpack.c.l.b16 %v3031
    %v4295 = vunpack.c.h.b16 %v3031
    %v4296 = vunpack.c.l.b16 %v3032
    %v4297 = vunpack.c.h.b16 %v3032
    %v4298 = vunpack.c.l.b16 %v3033
    %v4299 = vunpack.c.h.b16 %v3033
    %v4300 = vunpack.c.l.b16 %v3034
    %v4301 = vunpack.c.h.b16 %v3034
    %v4302 = vunpack.c.l.b16 %v3035
    %v4303 = vunpack.c.h.b16 %v3035
    %v4304 = vunpack.c.l.b16 %v3036
    %v4305 = vunpack.c.h.b16 %v3036
    %v4306 = vunpack.c.l.b16 %v3037
    %v4307 = vunpack.c.h.b16 %v3037
    %v4308 = vunpack.c.l.b16 %v3038
    %v4309 = vunpack.c.h.b16 %v3038
    %v4310 = vunpack.c.l.b16 %v3039
    %v4311 = vunpack.c.h.b16 %v3039
    %v4312 = vunpack.c.l.b16 %v3040
    %v4313 = vunpack.c.h.b16 %v3040
    %v4314 = vunpack.c.l.b16 %v3041
    %v4315 = vunpack.c.h.b16 %v3041
    %v4316 = vunpack.c.l.b16 %v3042
    %v4317 = vunpack.c.h.b16 %v3042
    %v4318 = vunpack.c.l.b16 %v3043
    %v4319 = vunpack.c.h.b16 %v3043
    %v4320 = vunpack.c.l.b16 %v3044
    %v4321 = vunpack.c.h.b16 %v3044
    %v4322 = vunpack.c.l.b16 %v3045
    %v4323 = vunpack.c.h.b16 %v3045
    %v4324 = vunpack.c.l.b16 %v3046
    %v4325 = vunpack.c.h.b16 %v3046
    %v4326 = vunpack.c.l.b16 %v3047
    %v4327 = vunpack.c.h.b16 %v3047
    %v4328 = vunpack.c.l.b16 %v3048
    %v4329 = vunpack.c.h.b16 %v3048
    %v4330 = vunpack.c.l.b16 %v3049
    %v4331 = vunpack.c.h.b16 %v3049
    %v4332 = vunpack.c.l.b16 %v3050
    %v4333 = vunpack.c.h.b16 %v3050
    %v4334 = vunpack.c.l.b16 %v3051
    %v4335 = vunpack.c.h.b16 %v3051
    %v4336 = vunpack.c.l.b16 %v3052
    %v4337 = vunpack.c.h.b16 %v3052
    %v4338 = vunpack.c.l.b16 %v3053
    %v4339 = vunpack.c.h.b16 %v3053
    %v4340 = vunpack.c.l.b16 %v3054
    %v4341 = vunpack.c.h.b16 %v3054
    %v4342 = vunpack.c.l.b16 %v3055
    %v4343 = vunpack.c.h.b16 %v3055
    %v4344 = vunpack.c.l.b16 %v3056
    %v4345 = vunpack.c.h.b16 %v3056
    %v4346 = vunpack.c.l.b16 %v3057
    %v4347 = vunpack.c.h.b16 %v3057
    %v4348 = vunpack.c.l.b16 %v3058
    %v4349 = vunpack.c.h.b16 %v3058
    %v4350 = vunpack.c.l.b16 %v3059
    %v4351 = vunpack.c.h.b16 %v3059
    %v4352 = vunpack.c.l.b16 %v3060
    %v4353 = vunpack.c.h.b16 %v3060
    %v4354 = vunpack.c.l.b16 %v3061
    %v4355 = vunpack.c.h.b16 %v3061
    %v4356 = vunpack.c.l.b16 %v3062
    %v4357 = vunpack.c.h.b16 %v3062
    %v4358 = vunpack.c.l.b16 %v3063
    %v4359 = vunpack.c.h.b16 %v3063
    %v4360 = vunpack.c.l.b16 %v3064
    %v4361 = vunpack.c.h.b16 %v3064
    %v4362 = vunpack.c.l.b16 %v3065
    %v4363 = vunpack.c.h.b16 %v3065
    %v4364 = vunpack.c.l.b16 %v3066
    %v4365 = vunpack.c.h.b16 %v3066
    %v4366 = vunpack.c.l.b16 %v3067
    %v4367 = vunpack.c.h.b16 %v3067
    %v4368 = vunpack.c.l.b16 %v3068
    %v4369 = vunpack.c.h.b16 %v3068
    %v4370 = vunpack.c.l.b16 %v3069
    %v4371 = vunpack.c.h.b16 %v3069
    %v4372 = vunpack.c.l.b16 %v3070
    %v4373 = vunpack.c.h.b16 %v3070
    %v4374 = vunpack.c.l.b16 %v3071
    %v4375 = vunpack.c.h.b16 %v3071
    %v4376 = vunpack.c.l.b16 %v3072
    %v4377 = vunpack.c.h.b16 %v3072
    %v4378 = vunpack.c.l.b16 %v3073
    %v4379 = vunpack.c.h.b16 %v3073
    %v4380 = vunpack.c.l.b16 %v3074
    %v4381 = vunpack.c.h.b16 %v3074
    %v4382 = vunpack.c.l.b16 %v3075
    %v4383 = vunpack.c.h.b16 %v3075
    %v4384 = vunpack.c.l.b16 %v3076
    %v4385 = vunpack.c.h.b16 %v3076
    %v4386 = vunpack.c.l.b16 %v3077
    %v4387 = vunpack.c.h.b16 %v3077
    %v4388 = vunpack.c.l.b16 %v3078
    %v4389 = vunpack.c.h.b16 %v3078
    %v4390 = vunpack.c.l.b16 %v3079
    %v4391 = vunpack.c.h.b16 %v3079
    %v4392 = vunpack.c.l.b16 %v3080
    %v4393 = vunpack.c.h.b16 %v3080
    %v4394 = vunpack.c.l.b16 %v3081
    %v4395 = vunpack.c.h.b16 %v3081
    %v4396 = vunpack.c.l.b16 %v3082
    %v4397 = vunpack.c.h.b16 %v3082
    %v4398 = vunpack.c.l.b16 %v3083
    %v4399 = vunpack.c.h.b16 %v3083
    %v4400 = vunpack.c.l.b16 %v3084
    %v4401 = vunpack.c.h.b16 %v3084
    %v4402 = vunpack.c.l.b16 %v3085
    %v4403 = vunpack.c.h.b16 %v3085
    %v4404 = vunpack.c.l.b16 %v3086
    %v4405 = vunpack.c.h.b16 %v3086
    %v4406 = vunpack.c.l.b16 %v3087
    %v4407 = vunpack.c.h.b16 %v3087
    %v4408 = vunpack.c.l.b16 %v3088
    %v4409 = vunpack.c.h.b16 %v3088
    %v4410 = vunpack.c.l.b16 %v3089
    %v4411 = vunpack.c.h.b16 %v3089
    %v4412 = vunpack.c.l.b16 %v3090
    %v4413 = vunpack.c.h.b16 %v3090
    %v4414 = vunpack.c.l.b16 %v3091
    %v4415 = vunpack.c.h.b16 %v3091
    %v4416 = vunpack.c.l.b16 %v3092
    %v4417 = vunpack.c.h.b16 %v3092
    %v4418 = vunpack.c.l.b16 %v3093
    %v4419 = vunpack.c.h.b16 %v3093
    %v4420 = vunpack.c.l.b16 %v3094
    %v4421 = vunpack.c.h.b16 %v3094
    %v4422 = vunpack.c.l.b16 %v3095
    %v4423 = vunpack.c.h.b16 %v3095
    %v4424 = vunpack.c.l.b16 %v3096
    %v4425 = vunpack.c.h.b16 %v3096
    %v4426 = vunpack.c.l.b16 %v3097
    %v4427 = vunpack.c.h.b16 %v3097
    %v4428 = vunpack.c.l.b16 %v3098
    %v4429 = vunpack.c.h.b16 %v3098
    %v4430 = vunpack.c.l.b16 %v3099
    %v4431 = vunpack.c.h.b16 %v3099
    %v4432 = vunpack.c.l.b16 %v3100
    %v4433 = vunpack.c.h.b16 %v3100
    %v4434 = vunpack.c.l.b16 %v3101
    %v4435 = vunpack.c.h.b16 %v3101
    %v4436 = vunpack.c.l.b16 %v3102
    %v4437 = vunpack.c.h.b16 %v3102
    %v4438 = vunpack.c.l.b16 %v3103
    %v4439 = vunpack.c.h.b16 %v3103
    %v4440 = vunpack.c.l.b16 %v3104
    %v4441 = vunpack.c.h.b16 %v3104
    %v4442 = vunpack.c.l.b16 %v3105
    %v4443 = vunpack.c.h.b16 %v3105
    %v4444 = vunpack.c.l.b16 %v3106
    %v4445 = vunpack.c.h.b16 %v3106
    %v4446 = vunpack.c.l.b16 %v3107
    %v4447 = vunpack.c.h.b16 %v3107
    %v4448 = vunpack.c.l.b16 %v3108
    %v4449 = vunpack.c.h.b16 %v3108
    %v4450 = vunpack.c.l.b16 %v3109
    %v4451 = vunpack.c.h.b16 %v3109
    %v4452 = vunpack.c.l.b16 %v3110
    %v4453 = vunpack.c.h.b16 %v3110
    %v4454 = vunpack.c.l.b16 %v3111
    %v4455 = vunpack.c.h.b16 %v3111
    %v4456 = vunpack.c.l.b16 %v3112
    %v4457 = vunpack.c.h.b16 %v3112
    %v4458 = vunpack.c.l.b16 %v3113
    %v4459 = vunpack.c.h.b16 %v3113
    %v4460 = vunpack.c.l.b16 %v3114
    %v4461 = vunpack.c.h.b16 %v3114
    %v4462 = vunpack.c.l.b16 %v3115
    %v4463 = vunpack.c.h.b16 %v3115
    %v4464 = vunpack.c.l.b16 %v3116
    %v4465 = vunpack.c.h.b16 %v3116
    %v4466 = vunpack.c.l.b16 %v3117
    %v4467 = vunpack.c.h.b16 %v3117
    %v4468 = vunpack.c.l.b16 %v3118
    %v4469 = vunpack.c.h.b16 %v3118
    %v4470 = vunpack.c.l.b16 %v3119
    %v4471 = vunpack.c.h.b16 %v3119
    %v4472 = vunpack.c.l.b16 %v3120
    %v4473 = vunpack.c.h.b16 %v3120
    %v4474 = vunpack.c.l.b16 %v3121
    %v4475 = vunpack.c.h.b16 %v3121
    %v4476 = vunpack.c.l.b16 %v3122
    %v4477 = vunpack.c.h.b16 %v3122
    %v4478 = vunpack.c.l.b16 %v3123
    %v4479 = vunpack.c.h.b16 %v3123
    %v4480 = vunpack.c.l.b16 %v3124
    %v4481 = vunpack.c.h.b16 %v3124
    %v4482 = vunpack.c.l.b16 %v3125
    %v4483 = vunpack.c.h.b16 %v3125
    %v4484 = vunpack.c.l.b16 %v3126
    %v4485 = vunpack.c.h.b16 %v3126
    %v4486 = vunpack.c.l.b16 %v3127
    %v4487 = vunpack.c.h.b16 %v3127
    %v4488 = vunpack.c.l.b16 %v3128
    %v4489 = vunpack.c.h.b16 %v3128
    %v4490 = vunpack.c.l.b16 %v3129
    %v4491 = vunpack.c.h.b16 %v3129
    %v4492 = vunpack.c.l.b16 %v3130
    %v4493 = vunpack.c.h.b16 %v3130
    %v4494 = vunpack.c.l.b16 %v3131
    %v4495 = vunpack.c.h.b16 %v3131
    %v4496 = vunpack.c.l.b16 %v3132
    %v4497 = vunpack.c.h.b16 %v3132
    %v4498 = vunpack.c.l.b16 %v3133
    %v4499 = vunpack.c.h.b16 %v3133
    %v4500 = vunpack.c.l.b16 %v3134
    %v4501 = vunpack.c.h.b16 %v3134
    %v4502 = vunpack.c.l.b16 %v3135
    %v4503 = vunpack.c.h.b16 %v3135
    %v4504 = vunpack.c.l.b16 %v3136
    %v4505 = vunpack.c.h.b16 %v3136
    %v4506 = vunpack.c.l.b16 %v3137
    %v4507 = vunpack.c.h.b16 %v3137
    %v4508 = vunpack.c.l.b16 %v3138
    %v4509 = vunpack.c.h.b16 %v3138
    %v4510 = vunpack.c.l.b16 %v3139
    %v4511 = vunpack.c.h.b16 %v3139
    %v4512 = vunpack.c.l.b16 %v3140
    %v4513 = vunpack.c.h.b16 %v3140
    %v4514 = vunpack.c.l.b16 %v3141
    %v4515 = vunpack.c.h.b16 %v3141
    %v4516 = vunpack.c.l.b16 %v3142
    %v4517 = vunpack.c.h.b16 %v3142
    %v4518 = vunpack.c.l.b16 %v3143
    %v4519 = vunpack.c.h.b16 %v3143
    %v4520 = vunpack.c.l.b16 %v3144
    %v4521 = vunpack.c.h.b16 %v3144
    %v4522 = vunpack.c.l.b16 %v3145
    %v4523 = vunpack.c.h.b16 %v3145
    %v4524 = vunpack.c.l.b16 %v3146
    %v4525 = vunpack.c.h.b16 %v3146
    %v4526 = vunpack.c.l.b16 %v3147
    %v4527 = vunpack.c.h.b16 %v3147
    %v4528 = vunpack.c.l.b16 %v3148
    %v4529 = vunpack.c.h.b16 %v3148
    %v4530 = vunpack.c.l.b16 %v3149
    %v4531 = vunpack.c.h.b16 %v3149
    %v4532 = vunpack.c.l.b16 %v3150
    %v4533 = vunpack.c.h.b16 %v3150
    %v4534 = vunpack.c.l.b16 %v3151
    %v4535 = vunpack.c.h.b16 %v3151
    %v4536 = vunpack.c.l.b16 %v3152
    %v4537 = vunpack.c.h.b16 %v3152
    %v4538 = vunpack.c.l.b16 %v3153
    %v4539 = vunpack.c.h.b16 %v3153
    %v4540 = vunpack.c.l.b16 %v3154
    %v4541 = vunpack.c.h.b16 %v3154
    %v4542 = vunpack.c.l.b16 %v3155
    %v4543 = vunpack.c.h.b16 %v3155
    %v4544 = vunpack.c.l.b16 %v3156
    %v4545 = vunpack.c.h.b16 %v3156
    %v4546 = vunpack.c.l.b16 %v3157
    %v4547 = vunpack.c.h.b16 %v3157
    %v4548 = vunpack.c.l.b16 %v3158
    %v4549 = vunpack.c.h.b16 %v3158
    %v4550 = vunpack.c.l.b16 %v3159
    %v4551 = vunpack.c.h.b16 %v3159
    %v4552 = vunpack.c.l.b16 %v3160
    %v4553 = vunpack.c.h.b16 %v3160
    %v4554 = vunpack.c.l.b16 %v3161
    %v4555 = vunpack.c.h.b16 %v3161
    %v4556 = vunpack.c.l.b16 %v3162
    %v4557 = vunpack.c.h.b16 %v3162
    %v4558 = vunpack.c.l.b16 %v3163
    %v4559 = vunpack.c.h.b16 %v3163
    %v4560 = vunpack.c.l.b16 %v3164
    %v4561 = vunpack.c.h.b16 %v3164
    %v4562 = vunpack.c.l.b16 %v3165
    %v4563 = vunpack.c.h.b16 %v3165
    %v4564 = vunpack.c.l.b16 %v3166
    %v4565 = vunpack.c.h.b16 %v3166
    %v4566 = vunpack.c.l.b16 %v3167
    %v4567 = vunpack.c.h.b16 %v3167
    %v4568 = vunpack.c.l.b16 %v3168
    %v4569 = vunpack.c.h.b16 %v3168
    %v4570 = vunpack.c.l.b16 %v3169
    %v4571 = vunpack.c.h.b16 %v3169
    %v4572 = vunpack.c.l.b16 %v3170
    %v4573 = vunpack.c.h.b16 %v3170
    %v4574 = vunpack.c.l.b16 %v3171
    %v4575 = vunpack.c.h.b16 %v3171
    %v4576 = vunpack.c.l.b16 %v3172
    %v4577 = vunpack.c.h.b16 %v3172
    %v4578 = vunpack.c.l.b16 %v3173
    %v4579 = vunpack.c.h.b16 %v3173
    %v4580 = vunpack.c.l.b16 %v3174
    %v4581 = vunpack.c.h.b16 %v3174
    %v4582 = vunpack.c.l.b16 %v3175
    %v4583 = vunpack.c.h.b16 %v3175
    %v4584 = vunpack.c.l.b16 %v3176
    %v4585 = vunpack.c.h.b16 %v3176
    %v4586 = vunpack.c.l.b16 %v3177
    %v4587 = vunpack.c.h.b16 %v3177
    %v4588 = vunpack.c.l.b16 %v3178
    %v4589 = vunpack.c.h.b16 %v3178
    %v4590 = vunpack.c.l.b16 %v3179
    %v4591 = vunpack.c.h.b16 %v3179
    %v4592 = vunpack.c.l.b16 %v3180
    %v4593 = vunpack.c.h.b16 %v3180
    %v4594 = vunpack.c.l.b16 %v3181
    %v4595 = vunpack.c.h.b16 %v3181
    %v4596 = vunpack.c.l.b16 %v3182
    %v4597 = vunpack.c.h.b16 %v3182
    %v4598 = vunpack.c.l.b16 %v3183
    %v4599 = vunpack.c.h.b16 %v3183
    %v4600 = vunpack.c.l.b16 %v3184
    %v4601 = vunpack.c.h.b16 %v3184
    %v4602 = vunpack.c.l.b16 %v3185
    %v4603 = vunpack.c.h.b16 %v3185
    %v4604 = vunpack.c.l.b16 %v3186
    %v4605 = vunpack.c.h.b16 %v3186
    %v4606 = vunpack.c.l.b16 %v3187
    %v4607 = vunpack.c.h.b16 %v3187
    %v4608 = vunpack.c.l.b16 %v3188
    %v4609 = vunpack.c.h.b16 %v3188
    %v4610 = vunpack.c.l.b16 %v3189
    %v4611 = vunpack.c.h.b16 %v3189
    %v4612 = vunpack.c.l.b16 %v3190
    %v4613 = vunpack.c.h.b16 %v3190
    %v4614 = vunpack.c.l.b16 %v3191
    %v4615 = vunpack.c.h.b16 %v3191
    %v4616 = vunpack.c.l.b16 %v3192
    %v4617 = vunpack.c.h.b16 %v3192
    %v4618 = vunpack.c.l.b16 %v3193
    %v4619 = vunpack.c.h.b16 %v3193
    %v4620 = vunpack.c.l.b16 %v3194
    %v4621 = vunpack.c.h.b16 %v3194
    %v4622 = vunpack.c.l.b16 %v3195
    %v4623 = vunpack.c.h.b16 %v3195
    %v4624 = vunpack.c.l.b16 %v3196
    %v4625 = vunpack.c.h.b16 %v3196
    %v4626 = vunpack.c.l.b16 %v3197
    %v4627 = vunpack.c.h.b16 %v3197
    %v4628 = vunpack.c.l.b16 %v3198
    %v4629 = vunpack.c.h.b16 %v3198
    %v4630 = vunpack.c.l.b16 %v3199
    %v4631 = vunpack.c.h.b16 %v3199
    %v4632 = vunpack.c.l.b16 %v3200
    %v4633 = vunpack.c.h.b16 %v3200
    %v4634 = vunpack.c.l.b16 %v3201
    %v4635 = vunpack.c.h.b16 %v3201
    %v4636 = vunpack.c.l.b16 %v3202
    %v4637 = vunpack.c.h.b16 %v3202
    %v4638 = vunpack.c.l.b16 %v3203
    %v4639 = vunpack.c.h.b16 %v3203
    %v4640 = vunpack.c.l.b16 %v3204
    %v4641 = vunpack.c.h.b16 %v3204
    %v4642 = vunpack.c.l.b16 %v3205
    %v4643 = vunpack.c.h.b16 %v3205
    %v4644 = vunpack.c.l.b16 %v3206
    %v4645 = vunpack.c.h.b16 %v3206
    %v4646 = vunpack.c.l.b16 %v3207
    %v4647 = vunpack.c.h.b16 %v3207
    %v4648 = vunpack.c.l.b16 %v3208
    %v4649 = vunpack.c.h.b16 %v3208
    %v4650 = vunpack.c.l.b16 %v3209
    %v4651 = vunpack.c.h.b16 %v3209
    %v4652 = vunpack.c.l.b16 %v3210
    %v4653 = vunpack.c.h.b16 %v3210
    %v4654 = vunpack.c.l.b16 %v3211
    %v4655 = vunpack.c.h.b16 %v3211
    %v4656 = vunpack.c.l.b16 %v3212
    %v4657 = vunpack.c.h.b16 %v3212
    %v4658 = vunpack.c.l.b16 %v3213
    %v4659 = vunpack.c.h.b16 %v3213
    %v4660 = vunpack.c.l.b16 %v3214
    %v4661 = vunpack.c.h.b16 %v3214
    %v4662 = vunpack.c.l.b16 %v3215
    %v4663 = vunpack.c.h.b16 %v3215
    %v4664 = vunpack.c.l.b16 %v3216
    %v4665 = vunpack.c.h.b16 %v3216
    %v4666 = vunpack.c.l.b16 %v3217
    %v4667 = vunpack.c.h.b16 %v3217
    %v4668 = vunpack.c.l.b16 %v3218
    %v4669 = vunpack.c.h.b16 %v3218
    %v4670 = vunpack.c.l.b16 %v3219
    %v4671 = vunpack.c.h.b16 %v3219
    %v4672 = vunpack.c.l.b16 %v3220
    %v4673 = vunpack.c.h.b16 %v3220
    %v4674 = vunpack.c.l.b16 %v3221
    %v4675 = vunpack.c.h.b16 %v3221
    %v4676 = vunpack.c.l.b16 %v3222
    %v4677 = vunpack.c.h.b16 %v3222
    %v4678 = vunpack.c.l.b16 %v3223
    %v4679 = vunpack.c.h.b16 %v3223
    %v4680 = vunpack.c.l.b16 %v3224
    %v4681 = vunpack.c.h.b16 %v3224
    %v4682 = vunpack.c.l.b16 %v3225
    %v4683 = vunpack.c.h.b16 %v3225
    %v4684 = vunpack.c.l.b16 %v3226
    %v4685 = vunpack.c.h.b16 %v3226
    %v4686 = vunpack.c.l.b16 %v3227
    %v4687 = vunpack.c.h.b16 %v3227
    %v4688 = vunpack.c.l.b16 %v3228
    %v4689 = vunpack.c.h.b16 %v3228
    %v4690 = vunpack.c.l.b16 %v3229
    %v4691 = vunpack.c.h.b16 %v3229
    %v4692 = vunpack.c.l.b16 %v3230
    %v4693 = vunpack.c.h.b16 %v3230
    %v4694 = vunpack.c.l.b16 %v3231
    %v4695 = vunpack.c.h.b16 %v3231
    %v4696 = vunpack.c.l.b16 %v3232
    %v4697 = vunpack.c.h.b16 %v3232
    %v4698 = vunpack.c.l.b16 %v3233
    %v4699 = vunpack.c.h.b16 %v3233
    %v4700 = vunpack.c.l.b16 %v3234
    %v4701 = vunpack.c.h.b16 %v3234
    %v4702 = vunpack.c.l.b16 %v3235
    %v4703 = vunpack.c.h.b16 %v3235
    %v4704 = vunpack.c.l.b16 %v3236
    %v4705 = vunpack.c.h.b16 %v3236
    %v4706 = vunpack.c.l.b16 %v3237
    %v4707 = vunpack.c.h.b16 %v3237
    %v4708 = vunpack.c.l.b16 %v3238
    %v4709 = vunpack.c.h.b16 %v3238
    %v4710 = vunpack.c.l.b16 %v3239
    %v4711 = vunpack.c.h.b16 %v3239
    %v4712 = vunpack.c.l.b16 %v3240
    %v4713 = vunpack.c.h.b16 %v3240
    %v4714 = vunpack.c.l.b16 %v3241
    %v4715 = vunpack.c.h.b16 %v3241
    %v4716 = vunpack.c.l.b16 %v3242
    %v4717 = vunpack.c.h.b16 %v3242
    %v4718 = vunpack.c.l.b16 %v3243
    %v4719 = vunpack.c.h.b16 %v3243
    %v4720 = vunpack.c.l.b16 %v3244
    %v4721 = vunpack.c.h.b16 %v3244
    %v4722 = vunpack.c.l.b16 %v3245
    %v4723 = vunpack.c.h.b16 %v3245
    %v4724 = vunpack.c.l.b16 %v3246
    %v4725 = vunpack.c.h.b16 %v3246
    %v4726 = vunpack.c.l.b16 %v3247
    %v4727 = vunpack.c.h.b16 %v3247
    %v4728 = vunpack.c.l.b16 %v3248
    %v4729 = vunpack.c.h.b16 %v3248
    %v4730 = vunpack.c.l.b16 %v3249
    %v4731 = vunpack.c.h.b16 %v3249
    %v4732 = vunpack.c.l.b16 %v3250
    %v4733 = vunpack.c.h.b16 %v3250
    %v4734 = vunpack.c.l.b16 %v3251
    %v4735 = vunpack.c.h.b16 %v3251
    %v4736 = vunpack.c.l.b16 %v3252
    %v4737 = vunpack.c.h.b16 %v3252
    %v4738 = vunpack.c.l.b16 %v3253
    %v4739 = vunpack.c.h.b16 %v3253
    %v4740 = vunpack.c.l.b16 %v3254
    %v4741 = vunpack.c.h.b16 %v3254
    %v4742 = vunpack.c.l.b16 %v3255
    %v4743 = vunpack.c.h.b16 %v3255
    %v4744 = vunpack.c.l.b16 %v3256
    %v4745 = vunpack.c.h.b16 %v3256
    %v4746 = vunpack.c.l.b16 %v3257
    %v4747 = vunpack.c.h.b16 %v3257
    %v4748 = vunpack.c.l.b16 %v3258
    %v4749 = vunpack.c.h.b16 %v3258
    %v4750 = vunpack.c.l.b16 %v3259
    %v4751 = vunpack.c.h.b16 %v3259
    %v4752 = vunpack.c.l.b16 %v3260
    %v4753 = vunpack.c.h.b16 %v3260
    %v4754 = vunpack.c.l.b16 %v3261
    %v4755 = vunpack.c.h.b16 %v3261
    %v4756 = vunpack.c.l.b16 %v3262
    %v4757 = vunpack.c.h.b16 %v3262
    %v4758 = vunpack.c.l.b16 %v3263
    %v4759 = vunpack.c.h.b16 %v3263
    %v4760 = vunpack.c.l.b16 %v3264
    %v4761 = vunpack.c.h.b16 %v3264
    %v4762 = vunpack.c.l.b16 %v3265
    %v4763 = vunpack.c.h.b16 %v3265
    %v4764 = vunpack.c.l.b16 %v3266
    %v4765 = vunpack.c.h.b16 %v3266
    %v4766 = vunpack.c.l.b16 %v3267
    %v4767 = vunpack.c.h.b16 %v3267
    %v4768 = vunpack.c.l.b16 %v3268
    %v4769 = vunpack.c.h.b16 %v3268
    %v4770 = vunpack.c.l.b16 %v3269
    %v4771 = vunpack.c.h.b16 %v3269
    %v4772 = vunpack.c.l.b16 %v3270
    %v4773 = vunpack.c.h.b16 %v3270
    %v4774 = vunpack.c.l.b16 %v3271
    %v4775 = vunpack.c.h.b16 %v3271
    %v4776 = vunpack.c.l.b16 %v3272
    %v4777 = vunpack.c.h.b16 %v3272
    %v4778 = vunpack.c.l.b16 %v3273
    %v4779 = vunpack.c.h.b16 %v3273
    %v4780 = vunpack.c.l.b16 %v3274
    %v4781 = vunpack.c.h.b16 %v3274
    %v4782 = vunpack.c.l.b16 %v3275
    %v4783 = vunpack.c.h.b16 %v3275
    %v4784 = vunpack.c.l.b16 %v3276
    %v4785 = vunpack.c.h.b16 %v3276
    %v4786 = vunpack.c.l.b16 %v3277
    %v4787 = vunpack.c.h.b16 %v3277
    %v4788 = vunpack.c.l.b16 %v3278
    %v4789 = vunpack.c.h.b16 %v3278
    %v4790 = vunpack.c.l.b16 %v3279
    %v4791 = vunpack.c.h.b16 %v3279
    %v4792 = vunpack.c.l.b16 %v3280
    %v4793 = vunpack.c.h.b16 %v3280
    %v4794 = vunpack.c.l.b16 %v3281
    %v4795 = vunpack.c.h.b16 %v3281
    %v4796 = vunpack.c.l.b16 %v3282
    %v4797 = vunpack.c.h.b16 %v3282
    %v4798 = vunpack.c.l.b16 %v3283
    %v4799 = vunpack.c.h.b16 %v3283
    %v4800 = vunpack.c.l.b16 %v3284
    %v4801 = vunpack.c.h.b16 %v3284
    %v4802 = vunpack.c.l.b16 %v3285
    %v4803 = vunpack.c.h.b16 %v3285
    %v4804 = vunpack.c.l.b16 %v3286
    %v4805 = vunpack.c.h.b16 %v3286
    %v4806 = vunpack.c.l.b16 %v3287
    %v4807 = vunpack.c.h.b16 %v3287
    %v4808 = vunpack.c.l.b16 %v3288
    %v4809 = vunpack.c.h.b16 %v3288
    %v4810 = vunpack.c.l.b16 %v3289
    %v4811 = vunpack.c.h.b16 %v3289
    %v4812 = vunpack.c.l.b16 %v3290
    %v4813 = vunpack.c.h.b16 %v3290
    %v4814 = vunpack.c.l.b16 %v3291
    %v4815 = vunpack.c.h.b16 %v3291
    %v4816 = vunpack.c.l.b16 %v3292
    %v4817 = vunpack.c.h.b16 %v3292
    %v4818 = vunpack.c.l.b16 %v3293
    %v4819 = vunpack.c.h.b16 %v3293
    %v4820 = vunpack.c.l.b16 %v3294
    %v4821 = vunpack.c.h.b16 %v3294
    %v4822 = vunpack.c.l.b16 %v3295
    %v4823 = vunpack.c.h.b16 %v3295
    %v4824 = vunpack.c.l.b16 %v3296
    %v4825 = vunpack.c.h.b16 %v3296
    %v4826 = vunpack.c.l.b16 %v3297
    %v4827 = vunpack.c.h.b16 %v3297
    %v4828 = vunpack.c.l.b16 %v3298
    %v4829 = vunpack.c.h.b16 %v3298
    %v4830 = vunpack.c.l.b16 %v3299
    %v4831 = vunpack.c.h.b16 %v3299
    %v4832 = vunpack.c.l.b16 %v3300
    %v4833 = vunpack.c.h.b16 %v3300
    %v4834 = vunpack.c.l.b16 %v3301
    %v4835 = vunpack.c.h.b16 %v3301
    %v4836 = vunpack.c.l.b16 %v3302
    %v4837 = vunpack.c.h.b16 %v3302
    %v4838 = vunpack.c.l.b16 %v3303
    %v4839 = vunpack.c.h.b16 %v3303
    %v4840 = vunpack.c.l.b16 %v3304
    %v4841 = vunpack.c.h.b16 %v3304
    %v4842 = vunpack.c.l.b16 %v3305
    %v4843 = vunpack.c.h.b16 %v3305
    %v4844 = vunpack.c.l.b16 %v3306
    %v4845 = vunpack.c.h.b16 %v3306
    %v4846 = vunpack.c.l.b16 %v3307
    %v4847 = vunpack.c.h.b16 %v3307
    %v4848 = vunpack.c.l.b16 %v3308
    %v4849 = vunpack.c.h.b16 %v3308
    %v4850 = vunpack.c.l.b16 %v3309
    %v4851 = vunpack.c.h.b16 %v3309
    %v4852 = vunpack.c.l.b16 %v3310
    %v4853 = vunpack.c.h.b16 %v3310
    %v4854 = vunpack.c.l.b16 %v3311
    %v4855 = vunpack.c.h.b16 %v3311
    %v4856 = vunpack.c.l.b16 %v3312
    %v4857 = vunpack.c.h.b16 %v3312
    %v4858 = vunpack.c.l.b16 %v3313
    %v4859 = vunpack.c.h.b16 %v3313
    %v4860 = vunpack.c.l.b16 %v3314
    %v4861 = vunpack.c.h.b16 %v3314
    %v4862 = vunpack.c.l.b16 %v3315
    %v4863 = vunpack.c.h.b16 %v3315
    %v4864 = vunpack.c.l.b16 %v3316
    %v4865 = vunpack.c.h.b16 %v3316
    %v4866 = vunpack.c.l.b16 %v3317
    %v4867 = vunpack.c.h.b16 %v3317
    %v4868 = vunpack.c.l.b16 %v3318
    %v4869 = vunpack.c.h.b16 %v3318
    %v4870 = vunpack.c.l.b16 %v3319
    %v4871 = vunpack.c.h.b16 %v3319
    %v4872 = vunpack.c.l.b16 %v3320
    %v4873 = vunpack.c.h.b16 %v3320
    %v4874 = vunpack.c.l.b16 %v3321
    %v4875 = vunpack.c.h.b16 %v3321
    %v4876 = vunpack.c.l.b16 %v3322
    %v4877 = vunpack.c.h.b16 %v3322
    %v4878 = vunpack.c.l.b16 %v3323
    %v4879 = vunpack.c.h.b16 %v3323
    %v4880 = vunpack.c.l.b16 %v3324
    %v4881 = vunpack.c.h.b16 %v3324
    %v4882 = vunpack.c.l.b16 %v3325
    %v4883 = vunpack.c.h.b16 %v3325
    %v4884 = vunpack.c.l.b16 %v3326
    %v4885 = vunpack.c.h.b16 %v3326
    %v4886 = vunpack.c.l.b16 %v3327
    %v4887 = vunpack.c.h.b16 %v3327
    %v4888 = vunpack.c.l.b16 %v3328
    %v4889 = vunpack.c.h.b16 %v3328
    %v4890 = vunpack.c.l.b16 %v3329
    %v4891 = vunpack.c.h.b16 %v3329
    %v4892 = vpack.c.b16 %v3876, %v3868
    %v4893 = vpack.c.b16 %v3877, %v3869
    %v4894 = vpack.c.b16 %v3878, %v3870
    %v4895 = vpack.c.b16 %v3879, %v3871
    %v4896 = vpack.c.b16 %v3880, %v3872
    %v4897 = vpack.c.b16 %v3881, %v3873
    %v4898 = vpack.c.b16 %v3882, %v3874
    %v4899 = vpack.c.b16 %v3883, %v3875
    %v4900 = vpack.c.b16 %v3892, %v3884
    %v4901 = vpack.c.b16 %v3893, %v3885
    %v4902 = vpack.c.b16 %v3894, %v3886
    %v4903 = vpack.c.b16 %v3895, %v3887
    %v4904 = vpack.c.b16 %v3896, %v3888
    %v4905 = vpack.c.b16 %v3897, %v3889
    %v4906 = vpack.c.b16 %v3898, %v3890
    %v4907 = vpack.c.b16 %v3899, %v3891
    %v4908 = vpack.c.b16 %v3908, %v3900
    %v4909 = vpack.c.b16 %v3909, %v3901
    %v4910 = vpack.c.b16 %v3910, %v3902
    %v4911 = vpack.c.b16 %v3911, %v3903
    %v4912 = vpack.c.b16 %v3912, %v3904
    %v4913 = vpack.c.b16 %v3913, %v3905
    %v4914 = vpack.c.b16 %v3914, %v3906
    %v4915 = vpack.c.b16 %v3915, %v3907
    %v4916 = vpack.c.b16 %v3924, %v3916
    %v4917 = vpack.c.b16 %v3925, %v3917
    %v4918 = vpack.c.b16 %v3926, %v3918
    %v4919 = vpack.c.b16 %v3927, %v3919
    %v4920 = vpack.c.b16 %v3928, %v3920
    %v4921 = vpack.c.b16 %v3929, %v3921
    %v4922 = vpack.c.b16 %v3930, %v3922
    %v4923 = vpack.c.b16 %v3931, %v3923
    %v4924 = vpack.c.b16 %v3940, %v3932
    %v4925 = vpack.c.b16 %v3941, %v3933
    %v4926 = vpack.c.b16 %v3942, %v3934
    %v4927 = vpack.c.b16 %v3943, %v3935
    %v4928 = vpack.c.b16 %v3944, %v3936
    %v4929 = vpack.c.b16 %v3945, %v3937
    %v4930 = vpack.c.b16 %v3946, %v3938
    %v4931 = vpack.c.b16 %v3947, %v3939
    %v4932 = vpack.c.b16 %v3956, %v3948
    %v4933 = vpack.c.b16 %v3957, %v3949
    %v4934 = vpack.c.b16 %v3958, %v3950
    %v4935 = vpack.c.b16 %v3959, %v3951
    %v4936 = vpack.c.b16 %v3960, %v3952
    %v4937 = vpack.c.b16 %v3961, %v3953
    %v4938 = vpack.c.b16 %v3962, %v3954
    %v4939 = vpack.c.b16 %v3963, %v3955
    %v4940 = vpack.c.b16 %v3972, %v3964
    %v4941 = vpack.c.b16 %v3973, %v3965
    %v4942 = vpack.c.b16 %v3974, %v3966
    %v4943 = vpack.c.b16 %v3975, %v3967
    %v4944 = vpack.c.b16 %v3976, %v3968
    %v4945 = vpack.c.b16 %v3977, %v3969
    %v4946 = vpack.c.b16 %v3978, %v3970
    %v4947 = vpack.c.b16 %v3979, %v3971
    %v4948 = vpack.c.b16 %v3988, %v3980
    %v4949 = vpack.c.b16 %v3989, %v3981
    %v4950 = vpack.c.b16 %v3990, %v3982
    %v4951 = vpack.c.b16 %v3991, %v3983
    %v4952 = vpack.c.b16 %v3992, %v3984
    %v4953 = vpack.c.b16 %v3993, %v3985
    %v4954 = vpack.c.b16 %v3994, %v3986
    %v4955 = vpack.c.b16 %v3995, %v3987
    %v4956 = vpack.c.b16 %v4004, %v3996
    %v4957 = vpack.c.b16 %v4005, %v3997
    %v4958 = vpack.c.b16 %v4006, %v3998
    %v4959 = vpack.c.b16 %v4007, %v3999
    %v4960 = vpack.c.b16 %v4008, %v4000
    %v4961 = vpack.c.b16 %v4009, %v4001
    %v4962 = vpack.c.b16 %v4010, %v4002
    %v4963 = vpack.c.b16 %v4011, %v4003
    %v4964 = vpack.c.b16 %v4020, %v4012
    %v4965 = vpack.c.b16 %v4021, %v4013
    %v4966 = vpack.c.b16 %v4022, %v4014
    %v4967 = vpack.c.b16 %v4023, %v4015
    %v4968 = vpack.c.b16 %v4024, %v4016
    %v4969 = vpack.c.b16 %v4025, %v4017
    %v4970 = vpack.c.b16 %v4026, %v4018
    %v4971 = vpack.c.b16 %v4027, %v4019
    %v4972 = vpack.c.b16 %v4036, %v4028
    %v4973 = vpack.c.b16 %v4037, %v4029
    %v4974 = vpack.c.b16 %v4038, %v4030
    %v4975 = vpack.c.b16 %v4039, %v4031
    %v4976 = vpack.c.b16 %v4040, %v4032
    %v4977 = vpack.c.b16 %v4041, %v4033
    %v4978 = vpack.c.b16 %v4042, %v4034
    %v4979 = vpack.c.b16 %v4043, %v4035
    %v4980 = vpack.c.b16 %v4052, %v4044
    %v4981 = vpack.c.b16 %v4053, %v4045
    %v4982 = vpack.c.b16 %v4054, %v4046
    %v4983 = vpack.c.b16 %v4055, %v4047
    %v4984 = vpack.c.b16 %v4056, %v4048
    %v4985 = vpack.c.b16 %v4057, %v4049
    %v4986 = vpack.c.b16 %v4058, %v4050
    %v4987 = vpack.c.b16 %v4059, %v4051
    %v4988 = vpack.c.b16 %v4068, %v4060
    %v4989 = vpack.c.b16 %v4069, %v4061
    %v4990 = vpack.c.b16 %v4070, %v4062
    %v4991 = vpack.c.b16 %v4071, %v4063
    %v4992 = vpack.c.b16 %v4072, %v4064
    %v4993 = vpack.c.b16 %v4073, %v4065
    %v4994 = vpack.c.b16 %v4074, %v4066
    %v4995 = vpack.c.b16 %v4075, %v4067
    %v4996 = vpack.c.b16 %v4084, %v4076
    %v4997 = vpack.c.b16 %v4085, %v4077
    %v4998 = vpack.c.b16 %v4086, %v4078
    %v4999 = vpack.c.b16 %v4087, %v4079
    %v5000 = vpack.c.b16 %v4088, %v4080
    %v5001 = vpack.c.b16 %v4089, %v4081
    %v5002 = vpack.c.b16 %v4090, %v4082
    %v5003 = vpack.c.b16 %v4091, %v4083
    %v5004 = vpack.c.b16 %v4100, %v4092
    %v5005 = vpack.c.b16 %v4101, %v4093
    %v5006 = vpack.c.b16 %v4102, %v4094
    %v5007 = vpack.c.b16 %v4103, %v4095
    %v5008 = vpack.c.b16 %v4104, %v4096
    %v5009 = vpack.c.b16 %v4105, %v4097
    %v5010 = vpack.c.b16 %v4106, %v4098
    %v5011 = vpack.c.b16 %v4107, %v4099
    %v5012 = vpack.c.b16 %v4116, %v4108
    %v5013 = vpack.c.b16 %v4117, %v4109
    %v5014 = vpack.c.b16 %v4118, %v4110
    %v5015 = vpack.c.b16 %v4119, %v4111
    %v5016 = vpack.c.b16 %v4120, %v4112
    %v5017 = vpack.c.b16 %v4121, %v4113
    %v5018 = vpack.c.b16 %v4122, %v4114
    %v5019 = vpack.c.b16 %v4123, %v4115
    %v5020 = vpack.c.b16 %v4132, %v4124
    %v5021 = vpack.c.b16 %v4133, %v4125
    %v5022 = vpack.c.b16 %v4134, %v4126
    %v5023 = vpack.c.b16 %v4135, %v4127
    %v5024 = vpack.c.b16 %v4136, %v4128
    %v5025 = vpack.c.b16 %v4137, %v4129
    %v5026 = vpack.c.b16 %v4138, %v4130
    %v5027 = vpack.c.b16 %v4139, %v4131
    %v5028 = vpack.c.b16 %v4148, %v4140
    %v5029 = vpack.c.b16 %v4149, %v4141
    %v5030 = vpack.c.b16 %v4150, %v4142
    %v5031 = vpack.c.b16 %v4151, %v4143
    %v5032 = vpack.c.b16 %v4152, %v4144
    %v5033 = vpack.c.b16 %v4153, %v4145
    %v5034 = vpack.c.b16 %v4154, %v4146
    %v5035 = vpack.c.b16 %v4155, %v4147
    %v5036 = vpack.c.b16 %v4164, %v4156
    %v5037 = vpack.c.b16 %v4165, %v4157
    %v5038 = vpack.c.b16 %v4166, %v4158
    %v5039 = vpack.c.b16 %v4167, %v4159
    %v5040 = vpack.c.b16 %v4168, %v4160
    %v5041 = vpack.c.b16 %v4169, %v4161
    %v5042 = vpack.c.b16 %v4170, %v4162
    %v5043 = vpack.c.b16 %v4171, %v4163
    %v5044 = vpack.c.b16 %v4180, %v4172
    %v5045 = vpack.c.b16 %v4181, %v4173
    %v5046 = vpack.c.b16 %v4182, %v4174
    %v5047 = vpack.c.b16 %v4183, %v4175
    %v5048 = vpack.c.b16 %v4184, %v4176
    %v5049 = vpack.c.b16 %v4185, %v4177
    %v5050 = vpack.c.b16 %v4186, %v4178
    %v5051 = vpack.c.b16 %v4187, %v4179
    %v5052 = vpack.c.b16 %v4196, %v4188
    %v5053 = vpack.c.b16 %v4197, %v4189
    %v5054 = vpack.c.b16 %v4198, %v4190
    %v5055 = vpack.c.b16 %v4199, %v4191
    %v5056 = vpack.c.b16 %v4200, %v4192
    %v5057 = vpack.c.b16 %v4201, %v4193
    %v5058 = vpack.c.b16 %v4202, %v4194
    %v5059 = vpack.c.b16 %v4203, %v4195
    %v5060 = vpack.c.b16 %v4212, %v4204
    %v5061 = vpack.c.b16 %v4213, %v4205
    %v5062 = vpack.c.b16 %v4214, %v4206
    %v5063 = vpack.c.b16 %v4215, %v4207
    %v5064 = vpack.c.b16 %v4216, %v4208
    %v5065 = vpack.c.b16 %v4217, %v4209
    %v5066 = vpack.c.b16 %v4218, %v4210
    %v5067 = vpack.c.b16 %v4219, %v4211
    %v5068 = vpack.c.b16 %v4228, %v4220
    %v5069 = vpack.c.b16 %v4229, %v4221
    %v5070 = vpack.c.b16 %v4230, %v4222
    %v5071 = vpack.c.b16 %v4231, %v4223
    %v5072 = vpack.c.b16 %v4232, %v4224
    %v5073 = vpack.c.b16 %v4233, %v4225
    %v5074 = vpack.c.b16 %v4234, %v4226
    %v5075 = vpack.c.b16 %v4235, %v4227
    %v5076 = vpack.c.b16 %v4244, %v4236
    %v5077 = vpack.c.b16 %v4245, %v4237
    %v5078 = vpack.c.b16 %v4246, %v4238
    %v5079 = vpack.c.b16 %v4247, %v4239
    %v5080 = vpack.c.b16 %v4248, %v4240
    %v5081 = vpack.c.b16 %v4249, %v4241
    %v5082 = vpack.c.b16 %v4250, %v4242
    %v5083 = vpack.c.b16 %v4251, %v4243
    %v5084 = vpack.c.b16 %v4260, %v4252
    %v5085 = vpack.c.b16 %v4261, %v4253
    %v5086 = vpack.c.b16 %v4262, %v4254
    %v5087 = vpack.c.b16 %v4263, %v4255
    %v5088 = vpack.c.b16 %v4264, %v4256
    %v5089 = vpack.c.b16 %v4265, %v4257
    %v5090 = vpack.c.b16 %v4266, %v4258
    %v5091 = vpack.c.b16 %v4267, %v4259
    %v5092 = vpack.c.b16 %v4276, %v4268
    %v5093 = vpack.c.b16 %v4277, %v4269
    %v5094 = vpack.c.b16 %v4278, %v4270
    %v5095 = vpack.c.b16 %v4279, %v4271
    %v5096 = vpack.c.b16 %v4280, %v4272
    %v5097 = vpack.c.b16 %v4281, %v4273
    %v5098 = vpack.c.b16 %v4282, %v4274
    %v5099 = vpack.c.b16 %v4283, %v4275
    %v5100 = vpack.c.b16 %v4292, %v4284
    %v5101 = vpack.c.b16 %v4293, %v4285
    %v5102 = vpack.c.b16 %v4294, %v4286
    %v5103 = vpack.c.b16 %v4295, %v4287
    %v5104 = vpack.c.b16 %v4296, %v4288
    %v5105 = vpack.c.b16 %v4297, %v4289
    %v5106 = vpack.c.b16 %v4298, %v4290
    %v5107 = vpack.c.b16 %v4299, %v4291
    %v5108 = vpack.c.b16 %v4308, %v4300
    %v5109 = vpack.c.b16 %v4309, %v4301
    %v5110 = vpack.c.b16 %v4310, %v4302
    %v5111 = vpack.c.b16 %v4311, %v4303
    %v5112 = vpack.c.b16 %v4312, %v4304
    %v5113 = vpack.c.b16 %v4313, %v4305
    %v5114 = vpack.c.b16 %v4314, %v4306
    %v5115 = vpack.c.b16 %v4315, %v4307
    %v5116 = vpack.c.b16 %v4324, %v4316
    %v5117 = vpack.c.b16 %v4325, %v4317
    %v5118 = vpack.c.b16 %v4326, %v4318
    %v5119 = vpack.c.b16 %v4327, %v4319
    %v5120 = vpack.c.b16 %v4328, %v4320
    %v5121 = vpack.c.b16 %v4329, %v4321
    %v5122 = vpack.c.b16 %v4330, %v4322
    %v5123 = vpack.c.b16 %v4331, %v4323
    %v5124 = vpack.c.b16 %v4340, %v4332
    %v5125 = vpack.c.b16 %v4341, %v4333
    %v5126 = vpack.c.b16 %v4342, %v4334
    %v5127 = vpack.c.b16 %v4343, %v4335
    %v5128 = vpack.c.b16 %v4344, %v4336
    %v5129 = vpack.c.b16 %v4345, %v4337
    %v5130 = vpack.c.b16 %v4346, %v4338
    %v5131 = vpack.c.b16 %v4347, %v4339
    %v5132 = vpack.c.b16 %v4356, %v4348
    %v5133 = vpack.c.b16 %v4357, %v4349
    %v5134 = vpack.c.b16 %v4358, %v4350
    %v5135 = vpack.c.b16 %v4359, %v4351
    %v5136 = vpack.c.b16 %v4360, %v4352
    %v5137 = vpack.c.b16 %v4361, %v4353
    %v5138 = vpack.c.b16 %v4362, %v4354
    %v5139 = vpack.c.b16 %v4363, %v4355
    %v5140 = vpack.c.b16 %v4372, %v4364
    %v5141 = vpack.c.b16 %v4373, %v4365
    %v5142 = vpack.c.b16 %v4374, %v4366
    %v5143 = vpack.c.b16 %v4375, %v4367
    %v5144 = vpack.c.b16 %v4376, %v4368
    %v5145 = vpack.c.b16 %v4377, %v4369
    %v5146 = vpack.c.b16 %v4378, %v4370
    %v5147 = vpack.c.b16 %v4379, %v4371
    %v5148 = vpack.c.b16 %v4388, %v4380
    %v5149 = vpack.c.b16 %v4389, %v4381
    %v5150 = vpack.c.b16 %v4390, %v4382
    %v5151 = vpack.c.b16 %v4391, %v4383
    %v5152 = vpack.c.b16 %v4392, %v4384
    %v5153 = vpack.c.b16 %v4393, %v4385
    %v5154 = vpack.c.b16 %v4394, %v4386
    %v5155 = vpack.c.b16 %v4395, %v4387
    %v5156 = vpack.c.b16 %v4404, %v4396
    %v5157 = vpack.c.b16 %v4405, %v4397
    %v5158 = vpack.c.b16 %v4406, %v4398
    %v5159 = vpack.c.b16 %v4407, %v4399
    %v5160 = vpack.c.b16 %v4408, %v4400
    %v5161 = vpack.c.b16 %v4409, %v4401
    %v5162 = vpack.c.b16 %v4410, %v4402
    %v5163 = vpack.c.b16 %v4411, %v4403
    %v5164 = vpack.c.b16 %v4420, %v4412
    %v5165 = vpack.c.b16 %v4421, %v4413
    %v5166 = vpack.c.b16 %v4422, %v4414
    %v5167 = vpack.c.b16 %v4423, %v4415
    %v5168 = vpack.c.b16 %v4424, %v4416
    %v5169 = vpack.c.b16 %v4425, %v4417
    %v5170 = vpack.c.b16 %v4426, %v4418
    %v5171 = vpack.c.b16 %v4427, %v4419
    %v5172 = vpack.c.b16 %v4436, %v4428
    %v5173 = vpack.c.b16 %v4437, %v4429
    %v5174 = vpack.c.b16 %v4438, %v4430
    %v5175 = vpack.c.b16 %v4439, %v4431
    %v5176 = vpack.c.b16 %v4440, %v4432
    %v5177 = vpack.c.b16 %v4441, %v4433
    %v5178 = vpack.c.b16 %v4442, %v4434
    %v5179 = vpack.c.b16 %v4443, %v4435
    %v5180 = vpack.c.b16 %v4452, %v4444
    %v5181 = vpack.c.b16 %v4453, %v4445
    %v5182 = vpack.c.b16 %v4454, %v4446
    %v5183 = vpack.c.b16 %v4455, %v4447
    %v5184 = vpack.c.b16 %v4456, %v4448
    %v5185 = vpack.c.b16 %v4457, %v4449
    %v5186 = vpack.c.b16 %v4458, %v4450
    %v5187 = vpack.c.b16 %v4459, %v4451
    %v5188 = vpack.c.b16 %v4468, %v4460
    %v5189 = vpack.c.b16 %v4469, %v4461
    %v5190 = vpack.c.b16 %v4470, %v4462
    %v5191 = vpack.c.b16 %v4471, %v4463
    %v5192 = vpack.c.b16 %v4472, %v4464
    %v5193 = vpack.c.b16 %v4473, %v4465
    %v5194 = vpack.c.b16 %v4474, %v4466
    %v5195 = vpack.c.b16 %v4475, %v4467
    %v5196 = vpack.c.b16 %v4484, %v4476
    %v5197 = vpack.c.b16 %v4485, %v4477
    %v5198 = vpack.c.b16 %v4486, %v4478
    %v5199 = vpack.c.b16 %v4487, %v4479
    %v5200 = vpack.c.b16 %v4488, %v4480
    %v5201 = vpack.c.b16 %v4489, %v4481
    %v5202 = vpack.c.b16 %v4490, %v4482
    %v5203 = vpack.c.b16 %v4491, %v4483
    %v5204 = vpack.c.b16 %v4500, %v4492
    %v5205 = vpack.c.b16 %v4501, %v4493
    %v5206 = vpack.c.b16 %v4502, %v4494
    %v5207 = vpack.c.b16 %v4503, %v4495
    %v5208 = vpack.c.b16 %v4504, %v4496
    %v5209 = vpack.c.b16 %v4505, %v4497
    %v5210 = vpack.c.b16 %v4506, %v4498
    %v5211 = vpack.c.b16 %v4507, %v4499
    %v5212 = vpack.c.b16 %v4516, %v4508
    %v5213 = vpack.c.b16 %v4517, %v4509
    %v5214 = vpack.c.b16 %v4518, %v4510
    %v5215 = vpack.c.b16 %v4519, %v4511
    %v5216 = vpack.c.b16 %v4520, %v4512
    %v5217 = vpack.c.b16 %v4521, %v4513
    %v5218 = vpack.c.b16 %v4522, %v4514
    %v5219 = vpack.c.b16 %v4523, %v4515
    %v5220 = vpack.c.b16 %v4532, %v4524
    %v5221 = vpack.c.b16 %v4533, %v4525
    %v5222 = vpack.c.b16 %v4534, %v4526
    %v5223 = vpack.c.b16 %v4535, %v4527
    %v5224 = vpack.c.b16 %v4536, %v4528
    %v5225 = vpack.c.b16 %v4537, %v4529
    %v5226 = vpack.c.b16 %v4538, %v4530
    %v5227 = vpack.c.b16 %v4539, %v4531
    %v5228 = vpack.c.b16 %v4548, %v4540
    %v5229 = vpack.c.b16 %v4549, %v4541
    %v5230 = vpack.c.b16 %v4550, %v4542
    %v5231 = vpack.c.b16 %v4551, %v4543
    %v5232 = vpack.c.b16 %v4552, %v4544
    %v5233 = vpack.c.b16 %v4553, %v4545
    %v5234 = vpack.c.b16 %v4554, %v4546
    %v5235 = vpack.c.b16 %v4555, %v4547
    %v5236 = vpack.c.b16 %v4564, %v4556
    %v5237 = vpack.c.b16 %v4565, %v4557
    %v5238 = vpack.c.b16 %v4566, %v4558
    %v5239 = vpack.c.b16 %v4567, %v4559
    %v5240 = vpack.c.b16 %v4568, %v4560
    %v5241 = vpack.c.b16 %v4569, %v4561
    %v5242 = vpack.c.b16 %v4570, %v4562
    %v5243 = vpack.c.b16 %v4571, %v4563
    %v5244 = vpack.c.b16 %v4580, %v4572
    %v5245 = vpack.c.b16 %v4581, %v4573
    %v5246 = vpack.c.b16 %v4582, %v4574
    %v5247 = vpack.c.b16 %v4583, %v4575
    %v5248 = vpack.c.b16 %v4584, %v4576
    %v5249 = vpack.c.b16 %v4585, %v4577
    %v5250 = vpack.c.b16 %v4586, %v4578
    %v5251 = vpack.c.b16 %v4587, %v4579
    %v5252 = vpack.c.b16 %v4596, %v4588
    %v5253 = vpack.c.b16 %v4597, %v4589
    %v5254 = vpack.c.b16 %v4598, %v4590
    %v5255 = vpack.c.b16 %v4599, %v4591
    %v5256 = vpack.c.b16 %v4600, %v4592
    %v5257 = vpack.c.b16 %v4601, %v4593
    %v5258 = vpack.c.b16 %v4602, %v4594
    %v5259 = vpack.c.b16 %v4603, %v4595
    %v5260 = vpack.c.b16 %v4612, %v4604
    %v5261 = vpack.c.b16 %v4613, %v4605
    %v5262 = vpack.c.b16 %v4614, %v4606
    %v5263 = vpack.c.b16 %v4615, %v4607
    %v5264 = vpack.c.b16 %v4616, %v4608
    %v5265 = vpack.c.b16 %v4617, %v4609
    %v5266 = vpack.c.b16 %v4618, %v4610
    %v5267 = vpack.c.b16 %v4619, %v4611
    %v5268 = vpack.c.b16 %v4628, %v4620
    %v5269 = vpack.c.b16 %v4629, %v4621
    %v5270 = vpack.c.b16 %v4630, %v4622
    %v5271 = vpack.c.b16 %v4631, %v4623
    %v5272 = vpack.c.b16 %v4632, %v4624
    %v5273 = vpack.c.b16 %v4633, %v4625
    %v5274 = vpack.c.b16 %v4634, %v4626
    %v5275 = vpack.c.b16 %v4635, %v4627
    %v5276 = vpack.c.b16 %v4644, %v4636
    %v5277 = vpack.c.b16 %v4645, %v4637
    %v5278 = vpack.c.b16 %v4646, %v4638
    %v5279 = vpack.c.b16 %v4647, %v4639
    %v5280 = vpack.c.b16 %v4648, %v4640
    %v5281 = vpack.c.b16 %v4649, %v4641
    %v5282 = vpack.c.b16 %v4650, %v4642
    %v5283 = vpack.c.b16 %v4651, %v4643
    %v5284 = vpack.c.b16 %v4660, %v4652
    %v5285 = vpack.c.b16 %v4661, %v4653
    %v5286 = vpack.c.b16 %v4662, %v4654
    %v5287 = vpack.c.b16 %v4663, %v4655
    %v5288 = vpack.c.b16 %v4664, %v4656
    %v5289 = vpack.c.b16 %v4665, %v4657
    %v5290 = vpack.c.b16 %v4666, %v4658
    %v5291 = vpack.c.b16 %v4667, %v4659
    %v5292 = vpack.c.b16 %v4676, %v4668
    %v5293 = vpack.c.b16 %v4677, %v4669
    %v5294 = vpack.c.b16 %v4678, %v4670
    %v5295 = vpack.c.b16 %v4679, %v4671
    %v5296 = vpack.c.b16 %v4680, %v4672
    %v5297 = vpack.c.b16 %v4681, %v4673
    %v5298 = vpack.c.b16 %v4682, %v4674
    %v5299 = vpack.c.b16 %v4683, %v4675
    %v5300 = vpack.c.b16 %v4692, %v4684
    %v5301 = vpack.c.b16 %v4693, %v4685
    %v5302 = vpack.c.b16 %v4694, %v4686
    %v5303 = vpack.c.b16 %v4695, %v4687
    %v5304 = vpack.c.b16 %v4696, %v4688
    %v5305 = vpack.c.b16 %v4697, %v4689
    %v5306 = vpack.c.b16 %v4698, %v4690
    %v5307 = vpack.c.b16 %v4699, %v4691
    %v5308 = vpack.c.b16 %v4708, %v4700
    %v5309 = vpack.c.b16 %v4709, %v4701
    %v5310 = vpack.c.b16 %v4710, %v4702
    %v5311 = vpack.c.b16 %v4711, %v4703
    %v5312 = vpack.c.b16 %v4712, %v4704
    %v5313 = vpack.c.b16 %v4713, %v4705
    %v5314 = vpack.c.b16 %v4714, %v4706
    %v5315 = vpack.c.b16 %v4715, %v4707
    %v5316 = vpack.c.b16 %v4724, %v4716
    %v5317 = vpack.c.b16 %v4725, %v4717
    %v5318 = vpack.c.b16 %v4726, %v4718
    %v5319 = vpack.c.b16 %v4727, %v4719
    %v5320 = vpack.c.b16 %v4728, %v4720
    %v5321 = vpack.c.b16 %v4729, %v4721
    %v5322 = vpack.c.b16 %v4730, %v4722
    %v5323 = vpack.c.b16 %v4731, %v4723
    %v5324 = vpack.c.b16 %v4740, %v4732
    %v5325 = vpack.c.b16 %v4741, %v4733
    %v5326 = vpack.c.b16 %v4742, %v4734
    %v5327 = vpack.c.b16 %v4743, %v4735
    %v5328 = vpack.c.b16 %v4744, %v4736
    %v5329 = vpack.c.b16 %v4745, %v4737
    %v5330 = vpack.c.b16 %v4746, %v4738
    %v5331 = vpack.c.b16 %v4747, %v4739
    %v5332 = vpack.c.b16 %v4756, %v4748
    %v5333 = vpack.c.b16 %v4757, %v4749
    %v5334 = vpack.c.b16 %v4758, %v4750
    %v5335 = vpack.c.b16 %v4759, %v4751
    %v5336 = vpack.c.b16 %v4760, %v4752
    %v5337 = vpack.c.b16 %v4761, %v4753
    %v5338 = vpack.c.b16 %v4762, %v4754
    %v5339 = vpack.c.b16 %v4763, %v4755
    %v5340 = vpack.c.b16 %v4772, %v4764
    %v5341 = vpack.c.b16 %v4773, %v4765
    %v5342 = vpack.c.b16 %v4774, %v4766
    %v5343 = vpack.c.b16 %v4775, %v4767
    %v5344 = vpack.c.b16 %v4776, %v4768
    %v5345 = vpack.c.b16 %v4777, %v4769
    %v5346 = vpack.c.b16 %v4778, %v4770
    %v5347 = vpack.c.b16 %v4779, %v4771
    %v5348 = vpack.c.b16 %v4788, %v4780
    %v5349 = vpack.c.b16 %v4789, %v4781
    %v5350 = vpack.c.b16 %v4790, %v4782
    %v5351 = vpack.c.b16 %v4791, %v4783
    %v5352 = vpack.c.b16 %v4792, %v4784
    %v5353 = vpack.c.b16 %v4793, %v4785
    %v5354 = vpack.c.b16 %v4794, %v4786
    %v5355 = vpack.c.b16 %v4795, %v4787
    %v5356 = vpack.c.b16 %v4804, %v4796
    %v5357 = vpack.c.b16 %v4805, %v4797
    %v5358 = vpack.c.b16 %v4806, %v4798
    %v5359 = vpack.c.b16 %v4807, %v4799
    %v5360 = vpack.c.b16 %v4808, %v4800
    %v5361 = vpack.c.b16 %v4809, %v4801
    %v5362 = vpack.c.b16 %v4810, %v4802
    %v5363 = vpack.c.b16 %v4811, %v4803
    %v5364 = vpack.c.b16 %v4820, %v4812
    %v5365 = vpack.c.b16 %v4821, %v4813
    %v5366 = vpack.c.b16 %v4822, %v4814
    %v5367 = vpack.c.b16 %v4823, %v4815
    %v5368 = vpack.c.b16 %v4824, %v4816
    %v5369 = vpack.c.b16 %v4825, %v4817
    %v5370 = vpack.c.b16 %v4826, %v4818
    %v5371 = vpack.c.b16 %v4827, %v4819
    %v5372 = vpack.c.b16 %v4836, %v4828
    %v5373 = vpack.c.b16 %v4837, %v4829
    %v5374 = vpack.c.b16 %v4838, %v4830
    %v5375 = vpack.c.b16 %v4839, %v4831
    %v5376 = vpack.c.b16 %v4840, %v4832
    %v5377 = vpack.c.b16 %v4841, %v4833
    %v5378 = vpack.c.b16 %v4842, %v4834
    %v5379 = vpack.c.b16 %v4843, %v4835
    %v5380 = vpack.c.b16 %v4852, %v4844
    %v5381 = vpack.c.b16 %v4853, %v4845
    %v5382 = vpack.c.b16 %v4854, %v4846
    %v5383 = vpack.c.b16 %v4855, %v4847
    %v5384 = vpack.c.b16 %v4856, %v4848
    %v5385 = vpack.c.b16 %v4857, %v4849
    %v5386 = vpack.c.b16 %v4858, %v4850
    %v5387 = vpack.c.b16 %v4859, %v4851
    %v5388 = vpack.c.b16 %v4868, %v4860
    %v5389 = vpack.c.b16 %v4869, %v4861
    %v5390 = vpack.c.b16 %v4870, %v4862
    %v5391 = vpack.c.b16 %v4871, %v4863
    %v5392 = vpack.c.b16 %v4872, %v4864
    %v5393 = vpack.c.b16 %v4873, %v4865
    %v5394 = vpack.c.b16 %v4874, %v4866
    %v5395 = vpack.c.b16 %v4875, %v4867
    %v5396 = vpack.c.b16 %v4884, %v4876
    %v5397 = vpack.c.b16 %v4885, %v4877
    %v5398 = vpack.c.b16 %v4886, %v4878
    %v5399 = vpack.c.b16 %v4887, %v4879
    %v5400 = vpack.c.b16 %v4888, %v4880
    %v5401 = vpack.c.b16 %v4889, %v4881
    %v5402 = vpack.c.b16 %v4890, %v4882
    %v5403 = vpack.c.b16 %v4891, %v4883
    %5916 = vmatpush.bf16.msra.mxu0 %v4948
    %5917 = vmatpush.bf16.msra.mxu0 %v4940
    %5918 = vmatpush.bf16.msra.mxu0 %v4932
    %5919 = vmatpush.bf16.msra.mxu0 %v4924
    %5920 = vmatpush.bf16.msra.mxu0 %v4916
    %5921 = vmatpush.bf16.msra.mxu0 %v4908
    %5922 = vmatpush.bf16.msra.mxu0 %v4900
    %5923 = vmatpush.bf16.msra.mxu0 %v4892
    %5924 = vmatmul.bf16.gmra.mxu0 %v3330
    %v5925 = vpop.f32.mrf.mxu0
    %v5926 = vadd.f32 %v3340, %v5925
    %v5927 = vpop.f32.mrf.mxu0
    %5928 = vdwg.mxu0
    %5929 = vmatpush.bf16.msra.mxu0 %v5012
    %5930 = vmatpush.bf16.msra.mxu0 %v5004
    %5931 = vmatpush.bf16.msra.mxu0 %v4996
    %5932 = vmatpush.bf16.msra.mxu0 %v4988
    %5933 = vmatpush.bf16.msra.mxu0 %v4980
    %5934 = vmatpush.bf16.msra.mxu0 %v4972
    %5935 = vmatpush.bf16.msra.mxu0 %v4964
    %5936 = vmatpush.bf16.msra.mxu0 %v4956
    %5937 = vmatmul.bf16.gmra.mxu0 %v3331
    %v5938 = vpop.f32.mrf.mxu0
    %v5939 = vadd.f32 %v5926, %v5938
    %v5940 = vpop.f32.mrf.mxu0
    %5941 = vdwg.mxu0
    %5942 = vmatpush.bf16.msra.mxu0 %v5076
    %5943 = vmatpush.bf16.msra.mxu0 %v5068
    %5944 = vmatpush.bf16.msra.mxu0 %v5060
    %5945 = vmatpush.bf16.msra.mxu0 %v5052
    %5946 = vmatpush.bf16.msra.mxu0 %v5044
    %5947 = vmatpush.bf16.msra.mxu0 %v5036
    %5948 = vmatpush.bf16.msra.mxu0 %v5028
    %5949 = vmatpush.bf16.msra.mxu0 %v5020
    %5950 = vmatmul.bf16.gmra.mxu0 %v3332
    %v5951 = vpop.f32.mrf.mxu0
    %v5952 = vadd.f32 %v5939, %v5951
    %v5953 = vpop.f32.mrf.mxu0
    %5954 = vdwg.mxu0
    %5955 = vmatpush.bf16.msra.mxu0 %v5140
    %5956 = vmatpush.bf16.msra.mxu0 %v5132
    %5957 = vmatpush.bf16.msra.mxu0 %v5124
    %5958 = vmatpush.bf16.msra.mxu0 %v5116
    %5959 = vmatpush.bf16.msra.mxu0 %v5108
    %5960 = vmatpush.bf16.msra.mxu0 %v5100
    %5961 = vmatpush.bf16.msra.mxu0 %v5092
    %5962 = vmatpush.bf16.msra.mxu0 %v5084
    %5963 = vmatmul.bf16.gmra.mxu0 %v3333
    %v5964 = vpop.f32.mrf.mxu0
    %v5965 = vadd.f32 %v5952, %v5964
    %v5966 = vpop.f32.mrf.mxu0
    %5967 = vdwg.mxu0
    %5968 = vmatpush.bf16.msra.mxu0 %v5204
    %5969 = vmatpush.bf16.msra.mxu0 %v5196
    %5970 = vmatpush.bf16.msra.mxu0 %v5188
    %5971 = vmatpush.bf16.msra.mxu0 %v5180
    %5972 = vmatpush.bf16.msra.mxu0 %v5172
    %5973 = vmatpush.bf16.msra.mxu0 %v5164
    %5974 = vmatpush.bf16.msra.mxu0 %v5156
    %5975 = vmatpush.bf16.msra.mxu0 %v5148
    %5976 = vmatmul.bf16.gmra.mxu0 %v3334
    %v5977 = vpop.f32.mrf.mxu0
    %v5978 = vadd.f32 %v5965, %v5977
    %v5979 = vpop.f32.mrf.mxu0
    %5980 = vdwg.mxu0
    %5981 = vmatpush.bf16.msra.mxu0 %v5268
    %5982 = vmatpush.bf16.msra.mxu0 %v5260
    %5983 = vmatpush.bf16.msra.mxu0 %v5252
    %5984 = vmatpush.bf16.msra.mxu0 %v5244
    %5985 = vmatpush.bf16.msra.mxu0 %v5236
    %5986 = vmatpush.bf16.msra.mxu0 %v5228
    %5987 = vmatpush.bf16.msra.mxu0 %v5220
    %5988 = vmatpush.bf16.msra.mxu0 %v5212
    %5989 = vmatmul.bf16.gmra.mxu0 %v3335
    %v5990 = vpop.f32.mrf.mxu0
    %v5991 = vadd.f32 %v5978, %v5990
    %v5992 = vpop.f32.mrf.mxu0
    %5993 = vdwg.mxu0
    %5994 = vmatpush.bf16.msra.mxu0 %v5332
    %5995 = vmatpush.bf16.msra.mxu0 %v5324
    %5996 = vmatpush.bf16.msra.mxu0 %v5316
    %5997 = vmatpush.bf16.msra.mxu0 %v5308
    %5998 = vmatpush.bf16.msra.mxu0 %v5300
    %5999 = vmatpush.bf16.msra.mxu0 %v5292
    %6000 = vmatpush.bf16.msra.mxu0 %v5284
    %6001 = vmatpush.bf16.msra.mxu0 %v5276
    %6002 = vmatmul.bf16.gmra.mxu0 %v3336
    %v6003 = vpop.f32.mrf.mxu0
    %v6004 = vadd.f32 %v5991, %v6003
    %v6005 = vpop.f32.mrf.mxu0
    %6006 = vdwg.mxu0
    %6007 = vmatpush.bf16.msra.mxu0 %v5396
    %6008 = vmatpush.bf16.msra.mxu0 %v5388
    %6009 = vmatpush.bf16.msra.mxu0 %v5380
    %6010 = vmatpush.bf16.msra.mxu0 %v5372
    %6011 = vmatpush.bf16.msra.mxu0 %v5364
    %6012 = vmatpush.bf16.msra.mxu0 %v5356
    %6013 = vmatpush.bf16.msra.mxu0 %v5348
    %6014 = vmatpush.bf16.msra.mxu0 %v5340
    %6015 = vmatmul.bf16.gmra.mxu0 %v3337
    %v6016 = vpop.f32.mrf.mxu0
    %v6017 = vadd.f32 %v6004, %v6016
    %v6018 = vpop.f32.mrf.mxu0
    %6019 = vdwg.mxu0
    %6020 = vmatpush.bf16.msra.mxu0 %v4949
    %6021 = vmatpush.bf16.msra.mxu0 %v4941
    %6022 = vmatpush.bf16.msra.mxu0 %v4933
    %6023 = vmatpush.bf16.msra.mxu0 %v4925
    %6024 = vmatpush.bf16.msra.mxu0 %v4917
    %6025 = vmatpush.bf16.msra.mxu0 %v4909
    %6026 = vmatpush.bf16.msra.mxu0 %v4901
    %6027 = vmatpush.bf16.msra.mxu0 %v4893
    %6028 = vmatmul.bf16.gmra.mxu0 %v3330
    %v6029 = vpop.f32.mrf.mxu0
    %v6030 = vadd.f32 %v3341, %v6029
    %v6031 = vpop.f32.mrf.mxu0
    %6032 = vdwg.mxu0
    %6033 = vmatpush.bf16.msra.mxu0 %v5013
    %6034 = vmatpush.bf16.msra.mxu0 %v5005
    %6035 = vmatpush.bf16.msra.mxu0 %v4997
    %6036 = vmatpush.bf16.msra.mxu0 %v4989
    %6037 = vmatpush.bf16.msra.mxu0 %v4981
    %6038 = vmatpush.bf16.msra.mxu0 %v4973
    %6039 = vmatpush.bf16.msra.mxu0 %v4965
    %6040 = vmatpush.bf16.msra.mxu0 %v4957
    %6041 = vmatmul.bf16.gmra.mxu0 %v3331
    %v6042 = vpop.f32.mrf.mxu0
    %v6043 = vadd.f32 %v6030, %v6042
    %v6044 = vpop.f32.mrf.mxu0
    %6045 = vdwg.mxu0
    %6046 = vmatpush.bf16.msra.mxu0 %v5077
    %6047 = vmatpush.bf16.msra.mxu0 %v5069
    %6048 = vmatpush.bf16.msra.mxu0 %v5061
    %6049 = vmatpush.bf16.msra.mxu0 %v5053
    %6050 = vmatpush.bf16.msra.mxu0 %v5045
    %6051 = vmatpush.bf16.msra.mxu0 %v5037
    %6052 = vmatpush.bf16.msra.mxu0 %v5029
    %6053 = vmatpush.bf16.msra.mxu0 %v5021
    %6054 = vmatmul.bf16.gmra.mxu0 %v3332
    %v6055 = vpop.f32.mrf.mxu0
    %v6056 = vadd.f32 %v6043, %v6055
    %v6057 = vpop.f32.mrf.mxu0
    %6058 = vdwg.mxu0
    %6059 = vmatpush.bf16.msra.mxu0 %v5141
    %6060 = vmatpush.bf16.msra.mxu0 %v5133
    %6061 = vmatpush.bf16.msra.mxu0 %v5125
    %6062 = vmatpush.bf16.msra.mxu0 %v5117
    %6063 = vmatpush.bf16.msra.mxu0 %v5109
    %6064 = vmatpush.bf16.msra.mxu0 %v5101
    %6065 = vmatpush.bf16.msra.mxu0 %v5093
    %6066 = vmatpush.bf16.msra.mxu0 %v5085
    %6067 = vmatmul.bf16.gmra.mxu0 %v3333
    %v6068 = vpop.f32.mrf.mxu0
    %v6069 = vadd.f32 %v6056, %v6068
    %v6070 = vpop.f32.mrf.mxu0
    %6071 = vdwg.mxu0
    %6072 = vmatpush.bf16.msra.mxu0 %v5205
    %6073 = vmatpush.bf16.msra.mxu0 %v5197
    %6074 = vmatpush.bf16.msra.mxu0 %v5189
    %6075 = vmatpush.bf16.msra.mxu0 %v5181
    %6076 = vmatpush.bf16.msra.mxu0 %v5173
    %6077 = vmatpush.bf16.msra.mxu0 %v5165
    %6078 = vmatpush.bf16.msra.mxu0 %v5157
    %6079 = vmatpush.bf16.msra.mxu0 %v5149
    %6080 = vmatmul.bf16.gmra.mxu0 %v3334
    %v6081 = vpop.f32.mrf.mxu0
    %v6082 = vadd.f32 %v6069, %v6081
    %v6083 = vpop.f32.mrf.mxu0
    %6084 = vdwg.mxu0
    %6085 = vmatpush.bf16.msra.mxu0 %v5269
    %6086 = vmatpush.bf16.msra.mxu0 %v5261
    %6087 = vmatpush.bf16.msra.mxu0 %v5253
    %6088 = vmatpush.bf16.msra.mxu0 %v5245
    %6089 = vmatpush.bf16.msra.mxu0 %v5237
    %6090 = vmatpush.bf16.msra.mxu0 %v5229
    %6091 = vmatpush.bf16.msra.mxu0 %v5221
    %6092 = vmatpush.bf16.msra.mxu0 %v5213
    %6093 = vmatmul.bf16.gmra.mxu0 %v3335
    %v6094 = vpop.f32.mrf.mxu0
    %v6095 = vadd.f32 %v6082, %v6094
    %v6096 = vpop.f32.mrf.mxu0
    %6097 = vdwg.mxu0
    %6098 = vmatpush.bf16.msra.mxu0 %v5333
    %6099 = vmatpush.bf16.msra.mxu0 %v5325
    %6100 = vmatpush.bf16.msra.mxu0 %v5317
    %6101 = vmatpush.bf16.msra.mxu0 %v5309
    %6102 = vmatpush.bf16.msra.mxu0 %v5301
    %6103 = vmatpush.bf16.msra.mxu0 %v5293
    %6104 = vmatpush.bf16.msra.mxu0 %v5285
    %6105 = vmatpush.bf16.msra.mxu0 %v5277
    %6106 = vmatmul.bf16.gmra.mxu0 %v3336
    %v6107 = vpop.f32.mrf.mxu0
    %v6108 = vadd.f32 %v6095, %v6107
    %v6109 = vpop.f32.mrf.mxu0
    %6110 = vdwg.mxu0
    %6111 = vmatpush.bf16.msra.mxu0 %v5397
    %6112 = vmatpush.bf16.msra.mxu0 %v5389
    %6113 = vmatpush.bf16.msra.mxu0 %v5381
    %6114 = vmatpush.bf16.msra.mxu0 %v5373
    %6115 = vmatpush.bf16.msra.mxu0 %v5365
    %6116 = vmatpush.bf16.msra.mxu0 %v5357
    %6117 = vmatpush.bf16.msra.mxu0 %v5349
    %6118 = vmatpush.bf16.msra.mxu0 %v5341
    %6119 = vmatmul.bf16.gmra.mxu0 %v3337
    %v6120 = vpop.f32.mrf.mxu0
    %v6121 = vadd.f32 %v6108, %v6120
    %v6122 = vpop.f32.mrf.mxu0
    %6123 = vdwg.mxu0
    %6124 = vmatpush.bf16.msra.mxu0 %v4950
    %6125 = vmatpush.bf16.msra.mxu0 %v4942
    %6126 = vmatpush.bf16.msra.mxu0 %v4934
    %6127 = vmatpush.bf16.msra.mxu0 %v4926
    %6128 = vmatpush.bf16.msra.mxu0 %v4918
    %6129 = vmatpush.bf16.msra.mxu0 %v4910
    %6130 = vmatpush.bf16.msra.mxu0 %v4902
    %6131 = vmatpush.bf16.msra.mxu0 %v4894
    %6132 = vmatmul.bf16.gmra.mxu0 %v3330
    %v6133 = vpop.f32.mrf.mxu0
    %v6134 = vadd.f32 %v3342, %v6133
    %v6135 = vpop.f32.mrf.mxu0
    %6136 = vdwg.mxu0
    %6137 = vmatpush.bf16.msra.mxu0 %v5014
    %6138 = vmatpush.bf16.msra.mxu0 %v5006
    %6139 = vmatpush.bf16.msra.mxu0 %v4998
    %6140 = vmatpush.bf16.msra.mxu0 %v4990
    %6141 = vmatpush.bf16.msra.mxu0 %v4982
    %6142 = vmatpush.bf16.msra.mxu0 %v4974
    %6143 = vmatpush.bf16.msra.mxu0 %v4966
    %6144 = vmatpush.bf16.msra.mxu0 %v4958
    %6145 = vmatmul.bf16.gmra.mxu0 %v3331
    %v6146 = vpop.f32.mrf.mxu0
    %v6147 = vadd.f32 %v6134, %v6146
    %v6148 = vpop.f32.mrf.mxu0
    %6149 = vdwg.mxu0
    %6150 = vmatpush.bf16.msra.mxu0 %v5078
    %6151 = vmatpush.bf16.msra.mxu0 %v5070
    %6152 = vmatpush.bf16.msra.mxu0 %v5062
    %6153 = vmatpush.bf16.msra.mxu0 %v5054
    %6154 = vmatpush.bf16.msra.mxu0 %v5046
    %6155 = vmatpush.bf16.msra.mxu0 %v5038
    %6156 = vmatpush.bf16.msra.mxu0 %v5030
    %6157 = vmatpush.bf16.msra.mxu0 %v5022
    %6158 = vmatmul.bf16.gmra.mxu0 %v3332
    %v6159 = vpop.f32.mrf.mxu0
    %v6160 = vadd.f32 %v6147, %v6159
    %v6161 = vpop.f32.mrf.mxu0
    %6162 = vdwg.mxu0
    %6163 = vmatpush.bf16.msra.mxu0 %v5142
    %6164 = vmatpush.bf16.msra.mxu0 %v5134
    %6165 = vmatpush.bf16.msra.mxu0 %v5126
    %6166 = vmatpush.bf16.msra.mxu0 %v5118
    %6167 = vmatpush.bf16.msra.mxu0 %v5110
    %6168 = vmatpush.bf16.msra.mxu0 %v5102
    %6169 = vmatpush.bf16.msra.mxu0 %v5094
    %6170 = vmatpush.bf16.msra.mxu0 %v5086
    %6171 = vmatmul.bf16.gmra.mxu0 %v3333
    %v6172 = vpop.f32.mrf.mxu0
    %v6173 = vadd.f32 %v6160, %v6172
    %v6174 = vpop.f32.mrf.mxu0
    %6175 = vdwg.mxu0
    %6176 = vmatpush.bf16.msra.mxu0 %v5206
    %6177 = vmatpush.bf16.msra.mxu0 %v5198
    %6178 = vmatpush.bf16.msra.mxu0 %v5190
    %6179 = vmatpush.bf16.msra.mxu0 %v5182
    %6180 = vmatpush.bf16.msra.mxu0 %v5174
    %6181 = vmatpush.bf16.msra.mxu0 %v5166
    %6182 = vmatpush.bf16.msra.mxu0 %v5158
    %6183 = vmatpush.bf16.msra.mxu0 %v5150
    %6184 = vmatmul.bf16.gmra.mxu0 %v3334
    %v6185 = vpop.f32.mrf.mxu0
    %v6186 = vadd.f32 %v6173, %v6185
    %v6187 = vpop.f32.mrf.mxu0
    %6188 = vdwg.mxu0
    %6189 = vmatpush.bf16.msra.mxu0 %v5270
    %6190 = vmatpush.bf16.msra.mxu0 %v5262
    %6191 = vmatpush.bf16.msra.mxu0 %v5254
    %6192 = vmatpush.bf16.msra.mxu0 %v5246
    %6193 = vmatpush.bf16.msra.mxu0 %v5238
    %6194 = vmatpush.bf16.msra.mxu0 %v5230
    %6195 = vmatpush.bf16.msra.mxu0 %v5222
    %6196 = vmatpush.bf16.msra.mxu0 %v5214
    %6197 = vmatmul.bf16.gmra.mxu0 %v3335
    %v6198 = vpop.f32.mrf.mxu0
    %v6199 = vadd.f32 %v6186, %v6198
    %v6200 = vpop.f32.mrf.mxu0
    %6201 = vdwg.mxu0
    %6202 = vmatpush.bf16.msra.mxu0 %v5334
    %6203 = vmatpush.bf16.msra.mxu0 %v5326
    %6204 = vmatpush.bf16.msra.mxu0 %v5318
    %6205 = vmatpush.bf16.msra.mxu0 %v5310
    %6206 = vmatpush.bf16.msra.mxu0 %v5302
    %6207 = vmatpush.bf16.msra.mxu0 %v5294
    %6208 = vmatpush.bf16.msra.mxu0 %v5286
    %6209 = vmatpush.bf16.msra.mxu0 %v5278
    %6210 = vmatmul.bf16.gmra.mxu0 %v3336
    %v6211 = vpop.f32.mrf.mxu0
    %v6212 = vadd.f32 %v6199, %v6211
    %v6213 = vpop.f32.mrf.mxu0
    %6214 = vdwg.mxu0
    %6215 = vmatpush.bf16.msra.mxu0 %v5398
    %6216 = vmatpush.bf16.msra.mxu0 %v5390
    %6217 = vmatpush.bf16.msra.mxu0 %v5382
    %6218 = vmatpush.bf16.msra.mxu0 %v5374
    %6219 = vmatpush.bf16.msra.mxu0 %v5366
    %6220 = vmatpush.bf16.msra.mxu0 %v5358
    %6221 = vmatpush.bf16.msra.mxu0 %v5350
    %6222 = vmatpush.bf16.msra.mxu0 %v5342
    %6223 = vmatmul.bf16.gmra.mxu0 %v3337
    %v6224 = vpop.f32.mrf.mxu0
    %v6225 = vadd.f32 %v6212, %v6224
    %v6226 = vpop.f32.mrf.mxu0
    %6227 = vdwg.mxu0
    %6228 = vmatpush.bf16.msra.mxu0 %v4951
    %6229 = vmatpush.bf16.msra.mxu0 %v4943
    %6230 = vmatpush.bf16.msra.mxu0 %v4935
    %6231 = vmatpush.bf16.msra.mxu0 %v4927
    %6232 = vmatpush.bf16.msra.mxu0 %v4919
    %6233 = vmatpush.bf16.msra.mxu0 %v4911
    %6234 = vmatpush.bf16.msra.mxu0 %v4903
    %6235 = vmatpush.bf16.msra.mxu0 %v4895
    %6236 = vmatmul.bf16.gmra.mxu0 %v3330
    %v6237 = vpop.f32.mrf.mxu0
    %v6238 = vadd.f32 %v3343, %v6237
    %v6239 = vpop.f32.mrf.mxu0
    %6240 = vdwg.mxu0
    %6241 = vmatpush.bf16.msra.mxu0 %v5015
    %6242 = vmatpush.bf16.msra.mxu0 %v5007
    %6243 = vmatpush.bf16.msra.mxu0 %v4999
    %6244 = vmatpush.bf16.msra.mxu0 %v4991
    %6245 = vmatpush.bf16.msra.mxu0 %v4983
    %6246 = vmatpush.bf16.msra.mxu0 %v4975
    %6247 = vmatpush.bf16.msra.mxu0 %v4967
    %6248 = vmatpush.bf16.msra.mxu0 %v4959
    %6249 = vmatmul.bf16.gmra.mxu0 %v3331
    %v6250 = vpop.f32.mrf.mxu0
    %v6251 = vadd.f32 %v6238, %v6250
    %v6252 = vpop.f32.mrf.mxu0
    %6253 = vdwg.mxu0
    %6254 = vmatpush.bf16.msra.mxu0 %v5079
    %6255 = vmatpush.bf16.msra.mxu0 %v5071
    %6256 = vmatpush.bf16.msra.mxu0 %v5063
    %6257 = vmatpush.bf16.msra.mxu0 %v5055
    %6258 = vmatpush.bf16.msra.mxu0 %v5047
    %6259 = vmatpush.bf16.msra.mxu0 %v5039
    %6260 = vmatpush.bf16.msra.mxu0 %v5031
    %6261 = vmatpush.bf16.msra.mxu0 %v5023
    %6262 = vmatmul.bf16.gmra.mxu0 %v3332
    %v6263 = vpop.f32.mrf.mxu0
    %v6264 = vadd.f32 %v6251, %v6263
    %v6265 = vpop.f32.mrf.mxu0
    %6266 = vdwg.mxu0
    %6267 = vmatpush.bf16.msra.mxu0 %v5143
    %6268 = vmatpush.bf16.msra.mxu0 %v5135
    %6269 = vmatpush.bf16.msra.mxu0 %v5127
    %6270 = vmatpush.bf16.msra.mxu0 %v5119
    %6271 = vmatpush.bf16.msra.mxu0 %v5111
    %6272 = vmatpush.bf16.msra.mxu0 %v5103
    %6273 = vmatpush.bf16.msra.mxu0 %v5095
    %6274 = vmatpush.bf16.msra.mxu0 %v5087
    %6275 = vmatmul.bf16.gmra.mxu0 %v3333
    %v6276 = vpop.f32.mrf.mxu0
    %v6277 = vadd.f32 %v6264, %v6276
    %v6278 = vpop.f32.mrf.mxu0
    %6279 = vdwg.mxu0
    %6280 = vmatpush.bf16.msra.mxu0 %v5207
    %6281 = vmatpush.bf16.msra.mxu0 %v5199
    %6282 = vmatpush.bf16.msra.mxu0 %v5191
    %6283 = vmatpush.bf16.msra.mxu0 %v5183
    %6284 = vmatpush.bf16.msra.mxu0 %v5175
    %6285 = vmatpush.bf16.msra.mxu0 %v5167
    %6286 = vmatpush.bf16.msra.mxu0 %v5159
    %6287 = vmatpush.bf16.msra.mxu0 %v5151
    %6288 = vmatmul.bf16.gmra.mxu0 %v3334
    %v6289 = vpop.f32.mrf.mxu0
    %v6290 = vadd.f32 %v6277, %v6289
    %v6291 = vpop.f32.mrf.mxu0
    %6292 = vdwg.mxu0
    %6293 = vmatpush.bf16.msra.mxu0 %v5271
    %6294 = vmatpush.bf16.msra.mxu0 %v5263
    %6295 = vmatpush.bf16.msra.mxu0 %v5255
    %6296 = vmatpush.bf16.msra.mxu0 %v5247
    %6297 = vmatpush.bf16.msra.mxu0 %v5239
    %6298 = vmatpush.bf16.msra.mxu0 %v5231
    %6299 = vmatpush.bf16.msra.mxu0 %v5223
    %6300 = vmatpush.bf16.msra.mxu0 %v5215
    %6301 = vmatmul.bf16.gmra.mxu0 %v3335
    %v6302 = vpop.f32.mrf.mxu0
    %v6303 = vadd.f32 %v6290, %v6302
    %v6304 = vpop.f32.mrf.mxu0
    %6305 = vdwg.mxu0
    %6306 = vmatpush.bf16.msra.mxu0 %v5335
    %6307 = vmatpush.bf16.msra.mxu0 %v5327
    %6308 = vmatpush.bf16.msra.mxu0 %v5319
    %6309 = vmatpush.bf16.msra.mxu0 %v5311
    %6310 = vmatpush.bf16.msra.mxu0 %v5303
    %6311 = vmatpush.bf16.msra.mxu0 %v5295
    %6312 = vmatpush.bf16.msra.mxu0 %v5287
    %6313 = vmatpush.bf16.msra.mxu0 %v5279
    %6314 = vmatmul.bf16.gmra.mxu0 %v3336
    %v6315 = vpop.f32.mrf.mxu0
    %v6316 = vadd.f32 %v6303, %v6315
    %v6317 = vpop.f32.mrf.mxu0
    %6318 = vdwg.mxu0
    %6319 = vmatpush.bf16.msra.mxu0 %v5399
    %6320 = vmatpush.bf16.msra.mxu0 %v5391
    %6321 = vmatpush.bf16.msra.mxu0 %v5383
    %6322 = vmatpush.bf16.msra.mxu0 %v5375
    %6323 = vmatpush.bf16.msra.mxu0 %v5367
    %6324 = vmatpush.bf16.msra.mxu0 %v5359
    %6325 = vmatpush.bf16.msra.mxu0 %v5351
    %6326 = vmatpush.bf16.msra.mxu0 %v5343
    %6327 = vmatmul.bf16.gmra.mxu0 %v3337
    %v6328 = vpop.f32.mrf.mxu0
    %v6329 = vadd.f32 %v6316, %v6328
    %v6330 = vpop.f32.mrf.mxu0
    %6331 = vdwg.mxu0
    %6332 = vmatpush.bf16.msra.mxu0 %v4952
    %6333 = vmatpush.bf16.msra.mxu0 %v4944
    %6334 = vmatpush.bf16.msra.mxu0 %v4936
    %6335 = vmatpush.bf16.msra.mxu0 %v4928
    %6336 = vmatpush.bf16.msra.mxu0 %v4920
    %6337 = vmatpush.bf16.msra.mxu0 %v4912
    %6338 = vmatpush.bf16.msra.mxu0 %v4904
    %6339 = vmatpush.bf16.msra.mxu0 %v4896
    %6340 = vmatmul.bf16.gmra.mxu0 %v3330
    %v6341 = vpop.f32.mrf.mxu0
    %v6342 = vadd.f32 %v3344, %v6341
    %v6343 = vpop.f32.mrf.mxu0
    %6344 = vdwg.mxu0
    %6345 = vmatpush.bf16.msra.mxu0 %v5016
    %6346 = vmatpush.bf16.msra.mxu0 %v5008
    %6347 = vmatpush.bf16.msra.mxu0 %v5000
    %6348 = vmatpush.bf16.msra.mxu0 %v4992
    %6349 = vmatpush.bf16.msra.mxu0 %v4984
    %6350 = vmatpush.bf16.msra.mxu0 %v4976
    %6351 = vmatpush.bf16.msra.mxu0 %v4968
    %6352 = vmatpush.bf16.msra.mxu0 %v4960
    %6353 = vmatmul.bf16.gmra.mxu0 %v3331
    %v6354 = vpop.f32.mrf.mxu0
    %v6355 = vadd.f32 %v6342, %v6354
    %v6356 = vpop.f32.mrf.mxu0
    %6357 = vdwg.mxu0
    %6358 = vmatpush.bf16.msra.mxu0 %v5080
    %6359 = vmatpush.bf16.msra.mxu0 %v5072
    %6360 = vmatpush.bf16.msra.mxu0 %v5064
    %6361 = vmatpush.bf16.msra.mxu0 %v5056
    %6362 = vmatpush.bf16.msra.mxu0 %v5048
    %6363 = vmatpush.bf16.msra.mxu0 %v5040
    %6364 = vmatpush.bf16.msra.mxu0 %v5032
    %6365 = vmatpush.bf16.msra.mxu0 %v5024
    %6366 = vmatmul.bf16.gmra.mxu0 %v3332
    %v6367 = vpop.f32.mrf.mxu0
    %v6368 = vadd.f32 %v6355, %v6367
    %v6369 = vpop.f32.mrf.mxu0
    %6370 = vdwg.mxu0
    %6371 = vmatpush.bf16.msra.mxu0 %v5144
    %6372 = vmatpush.bf16.msra.mxu0 %v5136
    %6373 = vmatpush.bf16.msra.mxu0 %v5128
    %6374 = vmatpush.bf16.msra.mxu0 %v5120
    %6375 = vmatpush.bf16.msra.mxu0 %v5112
    %6376 = vmatpush.bf16.msra.mxu0 %v5104
    %6377 = vmatpush.bf16.msra.mxu0 %v5096
    %6378 = vmatpush.bf16.msra.mxu0 %v5088
    %6379 = vmatmul.bf16.gmra.mxu0 %v3333
    %v6380 = vpop.f32.mrf.mxu0
    %v6381 = vadd.f32 %v6368, %v6380
    %v6382 = vpop.f32.mrf.mxu0
    %6383 = vdwg.mxu0
    %6384 = vmatpush.bf16.msra.mxu0 %v5208
    %6385 = vmatpush.bf16.msra.mxu0 %v5200
    %6386 = vmatpush.bf16.msra.mxu0 %v5192
    %6387 = vmatpush.bf16.msra.mxu0 %v5184
    %6388 = vmatpush.bf16.msra.mxu0 %v5176
    %6389 = vmatpush.bf16.msra.mxu0 %v5168
    %6390 = vmatpush.bf16.msra.mxu0 %v5160
    %6391 = vmatpush.bf16.msra.mxu0 %v5152
    %6392 = vmatmul.bf16.gmra.mxu0 %v3334
    %v6393 = vpop.f32.mrf.mxu0
    %v6394 = vadd.f32 %v6381, %v6393
    %v6395 = vpop.f32.mrf.mxu0
    %6396 = vdwg.mxu0
    %6397 = vmatpush.bf16.msra.mxu0 %v5272
    %6398 = vmatpush.bf16.msra.mxu0 %v5264
    %6399 = vmatpush.bf16.msra.mxu0 %v5256
    %6400 = vmatpush.bf16.msra.mxu0 %v5248
    %6401 = vmatpush.bf16.msra.mxu0 %v5240
    %6402 = vmatpush.bf16.msra.mxu0 %v5232
    %6403 = vmatpush.bf16.msra.mxu0 %v5224
    %6404 = vmatpush.bf16.msra.mxu0 %v5216
    %6405 = vmatmul.bf16.gmra.mxu0 %v3335
    %v6406 = vpop.f32.mrf.mxu0
    %v6407 = vadd.f32 %v6394, %v6406
    %v6408 = vpop.f32.mrf.mxu0
    %6409 = vdwg.mxu0
    %6410 = vmatpush.bf16.msra.mxu0 %v5336
    %6411 = vmatpush.bf16.msra.mxu0 %v5328
    %6412 = vmatpush.bf16.msra.mxu0 %v5320
    %6413 = vmatpush.bf16.msra.mxu0 %v5312
    %6414 = vmatpush.bf16.msra.mxu0 %v5304
    %6415 = vmatpush.bf16.msra.mxu0 %v5296
    %6416 = vmatpush.bf16.msra.mxu0 %v5288
    %6417 = vmatpush.bf16.msra.mxu0 %v5280
    %6418 = vmatmul.bf16.gmra.mxu0 %v3336
    %v6419 = vpop.f32.mrf.mxu0
    %v6420 = vadd.f32 %v6407, %v6419
    %v6421 = vpop.f32.mrf.mxu0
    %6422 = vdwg.mxu0
    %6423 = vmatpush.bf16.msra.mxu0 %v5400
    %6424 = vmatpush.bf16.msra.mxu0 %v5392
    %6425 = vmatpush.bf16.msra.mxu0 %v5384
    %6426 = vmatpush.bf16.msra.mxu0 %v5376
    %6427 = vmatpush.bf16.msra.mxu0 %v5368
    %6428 = vmatpush.bf16.msra.mxu0 %v5360
    %6429 = vmatpush.bf16.msra.mxu0 %v5352
    %6430 = vmatpush.bf16.msra.mxu0 %v5344
    %6431 = vmatmul.bf16.gmra.mxu0 %v3337
    %v6432 = vpop.f32.mrf.mxu0
    %v6433 = vadd.f32 %v6420, %v6432
    %v6434 = vpop.f32.mrf.mxu0
    %6435 = vdwg.mxu0
    %6436 = vmatpush.bf16.msra.mxu0 %v4953
    %6437 = vmatpush.bf16.msra.mxu0 %v4945
    %6438 = vmatpush.bf16.msra.mxu0 %v4937
    %6439 = vmatpush.bf16.msra.mxu0 %v4929
    %6440 = vmatpush.bf16.msra.mxu0 %v4921
    %6441 = vmatpush.bf16.msra.mxu0 %v4913
    %6442 = vmatpush.bf16.msra.mxu0 %v4905
    %6443 = vmatpush.bf16.msra.mxu0 %v4897
    %6444 = vmatmul.bf16.gmra.mxu0 %v3330
    %v6445 = vpop.f32.mrf.mxu0
    %v6446 = vadd.f32 %v3345, %v6445
    %v6447 = vpop.f32.mrf.mxu0
    %6448 = vdwg.mxu0
    %6449 = vmatpush.bf16.msra.mxu0 %v5017
    %6450 = vmatpush.bf16.msra.mxu0 %v5009
    %6451 = vmatpush.bf16.msra.mxu0 %v5001
    %6452 = vmatpush.bf16.msra.mxu0 %v4993
    %6453 = vmatpush.bf16.msra.mxu0 %v4985
    %6454 = vmatpush.bf16.msra.mxu0 %v4977
    %6455 = vmatpush.bf16.msra.mxu0 %v4969
    %6456 = vmatpush.bf16.msra.mxu0 %v4961
    %6457 = vmatmul.bf16.gmra.mxu0 %v3331
    %v6458 = vpop.f32.mrf.mxu0
    %v6459 = vadd.f32 %v6446, %v6458
    %v6460 = vpop.f32.mrf.mxu0
    %6461 = vdwg.mxu0
    %6462 = vmatpush.bf16.msra.mxu0 %v5081
    %6463 = vmatpush.bf16.msra.mxu0 %v5073
    %6464 = vmatpush.bf16.msra.mxu0 %v5065
    %6465 = vmatpush.bf16.msra.mxu0 %v5057
    %6466 = vmatpush.bf16.msra.mxu0 %v5049
    %6467 = vmatpush.bf16.msra.mxu0 %v5041
    %6468 = vmatpush.bf16.msra.mxu0 %v5033
    %6469 = vmatpush.bf16.msra.mxu0 %v5025
    %6470 = vmatmul.bf16.gmra.mxu0 %v3332
    %v6471 = vpop.f32.mrf.mxu0
    %v6472 = vadd.f32 %v6459, %v6471
    %v6473 = vpop.f32.mrf.mxu0
    %6474 = vdwg.mxu0
    %6475 = vmatpush.bf16.msra.mxu0 %v5145
    %6476 = vmatpush.bf16.msra.mxu0 %v5137
    %6477 = vmatpush.bf16.msra.mxu0 %v5129
    %6478 = vmatpush.bf16.msra.mxu0 %v5121
    %6479 = vmatpush.bf16.msra.mxu0 %v5113
    %6480 = vmatpush.bf16.msra.mxu0 %v5105
    %6481 = vmatpush.bf16.msra.mxu0 %v5097
    %6482 = vmatpush.bf16.msra.mxu0 %v5089
    %6483 = vmatmul.bf16.gmra.mxu0 %v3333
    %v6484 = vpop.f32.mrf.mxu0
    %v6485 = vadd.f32 %v6472, %v6484
    %v6486 = vpop.f32.mrf.mxu0
    %6487 = vdwg.mxu0
    %6488 = vmatpush.bf16.msra.mxu0 %v5209
    %6489 = vmatpush.bf16.msra.mxu0 %v5201
    %6490 = vmatpush.bf16.msra.mxu0 %v5193
    %6491 = vmatpush.bf16.msra.mxu0 %v5185
    %6492 = vmatpush.bf16.msra.mxu0 %v5177
    %6493 = vmatpush.bf16.msra.mxu0 %v5169
    %6494 = vmatpush.bf16.msra.mxu0 %v5161
    %6495 = vmatpush.bf16.msra.mxu0 %v5153
    %6496 = vmatmul.bf16.gmra.mxu0 %v3334
    %v6497 = vpop.f32.mrf.mxu0
    %v6498 = vadd.f32 %v6485, %v6497
    %v6499 = vpop.f32.mrf.mxu0
    %6500 = vdwg.mxu0
    %6501 = vmatpush.bf16.msra.mxu0 %v5273
    %6502 = vmatpush.bf16.msra.mxu0 %v5265
    %6503 = vmatpush.bf16.msra.mxu0 %v5257
    %6504 = vmatpush.bf16.msra.mxu0 %v5249
    %6505 = vmatpush.bf16.msra.mxu0 %v5241
    %6506 = vmatpush.bf16.msra.mxu0 %v5233
    %6507 = vmatpush.bf16.msra.mxu0 %v5225
    %6508 = vmatpush.bf16.msra.mxu0 %v5217
    %6509 = vmatmul.bf16.gmra.mxu0 %v3335
    %v6510 = vpop.f32.mrf.mxu0
    %v6511 = vadd.f32 %v6498, %v6510
    %v6512 = vpop.f32.mrf.mxu0
    %6513 = vdwg.mxu0
    %6514 = vmatpush.bf16.msra.mxu0 %v5337
    %6515 = vmatpush.bf16.msra.mxu0 %v5329
    %6516 = vmatpush.bf16.msra.mxu0 %v5321
    %6517 = vmatpush.bf16.msra.mxu0 %v5313
    %6518 = vmatpush.bf16.msra.mxu0 %v5305
    %6519 = vmatpush.bf16.msra.mxu0 %v5297
    %6520 = vmatpush.bf16.msra.mxu0 %v5289
    %6521 = vmatpush.bf16.msra.mxu0 %v5281
    %6522 = vmatmul.bf16.gmra.mxu0 %v3336
    %v6523 = vpop.f32.mrf.mxu0
    %v6524 = vadd.f32 %v6511, %v6523
    %v6525 = vpop.f32.mrf.mxu0
    %6526 = vdwg.mxu0
    %6527 = vmatpush.bf16.msra.mxu0 %v5401
    %6528 = vmatpush.bf16.msra.mxu0 %v5393
    %6529 = vmatpush.bf16.msra.mxu0 %v5385
    %6530 = vmatpush.bf16.msra.mxu0 %v5377
    %6531 = vmatpush.bf16.msra.mxu0 %v5369
    %6532 = vmatpush.bf16.msra.mxu0 %v5361
    %6533 = vmatpush.bf16.msra.mxu0 %v5353
    %6534 = vmatpush.bf16.msra.mxu0 %v5345
    %6535 = vmatmul.bf16.gmra.mxu0 %v3337
    %v6536 = vpop.f32.mrf.mxu0
    %v6537 = vadd.f32 %v6524, %v6536
    %v6538 = vpop.f32.mrf.mxu0
    %6539 = vdwg.mxu0
    %6540 = vmatpush.bf16.msra.mxu0 %v4954
    %6541 = vmatpush.bf16.msra.mxu0 %v4946
    %6542 = vmatpush.bf16.msra.mxu0 %v4938
    %6543 = vmatpush.bf16.msra.mxu0 %v4930
    %6544 = vmatpush.bf16.msra.mxu0 %v4922
    %6545 = vmatpush.bf16.msra.mxu0 %v4914
    %6546 = vmatpush.bf16.msra.mxu0 %v4906
    %6547 = vmatpush.bf16.msra.mxu0 %v4898
    %6548 = vmatmul.bf16.gmra.mxu0 %v3330
    %v6549 = vpop.f32.mrf.mxu0
    %v6550 = vadd.f32 %v3346, %v6549
    %v6551 = vpop.f32.mrf.mxu0
    %6552 = vdwg.mxu0
    %6553 = vmatpush.bf16.msra.mxu0 %v5018
    %6554 = vmatpush.bf16.msra.mxu0 %v5010
    %6555 = vmatpush.bf16.msra.mxu0 %v5002
    %6556 = vmatpush.bf16.msra.mxu0 %v4994
    %6557 = vmatpush.bf16.msra.mxu0 %v4986
    %6558 = vmatpush.bf16.msra.mxu0 %v4978
    %6559 = vmatpush.bf16.msra.mxu0 %v4970
    %6560 = vmatpush.bf16.msra.mxu0 %v4962
    %6561 = vmatmul.bf16.gmra.mxu0 %v3331
    %v6562 = vpop.f32.mrf.mxu0
    %v6563 = vadd.f32 %v6550, %v6562
    %v6564 = vpop.f32.mrf.mxu0
    %6565 = vdwg.mxu0
    %6566 = vmatpush.bf16.msra.mxu0 %v5082
    %6567 = vmatpush.bf16.msra.mxu0 %v5074
    %6568 = vmatpush.bf16.msra.mxu0 %v5066
    %6569 = vmatpush.bf16.msra.mxu0 %v5058
    %6570 = vmatpush.bf16.msra.mxu0 %v5050
    %6571 = vmatpush.bf16.msra.mxu0 %v5042
    %6572 = vmatpush.bf16.msra.mxu0 %v5034
    %6573 = vmatpush.bf16.msra.mxu0 %v5026
    %6574 = vmatmul.bf16.gmra.mxu0 %v3332
    %v6575 = vpop.f32.mrf.mxu0
    %v6576 = vadd.f32 %v6563, %v6575
    %v6577 = vpop.f32.mrf.mxu0
    %6578 = vdwg.mxu0
    %6579 = vmatpush.bf16.msra.mxu0 %v5146
    %6580 = vmatpush.bf16.msra.mxu0 %v5138
    %6581 = vmatpush.bf16.msra.mxu0 %v5130
    %6582 = vmatpush.bf16.msra.mxu0 %v5122
    %6583 = vmatpush.bf16.msra.mxu0 %v5114
    %6584 = vmatpush.bf16.msra.mxu0 %v5106
    %6585 = vmatpush.bf16.msra.mxu0 %v5098
    %6586 = vmatpush.bf16.msra.mxu0 %v5090
    %6587 = vmatmul.bf16.gmra.mxu0 %v3333
    %v6588 = vpop.f32.mrf.mxu0
    %v6589 = vadd.f32 %v6576, %v6588
    %v6590 = vpop.f32.mrf.mxu0
    %6591 = vdwg.mxu0
    %6592 = vmatpush.bf16.msra.mxu0 %v5210
    %6593 = vmatpush.bf16.msra.mxu0 %v5202
    %6594 = vmatpush.bf16.msra.mxu0 %v5194
    %6595 = vmatpush.bf16.msra.mxu0 %v5186
    %6596 = vmatpush.bf16.msra.mxu0 %v5178
    %6597 = vmatpush.bf16.msra.mxu0 %v5170
    %6598 = vmatpush.bf16.msra.mxu0 %v5162
    %6599 = vmatpush.bf16.msra.mxu0 %v5154
    %6600 = vmatmul.bf16.gmra.mxu0 %v3334
    %v6601 = vpop.f32.mrf.mxu0
    %v6602 = vadd.f32 %v6589, %v6601
    %v6603 = vpop.f32.mrf.mxu0
    %6604 = vdwg.mxu0
    %6605 = vmatpush.bf16.msra.mxu0 %v5274
    %6606 = vmatpush.bf16.msra.mxu0 %v5266
    %6607 = vmatpush.bf16.msra.mxu0 %v5258
    %6608 = vmatpush.bf16.msra.mxu0 %v5250
    %6609 = vmatpush.bf16.msra.mxu0 %v5242
    %6610 = vmatpush.bf16.msra.mxu0 %v5234
    %6611 = vmatpush.bf16.msra.mxu0 %v5226
    %6612 = vmatpush.bf16.msra.mxu0 %v5218
    %6613 = vmatmul.bf16.gmra.mxu0 %v3335
    %v6614 = vpop.f32.mrf.mxu0
    %v6615 = vadd.f32 %v6602, %v6614
    %v6616 = vpop.f32.mrf.mxu0
    %6617 = vdwg.mxu0
    %6618 = vmatpush.bf16.msra.mxu0 %v5338
    %6619 = vmatpush.bf16.msra.mxu0 %v5330
    %6620 = vmatpush.bf16.msra.mxu0 %v5322
    %6621 = vmatpush.bf16.msra.mxu0 %v5314
    %6622 = vmatpush.bf16.msra.mxu0 %v5306
    %6623 = vmatpush.bf16.msra.mxu0 %v5298
    %6624 = vmatpush.bf16.msra.mxu0 %v5290
    %6625 = vmatpush.bf16.msra.mxu0 %v5282
    %6626 = vmatmul.bf16.gmra.mxu0 %v3336
    %v6627 = vpop.f32.mrf.mxu0
    %v6628 = vadd.f32 %v6615, %v6627
    %v6629 = vpop.f32.mrf.mxu0
    %6630 = vdwg.mxu0
    %6631 = vmatpush.bf16.msra.mxu0 %v5402
    %6632 = vmatpush.bf16.msra.mxu0 %v5394
    %6633 = vmatpush.bf16.msra.mxu0 %v5386
    %6634 = vmatpush.bf16.msra.mxu0 %v5378
    %6635 = vmatpush.bf16.msra.mxu0 %v5370
    %6636 = vmatpush.bf16.msra.mxu0 %v5362
    %6637 = vmatpush.bf16.msra.mxu0 %v5354
    %6638 = vmatpush.bf16.msra.mxu0 %v5346
    %6639 = vmatmul.bf16.gmra.mxu0 %v3337
    %v6640 = vpop.f32.mrf.mxu0
    %v6641 = vadd.f32 %v6628, %v6640
    %v6642 = vpop.f32.mrf.mxu0
    %6643 = vdwg.mxu0
    %6644 = vmatpush.bf16.msra.mxu0 %v4955
    %6645 = vmatpush.bf16.msra.mxu0 %v4947
    %6646 = vmatpush.bf16.msra.mxu0 %v4939
    %6647 = vmatpush.bf16.msra.mxu0 %v4931
    %6648 = vmatpush.bf16.msra.mxu0 %v4923
    %6649 = vmatpush.bf16.msra.mxu0 %v4915
    %6650 = vmatpush.bf16.msra.mxu0 %v4907
    %6651 = vmatpush.bf16.msra.mxu0 %v4899
    %6652 = vmatmul.bf16.gmra.mxu0 %v3330
    %v6653 = vpop.f32.mrf.mxu0
    %v6654 = vadd.f32 %v3347, %v6653
    %v6655 = vpop.f32.mrf.mxu0
    %6656 = vdwg.mxu0
    %6657 = vmatpush.bf16.msra.mxu0 %v5019
    %6658 = vmatpush.bf16.msra.mxu0 %v5011
    %6659 = vmatpush.bf16.msra.mxu0 %v5003
    %6660 = vmatpush.bf16.msra.mxu0 %v4995
    %6661 = vmatpush.bf16.msra.mxu0 %v4987
    %6662 = vmatpush.bf16.msra.mxu0 %v4979
    %6663 = vmatpush.bf16.msra.mxu0 %v4971
    %6664 = vmatpush.bf16.msra.mxu0 %v4963
    %6665 = vmatmul.bf16.gmra.mxu0 %v3331
    %v6666 = vpop.f32.mrf.mxu0
    %v6667 = vadd.f32 %v6654, %v6666
    %v6668 = vpop.f32.mrf.mxu0
    %6669 = vdwg.mxu0
    %6670 = vmatpush.bf16.msra.mxu0 %v5083
    %6671 = vmatpush.bf16.msra.mxu0 %v5075
    %6672 = vmatpush.bf16.msra.mxu0 %v5067
    %6673 = vmatpush.bf16.msra.mxu0 %v5059
    %6674 = vmatpush.bf16.msra.mxu0 %v5051
    %6675 = vmatpush.bf16.msra.mxu0 %v5043
    %6676 = vmatpush.bf16.msra.mxu0 %v5035
    %6677 = vmatpush.bf16.msra.mxu0 %v5027
    %6678 = vmatmul.bf16.gmra.mxu0 %v3332
    %v6679 = vpop.f32.mrf.mxu0
    %v6680 = vadd.f32 %v6667, %v6679
    %v6681 = vpop.f32.mrf.mxu0
    %6682 = vdwg.mxu0
    %6683 = vmatpush.bf16.msra.mxu0 %v5147
    %6684 = vmatpush.bf16.msra.mxu0 %v5139
    %6685 = vmatpush.bf16.msra.mxu0 %v5131
    %6686 = vmatpush.bf16.msra.mxu0 %v5123
    %6687 = vmatpush.bf16.msra.mxu0 %v5115
    %6688 = vmatpush.bf16.msra.mxu0 %v5107
    %6689 = vmatpush.bf16.msra.mxu0 %v5099
    %6690 = vmatpush.bf16.msra.mxu0 %v5091
    %6691 = vmatmul.bf16.gmra.mxu0 %v3333
    %v6692 = vpop.f32.mrf.mxu0
    %v6693 = vadd.f32 %v6680, %v6692
    %v6694 = vpop.f32.mrf.mxu0
    %6695 = vdwg.mxu0
    %6696 = vmatpush.bf16.msra.mxu0 %v5211
    %6697 = vmatpush.bf16.msra.mxu0 %v5203
    %6698 = vmatpush.bf16.msra.mxu0 %v5195
    %6699 = vmatpush.bf16.msra.mxu0 %v5187
    %6700 = vmatpush.bf16.msra.mxu0 %v5179
    %6701 = vmatpush.bf16.msra.mxu0 %v5171
    %6702 = vmatpush.bf16.msra.mxu0 %v5163
    %6703 = vmatpush.bf16.msra.mxu0 %v5155
    %6704 = vmatmul.bf16.gmra.mxu0 %v3334
    %v6705 = vpop.f32.mrf.mxu0
    %v6706 = vadd.f32 %v6693, %v6705
    %v6707 = vpop.f32.mrf.mxu0
    %6708 = vdwg.mxu0
    %6709 = vmatpush.bf16.msra.mxu0 %v5275
    %6710 = vmatpush.bf16.msra.mxu0 %v5267
    %6711 = vmatpush.bf16.msra.mxu0 %v5259
    %6712 = vmatpush.bf16.msra.mxu0 %v5251
    %6713 = vmatpush.bf16.msra.mxu0 %v5243
    %6714 = vmatpush.bf16.msra.mxu0 %v5235
    %6715 = vmatpush.bf16.msra.mxu0 %v5227
    %6716 = vmatpush.bf16.msra.mxu0 %v5219
    %6717 = vmatmul.bf16.gmra.mxu0 %v3335
    %v6718 = vpop.f32.mrf.mxu0
    %v6719 = vadd.f32 %v6706, %v6718
    %v6720 = vpop.f32.mrf.mxu0
    %6721 = vdwg.mxu0
    %6722 = vmatpush.bf16.msra.mxu0 %v5339
    %6723 = vmatpush.bf16.msra.mxu0 %v5331
    %6724 = vmatpush.bf16.msra.mxu0 %v5323
    %6725 = vmatpush.bf16.msra.mxu0 %v5315
    %6726 = vmatpush.bf16.msra.mxu0 %v5307
    %6727 = vmatpush.bf16.msra.mxu0 %v5299
    %6728 = vmatpush.bf16.msra.mxu0 %v5291
    %6729 = vmatpush.bf16.msra.mxu0 %v5283
    %6730 = vmatmul.bf16.gmra.mxu0 %v3336
    %v6731 = vpop.f32.mrf.mxu0
    %v6732 = vadd.f32 %v6719, %v6731
    %v6733 = vpop.f32.mrf.mxu0
    %6734 = vdwg.mxu0
    %6735 = vmatpush.bf16.msra.mxu0 %v5403
    %6736 = vmatpush.bf16.msra.mxu0 %v5395
    %6737 = vmatpush.bf16.msra.mxu0 %v5387
    %6738 = vmatpush.bf16.msra.mxu0 %v5379
    %6739 = vmatpush.bf16.msra.mxu0 %v5371
    %6740 = vmatpush.bf16.msra.mxu0 %v5363
    %6741 = vmatpush.bf16.msra.mxu0 %v5355
    %6742 = vmatpush.bf16.msra.mxu0 %v5347
    %6743 = vmatmul.bf16.gmra.mxu0 %v3337
    %v6744 = vpop.f32.mrf.mxu0
    %v6745 = vadd.f32 %v6732, %v6744
    %v6746 = vpop.f32.mrf.mxu0
    %6747 = vdwg.mxu0
    %v6748 = vmax.f32 %v6017, 0.0
    %v6749 = vmax.f32 %v6121, 0.0
    %v6750 = vmax.f32 %v6225, 0.0
    %v6751 = vmax.f32 %v6329, 0.0
    %v6752 = vmax.f32 %v6433, 0.0
    %v6753 = vmax.f32 %v6537, 0.0
    %v6754 = vmax.f32 %v6641, 0.0
    %v6755 = vmax.f32 %v6745, 0.0
    %v6756 = vld [vmem:[#allocation17] sm:$0xff]
    %v6757 = vld [vmem:[#allocation17 + $0x8] sm:$0xff]
    %v6758 = vld [vmem:[#allocation17 + $0x10] sm:$0xff]
    %v6759 = vld [vmem:[#allocation17 + $0x18] sm:$0xff]
    %v6760 = vld [vmem:[#allocation17 + $0x20] sm:$0xff]
    %v6761 = vld [vmem:[#allocation17 + $0x28] sm:$0xff]
    %v6762 = vld [vmem:[#allocation17 + $0x30] sm:$0xff]
    %v6763 = vld [vmem:[#allocation17 + $0x38] sm:$0xff]
    %v6764 = vld [vmem:[#allocation17 + $0x40] sm:$0xff]
    %v6765 = vld [vmem:[#allocation17 + $0x48] sm:$0xff]
    %v6766 = vld [vmem:[#allocation17 + $0x50] sm:$0xff]
    %v6767 = vld [vmem:[#allocation17 + $0x58] sm:$0xff]
    %v6768 = vld [vmem:[#allocation17 + $0x60] sm:$0xff]
    %v6769 = vld [vmem:[#allocation17 + $0x68] sm:$0xff]
    %v6770 = vld [vmem:[#allocation17 + $0x70] sm:$0xff]
    %v6771 = vld [vmem:[#allocation17 + $0x78] sm:$0xff]
    %v6772 = vld [vmem:[#allocation17 + $0x80] sm:$0xff]
    %v6773 = vld [vmem:[#allocation17 + $0x88] sm:$0xff]
    %v6774 = vld [vmem:[#allocation17 + $0x90] sm:$0xff]
    %v6775 = vld [vmem:[#allocation17 + $0x98] sm:$0xff]
    %v6776 = vld [vmem:[#allocation17 + $0xa0] sm:$0xff]
    %v6777 = vld [vmem:[#allocation17 + $0xa8] sm:$0xff]
    %v6778 = vld [vmem:[#allocation17 + $0xb0] sm:$0xff]
    %v6779 = vld [vmem:[#allocation17 + $0xb8] sm:$0xff]
    %v6780 = vld [vmem:[#allocation17 + $0xc0] sm:$0xff]
    %v6781 = vld [vmem:[#allocation17 + $0xc8] sm:$0xff]
    %v6782 = vld [vmem:[#allocation17 + $0xd0] sm:$0xff]
    %v6783 = vld [vmem:[#allocation17 + $0xd8] sm:$0xff]
    %v6784 = vld [vmem:[#allocation17 + $0xe0] sm:$0xff]
    %v6785 = vld [vmem:[#allocation17 + $0xe8] sm:$0xff]
    %v6786 = vld [vmem:[#allocation17 + $0xf0] sm:$0xff]
    %v6787 = vld [vmem:[#allocation17 + $0xf8] sm:$0xff]
    %v6788 = vld [vmem:[#allocation17 + $0x100] sm:$0xff]
    %v6789 = vld [vmem:[#allocation17 + $0x108] sm:$0xff]
    %v6790 = vld [vmem:[#allocation17 + $0x110] sm:$0xff]
    %v6791 = vld [vmem:[#allocation17 + $0x118] sm:$0xff]
    %v6792 = vld [vmem:[#allocation17 + $0x120] sm:$0xff]
    %v6793 = vld [vmem:[#allocation17 + $0x128] sm:$0xff]
    %v6794 = vld [vmem:[#allocation17 + $0x130] sm:$0xff]
    %v6795 = vld [vmem:[#allocation17 + $0x138] sm:$0xff]
    %v6796 = vld [vmem:[#allocation17 + $0x140] sm:$0xff]
    %v6797 = vld [vmem:[#allocation17 + $0x148] sm:$0xff]
    %v6798 = vld [vmem:[#allocation17 + $0x150] sm:$0xff]
    %v6799 = vld [vmem:[#allocation17 + $0x158] sm:$0xff]
    %v6800 = vld [vmem:[#allocation17 + $0x160] sm:$0xff]
    %v6801 = vld [vmem:[#allocation17 + $0x168] sm:$0xff]
    %v6802 = vld [vmem:[#allocation17 + $0x170] sm:$0xff]
    %v6803 = vld [vmem:[#allocation17 + $0x178] sm:$0xff]
    %v6804 = vld [vmem:[#allocation17 + $0x180] sm:$0xff]
    %v6805 = vld [vmem:[#allocation17 + $0x188] sm:$0xff]
    %v6806 = vld [vmem:[#allocation17 + $0x190] sm:$0xff]
    %v6807 = vld [vmem:[#allocation17 + $0x198] sm:$0xff]
    %v6808 = vld [vmem:[#allocation17 + $0x1a0] sm:$0xff]
    %v6809 = vld [vmem:[#allocation17 + $0x1a8] sm:$0xff]
    %v6810 = vld [vmem:[#allocation17 + $0x1b0] sm:$0xff]
    %v6811 = vld [vmem:[#allocation17 + $0x1b8] sm:$0xff]
    %v6812 = vld [vmem:[#allocation17 + $0x1c0] sm:$0xff]
    %v6813 = vld [vmem:[#allocation17 + $0x1c8] sm:$0xff]
    %v6814 = vld [vmem:[#allocation17 + $0x1d0] sm:$0xff]
    %v6815 = vld [vmem:[#allocation17 + $0x1d8] sm:$0xff]
    %v6816 = vld [vmem:[#allocation17 + $0x1e0] sm:$0xff]
    %v6817 = vld [vmem:[#allocation17 + $0x1e8] sm:$0xff]
    %v6818 = vld [vmem:[#allocation17 + $0x1f0] sm:$0xff]
    %v6819 = vld [vmem:[#allocation17 + $0x1f8] sm:$0xff]
    %v6820 = vld [vmem:[#allocation17 + $0x200] sm:$0xff]
    %v6821 = vld [vmem:[#allocation17 + $0x208] sm:$0xff]
    %v6822 = vld [vmem:[#allocation17 + $0x210] sm:$0xff]
    %v6823 = vld [vmem:[#allocation17 + $0x218] sm:$0xff]
    %v6824 = vld [vmem:[#allocation17 + $0x220] sm:$0xff]
    %v6825 = vld [vmem:[#allocation17 + $0x228] sm:$0xff]
    %v6826 = vld [vmem:[#allocation17 + $0x230] sm:$0xff]
    %v6827 = vld [vmem:[#allocation17 + $0x238] sm:$0xff]
    %v6828 = vld [vmem:[#allocation17 + $0x240] sm:$0xff]
    %v6829 = vld [vmem:[#allocation17 + $0x248] sm:$0xff]
    %v6830 = vld [vmem:[#allocation17 + $0x250] sm:$0xff]
    %v6831 = vld [vmem:[#allocation17 + $0x258] sm:$0xff]
    %v6832 = vld [vmem:[#allocation17 + $0x260] sm:$0xff]
    %v6833 = vld [vmem:[#allocation17 + $0x268] sm:$0xff]
    %v6834 = vld [vmem:[#allocation17 + $0x270] sm:$0xff]
    %v6835 = vld [vmem:[#allocation17 + $0x278] sm:$0xff]
    %v6836 = vld [vmem:[#allocation17 + $0x280] sm:$0xff]
    %v6837 = vld [vmem:[#allocation17 + $0x288] sm:$0xff]
    %v6838 = vld [vmem:[#allocation17 + $0x290] sm:$0xff]
    %v6839 = vld [vmem:[#allocation17 + $0x298] sm:$0xff]
    %v6840 = vld [vmem:[#allocation17 + $0x2a0] sm:$0xff]
    %v6841 = vld [vmem:[#allocation17 + $0x2a8] sm:$0xff]
    %v6842 = vld [vmem:[#allocation17 + $0x2b0] sm:$0xff]
    %v6843 = vld [vmem:[#allocation17 + $0x2b8] sm:$0xff]
    %v6844 = vld [vmem:[#allocation17 + $0x2c0] sm:$0xff]
    %v6845 = vld [vmem:[#allocation17 + $0x2c8] sm:$0xff]
    %v6846 = vld [vmem:[#allocation17 + $0x2d0] sm:$0xff]
    %v6847 = vld [vmem:[#allocation17 + $0x2d8] sm:$0xff]
    %v6848 = vld [vmem:[#allocation17 + $0x2e0] sm:$0xff]
    %v6849 = vld [vmem:[#allocation17 + $0x2e8] sm:$0xff]
    %v6850 = vld [vmem:[#allocation17 + $0x2f0] sm:$0xff]
    %v6851 = vld [vmem:[#allocation17 + $0x2f8] sm:$0xff]
    %v6852 = vld [vmem:[#allocation17 + $0x300] sm:$0xff]
    %v6853 = vld [vmem:[#allocation17 + $0x308] sm:$0xff]
    %v6854 = vld [vmem:[#allocation17 + $0x310] sm:$0xff]
    %v6855 = vld [vmem:[#allocation17 + $0x318] sm:$0xff]
    %v6856 = vld [vmem:[#allocation17 + $0x320] sm:$0xff]
    %v6857 = vld [vmem:[#allocation17 + $0x328] sm:$0xff]
    %v6858 = vld [vmem:[#allocation17 + $0x330] sm:$0xff]
    %v6859 = vld [vmem:[#allocation17 + $0x338] sm:$0xff]
    %v6860 = vld [vmem:[#allocation17 + $0x340] sm:$0xff]
    %v6861 = vld [vmem:[#allocation17 + $0x348] sm:$0xff]
    %v6862 = vld [vmem:[#allocation17 + $0x350] sm:$0xff]
    %v6863 = vld [vmem:[#allocation17 + $0x358] sm:$0xff]
    %v6864 = vld [vmem:[#allocation17 + $0x360] sm:$0xff]
    %v6865 = vld [vmem:[#allocation17 + $0x368] sm:$0xff]
    %v6866 = vld [vmem:[#allocation17 + $0x370] sm:$0xff]
    %v6867 = vld [vmem:[#allocation17 + $0x378] sm:$0xff]
    %v6868 = vld [vmem:[#allocation17 + $0x380] sm:$0xff]
    %v6869 = vld [vmem:[#allocation17 + $0x388] sm:$0xff]
    %v6870 = vld [vmem:[#allocation17 + $0x390] sm:$0xff]
    %v6871 = vld [vmem:[#allocation17 + $0x398] sm:$0xff]
    %v6872 = vld [vmem:[#allocation17 + $0x3a0] sm:$0xff]
    %v6873 = vld [vmem:[#allocation17 + $0x3a8] sm:$0xff]
    %v6874 = vld [vmem:[#allocation17 + $0x3b0] sm:$0xff]
    %v6875 = vld [vmem:[#allocation17 + $0x3b8] sm:$0xff]
    %v6876 = vld [vmem:[#allocation17 + $0x3c0] sm:$0xff]
    %v6877 = vld [vmem:[#allocation17 + $0x3c8] sm:$0xff]
    %v6878 = vld [vmem:[#allocation17 + $0x3d0] sm:$0xff]
    %v6879 = vld [vmem:[#allocation17 + $0x3d8] sm:$0xff]
    %v6880 = vld [vmem:[#allocation17 + $0x3e0] sm:$0xff]
    %v6881 = vld [vmem:[#allocation17 + $0x3e8] sm:$0xff]
    %v6882 = vld [vmem:[#allocation17 + $0x3f0] sm:$0xff]
    %v6883 = vld [vmem:[#allocation17 + $0x3f8] sm:$0xff]
    %v6884 = vld [vmem:[#allocation17 + $0x400] sm:$0xff]
    %v6885 = vld [vmem:[#allocation17 + $0x408] sm:$0xff]
    %v6886 = vld [vmem:[#allocation17 + $0x410] sm:$0xff]
    %v6887 = vld [vmem:[#allocation17 + $0x418] sm:$0xff]
    %v6888 = vld [vmem:[#allocation17 + $0x420] sm:$0xff]
    %v6889 = vld [vmem:[#allocation17 + $0x428] sm:$0xff]
    %v6890 = vld [vmem:[#allocation17 + $0x430] sm:$0xff]
    %v6891 = vld [vmem:[#allocation17 + $0x438] sm:$0xff]
    %v6892 = vld [vmem:[#allocation17 + $0x440] sm:$0xff]
    %v6893 = vld [vmem:[#allocation17 + $0x448] sm:$0xff]
    %v6894 = vld [vmem:[#allocation17 + $0x450] sm:$0xff]
    %v6895 = vld [vmem:[#allocation17 + $0x458] sm:$0xff]
    %v6896 = vld [vmem:[#allocation17 + $0x460] sm:$0xff]
    %v6897 = vld [vmem:[#allocation17 + $0x468] sm:$0xff]
    %v6898 = vld [vmem:[#allocation17 + $0x470] sm:$0xff]
    %v6899 = vld [vmem:[#allocation17 + $0x478] sm:$0xff]
    %v6900 = vld [vmem:[#allocation17 + $0x480] sm:$0xff]
    %v6901 = vld [vmem:[#allocation17 + $0x488] sm:$0xff]
    %v6902 = vld [vmem:[#allocation17 + $0x490] sm:$0xff]
    %v6903 = vld [vmem:[#allocation17 + $0x498] sm:$0xff]
    %v6904 = vld [vmem:[#allocation17 + $0x4a0] sm:$0xff]
    %v6905 = vld [vmem:[#allocation17 + $0x4a8] sm:$0xff]
    %v6906 = vld [vmem:[#allocation17 + $0x4b0] sm:$0xff]
    %v6907 = vld [vmem:[#allocation17 + $0x4b8] sm:$0xff]
    %v6908 = vld [vmem:[#allocation17 + $0x4c0] sm:$0xff]
    %v6909 = vld [vmem:[#allocation17 + $0x4c8] sm:$0xff]
    %v6910 = vld [vmem:[#allocation17 + $0x4d0] sm:$0xff]
    %v6911 = vld [vmem:[#allocation17 + $0x4d8] sm:$0xff]
    %v6912 = vld [vmem:[#allocation17 + $0x4e0] sm:$0xff]
    %v6913 = vld [vmem:[#allocation17 + $0x4e8] sm:$0xff]
    %v6914 = vld [vmem:[#allocation17 + $0x4f0] sm:$0xff]
    %v6915 = vld [vmem:[#allocation17 + $0x4f8] sm:$0xff]
    %v6916 = vld [vmem:[#allocation17 + $0x500] sm:$0xff]
    %v6917 = vld [vmem:[#allocation17 + $0x508] sm:$0xff]
    %v6918 = vld [vmem:[#allocation17 + $0x510] sm:$0xff]
    %v6919 = vld [vmem:[#allocation17 + $0x518] sm:$0xff]
    %v6920 = vld [vmem:[#allocation17 + $0x520] sm:$0xff]
    %v6921 = vld [vmem:[#allocation17 + $0x528] sm:$0xff]
    %v6922 = vld [vmem:[#allocation17 + $0x530] sm:$0xff]
    %v6923 = vld [vmem:[#allocation17 + $0x538] sm:$0xff]
    %v6924 = vld [vmem:[#allocation17 + $0x540] sm:$0xff]
    %v6925 = vld [vmem:[#allocation17 + $0x548] sm:$0xff]
    %v6926 = vld [vmem:[#allocation17 + $0x550] sm:$0xff]
    %v6927 = vld [vmem:[#allocation17 + $0x558] sm:$0xff]
    %v6928 = vld [vmem:[#allocation17 + $0x560] sm:$0xff]
    %v6929 = vld [vmem:[#allocation17 + $0x568] sm:$0xff]
    %v6930 = vld [vmem:[#allocation17 + $0x570] sm:$0xff]
    %v6931 = vld [vmem:[#allocation17 + $0x578] sm:$0xff]
    %v6932 = vld [vmem:[#allocation17 + $0x580] sm:$0xff]
    %v6933 = vld [vmem:[#allocation17 + $0x588] sm:$0xff]
    %v6934 = vld [vmem:[#allocation17 + $0x590] sm:$0xff]
    %v6935 = vld [vmem:[#allocation17 + $0x598] sm:$0xff]
    %v6936 = vld [vmem:[#allocation17 + $0x5a0] sm:$0xff]
    %v6937 = vld [vmem:[#allocation17 + $0x5a8] sm:$0xff]
    %v6938 = vld [vmem:[#allocation17 + $0x5b0] sm:$0xff]
    %v6939 = vld [vmem:[#allocation17 + $0x5b8] sm:$0xff]
    %v6940 = vld [vmem:[#allocation17 + $0x5c0] sm:$0xff]
    %v6941 = vld [vmem:[#allocation17 + $0x5c8] sm:$0xff]
    %v6942 = vld [vmem:[#allocation17 + $0x5d0] sm:$0xff]
    %v6943 = vld [vmem:[#allocation17 + $0x5d8] sm:$0xff]
    %v6944 = vld [vmem:[#allocation17 + $0x5e0] sm:$0xff]
    %v6945 = vld [vmem:[#allocation17 + $0x5e8] sm:$0xff]
    %v6946 = vld [vmem:[#allocation17 + $0x5f0] sm:$0xff]
    %v6947 = vld [vmem:[#allocation17 + $0x5f8] sm:$0xff]
    %v6948 = vld [vmem:[#allocation17 + $0x600] sm:$0xff]
    %v6949 = vld [vmem:[#allocation17 + $0x608] sm:$0xff]
    %v6950 = vld [vmem:[#allocation17 + $0x610] sm:$0xff]
    %v6951 = vld [vmem:[#allocation17 + $0x618] sm:$0xff]
    %v6952 = vld [vmem:[#allocation17 + $0x620] sm:$0xff]
    %v6953 = vld [vmem:[#allocation17 + $0x628] sm:$0xff]
    %v6954 = vld [vmem:[#allocation17 + $0x630] sm:$0xff]
    %v6955 = vld [vmem:[#allocation17 + $0x638] sm:$0xff]
    %v6956 = vld [vmem:[#allocation17 + $0x640] sm:$0xff]
    %v6957 = vld [vmem:[#allocation17 + $0x648] sm:$0xff]
    %v6958 = vld [vmem:[#allocation17 + $0x650] sm:$0xff]
    %v6959 = vld [vmem:[#allocation17 + $0x658] sm:$0xff]
    %v6960 = vld [vmem:[#allocation17 + $0x660] sm:$0xff]
    %v6961 = vld [vmem:[#allocation17 + $0x668] sm:$0xff]
    %v6962 = vld [vmem:[#allocation17 + $0x670] sm:$0xff]
    %v6963 = vld [vmem:[#allocation17 + $0x678] sm:$0xff]
    %v6964 = vld [vmem:[#allocation17 + $0x680] sm:$0xff]
    %v6965 = vld [vmem:[#allocation17 + $0x688] sm:$0xff]
    %v6966 = vld [vmem:[#allocation17 + $0x690] sm:$0xff]
    %v6967 = vld [vmem:[#allocation17 + $0x698] sm:$0xff]
    %v6968 = vld [vmem:[#allocation17 + $0x6a0] sm:$0xff]
    %v6969 = vld [vmem:[#allocation17 + $0x6a8] sm:$0xff]
    %v6970 = vld [vmem:[#allocation17 + $0x6b0] sm:$0xff]
    %v6971 = vld [vmem:[#allocation17 + $0x6b8] sm:$0xff]
    %v6972 = vld [vmem:[#allocation17 + $0x6c0] sm:$0xff]
    %v6973 = vld [vmem:[#allocation17 + $0x6c8] sm:$0xff]
    %v6974 = vld [vmem:[#allocation17 + $0x6d0] sm:$0xff]
    %v6975 = vld [vmem:[#allocation17 + $0x6d8] sm:$0xff]
    %v6976 = vld [vmem:[#allocation17 + $0x6e0] sm:$0xff]
    %v6977 = vld [vmem:[#allocation17 + $0x6e8] sm:$0xff]
    %v6978 = vld [vmem:[#allocation17 + $0x6f0] sm:$0xff]
    %v6979 = vld [vmem:[#allocation17 + $0x6f8] sm:$0xff]
    %v6980 = vld [vmem:[#allocation17 + $0x700] sm:$0xff]
    %v6981 = vld [vmem:[#allocation17 + $0x708] sm:$0xff]
    %v6982 = vld [vmem:[#allocation17 + $0x710] sm:$0xff]
    %v6983 = vld [vmem:[#allocation17 + $0x718] sm:$0xff]
    %v6984 = vld [vmem:[#allocation17 + $0x720] sm:$0xff]
    %v6985 = vld [vmem:[#allocation17 + $0x728] sm:$0xff]
    %v6986 = vld [vmem:[#allocation17 + $0x730] sm:$0xff]
    %v6987 = vld [vmem:[#allocation17 + $0x738] sm:$0xff]
    %v6988 = vld [vmem:[#allocation17 + $0x740] sm:$0xff]
    %v6989 = vld [vmem:[#allocation17 + $0x748] sm:$0xff]
    %v6990 = vld [vmem:[#allocation17 + $0x750] sm:$0xff]
    %v6991 = vld [vmem:[#allocation17 + $0x758] sm:$0xff]
    %v6992 = vld [vmem:[#allocation17 + $0x760] sm:$0xff]
    %v6993 = vld [vmem:[#allocation17 + $0x768] sm:$0xff]
    %v6994 = vld [vmem:[#allocation17 + $0x770] sm:$0xff]
    %v6995 = vld [vmem:[#allocation17 + $0x778] sm:$0xff]
    %v6996 = vld [vmem:[#allocation17 + $0x780] sm:$0xff]
    %v6997 = vld [vmem:[#allocation17 + $0x788] sm:$0xff]
    %v6998 = vld [vmem:[#allocation17 + $0x790] sm:$0xff]
    %v6999 = vld [vmem:[#allocation17 + $0x798] sm:$0xff]
    %v7000 = vld [vmem:[#allocation17 + $0x7a0] sm:$0xff]
    %v7001 = vld [vmem:[#allocation17 + $0x7a8] sm:$0xff]
    %v7002 = vld [vmem:[#allocation17 + $0x7b0] sm:$0xff]
    %v7003 = vld [vmem:[#allocation17 + $0x7b8] sm:$0xff]
    %v7004 = vld [vmem:[#allocation17 + $0x7c0] sm:$0xff]
    %v7005 = vld [vmem:[#allocation17 + $0x7c8] sm:$0xff]
    %v7006 = vld [vmem:[#allocation17 + $0x7d0] sm:$0xff]
    %v7007 = vld [vmem:[#allocation17 + $0x7d8] sm:$0xff]
    %v7008 = vld [vmem:[#allocation17 + $0x7e0] sm:$0xff]
    %v7009 = vld [vmem:[#allocation17 + $0x7e8] sm:$0xff]
    %v7010 = vld [vmem:[#allocation17 + $0x7f0] sm:$0xff]
    %v7011 = vld [vmem:[#allocation17 + $0x7f8] sm:$0xff]
    %v7012 = vpack.c.bf16 %v6748, %v6748
    %v7013 = vpack.c.bf16 %v6749, %v6749
    %v7014 = vpack.c.bf16 %v6750, %v6750
    %v7015 = vpack.c.bf16 %v6751, %v6751
    %v7016 = vpack.c.bf16 %v6752, %v6752
    %v7017 = vpack.c.bf16 %v6753, %v6753
    %v7018 = vpack.c.bf16 %v6754, %v6754
    %v7019 = vpack.c.bf16 %v6755, %v6755
    %v7020 = vld [vmem:[#allocation19] sm:$0xf]
    %v7022 = vperm.slane %v7020, 0
    %v7023 = vperm.slane %v7020, 1
    %v7024 = vperm.slane %v7020, 2
    %v7025 = vperm.slane %v7020, 3
    %v7286 = vunpack.c.l.b16 %v6756
    %v7287 = vunpack.c.h.b16 %v6756
    %v7288 = vunpack.c.l.b16 %v6757
    %v7289 = vunpack.c.h.b16 %v6757
    %v7290 = vunpack.c.l.b16 %v6758
    %v7291 = vunpack.c.h.b16 %v6758
    %v7292 = vunpack.c.l.b16 %v6759
    %v7293 = vunpack.c.h.b16 %v6759
    %v7294 = vunpack.c.l.b16 %v6760
    %v7295 = vunpack.c.h.b16 %v6760
    %v7296 = vunpack.c.l.b16 %v6761
    %v7297 = vunpack.c.h.b16 %v6761
    %v7298 = vunpack.c.l.b16 %v6762
    %v7299 = vunpack.c.h.b16 %v6762
    %v7300 = vunpack.c.l.b16 %v6763
    %v7301 = vunpack.c.h.b16 %v6763
    %v7302 = vunpack.c.l.b16 %v6764
    %v7303 = vunpack.c.h.b16 %v6764
    %v7304 = vunpack.c.l.b16 %v6765
    %v7305 = vunpack.c.h.b16 %v6765
    %v7306 = vunpack.c.l.b16 %v6766
    %v7307 = vunpack.c.h.b16 %v6766
    %v7308 = vunpack.c.l.b16 %v6767
    %v7309 = vunpack.c.h.b16 %v6767
    %v7310 = vunpack.c.l.b16 %v6768
    %v7311 = vunpack.c.h.b16 %v6768
    %v7312 = vunpack.c.l.b16 %v6769
    %v7313 = vunpack.c.h.b16 %v6769
    %v7314 = vunpack.c.l.b16 %v6770
    %v7315 = vunpack.c.h.b16 %v6770
    %v7316 = vunpack.c.l.b16 %v6771
    %v7317 = vunpack.c.h.b16 %v6771
    %v7318 = vunpack.c.l.b16 %v6772
    %v7319 = vunpack.c.h.b16 %v6772
    %v7320 = vunpack.c.l.b16 %v6773
    %v7321 = vunpack.c.h.b16 %v6773
    %v7322 = vunpack.c.l.b16 %v6774
    %v7323 = vunpack.c.h.b16 %v6774
    %v7324 = vunpack.c.l.b16 %v6775
    %v7325 = vunpack.c.h.b16 %v6775
    %v7326 = vunpack.c.l.b16 %v6776
    %v7327 = vunpack.c.h.b16 %v6776
    %v7328 = vunpack.c.l.b16 %v6777
    %v7329 = vunpack.c.h.b16 %v6777
    %v7330 = vunpack.c.l.b16 %v6778
    %v7331 = vunpack.c.h.b16 %v6778
    %v7332 = vunpack.c.l.b16 %v6779
    %v7333 = vunpack.c.h.b16 %v6779
    %v7334 = vunpack.c.l.b16 %v6780
    %v7335 = vunpack.c.h.b16 %v6780
    %v7336 = vunpack.c.l.b16 %v6781
    %v7337 = vunpack.c.h.b16 %v6781
    %v7338 = vunpack.c.l.b16 %v6782
    %v7339 = vunpack.c.h.b16 %v6782
    %v7340 = vunpack.c.l.b16 %v6783
    %v7341 = vunpack.c.h.b16 %v6783
    %v7342 = vunpack.c.l.b16 %v6784
    %v7343 = vunpack.c.h.b16 %v6784
    %v7344 = vunpack.c.l.b16 %v6785
    %v7345 = vunpack.c.h.b16 %v6785
    %v7346 = vunpack.c.l.b16 %v6786
    %v7347 = vunpack.c.h.b16 %v6786
    %v7348 = vunpack.c.l.b16 %v6787
    %v7349 = vunpack.c.h.b16 %v6787
    %v7350 = vunpack.c.l.b16 %v6788
    %v7351 = vunpack.c.h.b16 %v6788
    %v7352 = vunpack.c.l.b16 %v6789
    %v7353 = vunpack.c.h.b16 %v6789
    %v7354 = vunpack.c.l.b16 %v6790
    %v7355 = vunpack.c.h.b16 %v6790
    %v7356 = vunpack.c.l.b16 %v6791
    %v7357 = vunpack.c.h.b16 %v6791
    %v7358 = vunpack.c.l.b16 %v6792
    %v7359 = vunpack.c.h.b16 %v6792
    %v7360 = vunpack.c.l.b16 %v6793
    %v7361 = vunpack.c.h.b16 %v6793
    %v7362 = vunpack.c.l.b16 %v6794
    %v7363 = vunpack.c.h.b16 %v6794
    %v7364 = vunpack.c.l.b16 %v6795
    %v7365 = vunpack.c.h.b16 %v6795
    %v7366 = vunpack.c.l.b16 %v6796
    %v7367 = vunpack.c.h.b16 %v6796
    %v7368 = vunpack.c.l.b16 %v6797
    %v7369 = vunpack.c.h.b16 %v6797
    %v7370 = vunpack.c.l.b16 %v6798
    %v7371 = vunpack.c.h.b16 %v6798
    %v7372 = vunpack.c.l.b16 %v6799
    %v7373 = vunpack.c.h.b16 %v6799
    %v7374 = vunpack.c.l.b16 %v6800
    %v7375 = vunpack.c.h.b16 %v6800
    %v7376 = vunpack.c.l.b16 %v6801
    %v7377 = vunpack.c.h.b16 %v6801
    %v7378 = vunpack.c.l.b16 %v6802
    %v7379 = vunpack.c.h.b16 %v6802
    %v7380 = vunpack.c.l.b16 %v6803
    %v7381 = vunpack.c.h.b16 %v6803
    %v7382 = vunpack.c.l.b16 %v6804
    %v7383 = vunpack.c.h.b16 %v6804
    %v7384 = vunpack.c.l.b16 %v6805
    %v7385 = vunpack.c.h.b16 %v6805
    %v7386 = vunpack.c.l.b16 %v6806
    %v7387 = vunpack.c.h.b16 %v6806
    %v7388 = vunpack.c.l.b16 %v6807
    %v7389 = vunpack.c.h.b16 %v6807
    %v7390 = vunpack.c.l.b16 %v6808
    %v7391 = vunpack.c.h.b16 %v6808
    %v7392 = vunpack.c.l.b16 %v6809
    %v7393 = vunpack.c.h.b16 %v6809
    %v7394 = vunpack.c.l.b16 %v6810
    %v7395 = vunpack.c.h.b16 %v6810
    %v7396 = vunpack.c.l.b16 %v6811
    %v7397 = vunpack.c.h.b16 %v6811
    %v7398 = vunpack.c.l.b16 %v6812
    %v7399 = vunpack.c.h.b16 %v6812
    %v7400 = vunpack.c.l.b16 %v6813
    %v7401 = vunpack.c.h.b16 %v6813
    %v7402 = vunpack.c.l.b16 %v6814
    %v7403 = vunpack.c.h.b16 %v6814
    %v7404 = vunpack.c.l.b16 %v6815
    %v7405 = vunpack.c.h.b16 %v6815
    %v7406 = vunpack.c.l.b16 %v6816
    %v7407 = vunpack.c.h.b16 %v6816
    %v7408 = vunpack.c.l.b16 %v6817
    %v7409 = vunpack.c.h.b16 %v6817
    %v7410 = vunpack.c.l.b16 %v6818
    %v7411 = vunpack.c.h.b16 %v6818
    %v7412 = vunpack.c.l.b16 %v6819
    %v7413 = vunpack.c.h.b16 %v6819
    %v7414 = vunpack.c.l.b16 %v6820
    %v7415 = vunpack.c.h.b16 %v6820
    %v7416 = vunpack.c.l.b16 %v6821
    %v7417 = vunpack.c.h.b16 %v6821
    %v7418 = vunpack.c.l.b16 %v6822
    %v7419 = vunpack.c.h.b16 %v6822
    %v7420 = vunpack.c.l.b16 %v6823
    %v7421 = vunpack.c.h.b16 %v6823
    %v7422 = vunpack.c.l.b16 %v6824
    %v7423 = vunpack.c.h.b16 %v6824
    %v7424 = vunpack.c.l.b16 %v6825
    %v7425 = vunpack.c.h.b16 %v6825
    %v7426 = vunpack.c.l.b16 %v6826
    %v7427 = vunpack.c.h.b16 %v6826
    %v7428 = vunpack.c.l.b16 %v6827
    %v7429 = vunpack.c.h.b16 %v6827
    %v7430 = vunpack.c.l.b16 %v6828
    %v7431 = vunpack.c.h.b16 %v6828
    %v7432 = vunpack.c.l.b16 %v6829
    %v7433 = vunpack.c.h.b16 %v6829
    %v7434 = vunpack.c.l.b16 %v6830
    %v7435 = vunpack.c.h.b16 %v6830
    %v7436 = vunpack.c.l.b16 %v6831
    %v7437 = vunpack.c.h.b16 %v6831
    %v7438 = vunpack.c.l.b16 %v6832
    %v7439 = vunpack.c.h.b16 %v6832
    %v7440 = vunpack.c.l.b16 %v6833
    %v7441 = vunpack.c.h.b16 %v6833
    %v7442 = vunpack.c.l.b16 %v6834
    %v7443 = vunpack.c.h.b16 %v6834
    %v7444 = vunpack.c.l.b16 %v6835
    %v7445 = vunpack.c.h.b16 %v6835
    %v7446 = vunpack.c.l.b16 %v6836
    %v7447 = vunpack.c.h.b16 %v6836
    %v7448 = vunpack.c.l.b16 %v6837
    %v7449 = vunpack.c.h.b16 %v6837
    %v7450 = vunpack.c.l.b16 %v6838
    %v7451 = vunpack.c.h.b16 %v6838
    %v7452 = vunpack.c.l.b16 %v6839
    %v7453 = vunpack.c.h.b16 %v6839
    %v7454 = vunpack.c.l.b16 %v6840
    %v7455 = vunpack.c.h.b16 %v6840
    %v7456 = vunpack.c.l.b16 %v6841
    %v7457 = vunpack.c.h.b16 %v6841
    %v7458 = vunpack.c.l.b16 %v6842
    %v7459 = vunpack.c.h.b16 %v6842
    %v7460 = vunpack.c.l.b16 %v6843
    %v7461 = vunpack.c.h.b16 %v6843
    %v7462 = vunpack.c.l.b16 %v6844
    %v7463 = vunpack.c.h.b16 %v6844
    %v7464 = vunpack.c.l.b16 %v6845
    %v7465 = vunpack.c.h.b16 %v6845
    %v7466 = vunpack.c.l.b16 %v6846
    %v7467 = vunpack.c.h.b16 %v6846
    %v7468 = vunpack.c.l.b16 %v6847
    %v7469 = vunpack.c.h.b16 %v6847
    %v7470 = vunpack.c.l.b16 %v6848
    %v7471 = vunpack.c.h.b16 %v6848
    %v7472 = vunpack.c.l.b16 %v6849
    %v7473 = vunpack.c.h.b16 %v6849
    %v7474 = vunpack.c.l.b16 %v6850
    %v7475 = vunpack.c.h.b16 %v6850
    %v7476 = vunpack.c.l.b16 %v6851
    %v7477 = vunpack.c.h.b16 %v6851
    %v7478 = vunpack.c.l.b16 %v6852
    %v7479 = vunpack.c.h.b16 %v6852
    %v7480 = vunpack.c.l.b16 %v6853
    %v7481 = vunpack.c.h.b16 %v6853
    %v7482 = vunpack.c.l.b16 %v6854
    %v7483 = vunpack.c.h.b16 %v6854
    %v7484 = vunpack.c.l.b16 %v6855
    %v7485 = vunpack.c.h.b16 %v6855
    %v7486 = vunpack.c.l.b16 %v6856
    %v7487 = vunpack.c.h.b16 %v6856
    %v7488 = vunpack.c.l.b16 %v6857
    %v7489 = vunpack.c.h.b16 %v6857
    %v7490 = vunpack.c.l.b16 %v6858
    %v7491 = vunpack.c.h.b16 %v6858
    %v7492 = vunpack.c.l.b16 %v6859
    %v7493 = vunpack.c.h.b16 %v6859
    %v7494 = vunpack.c.l.b16 %v6860
    %v7495 = vunpack.c.h.b16 %v6860
    %v7496 = vunpack.c.l.b16 %v6861
    %v7497 = vunpack.c.h.b16 %v6861
    %v7498 = vunpack.c.l.b16 %v6862
    %v7499 = vunpack.c.h.b16 %v6862
    %v7500 = vunpack.c.l.b16 %v6863
    %v7501 = vunpack.c.h.b16 %v6863
    %v7502 = vunpack.c.l.b16 %v6864
    %v7503 = vunpack.c.h.b16 %v6864
    %v7504 = vunpack.c.l.b16 %v6865
    %v7505 = vunpack.c.h.b16 %v6865
    %v7506 = vunpack.c.l.b16 %v6866
    %v7507 = vunpack.c.h.b16 %v6866
    %v7508 = vunpack.c.l.b16 %v6867
    %v7509 = vunpack.c.h.b16 %v6867
    %v7510 = vunpack.c.l.b16 %v6868
    %v7511 = vunpack.c.h.b16 %v6868
    %v7512 = vunpack.c.l.b16 %v6869
    %v7513 = vunpack.c.h.b16 %v6869
    %v7514 = vunpack.c.l.b16 %v6870
    %v7515 = vunpack.c.h.b16 %v6870
    %v7516 = vunpack.c.l.b16 %v6871
    %v7517 = vunpack.c.h.b16 %v6871
    %v7518 = vunpack.c.l.b16 %v6872
    %v7519 = vunpack.c.h.b16 %v6872
    %v7520 = vunpack.c.l.b16 %v6873
    %v7521 = vunpack.c.h.b16 %v6873
    %v7522 = vunpack.c.l.b16 %v6874
    %v7523 = vunpack.c.h.b16 %v6874
    %v7524 = vunpack.c.l.b16 %v6875
    %v7525 = vunpack.c.h.b16 %v6875
    %v7526 = vunpack.c.l.b16 %v6876
    %v7527 = vunpack.c.h.b16 %v6876
    %v7528 = vunpack.c.l.b16 %v6877
    %v7529 = vunpack.c.h.b16 %v6877
    %v7530 = vunpack.c.l.b16 %v6878
    %v7531 = vunpack.c.h.b16 %v6878
    %v7532 = vunpack.c.l.b16 %v6879
    %v7533 = vunpack.c.h.b16 %v6879
    %v7534 = vunpack.c.l.b16 %v6880
    %v7535 = vunpack.c.h.b16 %v6880
    %v7536 = vunpack.c.l.b16 %v6881
    %v7537 = vunpack.c.h.b16 %v6881
    %v7538 = vunpack.c.l.b16 %v6882
    %v7539 = vunpack.c.h.b16 %v6882
    %v7540 = vunpack.c.l.b16 %v6883
    %v7541 = vunpack.c.h.b16 %v6883
    %v7542 = vunpack.c.l.b16 %v6884
    %v7543 = vunpack.c.h.b16 %v6884
    %v7544 = vunpack.c.l.b16 %v6885
    %v7545 = vunpack.c.h.b16 %v6885
    %v7546 = vunpack.c.l.b16 %v6886
    %v7547 = vunpack.c.h.b16 %v6886
    %v7548 = vunpack.c.l.b16 %v6887
    %v7549 = vunpack.c.h.b16 %v6887
    %v7550 = vunpack.c.l.b16 %v6888
    %v7551 = vunpack.c.h.b16 %v6888
    %v7552 = vunpack.c.l.b16 %v6889
    %v7553 = vunpack.c.h.b16 %v6889
    %v7554 = vunpack.c.l.b16 %v6890
    %v7555 = vunpack.c.h.b16 %v6890
    %v7556 = vunpack.c.l.b16 %v6891
    %v7557 = vunpack.c.h.b16 %v6891
    %v7558 = vunpack.c.l.b16 %v6892
    %v7559 = vunpack.c.h.b16 %v6892
    %v7560 = vunpack.c.l.b16 %v6893
    %v7561 = vunpack.c.h.b16 %v6893
    %v7562 = vunpack.c.l.b16 %v6894
    %v7563 = vunpack.c.h.b16 %v6894
    %v7564 = vunpack.c.l.b16 %v6895
    %v7565 = vunpack.c.h.b16 %v6895
    %v7566 = vunpack.c.l.b16 %v6896
    %v7567 = vunpack.c.h.b16 %v6896
    %v7568 = vunpack.c.l.b16 %v6897
    %v7569 = vunpack.c.h.b16 %v6897
    %v7570 = vunpack.c.l.b16 %v6898
    %v7571 = vunpack.c.h.b16 %v6898
    %v7572 = vunpack.c.l.b16 %v6899
    %v7573 = vunpack.c.h.b16 %v6899
    %v7574 = vunpack.c.l.b16 %v6900
    %v7575 = vunpack.c.h.b16 %v6900
    %v7576 = vunpack.c.l.b16 %v6901
    %v7577 = vunpack.c.h.b16 %v6901
    %v7578 = vunpack.c.l.b16 %v6902
    %v7579 = vunpack.c.h.b16 %v6902
    %v7580 = vunpack.c.l.b16 %v6903
    %v7581 = vunpack.c.h.b16 %v6903
    %v7582 = vunpack.c.l.b16 %v6904
    %v7583 = vunpack.c.h.b16 %v6904
    %v7584 = vunpack.c.l.b16 %v6905
    %v7585 = vunpack.c.h.b16 %v6905
    %v7586 = vunpack.c.l.b16 %v6906
    %v7587 = vunpack.c.h.b16 %v6906
    %v7588 = vunpack.c.l.b16 %v6907
    %v7589 = vunpack.c.h.b16 %v6907
    %v7590 = vunpack.c.l.b16 %v6908
    %v7591 = vunpack.c.h.b16 %v6908
    %v7592 = vunpack.c.l.b16 %v6909
    %v7593 = vunpack.c.h.b16 %v6909
    %v7594 = vunpack.c.l.b16 %v6910
    %v7595 = vunpack.c.h.b16 %v6910
    %v7596 = vunpack.c.l.b16 %v6911
    %v7597 = vunpack.c.h.b16 %v6911
    %v7598 = vunpack.c.l.b16 %v6912
    %v7599 = vunpack.c.h.b16 %v6912
    %v7600 = vunpack.c.l.b16 %v6913
    %v7601 = vunpack.c.h.b16 %v6913
    %v7602 = vunpack.c.l.b16 %v6914
    %v7603 = vunpack.c.h.b16 %v6914
    %v7604 = vunpack.c.l.b16 %v6915
    %v7605 = vunpack.c.h.b16 %v6915
    %v7606 = vunpack.c.l.b16 %v6916
    %v7607 = vunpack.c.h.b16 %v6916
    %v7608 = vunpack.c.l.b16 %v6917
    %v7609 = vunpack.c.h.b16 %v6917
    %v7610 = vunpack.c.l.b16 %v6918
    %v7611 = vunpack.c.h.b16 %v6918
    %v7612 = vunpack.c.l.b16 %v6919
    %v7613 = vunpack.c.h.b16 %v6919
    %v7614 = vunpack.c.l.b16 %v6920
    %v7615 = vunpack.c.h.b16 %v6920
    %v7616 = vunpack.c.l.b16 %v6921
    %v7617 = vunpack.c.h.b16 %v6921
    %v7618 = vunpack.c.l.b16 %v6922
    %v7619 = vunpack.c.h.b16 %v6922
    %v7620 = vunpack.c.l.b16 %v6923
    %v7621 = vunpack.c.h.b16 %v6923
    %v7622 = vunpack.c.l.b16 %v6924
    %v7623 = vunpack.c.h.b16 %v6924
    %v7624 = vunpack.c.l.b16 %v6925
    %v7625 = vunpack.c.h.b16 %v6925
    %v7626 = vunpack.c.l.b16 %v6926
    %v7627 = vunpack.c.h.b16 %v6926
    %v7628 = vunpack.c.l.b16 %v6927
    %v7629 = vunpack.c.h.b16 %v6927
    %v7630 = vunpack.c.l.b16 %v6928
    %v7631 = vunpack.c.h.b16 %v6928
    %v7632 = vunpack.c.l.b16 %v6929
    %v7633 = vunpack.c.h.b16 %v6929
    %v7634 = vunpack.c.l.b16 %v6930
    %v7635 = vunpack.c.h.b16 %v6930
    %v7636 = vunpack.c.l.b16 %v6931
    %v7637 = vunpack.c.h.b16 %v6931
    %v7638 = vunpack.c.l.b16 %v6932
    %v7639 = vunpack.c.h.b16 %v6932
    %v7640 = vunpack.c.l.b16 %v6933
    %v7641 = vunpack.c.h.b16 %v6933
    %v7642 = vunpack.c.l.b16 %v6934
    %v7643 = vunpack.c.h.b16 %v6934
    %v7644 = vunpack.c.l.b16 %v6935
    %v7645 = vunpack.c.h.b16 %v6935
    %v7646 = vunpack.c.l.b16 %v6936
    %v7647 = vunpack.c.h.b16 %v6936
    %v7648 = vunpack.c.l.b16 %v6937
    %v7649 = vunpack.c.h.b16 %v6937
    %v7650 = vunpack.c.l.b16 %v6938
    %v7651 = vunpack.c.h.b16 %v6938
    %v7652 = vunpack.c.l.b16 %v6939
    %v7653 = vunpack.c.h.b16 %v6939
    %v7654 = vunpack.c.l.b16 %v6940
    %v7655 = vunpack.c.h.b16 %v6940
    %v7656 = vunpack.c.l.b16 %v6941
    %v7657 = vunpack.c.h.b16 %v6941
    %v7658 = vunpack.c.l.b16 %v6942
    %v7659 = vunpack.c.h.b16 %v6942
    %v7660 = vunpack.c.l.b16 %v6943
    %v7661 = vunpack.c.h.b16 %v6943
    %v7662 = vunpack.c.l.b16 %v6944
    %v7663 = vunpack.c.h.b16 %v6944
    %v7664 = vunpack.c.l.b16 %v6945
    %v7665 = vunpack.c.h.b16 %v6945
    %v7666 = vunpack.c.l.b16 %v6946
    %v7667 = vunpack.c.h.b16 %v6946
    %v7668 = vunpack.c.l.b16 %v6947
    %v7669 = vunpack.c.h.b16 %v6947
    %v7670 = vunpack.c.l.b16 %v6948
    %v7671 = vunpack.c.h.b16 %v6948
    %v7672 = vunpack.c.l.b16 %v6949
    %v7673 = vunpack.c.h.b16 %v6949
    %v7674 = vunpack.c.l.b16 %v6950
    %v7675 = vunpack.c.h.b16 %v6950
    %v7676 = vunpack.c.l.b16 %v6951
    %v7677 = vunpack.c.h.b16 %v6951
    %v7678 = vunpack.c.l.b16 %v6952
    %v7679 = vunpack.c.h.b16 %v6952
    %v7680 = vunpack.c.l.b16 %v6953
    %v7681 = vunpack.c.h.b16 %v6953
    %v7682 = vunpack.c.l.b16 %v6954
    %v7683 = vunpack.c.h.b16 %v6954
    %v7684 = vunpack.c.l.b16 %v6955
    %v7685 = vunpack.c.h.b16 %v6955
    %v7686 = vunpack.c.l.b16 %v6956
    %v7687 = vunpack.c.h.b16 %v6956
    %v7688 = vunpack.c.l.b16 %v6957
    %v7689 = vunpack.c.h.b16 %v6957
    %v7690 = vunpack.c.l.b16 %v6958
    %v7691 = vunpack.c.h.b16 %v6958
    %v7692 = vunpack.c.l.b16 %v6959
    %v7693 = vunpack.c.h.b16 %v6959
    %v7694 = vunpack.c.l.b16 %v6960
    %v7695 = vunpack.c.h.b16 %v6960
    %v7696 = vunpack.c.l.b16 %v6961
    %v7697 = vunpack.c.h.b16 %v6961
    %v7698 = vunpack.c.l.b16 %v6962
    %v7699 = vunpack.c.h.b16 %v6962
    %v7700 = vunpack.c.l.b16 %v6963
    %v7701 = vunpack.c.h.b16 %v6963
    %v7702 = vunpack.c.l.b16 %v6964
    %v7703 = vunpack.c.h.b16 %v6964
    %v7704 = vunpack.c.l.b16 %v6965
    %v7705 = vunpack.c.h.b16 %v6965
    %v7706 = vunpack.c.l.b16 %v6966
    %v7707 = vunpack.c.h.b16 %v6966
    %v7708 = vunpack.c.l.b16 %v6967
    %v7709 = vunpack.c.h.b16 %v6967
    %v7710 = vunpack.c.l.b16 %v6968
    %v7711 = vunpack.c.h.b16 %v6968
    %v7712 = vunpack.c.l.b16 %v6969
    %v7713 = vunpack.c.h.b16 %v6969
    %v7714 = vunpack.c.l.b16 %v6970
    %v7715 = vunpack.c.h.b16 %v6970
    %v7716 = vunpack.c.l.b16 %v6971
    %v7717 = vunpack.c.h.b16 %v6971
    %v7718 = vunpack.c.l.b16 %v6972
    %v7719 = vunpack.c.h.b16 %v6972
    %v7720 = vunpack.c.l.b16 %v6973
    %v7721 = vunpack.c.h.b16 %v6973
    %v7722 = vunpack.c.l.b16 %v6974
    %v7723 = vunpack.c.h.b16 %v6974
    %v7724 = vunpack.c.l.b16 %v6975
    %v7725 = vunpack.c.h.b16 %v6975
    %v7726 = vunpack.c.l.b16 %v6976
    %v7727 = vunpack.c.h.b16 %v6976
    %v7728 = vunpack.c.l.b16 %v6977
    %v7729 = vunpack.c.h.b16 %v6977
    %v7730 = vunpack.c.l.b16 %v6978
    %v7731 = vunpack.c.h.b16 %v6978
    %v7732 = vunpack.c.l.b16 %v6979
    %v7733 = vunpack.c.h.b16 %v6979
    %v7734 = vunpack.c.l.b16 %v6980
    %v7735 = vunpack.c.h.b16 %v6980
    %v7736 = vunpack.c.l.b16 %v6981
    %v7737 = vunpack.c.h.b16 %v6981
    %v7738 = vunpack.c.l.b16 %v6982
    %v7739 = vunpack.c.h.b16 %v6982
    %v7740 = vunpack.c.l.b16 %v6983
    %v7741 = vunpack.c.h.b16 %v6983
    %v7742 = vunpack.c.l.b16 %v6984
    %v7743 = vunpack.c.h.b16 %v6984
    %v7744 = vunpack.c.l.b16 %v6985
    %v7745 = vunpack.c.h.b16 %v6985
    %v7746 = vunpack.c.l.b16 %v6986
    %v7747 = vunpack.c.h.b16 %v6986
    %v7748 = vunpack.c.l.b16 %v6987
    %v7749 = vunpack.c.h.b16 %v6987
    %v7750 = vunpack.c.l.b16 %v6988
    %v7751 = vunpack.c.h.b16 %v6988
    %v7752 = vunpack.c.l.b16 %v6989
    %v7753 = vunpack.c.h.b16 %v6989
    %v7754 = vunpack.c.l.b16 %v6990
    %v7755 = vunpack.c.h.b16 %v6990
    %v7756 = vunpack.c.l.b16 %v6991
    %v7757 = vunpack.c.h.b16 %v6991
    %v7758 = vunpack.c.l.b16 %v6992
    %v7759 = vunpack.c.h.b16 %v6992
    %v7760 = vunpack.c.l.b16 %v6993
    %v7761 = vunpack.c.h.b16 %v6993
    %v7762 = vunpack.c.l.b16 %v6994
    %v7763 = vunpack.c.h.b16 %v6994
    %v7764 = vunpack.c.l.b16 %v6995
    %v7765 = vunpack.c.h.b16 %v6995
    %v7766 = vunpack.c.l.b16 %v6996
    %v7767 = vunpack.c.h.b16 %v6996
    %v7768 = vunpack.c.l.b16 %v6997
    %v7769 = vunpack.c.h.b16 %v6997
    %v7770 = vunpack.c.l.b16 %v6998
    %v7771 = vunpack.c.h.b16 %v6998
    %v7772 = vunpack.c.l.b16 %v6999
    %v7773 = vunpack.c.h.b16 %v6999
    %v7774 = vunpack.c.l.b16 %v7000
    %v7775 = vunpack.c.h.b16 %v7000
    %v7776 = vunpack.c.l.b16 %v7001
    %v7777 = vunpack.c.h.b16 %v7001
    %v7778 = vunpack.c.l.b16 %v7002
    %v7779 = vunpack.c.h.b16 %v7002
    %v7780 = vunpack.c.l.b16 %v7003
    %v7781 = vunpack.c.h.b16 %v7003
    %v7782 = vunpack.c.l.b16 %v7004
    %v7783 = vunpack.c.h.b16 %v7004
    %v7784 = vunpack.c.l.b16 %v7005
    %v7785 = vunpack.c.h.b16 %v7005
    %v7786 = vunpack.c.l.b16 %v7006
    %v7787 = vunpack.c.h.b16 %v7006
    %v7788 = vunpack.c.l.b16 %v7007
    %v7789 = vunpack.c.h.b16 %v7007
    %v7790 = vunpack.c.l.b16 %v7008
    %v7791 = vunpack.c.h.b16 %v7008
    %v7792 = vunpack.c.l.b16 %v7009
    %v7793 = vunpack.c.h.b16 %v7009
    %v7794 = vunpack.c.l.b16 %v7010
    %v7795 = vunpack.c.h.b16 %v7010
    %v7796 = vunpack.c.l.b16 %v7011
    %v7797 = vunpack.c.h.b16 %v7011
    %v7798 = vpack.c.b16 %v7290, %v7286
    %v7799 = vpack.c.b16 %v7291, %v7287
    %v7800 = vpack.c.b16 %v7292, %v7288
    %v7801 = vpack.c.b16 %v7293, %v7289
    %v7802 = vpack.c.b16 %v7298, %v7294
    %v7803 = vpack.c.b16 %v7299, %v7295
    %v7804 = vpack.c.b16 %v7300, %v7296
    %v7805 = vpack.c.b16 %v7301, %v7297
    %v7806 = vpack.c.b16 %v7306, %v7302
    %v7807 = vpack.c.b16 %v7307, %v7303
    %v7808 = vpack.c.b16 %v7308, %v7304
    %v7809 = vpack.c.b16 %v7309, %v7305
    %v7810 = vpack.c.b16 %v7314, %v7310
    %v7811 = vpack.c.b16 %v7315, %v7311
    %v7812 = vpack.c.b16 %v7316, %v7312
    %v7813 = vpack.c.b16 %v7317, %v7313
    %v7814 = vpack.c.b16 %v7322, %v7318
    %v7815 = vpack.c.b16 %v7323, %v7319
    %v7816 = vpack.c.b16 %v7324, %v7320
    %v7817 = vpack.c.b16 %v7325, %v7321
    %v7818 = vpack.c.b16 %v7330, %v7326
    %v7819 = vpack.c.b16 %v7331, %v7327
    %v7820 = vpack.c.b16 %v7332, %v7328
    %v7821 = vpack.c.b16 %v7333, %v7329
    %v7822 = vpack.c.b16 %v7338, %v7334
    %v7823 = vpack.c.b16 %v7339, %v7335
    %v7824 = vpack.c.b16 %v7340, %v7336
    %v7825 = vpack.c.b16 %v7341, %v7337
    %v7826 = vpack.c.b16 %v7346, %v7342
    %v7827 = vpack.c.b16 %v7347, %v7343
    %v7828 = vpack.c.b16 %v7348, %v7344
    %v7829 = vpack.c.b16 %v7349, %v7345
    %v7830 = vpack.c.b16 %v7354, %v7350
    %v7831 = vpack.c.b16 %v7355, %v7351
    %v7832 = vpack.c.b16 %v7356, %v7352
    %v7833 = vpack.c.b16 %v7357, %v7353
    %v7834 = vpack.c.b16 %v7362, %v7358
    %v7835 = vpack.c.b16 %v7363, %v7359
    %v7836 = vpack.c.b16 %v7364, %v7360
    %v7837 = vpack.c.b16 %v7365, %v7361
    %v7838 = vpack.c.b16 %v7370, %v7366
    %v7839 = vpack.c.b16 %v7371, %v7367
    %v7840 = vpack.c.b16 %v7372, %v7368
    %v7841 = vpack.c.b16 %v7373, %v7369
    %v7842 = vpack.c.b16 %v7378, %v7374
    %v7843 = vpack.c.b16 %v7379, %v7375
    %v7844 = vpack.c.b16 %v7380, %v7376
    %v7845 = vpack.c.b16 %v7381, %v7377
    %v7846 = vpack.c.b16 %v7386, %v7382
    %v7847 = vpack.c.b16 %v7387, %v7383
    %v7848 = vpack.c.b16 %v7388, %v7384
    %v7849 = vpack.c.b16 %v7389, %v7385
    %v7850 = vpack.c.b16 %v7394, %v7390
    %v7851 = vpack.c.b16 %v7395, %v7391
    %v7852 = vpack.c.b16 %v7396, %v7392
    %v7853 = vpack.c.b16 %v7397, %v7393
    %v7854 = vpack.c.b16 %v7402, %v7398
    %v7855 = vpack.c.b16 %v7403, %v7399
    %v7856 = vpack.c.b16 %v7404, %v7400
    %v7857 = vpack.c.b16 %v7405, %v7401
    %v7858 = vpack.c.b16 %v7410, %v7406
    %v7859 = vpack.c.b16 %v7411, %v7407
    %v7860 = vpack.c.b16 %v7412, %v7408
    %v7861 = vpack.c.b16 %v7413, %v7409
    %v7862 = vpack.c.b16 %v7418, %v7414
    %v7863 = vpack.c.b16 %v7419, %v7415
    %v7864 = vpack.c.b16 %v7420, %v7416
    %v7865 = vpack.c.b16 %v7421, %v7417
    %v7866 = vpack.c.b16 %v7426, %v7422
    %v7867 = vpack.c.b16 %v7427, %v7423
    %v7868 = vpack.c.b16 %v7428, %v7424
    %v7869 = vpack.c.b16 %v7429, %v7425
    %v7870 = vpack.c.b16 %v7434, %v7430
    %v7871 = vpack.c.b16 %v7435, %v7431
    %v7872 = vpack.c.b16 %v7436, %v7432
    %v7873 = vpack.c.b16 %v7437, %v7433
    %v7874 = vpack.c.b16 %v7442, %v7438
    %v7875 = vpack.c.b16 %v7443, %v7439
    %v7876 = vpack.c.b16 %v7444, %v7440
    %v7877 = vpack.c.b16 %v7445, %v7441
    %v7878 = vpack.c.b16 %v7450, %v7446
    %v7879 = vpack.c.b16 %v7451, %v7447
    %v7880 = vpack.c.b16 %v7452, %v7448
    %v7881 = vpack.c.b16 %v7453, %v7449
    %v7882 = vpack.c.b16 %v7458, %v7454
    %v7883 = vpack.c.b16 %v7459, %v7455
    %v7884 = vpack.c.b16 %v7460, %v7456
    %v7885 = vpack.c.b16 %v7461, %v7457
    %v7886 = vpack.c.b16 %v7466, %v7462
    %v7887 = vpack.c.b16 %v7467, %v7463
    %v7888 = vpack.c.b16 %v7468, %v7464
    %v7889 = vpack.c.b16 %v7469, %v7465
    %v7890 = vpack.c.b16 %v7474, %v7470
    %v7891 = vpack.c.b16 %v7475, %v7471
    %v7892 = vpack.c.b16 %v7476, %v7472
    %v7893 = vpack.c.b16 %v7477, %v7473
    %v7894 = vpack.c.b16 %v7482, %v7478
    %v7895 = vpack.c.b16 %v7483, %v7479
    %v7896 = vpack.c.b16 %v7484, %v7480
    %v7897 = vpack.c.b16 %v7485, %v7481
    %v7898 = vpack.c.b16 %v7490, %v7486
    %v7899 = vpack.c.b16 %v7491, %v7487
    %v7900 = vpack.c.b16 %v7492, %v7488
    %v7901 = vpack.c.b16 %v7493, %v7489
    %v7902 = vpack.c.b16 %v7498, %v7494
    %v7903 = vpack.c.b16 %v7499, %v7495
    %v7904 = vpack.c.b16 %v7500, %v7496
    %v7905 = vpack.c.b16 %v7501, %v7497
    %v7906 = vpack.c.b16 %v7506, %v7502
    %v7907 = vpack.c.b16 %v7507, %v7503
    %v7908 = vpack.c.b16 %v7508, %v7504
    %v7909 = vpack.c.b16 %v7509, %v7505
    %v7910 = vpack.c.b16 %v7514, %v7510
    %v7911 = vpack.c.b16 %v7515, %v7511
    %v7912 = vpack.c.b16 %v7516, %v7512
    %v7913 = vpack.c.b16 %v7517, %v7513
    %v7914 = vpack.c.b16 %v7522, %v7518
    %v7915 = vpack.c.b16 %v7523, %v7519
    %v7916 = vpack.c.b16 %v7524, %v7520
    %v7917 = vpack.c.b16 %v7525, %v7521
    %v7918 = vpack.c.b16 %v7530, %v7526
    %v7919 = vpack.c.b16 %v7531, %v7527
    %v7920 = vpack.c.b16 %v7532, %v7528
    %v7921 = vpack.c.b16 %v7533, %v7529
    %v7922 = vpack.c.b16 %v7538, %v7534
    %v7923 = vpack.c.b16 %v7539, %v7535
    %v7924 = vpack.c.b16 %v7540, %v7536
    %v7925 = vpack.c.b16 %v7541, %v7537
    %v7926 = vpack.c.b16 %v7546, %v7542
    %v7927 = vpack.c.b16 %v7547, %v7543
    %v7928 = vpack.c.b16 %v7548, %v7544
    %v7929 = vpack.c.b16 %v7549, %v7545
    %v7930 = vpack.c.b16 %v7554, %v7550
    %v7931 = vpack.c.b16 %v7555, %v7551
    %v7932 = vpack.c.b16 %v7556, %v7552
    %v7933 = vpack.c.b16 %v7557, %v7553
    %v7934 = vpack.c.b16 %v7562, %v7558
    %v7935 = vpack.c.b16 %v7563, %v7559
    %v7936 = vpack.c.b16 %v7564, %v7560
    %v7937 = vpack.c.b16 %v7565, %v7561
    %v7938 = vpack.c.b16 %v7570, %v7566
    %v7939 = vpack.c.b16 %v7571, %v7567
    %v7940 = vpack.c.b16 %v7572, %v7568
    %v7941 = vpack.c.b16 %v7573, %v7569
    %v7942 = vpack.c.b16 %v7578, %v7574
    %v7943 = vpack.c.b16 %v7579, %v7575
    %v7944 = vpack.c.b16 %v7580, %v7576
    %v7945 = vpack.c.b16 %v7581, %v7577
    %v7946 = vpack.c.b16 %v7586, %v7582
    %v7947 = vpack.c.b16 %v7587, %v7583
    %v7948 = vpack.c.b16 %v7588, %v7584
    %v7949 = vpack.c.b16 %v7589, %v7585
    %v7950 = vpack.c.b16 %v7594, %v7590
    %v7951 = vpack.c.b16 %v7595, %v7591
    %v7952 = vpack.c.b16 %v7596, %v7592
    %v7953 = vpack.c.b16 %v7597, %v7593
    %v7954 = vpack.c.b16 %v7602, %v7598
    %v7955 = vpack.c.b16 %v7603, %v7599
    %v7956 = vpack.c.b16 %v7604, %v7600
    %v7957 = vpack.c.b16 %v7605, %v7601
    %v7958 = vpack.c.b16 %v7610, %v7606
    %v7959 = vpack.c.b16 %v7611, %v7607
    %v7960 = vpack.c.b16 %v7612, %v7608
    %v7961 = vpack.c.b16 %v7613, %v7609
    %v7962 = vpack.c.b16 %v7618, %v7614
    %v7963 = vpack.c.b16 %v7619, %v7615
    %v7964 = vpack.c.b16 %v7620, %v7616
    %v7965 = vpack.c.b16 %v7621, %v7617
    %v7966 = vpack.c.b16 %v7626, %v7622
    %v7967 = vpack.c.b16 %v7627, %v7623
    %v7968 = vpack.c.b16 %v7628, %v7624
    %v7969 = vpack.c.b16 %v7629, %v7625
    %v7970 = vpack.c.b16 %v7634, %v7630
    %v7971 = vpack.c.b16 %v7635, %v7631
    %v7972 = vpack.c.b16 %v7636, %v7632
    %v7973 = vpack.c.b16 %v7637, %v7633
    %v7974 = vpack.c.b16 %v7642, %v7638
    %v7975 = vpack.c.b16 %v7643, %v7639
    %v7976 = vpack.c.b16 %v7644, %v7640
    %v7977 = vpack.c.b16 %v7645, %v7641
    %v7978 = vpack.c.b16 %v7650, %v7646
    %v7979 = vpack.c.b16 %v7651, %v7647
    %v7980 = vpack.c.b16 %v7652, %v7648
    %v7981 = vpack.c.b16 %v7653, %v7649
    %v7982 = vpack.c.b16 %v7658, %v7654
    %v7983 = vpack.c.b16 %v7659, %v7655
    %v7984 = vpack.c.b16 %v7660, %v7656
    %v7985 = vpack.c.b16 %v7661, %v7657
    %v7986 = vpack.c.b16 %v7666, %v7662
    %v7987 = vpack.c.b16 %v7667, %v7663
    %v7988 = vpack.c.b16 %v7668, %v7664
    %v7989 = vpack.c.b16 %v7669, %v7665
    %v7990 = vpack.c.b16 %v7674, %v7670
    %v7991 = vpack.c.b16 %v7675, %v7671
    %v7992 = vpack.c.b16 %v7676, %v7672
    %v7993 = vpack.c.b16 %v7677, %v7673
    %v7994 = vpack.c.b16 %v7682, %v7678
    %v7995 = vpack.c.b16 %v7683, %v7679
    %v7996 = vpack.c.b16 %v7684, %v7680
    %v7997 = vpack.c.b16 %v7685, %v7681
    %v7998 = vpack.c.b16 %v7690, %v7686
    %v7999 = vpack.c.b16 %v7691, %v7687
    %v8000 = vpack.c.b16 %v7692, %v7688
    %v8001 = vpack.c.b16 %v7693, %v7689
    %v8002 = vpack.c.b16 %v7698, %v7694
    %v8003 = vpack.c.b16 %v7699, %v7695
    %v8004 = vpack.c.b16 %v7700, %v7696
    %v8005 = vpack.c.b16 %v7701, %v7697
    %v8006 = vpack.c.b16 %v7706, %v7702
    %v8007 = vpack.c.b16 %v7707, %v7703
    %v8008 = vpack.c.b16 %v7708, %v7704
    %v8009 = vpack.c.b16 %v7709, %v7705
    %v8010 = vpack.c.b16 %v7714, %v7710
    %v8011 = vpack.c.b16 %v7715, %v7711
    %v8012 = vpack.c.b16 %v7716, %v7712
    %v8013 = vpack.c.b16 %v7717, %v7713
    %v8014 = vpack.c.b16 %v7722, %v7718
    %v8015 = vpack.c.b16 %v7723, %v7719
    %v8016 = vpack.c.b16 %v7724, %v7720
    %v8017 = vpack.c.b16 %v7725, %v7721
    %v8018 = vpack.c.b16 %v7730, %v7726
    %v8019 = vpack.c.b16 %v7731, %v7727
    %v8020 = vpack.c.b16 %v7732, %v7728
    %v8021 = vpack.c.b16 %v7733, %v7729
    %v8022 = vpack.c.b16 %v7738, %v7734
    %v8023 = vpack.c.b16 %v7739, %v7735
    %v8024 = vpack.c.b16 %v7740, %v7736
    %v8025 = vpack.c.b16 %v7741, %v7737
    %v8026 = vpack.c.b16 %v7746, %v7742
    %v8027 = vpack.c.b16 %v7747, %v7743
    %v8028 = vpack.c.b16 %v7748, %v7744
    %v8029 = vpack.c.b16 %v7749, %v7745
    %v8030 = vpack.c.b16 %v7754, %v7750
    %v8031 = vpack.c.b16 %v7755, %v7751
    %v8032 = vpack.c.b16 %v7756, %v7752
    %v8033 = vpack.c.b16 %v7757, %v7753
    %v8034 = vpack.c.b16 %v7762, %v7758
    %v8035 = vpack.c.b16 %v7763, %v7759
    %v8036 = vpack.c.b16 %v7764, %v7760
    %v8037 = vpack.c.b16 %v7765, %v7761
    %v8038 = vpack.c.b16 %v7770, %v7766
    %v8039 = vpack.c.b16 %v7771, %v7767
    %v8040 = vpack.c.b16 %v7772, %v7768
    %v8041 = vpack.c.b16 %v7773, %v7769
    %v8042 = vpack.c.b16 %v7778, %v7774
    %v8043 = vpack.c.b16 %v7779, %v7775
    %v8044 = vpack.c.b16 %v7780, %v7776
    %v8045 = vpack.c.b16 %v7781, %v7777
    %v8046 = vpack.c.b16 %v7786, %v7782
    %v8047 = vpack.c.b16 %v7787, %v7783
    %v8048 = vpack.c.b16 %v7788, %v7784
    %v8049 = vpack.c.b16 %v7789, %v7785
    %v8050 = vpack.c.b16 %v7794, %v7790
    %v8051 = vpack.c.b16 %v7795, %v7791
    %v8052 = vpack.c.b16 %v7796, %v7792
    %v8053 = vpack.c.b16 %v7797, %v7793
    %8310 = vmatpush.bf16.msra.mxu0 %v7826
    %8311 = vmatpush.bf16.msra.mxu0 %v7822
    %8312 = vmatpush.bf16.msra.mxu0 %v7818
    %8313 = vmatpush.bf16.msra.mxu0 %v7814
    %8314 = vmatpush.bf16.msra.mxu0 %v7810
    %8315 = vmatpush.bf16.msra.mxu0 %v7806
    %8316 = vmatpush.bf16.msra.mxu0 %v7802
    %8317 = vmatpush.bf16.msra.mxu0 %v7798
    %8318 = vmatmul.bf16.gmra.mxu0 %v7012
    %v8319 = vpop.f32.mrf.mxu0
    %v8320 = vadd.f32 %v7022, %v8319
    %v8321 = vpop.f32.mrf.mxu0
    %8322 = vdwg.mxu0
    %8323 = vmatpush.bf16.msra.mxu0 %v7858
    %8324 = vmatpush.bf16.msra.mxu0 %v7854
    %8325 = vmatpush.bf16.msra.mxu0 %v7850
    %8326 = vmatpush.bf16.msra.mxu0 %v7846
    %8327 = vmatpush.bf16.msra.mxu0 %v7842
    %8328 = vmatpush.bf16.msra.mxu0 %v7838
    %8329 = vmatpush.bf16.msra.mxu0 %v7834
    %8330 = vmatpush.bf16.msra.mxu0 %v7830
    %8331 = vmatmul.bf16.gmra.mxu0 %v7013
    %v8332 = vpop.f32.mrf.mxu0
    %v8333 = vadd.f32 %v8320, %v8332
    %v8334 = vpop.f32.mrf.mxu0
    %8335 = vdwg.mxu0
    %8336 = vmatpush.bf16.msra.mxu0 %v7890
    %8337 = vmatpush.bf16.msra.mxu0 %v7886
    %8338 = vmatpush.bf16.msra.mxu0 %v7882
    %8339 = vmatpush.bf16.msra.mxu0 %v7878
    %8340 = vmatpush.bf16.msra.mxu0 %v7874
    %8341 = vmatpush.bf16.msra.mxu0 %v7870
    %8342 = vmatpush.bf16.msra.mxu0 %v7866
    %8343 = vmatpush.bf16.msra.mxu0 %v7862
    %8344 = vmatmul.bf16.gmra.mxu0 %v7014
    %v8345 = vpop.f32.mrf.mxu0
    %v8346 = vadd.f32 %v8333, %v8345
    %v8347 = vpop.f32.mrf.mxu0
    %8348 = vdwg.mxu0
    %8349 = vmatpush.bf16.msra.mxu0 %v7922
    %8350 = vmatpush.bf16.msra.mxu0 %v7918
    %8351 = vmatpush.bf16.msra.mxu0 %v7914
    %8352 = vmatpush.bf16.msra.mxu0 %v7910
    %8353 = vmatpush.bf16.msra.mxu0 %v7906
    %8354 = vmatpush.bf16.msra.mxu0 %v7902
    %8355 = vmatpush.bf16.msra.mxu0 %v7898
    %8356 = vmatpush.bf16.msra.mxu0 %v7894
    %8357 = vmatmul.bf16.gmra.mxu0 %v7015
    %v8358 = vpop.f32.mrf.mxu0
    %v8359 = vadd.f32 %v8346, %v8358
    %v8360 = vpop.f32.mrf.mxu0
    %8361 = vdwg.mxu0
    %8362 = vmatpush.bf16.msra.mxu0 %v7954
    %8363 = vmatpush.bf16.msra.mxu0 %v7950
    %8364 = vmatpush.bf16.msra.mxu0 %v7946
    %8365 = vmatpush.bf16.msra.mxu0 %v7942
    %8366 = vmatpush.bf16.msra.mxu0 %v7938
    %8367 = vmatpush.bf16.msra.mxu0 %v7934
    %8368 = vmatpush.bf16.msra.mxu0 %v7930
    %8369 = vmatpush.bf16.msra.mxu0 %v7926
    %8370 = vmatmul.bf16.gmra.mxu0 %v7016
    %v8371 = vpop.f32.mrf.mxu0
    %v8372 = vadd.f32 %v8359, %v8371
    %v8373 = vpop.f32.mrf.mxu0
    %8374 = vdwg.mxu0
    %8375 = vmatpush.bf16.msra.mxu0 %v7986
    %8376 = vmatpush.bf16.msra.mxu0 %v7982
    %8377 = vmatpush.bf16.msra.mxu0 %v7978
    %8378 = vmatpush.bf16.msra.mxu0 %v7974
    %8379 = vmatpush.bf16.msra.mxu0 %v7970
    %8380 = vmatpush.bf16.msra.mxu0 %v7966
    %8381 = vmatpush.bf16.msra.mxu0 %v7962
    %8382 = vmatpush.bf16.msra.mxu0 %v7958
    %8383 = vmatmul.bf16.gmra.mxu0 %v7017
    %v8384 = vpop.f32.mrf.mxu0
    %v8385 = vadd.f32 %v8372, %v8384
    %v8386 = vpop.f32.mrf.mxu0
    %8387 = vdwg.mxu0
    %8388 = vmatpush.bf16.msra.mxu0 %v8018
    %8389 = vmatpush.bf16.msra.mxu0 %v8014
    %8390 = vmatpush.bf16.msra.mxu0 %v8010
    %8391 = vmatpush.bf16.msra.mxu0 %v8006
    %8392 = vmatpush.bf16.msra.mxu0 %v8002
    %8393 = vmatpush.bf16.msra.mxu0 %v7998
    %8394 = vmatpush.bf16.msra.mxu0 %v7994
    %8395 = vmatpush.bf16.msra.mxu0 %v7990
    %8396 = vmatmul.bf16.gmra.mxu0 %v7018
    %v8397 = vpop.f32.mrf.mxu0
    %v8398 = vadd.f32 %v8385, %v8397
    %v8399 = vpop.f32.mrf.mxu0
    %8400 = vdwg.mxu0
    %8401 = vmatpush.bf16.msra.mxu0 %v8050
    %8402 = vmatpush.bf16.msra.mxu0 %v8046
    %8403 = vmatpush.bf16.msra.mxu0 %v8042
    %8404 = vmatpush.bf16.msra.mxu0 %v8038
    %8405 = vmatpush.bf16.msra.mxu0 %v8034
    %8406 = vmatpush.bf16.msra.mxu0 %v8030
    %8407 = vmatpush.bf16.msra.mxu0 %v8026
    %8408 = vmatpush.bf16.msra.mxu0 %v8022
    %8409 = vmatmul.bf16.gmra.mxu0 %v7019
    %v8410 = vpop.f32.mrf.mxu0
    %v8411 = vadd.f32 %v8398, %v8410
    %v8412 = vpop.f32.mrf.mxu0
    %8413 = vdwg.mxu0
    %8414 = vmatpush.bf16.msra.mxu0 %v7827
    %8415 = vmatpush.bf16.msra.mxu0 %v7823
    %8416 = vmatpush.bf16.msra.mxu0 %v7819
    %8417 = vmatpush.bf16.msra.mxu0 %v7815
    %8418 = vmatpush.bf16.msra.mxu0 %v7811
    %8419 = vmatpush.bf16.msra.mxu0 %v7807
    %8420 = vmatpush.bf16.msra.mxu0 %v7803
    %8421 = vmatpush.bf16.msra.mxu0 %v7799
    %8422 = vmatmul.bf16.gmra.mxu0 %v7012
    %v8423 = vpop.f32.mrf.mxu0
    %v8424 = vadd.f32 %v7023, %v8423
    %v8425 = vpop.f32.mrf.mxu0
    %8426 = vdwg.mxu0
    %8427 = vmatpush.bf16.msra.mxu0 %v7859
    %8428 = vmatpush.bf16.msra.mxu0 %v7855
    %8429 = vmatpush.bf16.msra.mxu0 %v7851
    %8430 = vmatpush.bf16.msra.mxu0 %v7847
    %8431 = vmatpush.bf16.msra.mxu0 %v7843
    %8432 = vmatpush.bf16.msra.mxu0 %v7839
    %8433 = vmatpush.bf16.msra.mxu0 %v7835
    %8434 = vmatpush.bf16.msra.mxu0 %v7831
    %8435 = vmatmul.bf16.gmra.mxu0 %v7013
    %v8436 = vpop.f32.mrf.mxu0
    %v8437 = vadd.f32 %v8424, %v8436
    %v8438 = vpop.f32.mrf.mxu0
    %8439 = vdwg.mxu0
    %8440 = vmatpush.bf16.msra.mxu0 %v7891
    %8441 = vmatpush.bf16.msra.mxu0 %v7887
    %8442 = vmatpush.bf16.msra.mxu0 %v7883
    %8443 = vmatpush.bf16.msra.mxu0 %v7879
    %8444 = vmatpush.bf16.msra.mxu0 %v7875
    %8445 = vmatpush.bf16.msra.mxu0 %v7871
    %8446 = vmatpush.bf16.msra.mxu0 %v7867
    %8447 = vmatpush.bf16.msra.mxu0 %v7863
    %8448 = vmatmul.bf16.gmra.mxu0 %v7014
    %v8449 = vpop.f32.mrf.mxu0
    %v8450 = vadd.f32 %v8437, %v8449
    %v8451 = vpop.f32.mrf.mxu0
    %8452 = vdwg.mxu0
    %8453 = vmatpush.bf16.msra.mxu0 %v7923
    %8454 = vmatpush.bf16.msra.mxu0 %v7919
    %8455 = vmatpush.bf16.msra.mxu0 %v7915
    %8456 = vmatpush.bf16.msra.mxu0 %v7911
    %8457 = vmatpush.bf16.msra.mxu0 %v7907
    %8458 = vmatpush.bf16.msra.mxu0 %v7903
    %8459 = vmatpush.bf16.msra.mxu0 %v7899
    %8460 = vmatpush.bf16.msra.mxu0 %v7895
    %8461 = vmatmul.bf16.gmra.mxu0 %v7015
    %v8462 = vpop.f32.mrf.mxu0
    %v8463 = vadd.f32 %v8450, %v8462
    %v8464 = vpop.f32.mrf.mxu0
    %8465 = vdwg.mxu0
    %8466 = vmatpush.bf16.msra.mxu0 %v7955
    %8467 = vmatpush.bf16.msra.mxu0 %v7951
    %8468 = vmatpush.bf16.msra.mxu0 %v7947
    %8469 = vmatpush.bf16.msra.mxu0 %v7943
    %8470 = vmatpush.bf16.msra.mxu0 %v7939
    %8471 = vmatpush.bf16.msra.mxu0 %v7935
    %8472 = vmatpush.bf16.msra.mxu0 %v7931
    %8473 = vmatpush.bf16.msra.mxu0 %v7927
    %8474 = vmatmul.bf16.gmra.mxu0 %v7016
    %v8475 = vpop.f32.mrf.mxu0
    %v8476 = vadd.f32 %v8463, %v8475
    %v8477 = vpop.f32.mrf.mxu0
    %8478 = vdwg.mxu0
    %8479 = vmatpush.bf16.msra.mxu0 %v7987
    %8480 = vmatpush.bf16.msra.mxu0 %v7983
    %8481 = vmatpush.bf16.msra.mxu0 %v7979
    %8482 = vmatpush.bf16.msra.mxu0 %v7975
    %8483 = vmatpush.bf16.msra.mxu0 %v7971
    %8484 = vmatpush.bf16.msra.mxu0 %v7967
    %8485 = vmatpush.bf16.msra.mxu0 %v7963
    %8486 = vmatpush.bf16.msra.mxu0 %v7959
    %8487 = vmatmul.bf16.gmra.mxu0 %v7017
    %v8488 = vpop.f32.mrf.mxu0
    %v8489 = vadd.f32 %v8476, %v8488
    %v8490 = vpop.f32.mrf.mxu0
    %8491 = vdwg.mxu0
    %8492 = vmatpush.bf16.msra.mxu0 %v8019
    %8493 = vmatpush.bf16.msra.mxu0 %v8015
    %8494 = vmatpush.bf16.msra.mxu0 %v8011
    %8495 = vmatpush.bf16.msra.mxu0 %v8007
    %8496 = vmatpush.bf16.msra.mxu0 %v8003
    %8497 = vmatpush.bf16.msra.mxu0 %v7999
    %8498 = vmatpush.bf16.msra.mxu0 %v7995
    %8499 = vmatpush.bf16.msra.mxu0 %v7991
    %8500 = vmatmul.bf16.gmra.mxu0 %v7018
    %v8501 = vpop.f32.mrf.mxu0
    %v8502 = vadd.f32 %v8489, %v8501
    %v8503 = vpop.f32.mrf.mxu0
    %8504 = vdwg.mxu0
    %8505 = vmatpush.bf16.msra.mxu0 %v8051
    %8506 = vmatpush.bf16.msra.mxu0 %v8047
    %8507 = vmatpush.bf16.msra.mxu0 %v8043
    %8508 = vmatpush.bf16.msra.mxu0 %v8039
    %8509 = vmatpush.bf16.msra.mxu0 %v8035
    %8510 = vmatpush.bf16.msra.mxu0 %v8031
    %8511 = vmatpush.bf16.msra.mxu0 %v8027
    %8512 = vmatpush.bf16.msra.mxu0 %v8023
    %8513 = vmatmul.bf16.gmra.mxu0 %v7019
    %v8514 = vpop.f32.mrf.mxu0
    %v8515 = vadd.f32 %v8502, %v8514
    %v8516 = vpop.f32.mrf.mxu0
    %8517 = vdwg.mxu0
    %8518 = vmatpush.bf16.msra.mxu0 %v7828
    %8519 = vmatpush.bf16.msra.mxu0 %v7824
    %8520 = vmatpush.bf16.msra.mxu0 %v7820
    %8521 = vmatpush.bf16.msra.mxu0 %v7816
    %8522 = vmatpush.bf16.msra.mxu0 %v7812
    %8523 = vmatpush.bf16.msra.mxu0 %v7808
    %8524 = vmatpush.bf16.msra.mxu0 %v7804
    %8525 = vmatpush.bf16.msra.mxu0 %v7800
    %8526 = vmatmul.bf16.gmra.mxu0 %v7012
    %v8527 = vpop.f32.mrf.mxu0
    %v8528 = vadd.f32 %v7024, %v8527
    %v8529 = vpop.f32.mrf.mxu0
    %8530 = vdwg.mxu0
    %8531 = vmatpush.bf16.msra.mxu0 %v7860
    %8532 = vmatpush.bf16.msra.mxu0 %v7856
    %8533 = vmatpush.bf16.msra.mxu0 %v7852
    %8534 = vmatpush.bf16.msra.mxu0 %v7848
    %8535 = vmatpush.bf16.msra.mxu0 %v7844
    %8536 = vmatpush.bf16.msra.mxu0 %v7840
    %8537 = vmatpush.bf16.msra.mxu0 %v7836
    %8538 = vmatpush.bf16.msra.mxu0 %v7832
    %8539 = vmatmul.bf16.gmra.mxu0 %v7013
    %v8540 = vpop.f32.mrf.mxu0
    %v8541 = vadd.f32 %v8528, %v8540
    %v8542 = vpop.f32.mrf.mxu0
    %8543 = vdwg.mxu0
    %8544 = vmatpush.bf16.msra.mxu0 %v7892
    %8545 = vmatpush.bf16.msra.mxu0 %v7888
    %8546 = vmatpush.bf16.msra.mxu0 %v7884
    %8547 = vmatpush.bf16.msra.mxu0 %v7880
    %8548 = vmatpush.bf16.msra.mxu0 %v7876
    %8549 = vmatpush.bf16.msra.mxu0 %v7872
    %8550 = vmatpush.bf16.msra.mxu0 %v7868
    %8551 = vmatpush.bf16.msra.mxu0 %v7864
    %8552 = vmatmul.bf16.gmra.mxu0 %v7014
    %v8553 = vpop.f32.mrf.mxu0
    %v8554 = vadd.f32 %v8541, %v8553
    %v8555 = vpop.f32.mrf.mxu0
    %8556 = vdwg.mxu0
    %8557 = vmatpush.bf16.msra.mxu0 %v7924
    %8558 = vmatpush.bf16.msra.mxu0 %v7920
    %8559 = vmatpush.bf16.msra.mxu0 %v7916
    %8560 = vmatpush.bf16.msra.mxu0 %v7912
    %8561 = vmatpush.bf16.msra.mxu0 %v7908
    %8562 = vmatpush.bf16.msra.mxu0 %v7904
    %8563 = vmatpush.bf16.msra.mxu0 %v7900
    %8564 = vmatpush.bf16.msra.mxu0 %v7896
    %8565 = vmatmul.bf16.gmra.mxu0 %v7015
    %v8566 = vpop.f32.mrf.mxu0
    %v8567 = vadd.f32 %v8554, %v8566
    %v8568 = vpop.f32.mrf.mxu0
    %8569 = vdwg.mxu0
    %8570 = vmatpush.bf16.msra.mxu0 %v7956
    %8571 = vmatpush.bf16.msra.mxu0 %v7952
    %8572 = vmatpush.bf16.msra.mxu0 %v7948
    %8573 = vmatpush.bf16.msra.mxu0 %v7944
    %8574 = vmatpush.bf16.msra.mxu0 %v7940
    %8575 = vmatpush.bf16.msra.mxu0 %v7936
    %8576 = vmatpush.bf16.msra.mxu0 %v7932
    %8577 = vmatpush.bf16.msra.mxu0 %v7928
    %8578 = vmatmul.bf16.gmra.mxu0 %v7016
    %v8579 = vpop.f32.mrf.mxu0
    %v8580 = vadd.f32 %v8567, %v8579
    %v8581 = vpop.f32.mrf.mxu0
    %8582 = vdwg.mxu0
    %8583 = vmatpush.bf16.msra.mxu0 %v7988
    %8584 = vmatpush.bf16.msra.mxu0 %v7984
    %8585 = vmatpush.bf16.msra.mxu0 %v7980
    %8586 = vmatpush.bf16.msra.mxu0 %v7976
    %8587 = vmatpush.bf16.msra.mxu0 %v7972
    %8588 = vmatpush.bf16.msra.mxu0 %v7968
    %8589 = vmatpush.bf16.msra.mxu0 %v7964
    %8590 = vmatpush.bf16.msra.mxu0 %v7960
    %8591 = vmatmul.bf16.gmra.mxu0 %v7017
    %v8592 = vpop.f32.mrf.mxu0
    %v8593 = vadd.f32 %v8580, %v8592
    %v8594 = vpop.f32.mrf.mxu0
    %8595 = vdwg.mxu0
    %8596 = vmatpush.bf16.msra.mxu0 %v8020
    %8597 = vmatpush.bf16.msra.mxu0 %v8016
    %8598 = vmatpush.bf16.msra.mxu0 %v8012
    %8599 = vmatpush.bf16.msra.mxu0 %v8008
    %8600 = vmatpush.bf16.msra.mxu0 %v8004
    %8601 = vmatpush.bf16.msra.mxu0 %v8000
    %8602 = vmatpush.bf16.msra.mxu0 %v7996
    %8603 = vmatpush.bf16.msra.mxu0 %v7992
    %8604 = vmatmul.bf16.gmra.mxu0 %v7018
    %v8605 = vpop.f32.mrf.mxu0
    %v8606 = vadd.f32 %v8593, %v8605
    %v8607 = vpop.f32.mrf.mxu0
    %8608 = vdwg.mxu0
    %8609 = vmatpush.bf16.msra.mxu0 %v8052
    %8610 = vmatpush.bf16.msra.mxu0 %v8048
    %8611 = vmatpush.bf16.msra.mxu0 %v8044
    %8612 = vmatpush.bf16.msra.mxu0 %v8040
    %8613 = vmatpush.bf16.msra.mxu0 %v8036
    %8614 = vmatpush.bf16.msra.mxu0 %v8032
    %8615 = vmatpush.bf16.msra.mxu0 %v8028
    %8616 = vmatpush.bf16.msra.mxu0 %v8024
    %8617 = vmatmul.bf16.gmra.mxu0 %v7019
    %v8618 = vpop.f32.mrf.mxu0
    %v8619 = vadd.f32 %v8606, %v8618
    %v8620 = vpop.f32.mrf.mxu0
    %8621 = vdwg.mxu0
    %8622 = vmatpush.bf16.msra.mxu0 %v7829
    %8623 = vmatpush.bf16.msra.mxu0 %v7825
    %8624 = vmatpush.bf16.msra.mxu0 %v7821
    %8625 = vmatpush.bf16.msra.mxu0 %v7817
    %8626 = vmatpush.bf16.msra.mxu0 %v7813
    %8627 = vmatpush.bf16.msra.mxu0 %v7809
    %8628 = vmatpush.bf16.msra.mxu0 %v7805
    %8629 = vmatpush.bf16.msra.mxu0 %v7801
    %8630 = vmatmul.bf16.gmra.mxu0 %v7012
    %v8631 = vpop.f32.mrf.mxu0
    %v8632 = vadd.f32 %v7025, %v8631
    %v8633 = vpop.f32.mrf.mxu0
    %8634 = vdwg.mxu0
    %8635 = vmatpush.bf16.msra.mxu0 %v7861
    %8636 = vmatpush.bf16.msra.mxu0 %v7857
    %8637 = vmatpush.bf16.msra.mxu0 %v7853
    %8638 = vmatpush.bf16.msra.mxu0 %v7849
    %8639 = vmatpush.bf16.msra.mxu0 %v7845
    %8640 = vmatpush.bf16.msra.mxu0 %v7841
    %8641 = vmatpush.bf16.msra.mxu0 %v7837
    %8642 = vmatpush.bf16.msra.mxu0 %v7833
    %8643 = vmatmul.bf16.gmra.mxu0 %v7013
    %v8644 = vpop.f32.mrf.mxu0
    %v8645 = vadd.f32 %v8632, %v8644
    %v8646 = vpop.f32.mrf.mxu0
    %8647 = vdwg.mxu0
    %8648 = vmatpush.bf16.msra.mxu0 %v7893
    %8649 = vmatpush.bf16.msra.mxu0 %v7889
    %8650 = vmatpush.bf16.msra.mxu0 %v7885
    %8651 = vmatpush.bf16.msra.mxu0 %v7881
    %8652 = vmatpush.bf16.msra.mxu0 %v7877
    %8653 = vmatpush.bf16.msra.mxu0 %v7873
    %8654 = vmatpush.bf16.msra.mxu0 %v7869
    %8655 = vmatpush.bf16.msra.mxu0 %v7865
    %8656 = vmatmul.bf16.gmra.mxu0 %v7014
    %v8657 = vpop.f32.mrf.mxu0
    %v8658 = vadd.f32 %v8645, %v8657
    %v8659 = vpop.f32.mrf.mxu0
    %8660 = vdwg.mxu0
    %8661 = vmatpush.bf16.msra.mxu0 %v7925
    %8662 = vmatpush.bf16.msra.mxu0 %v7921
    %8663 = vmatpush.bf16.msra.mxu0 %v7917
    %8664 = vmatpush.bf16.msra.mxu0 %v7913
    %8665 = vmatpush.bf16.msra.mxu0 %v7909
    %8666 = vmatpush.bf16.msra.mxu0 %v7905
    %8667 = vmatpush.bf16.msra.mxu0 %v7901
    %8668 = vmatpush.bf16.msra.mxu0 %v7897
    %8669 = vmatmul.bf16.gmra.mxu0 %v7015
    %v8670 = vpop.f32.mrf.mxu0
    %v8671 = vadd.f32 %v8658, %v8670
    %v8672 = vpop.f32.mrf.mxu0
    %8673 = vdwg.mxu0
    %8674 = vmatpush.bf16.msra.mxu0 %v7957
    %8675 = vmatpush.bf16.msra.mxu0 %v7953
    %8676 = vmatpush.bf16.msra.mxu0 %v7949
    %8677 = vmatpush.bf16.msra.mxu0 %v7945
    %8678 = vmatpush.bf16.msra.mxu0 %v7941
    %8679 = vmatpush.bf16.msra.mxu0 %v7937
    %8680 = vmatpush.bf16.msra.mxu0 %v7933
    %8681 = vmatpush.bf16.msra.mxu0 %v7929
    %8682 = vmatmul.bf16.gmra.mxu0 %v7016
    %v8683 = vpop.f32.mrf.mxu0
    %v8684 = vadd.f32 %v8671, %v8683
    %v8685 = vpop.f32.mrf.mxu0
    %8686 = vdwg.mxu0
    %8687 = vmatpush.bf16.msra.mxu0 %v7989
    %8688 = vmatpush.bf16.msra.mxu0 %v7985
    %8689 = vmatpush.bf16.msra.mxu0 %v7981
    %8690 = vmatpush.bf16.msra.mxu0 %v7977
    %8691 = vmatpush.bf16.msra.mxu0 %v7973
    %8692 = vmatpush.bf16.msra.mxu0 %v7969
    %8693 = vmatpush.bf16.msra.mxu0 %v7965
    %8694 = vmatpush.bf16.msra.mxu0 %v7961
    %8695 = vmatmul.bf16.gmra.mxu0 %v7017
    %v8696 = vpop.f32.mrf.mxu0
    %v8697 = vadd.f32 %v8684, %v8696
    %v8698 = vpop.f32.mrf.mxu0
    %8699 = vdwg.mxu0
    %8700 = vmatpush.bf16.msra.mxu0 %v8021
    %8701 = vmatpush.bf16.msra.mxu0 %v8017
    %8702 = vmatpush.bf16.msra.mxu0 %v8013
    %8703 = vmatpush.bf16.msra.mxu0 %v8009
    %8704 = vmatpush.bf16.msra.mxu0 %v8005
    %8705 = vmatpush.bf16.msra.mxu0 %v8001
    %8706 = vmatpush.bf16.msra.mxu0 %v7997
    %8707 = vmatpush.bf16.msra.mxu0 %v7993
    %8708 = vmatmul.bf16.gmra.mxu0 %v7018
    %v8709 = vpop.f32.mrf.mxu0
    %v8710 = vadd.f32 %v8697, %v8709
    %v8711 = vpop.f32.mrf.mxu0
    %8712 = vdwg.mxu0
    %8713 = vmatpush.bf16.msra.mxu0 %v8053
    %8714 = vmatpush.bf16.msra.mxu0 %v8049
    %8715 = vmatpush.bf16.msra.mxu0 %v8045
    %8716 = vmatpush.bf16.msra.mxu0 %v8041
    %8717 = vmatpush.bf16.msra.mxu0 %v8037
    %8718 = vmatpush.bf16.msra.mxu0 %v8033
    %8719 = vmatpush.bf16.msra.mxu0 %v8029
    %8720 = vmatpush.bf16.msra.mxu0 %v8025
    %8721 = vmatmul.bf16.gmra.mxu0 %v7019
    %v8722 = vpop.f32.mrf.mxu0
    %v8723 = vadd.f32 %v8710, %v8722
    %v8724 = vpop.f32.mrf.mxu0
    %8725 = vdwg.mxu0
    %v8726 = vmax.f32 %v8411, 0.0
    %v8727 = vmax.f32 %v8515, 0.0
    %v8728 = vmax.f32 %v8619, 0.0
    %v8729 = vmax.f32 %v8723, 0.0
    %v8730 = vld [vmem:[#allocation20] sm:$0xff]
    %v8731 = vld [vmem:[#allocation20 + $0x8] sm:$0xff]
    %v8732 = vld [vmem:[#allocation20 + $0x10] sm:$0xff]
    %v8733 = vld [vmem:[#allocation20 + $0x18] sm:$0xff]
    %v8734 = vld [vmem:[#allocation20 + $0x20] sm:$0xff]
    %v8735 = vld [vmem:[#allocation20 + $0x28] sm:$0xff]
    %v8736 = vld [vmem:[#allocation20 + $0x30] sm:$0xff]
    %v8737 = vld [vmem:[#allocation20 + $0x38] sm:$0xff]
    %v8738 = vld [vmem:[#allocation20 + $0x40] sm:$0xff]
    %v8739 = vld [vmem:[#allocation20 + $0x48] sm:$0xff]
    %v8740 = vld [vmem:[#allocation20 + $0x50] sm:$0xff]
    %v8741 = vld [vmem:[#allocation20 + $0x58] sm:$0xff]
    %v8742 = vld [vmem:[#allocation20 + $0x60] sm:$0xff]
    %v8743 = vld [vmem:[#allocation20 + $0x68] sm:$0xff]
    %v8744 = vld [vmem:[#allocation20 + $0x70] sm:$0xff]
    %v8745 = vld [vmem:[#allocation20 + $0x78] sm:$0xff]
    %v8746 = vld [vmem:[#allocation20 + $0x80] sm:$0xff]
    %v8747 = vld [vmem:[#allocation20 + $0x88] sm:$0xff]
    %v8748 = vld [vmem:[#allocation20 + $0x90] sm:$0xff]
    %v8749 = vld [vmem:[#allocation20 + $0x98] sm:$0xff]
    %v8750 = vld [vmem:[#allocation20 + $0xa0] sm:$0xff]
    %v8751 = vld [vmem:[#allocation20 + $0xa8] sm:$0xff]
    %v8752 = vld [vmem:[#allocation20 + $0xb0] sm:$0xff]
    %v8753 = vld [vmem:[#allocation20 + $0xb8] sm:$0xff]
    %v8754 = vld [vmem:[#allocation20 + $0xc0] sm:$0xff]
    %v8755 = vld [vmem:[#allocation20 + $0xc8] sm:$0xff]
    %v8756 = vld [vmem:[#allocation20 + $0xd0] sm:$0xff]
    %v8757 = vld [vmem:[#allocation20 + $0xd8] sm:$0xff]
    %v8758 = vld [vmem:[#allocation20 + $0xe0] sm:$0xff]
    %v8759 = vld [vmem:[#allocation20 + $0xe8] sm:$0xff]
    %v8760 = vld [vmem:[#allocation20 + $0xf0] sm:$0xff]
    %v8761 = vld [vmem:[#allocation20 + $0xf8] sm:$0xff]
    %v8762 = vld [vmem:[#allocation20 + $0x100] sm:$0xff]
    %v8763 = vld [vmem:[#allocation20 + $0x108] sm:$0xff]
    %v8764 = vld [vmem:[#allocation20 + $0x110] sm:$0xff]
    %v8765 = vld [vmem:[#allocation20 + $0x118] sm:$0xff]
    %v8766 = vld [vmem:[#allocation20 + $0x120] sm:$0xff]
    %v8767 = vld [vmem:[#allocation20 + $0x128] sm:$0xff]
    %v8768 = vld [vmem:[#allocation20 + $0x130] sm:$0xff]
    %v8769 = vld [vmem:[#allocation20 + $0x138] sm:$0xff]
    %v8770 = vld [vmem:[#allocation20 + $0x140] sm:$0xff]
    %v8771 = vld [vmem:[#allocation20 + $0x148] sm:$0xff]
    %v8772 = vld [vmem:[#allocation20 + $0x150] sm:$0xff]
    %v8773 = vld [vmem:[#allocation20 + $0x158] sm:$0xff]
    %v8774 = vld [vmem:[#allocation20 + $0x160] sm:$0xff]
    %v8775 = vld [vmem:[#allocation20 + $0x168] sm:$0xff]
    %v8776 = vld [vmem:[#allocation20 + $0x170] sm:$0xff]
    %v8777 = vld [vmem:[#allocation20 + $0x178] sm:$0xff]
    %v8778 = vld [vmem:[#allocation20 + $0x180] sm:$0xff]
    %v8779 = vld [vmem:[#allocation20 + $0x188] sm:$0xff]
    %v8780 = vld [vmem:[#allocation20 + $0x190] sm:$0xff]
    %v8781 = vld [vmem:[#allocation20 + $0x198] sm:$0xff]
    %v8782 = vld [vmem:[#allocation20 + $0x1a0] sm:$0xff]
    %v8783 = vld [vmem:[#allocation20 + $0x1a8] sm:$0xff]
    %v8784 = vld [vmem:[#allocation20 + $0x1b0] sm:$0xff]
    %v8785 = vld [vmem:[#allocation20 + $0x1b8] sm:$0xff]
    %v8786 = vld [vmem:[#allocation20 + $0x1c0] sm:$0xff]
    %v8787 = vld [vmem:[#allocation20 + $0x1c8] sm:$0xff]
    %v8788 = vld [vmem:[#allocation20 + $0x1d0] sm:$0xff]
    %v8789 = vld [vmem:[#allocation20 + $0x1d8] sm:$0xff]
    %v8790 = vld [vmem:[#allocation20 + $0x1e0] sm:$0xff]
    %v8791 = vld [vmem:[#allocation20 + $0x1e8] sm:$0xff]
    %v8792 = vld [vmem:[#allocation20 + $0x1f0] sm:$0xff]
    %v8793 = vld [vmem:[#allocation20 + $0x1f8] sm:$0xff]
    %v8794 = vpack.c.bf16 %v8726, %v8726
    %v8795 = vpack.c.bf16 %v8727, %v8727
    %v8796 = vpack.c.bf16 %v8728, %v8728
    %v8797 = vpack.c.bf16 %v8729, %v8729
    %v8798 = vld [vmem:[#allocation22] sm:$0x3]
    %v8800 = vperm.slane %v8798, 0
    %v8801 = vperm.slane %v8798, 1
    %v8868 = vunpack.c.l.b16 %v8730
    %v8869 = vunpack.c.h.b16 %v8730
    %v8870 = vunpack.c.l.b16 %v8731
    %v8871 = vunpack.c.h.b16 %v8731
    %v8872 = vunpack.c.l.b16 %v8732
    %v8873 = vunpack.c.h.b16 %v8732
    %v8874 = vunpack.c.l.b16 %v8733
    %v8875 = vunpack.c.h.b16 %v8733
    %v8876 = vunpack.c.l.b16 %v8734
    %v8877 = vunpack.c.h.b16 %v8734
    %v8878 = vunpack.c.l.b16 %v8735
    %v8879 = vunpack.c.h.b16 %v8735
    %v8880 = vunpack.c.l.b16 %v8736
    %v8881 = vunpack.c.h.b16 %v8736
    %v8882 = vunpack.c.l.b16 %v8737
    %v8883 = vunpack.c.h.b16 %v8737
    %v8884 = vunpack.c.l.b16 %v8738
    %v8885 = vunpack.c.h.b16 %v8738
    %v8886 = vunpack.c.l.b16 %v8739
    %v8887 = vunpack.c.h.b16 %v8739
    %v8888 = vunpack.c.l.b16 %v8740
    %v8889 = vunpack.c.h.b16 %v8740
    %v8890 = vunpack.c.l.b16 %v8741
    %v8891 = vunpack.c.h.b16 %v8741
    %v8892 = vunpack.c.l.b16 %v8742
    %v8893 = vunpack.c.h.b16 %v8742
    %v8894 = vunpack.c.l.b16 %v8743
    %v8895 = vunpack.c.h.b16 %v8743
    %v8896 = vunpack.c.l.b16 %v8744
    %v8897 = vunpack.c.h.b16 %v8744
    %v8898 = vunpack.c.l.b16 %v8745
    %v8899 = vunpack.c.h.b16 %v8745
    %v8900 = vunpack.c.l.b16 %v8746
    %v8901 = vunpack.c.h.b16 %v8746
    %v8902 = vunpack.c.l.b16 %v8747
    %v8903 = vunpack.c.h.b16 %v8747
    %v8904 = vunpack.c.l.b16 %v8748
    %v8905 = vunpack.c.h.b16 %v8748
    %v8906 = vunpack.c.l.b16 %v8749
    %v8907 = vunpack.c.h.b16 %v8749
    %v8908 = vunpack.c.l.b16 %v8750
    %v8909 = vunpack.c.h.b16 %v8750
    %v8910 = vunpack.c.l.b16 %v8751
    %v8911 = vunpack.c.h.b16 %v8751
    %v8912 = vunpack.c.l.b16 %v8752
    %v8913 = vunpack.c.h.b16 %v8752
    %v8914 = vunpack.c.l.b16 %v8753
    %v8915 = vunpack.c.h.b16 %v8753
    %v8916 = vunpack.c.l.b16 %v8754
    %v8917 = vunpack.c.h.b16 %v8754
    %v8918 = vunpack.c.l.b16 %v8755
    %v8919 = vunpack.c.h.b16 %v8755
    %v8920 = vunpack.c.l.b16 %v8756
    %v8921 = vunpack.c.h.b16 %v8756
    %v8922 = vunpack.c.l.b16 %v8757
    %v8923 = vunpack.c.h.b16 %v8757
    %v8924 = vunpack.c.l.b16 %v8758
    %v8925 = vunpack.c.h.b16 %v8758
    %v8926 = vunpack.c.l.b16 %v8759
    %v8927 = vunpack.c.h.b16 %v8759
    %v8928 = vunpack.c.l.b16 %v8760
    %v8929 = vunpack.c.h.b16 %v8760
    %v8930 = vunpack.c.l.b16 %v8761
    %v8931 = vunpack.c.h.b16 %v8761
    %v8932 = vunpack.c.l.b16 %v8762
    %v8933 = vunpack.c.h.b16 %v8762
    %v8934 = vunpack.c.l.b16 %v8763
    %v8935 = vunpack.c.h.b16 %v8763
    %v8936 = vunpack.c.l.b16 %v8764
    %v8937 = vunpack.c.h.b16 %v8764
    %v8938 = vunpack.c.l.b16 %v8765
    %v8939 = vunpack.c.h.b16 %v8765
    %v8940 = vunpack.c.l.b16 %v8766
    %v8941 = vunpack.c.h.b16 %v8766
    %v8942 = vunpack.c.l.b16 %v8767
    %v8943 = vunpack.c.h.b16 %v8767
    %v8944 = vunpack.c.l.b16 %v8768
    %v8945 = vunpack.c.h.b16 %v8768
    %v8946 = vunpack.c.l.b16 %v8769
    %v8947 = vunpack.c.h.b16 %v8769
    %v8948 = vunpack.c.l.b16 %v8770
    %v8949 = vunpack.c.h.b16 %v8770
    %v8950 = vunpack.c.l.b16 %v8771
    %v8951 = vunpack.c.h.b16 %v8771
    %v8952 = vunpack.c.l.b16 %v8772
    %v8953 = vunpack.c.h.b16 %v8772
    %v8954 = vunpack.c.l.b16 %v8773
    %v8955 = vunpack.c.h.b16 %v8773
    %v8956 = vunpack.c.l.b16 %v8774
    %v8957 = vunpack.c.h.b16 %v8774
    %v8958 = vunpack.c.l.b16 %v8775
    %v8959 = vunpack.c.h.b16 %v8775
    %v8960 = vunpack.c.l.b16 %v8776
    %v8961 = vunpack.c.h.b16 %v8776
    %v8962 = vunpack.c.l.b16 %v8777
    %v8963 = vunpack.c.h.b16 %v8777
    %v8964 = vunpack.c.l.b16 %v8778
    %v8965 = vunpack.c.h.b16 %v8778
    %v8966 = vunpack.c.l.b16 %v8779
    %v8967 = vunpack.c.h.b16 %v8779
    %v8968 = vunpack.c.l.b16 %v8780
    %v8969 = vunpack.c.h.b16 %v8780
    %v8970 = vunpack.c.l.b16 %v8781
    %v8971 = vunpack.c.h.b16 %v8781
    %v8972 = vunpack.c.l.b16 %v8782
    %v8973 = vunpack.c.h.b16 %v8782
    %v8974 = vunpack.c.l.b16 %v8783
    %v8975 = vunpack.c.h.b16 %v8783
    %v8976 = vunpack.c.l.b16 %v8784
    %v8977 = vunpack.c.h.b16 %v8784
    %v8978 = vunpack.c.l.b16 %v8785
    %v8979 = vunpack.c.h.b16 %v8785
    %v8980 = vunpack.c.l.b16 %v8786
    %v8981 = vunpack.c.h.b16 %v8786
    %v8982 = vunpack.c.l.b16 %v8787
    %v8983 = vunpack.c.h.b16 %v8787
    %v8984 = vunpack.c.l.b16 %v8788
    %v8985 = vunpack.c.h.b16 %v8788
    %v8986 = vunpack.c.l.b16 %v8789
    %v8987 = vunpack.c.h.b16 %v8789
    %v8988 = vunpack.c.l.b16 %v8790
    %v8989 = vunpack.c.h.b16 %v8790
    %v8990 = vunpack.c.l.b16 %v8791
    %v8991 = vunpack.c.h.b16 %v8791
    %v8992 = vunpack.c.l.b16 %v8792
    %v8993 = vunpack.c.h.b16 %v8792
    %v8994 = vunpack.c.l.b16 %v8793
    %v8995 = vunpack.c.h.b16 %v8793
    %v8996 = vpack.c.b16 %v8870, %v8868
    %v8997 = vpack.c.b16 %v8871, %v8869
    %v8998 = vpack.c.b16 %v8874, %v8872
    %v8999 = vpack.c.b16 %v8875, %v8873
    %v9000 = vpack.c.b16 %v8878, %v8876
    %v9001 = vpack.c.b16 %v8879, %v8877
    %v9002 = vpack.c.b16 %v8882, %v8880
    %v9003 = vpack.c.b16 %v8883, %v8881
    %v9004 = vpack.c.b16 %v8886, %v8884
    %v9005 = vpack.c.b16 %v8887, %v8885
    %v9006 = vpack.c.b16 %v8890, %v8888
    %v9007 = vpack.c.b16 %v8891, %v8889
    %v9008 = vpack.c.b16 %v8894, %v8892
    %v9009 = vpack.c.b16 %v8895, %v8893
    %v9010 = vpack.c.b16 %v8898, %v8896
    %v9011 = vpack.c.b16 %v8899, %v8897
    %v9012 = vpack.c.b16 %v8902, %v8900
    %v9013 = vpack.c.b16 %v8903, %v8901
    %v9014 = vpack.c.b16 %v8906, %v8904
    %v9015 = vpack.c.b16 %v8907, %v8905
    %v9016 = vpack.c.b16 %v8910, %v8908
    %v9017 = vpack.c.b16 %v8911, %v8909
    %v9018 = vpack.c.b16 %v8914, %v8912
    %v9019 = vpack.c.b16 %v8915, %v8913
    %v9020 = vpack.c.b16 %v8918, %v8916
    %v9021 = vpack.c.b16 %v8919, %v8917
    %v9022 = vpack.c.b16 %v8922, %v8920
    %v9023 = vpack.c.b16 %v8923, %v8921
    %v9024 = vpack.c.b16 %v8926, %v8924
    %v9025 = vpack.c.b16 %v8927, %v8925
    %v9026 = vpack.c.b16 %v8930, %v8928
    %v9027 = vpack.c.b16 %v8931, %v8929
    %v9028 = vpack.c.b16 %v8934, %v8932
    %v9029 = vpack.c.b16 %v8935, %v8933
    %v9030 = vpack.c.b16 %v8938, %v8936
    %v9031 = vpack.c.b16 %v8939, %v8937
    %v9032 = vpack.c.b16 %v8942, %v8940
    %v9033 = vpack.c.b16 %v8943, %v8941
    %v9034 = vpack.c.b16 %v8946, %v8944
    %v9035 = vpack.c.b16 %v8947, %v8945
    %v9036 = vpack.c.b16 %v8950, %v8948
    %v9037 = vpack.c.b16 %v8951, %v8949
    %v9038 = vpack.c.b16 %v8954, %v8952
    %v9039 = vpack.c.b16 %v8955, %v8953
    %v9040 = vpack.c.b16 %v8958, %v8956
    %v9041 = vpack.c.b16 %v8959, %v8957
    %v9042 = vpack.c.b16 %v8962, %v8960
    %v9043 = vpack.c.b16 %v8963, %v8961
    %v9044 = vpack.c.b16 %v8966, %v8964
    %v9045 = vpack.c.b16 %v8967, %v8965
    %v9046 = vpack.c.b16 %v8970, %v8968
    %v9047 = vpack.c.b16 %v8971, %v8969
    %v9048 = vpack.c.b16 %v8974, %v8972
    %v9049 = vpack.c.b16 %v8975, %v8973
    %v9050 = vpack.c.b16 %v8978, %v8976
    %v9051 = vpack.c.b16 %v8979, %v8977
    %v9052 = vpack.c.b16 %v8982, %v8980
    %v9053 = vpack.c.b16 %v8983, %v8981
    %v9054 = vpack.c.b16 %v8986, %v8984
    %v9055 = vpack.c.b16 %v8987, %v8985
    %v9056 = vpack.c.b16 %v8990, %v8988
    %v9057 = vpack.c.b16 %v8991, %v8989
    %v9058 = vpack.c.b16 %v8994, %v8992
    %v9059 = vpack.c.b16 %v8995, %v8993
    %9124 = vmatpush.bf16.msra.mxu0 %v9010
    %9125 = vmatpush.bf16.msra.mxu0 %v9008
    %9126 = vmatpush.bf16.msra.mxu0 %v9006
    %9127 = vmatpush.bf16.msra.mxu0 %v9004
    %9128 = vmatpush.bf16.msra.mxu0 %v9002
    %9129 = vmatpush.bf16.msra.mxu0 %v9000
    %9130 = vmatpush.bf16.msra.mxu0 %v8998
    %9131 = vmatpush.bf16.msra.mxu0 %v8996
    %9132 = vmatmul.bf16.gmra.mxu0 %v8794
    %v9133 = vpop.f32.mrf.mxu0
    %v9134 = vadd.f32 %v8800, %v9133
    %v9135 = vpop.f32.mrf.mxu0
    %9136 = vdwg.mxu0
    %9137 = vmatpush.bf16.msra.mxu0 %v9026
    %9138 = vmatpush.bf16.msra.mxu0 %v9024
    %9139 = vmatpush.bf16.msra.mxu0 %v9022
    %9140 = vmatpush.bf16.msra.mxu0 %v9020
    %9141 = vmatpush.bf16.msra.mxu0 %v9018
    %9142 = vmatpush.bf16.msra.mxu0 %v9016
    %9143 = vmatpush.bf16.msra.mxu0 %v9014
    %9144 = vmatpush.bf16.msra.mxu0 %v9012
    %9145 = vmatmul.bf16.gmra.mxu0 %v8795
    %v9146 = vpop.f32.mrf.mxu0
    %v9147 = vadd.f32 %v9134, %v9146
    %v9148 = vpop.f32.mrf.mxu0
    %9149 = vdwg.mxu0
    %9150 = vmatpush.bf16.msra.mxu0 %v9042
    %9151 = vmatpush.bf16.msra.mxu0 %v9040
    %9152 = vmatpush.bf16.msra.mxu0 %v9038
    %9153 = vmatpush.bf16.msra.mxu0 %v9036
    %9154 = vmatpush.bf16.msra.mxu0 %v9034
    %9155 = vmatpush.bf16.msra.mxu0 %v9032
    %9156 = vmatpush.bf16.msra.mxu0 %v9030
    %9157 = vmatpush.bf16.msra.mxu0 %v9028
    %9158 = vmatmul.bf16.gmra.mxu0 %v8796
    %v9159 = vpop.f32.mrf.mxu0
    %v9160 = vadd.f32 %v9147, %v9159
    %v9161 = vpop.f32.mrf.mxu0
    %9162 = vdwg.mxu0
    %9163 = vmatpush.bf16.msra.mxu0 %v9058
    %9164 = vmatpush.bf16.msra.mxu0 %v9056
    %9165 = vmatpush.bf16.msra.mxu0 %v9054
    %9166 = vmatpush.bf16.msra.mxu0 %v9052
    %9167 = vmatpush.bf16.msra.mxu0 %v9050
    %9168 = vmatpush.bf16.msra.mxu0 %v9048
    %9169 = vmatpush.bf16.msra.mxu0 %v9046
    %9170 = vmatpush.bf16.msra.mxu0 %v9044
    %9171 = vmatmul.bf16.gmra.mxu0 %v8797
    %v9172 = vpop.f32.mrf.mxu0
    %v9173 = vadd.f32 %v9160, %v9172
    %v9174 = vpop.f32.mrf.mxu0
    %9175 = vdwg.mxu0
    %9176 = vmatpush.bf16.msra.mxu0 %v9011
    %9177 = vmatpush.bf16.msra.mxu0 %v9009
    %9178 = vmatpush.bf16.msra.mxu0 %v9007
    %9179 = vmatpush.bf16.msra.mxu0 %v9005
    %9180 = vmatpush.bf16.msra.mxu0 %v9003
    %9181 = vmatpush.bf16.msra.mxu0 %v9001
    %9182 = vmatpush.bf16.msra.mxu0 %v8999
    %9183 = vmatpush.bf16.msra.mxu0 %v8997
    %9184 = vmatmul.bf16.gmra.mxu0 %v8794
    %v9185 = vpop.f32.mrf.mxu0
    %v9186 = vadd.f32 %v8801, %v9185
    %v9187 = vpop.f32.mrf.mxu0
    %9188 = vdwg.mxu0
    %9189 = vmatpush.bf16.msra.mxu0 %v9027
    %9190 = vmatpush.bf16.msra.mxu0 %v9025
    %9191 = vmatpush.bf16.msra.mxu0 %v9023
    %9192 = vmatpush.bf16.msra.mxu0 %v9021
    %9193 = vmatpush.bf16.msra.mxu0 %v9019
    %9194 = vmatpush.bf16.msra.mxu0 %v9017
    %9195 = vmatpush.bf16.msra.mxu0 %v9015
    %9196 = vmatpush.bf16.msra.mxu0 %v9013
    %9197 = vmatmul.bf16.gmra.mxu0 %v8795
    %v9198 = vpop.f32.mrf.mxu0
    %v9199 = vadd.f32 %v9186, %v9198
    %v9200 = vpop.f32.mrf.mxu0
    %9201 = vdwg.mxu0
    %9202 = vmatpush.bf16.msra.mxu0 %v9043
    %9203 = vmatpush.bf16.msra.mxu0 %v9041
    %9204 = vmatpush.bf16.msra.mxu0 %v9039
    %9205 = vmatpush.bf16.msra.mxu0 %v9037
    %9206 = vmatpush.bf16.msra.mxu0 %v9035
    %9207 = vmatpush.bf16.msra.mxu0 %v9033
    %9208 = vmatpush.bf16.msra.mxu0 %v9031
    %9209 = vmatpush.bf16.msra.mxu0 %v9029
    %9210 = vmatmul.bf16.gmra.mxu0 %v8796
    %v9211 = vpop.f32.mrf.mxu0
    %v9212 = vadd.f32 %v9199, %v9211
    %v9213 = vpop.f32.mrf.mxu0
    %9214 = vdwg.mxu0
    %9215 = vmatpush.bf16.msra.mxu0 %v9059
    %9216 = vmatpush.bf16.msra.mxu0 %v9057
    %9217 = vmatpush.bf16.msra.mxu0 %v9055
    %9218 = vmatpush.bf16.msra.mxu0 %v9053
    %9219 = vmatpush.bf16.msra.mxu0 %v9051
    %9220 = vmatpush.bf16.msra.mxu0 %v9049
    %9221 = vmatpush.bf16.msra.mxu0 %v9047
    %9222 = vmatpush.bf16.msra.mxu0 %v9045
    %9223 = vmatmul.bf16.gmra.mxu0 %v8797
    %v9224 = vpop.f32.mrf.mxu0
    %v9225 = vadd.f32 %v9212, %v9224
    %v9226 = vpop.f32.mrf.mxu0
    %9227 = vdwg.mxu0
    %v9228 = vmax.f32 %v9173, 0.0
    %v9229 = vmax.f32 %v9225, 0.0
    %v9230 = vld [vmem:[#allocation23] sm:$0xf]
    %v9231 = vld [vmem:[#allocation23 + $0x4] sm:$0xf]
    %v9232 = vld [vmem:[#allocation23 + $0x8] sm:$0xf]
    %v9233 = vld [vmem:[#allocation23 + $0xc] sm:$0xf]
    %v9234 = vld [vmem:[#allocation23 + $0x10] sm:$0xf]
    %v9235 = vld [vmem:[#allocation23 + $0x14] sm:$0xf]
    %v9236 = vld [vmem:[#allocation23 + $0x18] sm:$0xf]
    %v9237 = vld [vmem:[#allocation23 + $0x1c] sm:$0xf]
    %v9238 = vld [vmem:[#allocation23 + $0x20] sm:$0xf]
    %v9239 = vld [vmem:[#allocation23 + $0x24] sm:$0xf]
    %v9240 = vld [vmem:[#allocation23 + $0x28] sm:$0xf]
    %v9241 = vld [vmem:[#allocation23 + $0x2c] sm:$0xf]
    %v9242 = vld [vmem:[#allocation23 + $0x30] sm:$0xf]
    %v9243 = vld [vmem:[#allocation23 + $0x34] sm:$0xf]
    %v9244 = vld [vmem:[#allocation23 + $0x38] sm:$0xf]
    %v9245 = vld [vmem:[#allocation23 + $0x3c] sm:$0xf]
    %v9246 = vld [vmem:[#allocation23 + $0x40] sm:$0xf]
    %v9247 = vld [vmem:[#allocation23 + $0x44] sm:$0xf]
    %v9248 = vld [vmem:[#allocation23 + $0x48] sm:$0xf]
    %v9249 = vld [vmem:[#allocation23 + $0x4c] sm:$0xf]
    %v9250 = vld [vmem:[#allocation23 + $0x50] sm:$0xf]
    %v9251 = vld [vmem:[#allocation23 + $0x54] sm:$0xf]
    %v9252 = vld [vmem:[#allocation23 + $0x58] sm:$0xf]
    %v9253 = vld [vmem:[#allocation23 + $0x5c] sm:$0xf]
    %v9254 = vld [vmem:[#allocation23 + $0x60] sm:$0xf]
    %v9255 = vld [vmem:[#allocation23 + $0x64] sm:$0xf]
    %v9256 = vld [vmem:[#allocation23 + $0x68] sm:$0xf]
    %v9257 = vld [vmem:[#allocation23 + $0x6c] sm:$0xf]
    %v9258 = vld [vmem:[#allocation23 + $0x70] sm:$0xf]
    %v9259 = vld [vmem:[#allocation23 + $0x74] sm:$0xf]
    %v9260 = vld [vmem:[#allocation23 + $0x78] sm:$0xf]
    %v9261 = vld [vmem:[#allocation23 + $0x7c] sm:$0xf]
    %v9262 = vpack.c.bf16 %v9228, %v9228
    %v9263 = vpack.c.bf16 %v9229, %v9229
    %v9264 = vld [vmem:[#allocation25] sm:$0x1]
    %v9266 = vperm.slane %v9264, 0
    %v9300 = vunpack.c.l.b16 %v9230
    %v9301 = vunpack.c.l.b16 %v9231
    %v9302 = vunpack.c.l.b16 %v9232
    %v9303 = vunpack.c.l.b16 %v9233
    %v9304 = vunpack.c.l.b16 %v9234
    %v9305 = vunpack.c.l.b16 %v9235
    %v9306 = vunpack.c.l.b16 %v9236
    %v9307 = vunpack.c.l.b16 %v9237
    %v9308 = vunpack.c.l.b16 %v9238
    %v9309 = vunpack.c.l.b16 %v9239
    %v9310 = vunpack.c.l.b16 %v9240
    %v9311 = vunpack.c.l.b16 %v9241
    %v9312 = vunpack.c.l.b16 %v9242
    %v9313 = vunpack.c.l.b16 %v9243
    %v9314 = vunpack.c.l.b16 %v9244
    %v9315 = vunpack.c.l.b16 %v9245
    %v9316 = vunpack.c.l.b16 %v9246
    %v9317 = vunpack.c.l.b16 %v9247
    %v9318 = vunpack.c.l.b16 %v9248
    %v9319 = vunpack.c.l.b16 %v9249
    %v9320 = vunpack.c.l.b16 %v9250
    %v9321 = vunpack.c.l.b16 %v9251
    %v9322 = vunpack.c.l.b16 %v9252
    %v9323 = vunpack.c.l.b16 %v9253
    %v9324 = vunpack.c.l.b16 %v9254
    %v9325 = vunpack.c.l.b16 %v9255
    %v9326 = vunpack.c.l.b16 %v9256
    %v9327 = vunpack.c.l.b16 %v9257
    %v9328 = vunpack.c.l.b16 %v9258
    %v9329 = vunpack.c.l.b16 %v9259
    %v9330 = vunpack.c.l.b16 %v9260
    %v9331 = vunpack.c.l.b16 %v9261
    %v9332 = vpack.c.b16 %v9301, %v9300
    %v9333 = vpack.c.b16 %v9303, %v9302
    %v9334 = vpack.c.b16 %v9305, %v9304
    %v9335 = vpack.c.b16 %v9307, %v9306
    %v9336 = vpack.c.b16 %v9309, %v9308
    %v9337 = vpack.c.b16 %v9311, %v9310
    %v9338 = vpack.c.b16 %v9313, %v9312
    %v9339 = vpack.c.b16 %v9315, %v9314
    %v9340 = vpack.c.b16 %v9317, %v9316
    %v9341 = vpack.c.b16 %v9319, %v9318
    %v9342 = vpack.c.b16 %v9321, %v9320
    %v9343 = vpack.c.b16 %v9323, %v9322
    %v9344 = vpack.c.b16 %v9325, %v9324
    %v9345 = vpack.c.b16 %v9327, %v9326
    %v9346 = vpack.c.b16 %v9329, %v9328
    %v9347 = vpack.c.b16 %v9331, %v9330
    %9364 = vmatpush.bf16.msra.mxu0 %v9339
    %9365 = vmatpush.bf16.msra.mxu0 %v9338
    %9366 = vmatpush.bf16.msra.mxu0 %v9337
    %9367 = vmatpush.bf16.msra.mxu0 %v9336
    %9368 = vmatpush.bf16.msra.mxu0 %v9335
    %9369 = vmatpush.bf16.msra.mxu0 %v9334
    %9370 = vmatpush.bf16.msra.mxu0 %v9333
    %9371 = vmatpush.bf16.msra.mxu0 %v9332
    %9372 = vmatmul.bf16.gmra.mxu0 %v9262
    %v9373 = vpop.f32.mrf.mxu0
    %v9374 = vadd.f32 %v9266, %v9373
    %v9375 = vpop.f32.mrf.mxu0
    %9376 = vdwg.mxu0
    %9377 = vmatpush.bf16.msra.mxu0 %v9347
    %9378 = vmatpush.bf16.msra.mxu0 %v9346
    %9379 = vmatpush.bf16.msra.mxu0 %v9345
    %9380 = vmatpush.bf16.msra.mxu0 %v9344
    %9381 = vmatpush.bf16.msra.mxu0 %v9343
    %9382 = vmatpush.bf16.msra.mxu0 %v9342
    %9383 = vmatpush.bf16.msra.mxu0 %v9341
    %9384 = vmatpush.bf16.msra.mxu0 %v9340
    %9385 = vmatmul.bf16.gmra.mxu0 %v9263
    %v9386 = vpop.f32.mrf.mxu0
    %v9387 = vadd.f32 %v9374, %v9386
    %v9388 = vpop.f32.mrf.mxu0
    %9389 = vdwg.mxu0
    %9390 = vst [vmem:[#allocation26] sm:$0xff] %v9387
    // Predicated region
    $region122: #{tpu_custom_call.1} parent=1 // pred_check
      _
    $region123: #{tpu_custom_call.1} parent=1 // pred_check_branch
      %9392 = sbr.rel (0) target = $region125
    $region124: #{tpu_custom_call.1} parent=1 // pred_region
      %9394 = vsyncadd [#allocation4], 0
      %s9396 = sshll.u32 [#allocation26], 4
      %s9397 = int_to_ptr.vmem [resolvable:$true] %s9396
      %s9398 = sshll.u32 %s15, 4
      %s9399 = int_to_ptr.hbm [resolvable:$true] %s9398
      %9401 = dma.vmem_to_hbm [thread:$0]  %s9397, 128, %s9399, [#allocation4]
    $region125: #{tpu_custom_call.1} parent=1 // pred_fallthru
      _
    // Predicated region
    $region126: #{tpu_custom_call.1} parent=1 // pred_check
      _
    $region127: #{tpu_custom_call.1} parent=1 // pred_check_branch
      %9403 = sbr.rel (0) target = $region129
    $region128: #{tpu_custom_call.1} parent=1 // pred_region
      %9405 = dma.done [#allocation4], 128
    $region129: #{tpu_custom_call.1} parent=1 // pred_fallthru
      _
    %9406 = vsyncpa [#allocation3], 1
    %9407 = vsyncpa [#allocation6], 1
    %9408 = vsyncpa [#allocation9], 1
    %9409 = vsyncpa [#allocation12], 1
    %9410 = vsyncpa [#allocation15], 1
    %9411 = vsyncpa [#allocation18], 1
    %9412 = vsyncpa [#allocation21], 1
    %9413 = vsyncpa [#allocation24], 1
    %9414 = vsyncpa [#allocation4], 1

</llo_original>
